<compile_context>
chip_gen: v7x
topology: tpu7x:2x2x1
jax: 0.10.0
libtpu: 0.0.40
codegen_flags: <defaults>
</compile_context>

<pallas_src>
import functools

import jax
import jax.numpy as jnp
from jax.experimental import pallas as pl
from jax.experimental.pallas import tpu as pltpu


_VMEM_LIMIT = 32 * 1024 * 1024  # safe on v5e/v6e (128 MiB phys) and v7x (64 MiB/TC)


def _nbytes(a):
  return int(a.size) * a.dtype.itemsize


# ----------------------------- Pallas kernels --------------------------------


def _trunk_kernel(em_ref, w1_ref, s1_ref, w2_ref, s2_ref, o_ref,
                  h1_ref, acc_ref, *, tk):
  """Fused shared trunk: out = relu(relu(em@W1+s1) @ W2 + s2), K-accumulated."""
  k = pl.program_id(1)

  @pl.when(k == 0)
  def _():
    # Layer 1 (288 -> 4096): tiny matmul, recomputed once per output-column
    # block j so each megacore has its own valid h1 copy; it hides entirely
    # under the layer-2 weight DMA.
    h1 = jnp.dot(em_ref[...], w1_ref[...], preferred_element_type=jnp.float32)
    h1_ref[...] = jnp.maximum(h1 + s1_ref[...], 0.0).astype(h1_ref.dtype)
    acc_ref[...] = jnp.zeros_like(acc_ref)

  kk = pl.multiple_of(k * tk, tk)
  acc_ref[...] += jnp.dot(h1_ref[:, pl.ds(kk, tk)], w2_ref[...],
                          preferred_element_type=jnp.float32)

  @pl.when(k == pl.num_programs(1) - 1)
  def _():
    o_ref[...] = jnp.maximum(acc_ref[...] + s2_ref[...], 0.0).astype(o_ref.dtype)


def trunk_fused(em_vec, w1, s1, w2, s2, *, tn=1024, tk=2048,
                out_dtype=jnp.bfloat16):
  """Both share_layer blocks (Linear+BN+ReLU x2) in one pallas_call."""
  B, K1 = em_vec.shape
  K1w, N1 = w1.shape
  N1w, N2 = w2.shape
  assert K1 == K1w and N1 == N1w, (K1, K1w, N1, N1w)
  assert N1 % tk == 0 and N2 % tn == 0, (N1, tk, N2, tn)
  assert B % 8 == 0, "batch must be a multiple of 8 (sublane constraint)"

  s1_2 = s1.reshape(1, N1).astype(jnp.float32)
  s2_2 = s2.reshape(1, N2).astype(jnp.float32)

  grid = (N2 // tn, N1 // tk)  # reduction axis last; parallel axis >= 2 for v7x
  flops = 2 * B * (K1 * N1 * grid[0] + N1 * N2)
  bytes_accessed = (_nbytes(em_vec) + _nbytes(w1) + _nbytes(s1_2)
                    + _nbytes(w2) + _nbytes(s2_2)
                    + B * N2 * jnp.dtype(out_dtype).itemsize)

  return pl.pallas_call(
      functools.partial(_trunk_kernel, tk=tk),
      out_shape=jax.ShapeDtypeStruct((B, N2), out_dtype),
      grid_spec=pltpu.PrefetchScalarGridSpec(
          num_scalar_prefetch=0,
          grid=grid,
          in_specs=[
              pl.BlockSpec((B, K1), lambda j, k: (0, 0)),      # em (resident)
              pl.BlockSpec((K1, N1), lambda j, k: (0, 0)),     # W1 (resident, 2.4MB)
              pl.BlockSpec((1, N1), lambda j, k: (0, 0)),      # s1
              pl.BlockSpec((tk, tn), lambda j, k: (k, j)),     # W2 tile (4MB)
              pl.BlockSpec((1, tn), lambda j, k: (0, j)),      # s2 tile
          ],
          out_specs=pl.BlockSpec((B, tn), lambda j, k: (0, j)),
          scratch_shapes=[pltpu.VMEM((B, N1), jnp.bfloat16),   # h1 (64 KB)
                          pltpu.VMEM((B, tn), jnp.float32)],   # acc
      ),
      compiler_params=pltpu.CompilerParams(
          dimension_semantics=("parallel", "arbitrary"),
          vmem_limit_bytes=_VMEM_LIMIT),
      cost_estimate=pl.CostEstimate(flops=int(flops), transcendentals=0,
                                    bytes_accessed=int(bytes_accessed)),
  )(em_vec, w1, s1_2, w2, s2_2)


def _head_kernel(x_ref, w1_ref, s1_ref, w2_ref, s2_ref, wl_ref, sl_ref,
                 o_ref, acc_ref):
  """One task head per h grid index; k tiles W1's output cols == W2's K dim."""
  k = pl.program_id(1)

  @pl.when(k == 0)
  def _():
    acc_ref[...] = jnp.zeros_like(acc_ref)

  # Column block of h1 = relu(x @ W1 + s1) finished this step directly feeds
  # the matching reduction block of the second matmul (dropout = identity).
  h1 = jnp.dot(x_ref[...], w1_ref[...], preferred_element_type=jnp.float32)
  h1 = jnp.maximum(h1 + s1_ref[...], 0.0)
  acc_ref[...] += jnp.dot(h1.astype(w2_ref.dtype), w2_ref[...],
                          preferred_element_type=jnp.float32)

  @pl.when(k == pl.num_programs(1) - 1)
  def _():
    h2 = jnp.maximum(acc_ref[...] + s2_ref[...], 0.0)
    logits = jnp.dot(h2.astype(wl_ref.dtype), wl_ref[...],
                     preferred_element_type=jnp.float32)
    o_ref[...] = (logits + sl_ref[...]).astype(o_ref.dtype)


def heads_fused(x, hp, *, tc=512):
  """Run all task heads in one pallas_call; grid = (head, k-block)."""
  B, D = x.shape
  n_heads, Dw, H1 = hp["w1"].shape
  assert D == Dw, (D, Dw)
  assert H1 % tc == 0, (H1, tc)
  NL = hp["wl"].shape[2]           # padded, lane-dense logits width (128)

  grid = (n_heads, H1 // tc)
  flops = n_heads * 2 * B * (D * H1 + H1 * H1 + H1 * NL)
  bytes_accessed = (_nbytes(x)
                    + sum(_nbytes(hp[key]) for key in
                          ("w1", "s1", "w2", "s2", "wl", "sl"))
                    + n_heads * B * NL * 4)

  return pl.pallas_call(
      _head_kernel,
      out_shape=jax.ShapeDtypeStruct((n_heads, B, NL), jnp.float32),
      grid_spec=pltpu.PrefetchScalarGridSpec(
          num_scalar_prefetch=0,
          grid=grid,
          in_specs=[
              pl.BlockSpec((B, D), lambda h, k: (0, 0)),
              pl.BlockSpec((None, D, tc), lambda h, k: (h, 0, k)),   # W1 col block
              pl.BlockSpec((None, 1, tc), lambda h, k: (h, 0, k)),   # s1 col block
              pl.BlockSpec((None, tc, H1), lambda h, k: (h, k, 0)),  # W2 row block
              pl.BlockSpec((None, 1, H1), lambda h, k: (h, 0, 0)),   # s2
              pl.BlockSpec((None, H1, NL), lambda h, k: (h, 0, 0)),  # W_logits
              pl.BlockSpec((None, 1, NL), lambda h, k: (h, 0, 0)),   # s_logits
          ],
          out_specs=pl.BlockSpec((None, B, NL), lambda h, k: (h, 0, 0)),
          scratch_shapes=[pltpu.VMEM((B, H1), jnp.float32)],
      ),
      compiler_params=pltpu.CompilerParams(
          dimension_semantics=("parallel", "arbitrary"),
          vmem_limit_bytes=_VMEM_LIMIT),
      cost_estimate=pl.CostEstimate(flops=int(flops), transcendentals=0,
                                    bytes_accessed=int(bytes_accessed)),
  )(x, hp["w1"], hp["s1"], hp["w2"], hp["s2"], hp["wl"], hp["sl"])


# --------------------------- Parameter helpers -------------------------------


def _fold_linear_bn(key, fan_in, fan_out, *, bn=True, eps=1e-5):
  """Linear init (PyTorch-style) with eval-mode BN folded into W / shift.

  Returns (W_folded[bf16, in x out], shift[f32, out]).
  """
  kw, kb, kg, kbeta = jax.random.split(key, 4)
  lim = 1.0 / jnp.sqrt(fan_in)
  w = jax.random.uniform(kw, (fan_in, fan_out), jnp.float32, -lim, lim)
  b = jax.random.uniform(kb, (fan_out,), jnp.float32, -lim, lim)
  if bn:
    gamma = jax.random.uniform(kg, (fan_out,), jnp.float32, 0.5, 1.5)
    beta = jax.random.uniform(kbeta, (fan_out,), jnp.float32, -0.1, 0.1)
    running_mean = jnp.zeros((fan_out,), jnp.float32)
    running_var = jnp.ones((fan_out,), jnp.float32)
    scale = gamma / jnp.sqrt(running_var + eps)
    shift_bn = beta - running_mean * scale
    w = w * scale[None, :]
    shift = b * scale + shift_bn
  else:
    shift = b
  return w.astype(jnp.bfloat16), shift.astype(jnp.float32)


# ------------------------------ Model build ----------------------------------

EM_KEYS = ("plat_form", "biz_type", "cate1_id", "cate2_id", "cate3_id",
           "seller_uid", "company_name", "rvcr_prov_name", "rvcr_city_name")
PRE_KEYS = ("lgst_company", "warehouse_id", "shipped_prov_id", "shipped_city_id")

_LOGIT_PAD = 128  # lane-dense padded logits width (all ranges <= 128)


def build_params(config, key):
  params = {"trunk": None, "heads": {}, "head_ranges": {}}
  keys = jax.random.split(key, 64)
  ki = 0
  E = config["embadding_dim"]

  # One concatenated embedding table (bf16) + per-key row offsets, so the
  # forward does a single gather instead of 9 gathers + concat.
  tables, offsets, off = [], {}, 0
  for name in EM_KEYS:
    vocab = config[name + "_range"]
    tbl = jax.random.normal(keys[ki], (vocab, E), jnp.float32) * 0.02
    tables.append(tbl)
    offsets[name] = off
    off += vocab
    ki += 1
  params["em_table"] = jnp.concatenate(tables, axis=0).astype(jnp.bfloat16)
  params["em_offsets"] = offsets

  # share_layer: Linear(9E,4096)+BN+ReLU ; Linear(4096,2048)+BN+ReLU
  w1, s1 = _fold_linear_bn(keys[ki], len(EM_KEYS) * E, 4096, bn=True); ki += 1
  w2, s2 = _fold_linear_bn(keys[ki], 4096, 2048, bn=True); ki += 1
  params["trunk"] = (w1, s1, w2, s2)

  # heads: Linear(2048,1024)+BN+Drop+ReLU ; Linear(1024,1024)+BN+Drop+ReLU ;
  #        Linear(1024, range) -- padded to 128 lanes, stacked across heads.
  w1s, s1s, w2s, s2s, wls, sls = [], [], [], [], [], []
  for name in PRE_KEYS:
    out_range = config[name + "_range"]
    params["head_ranges"][name] = out_range

    hw1, hs1 = _fold_linear_bn(keys[ki], 2048, 1024, bn=True); ki += 1
    hw2, hs2 = _fold_linear_bn(keys[ki], 1024, 1024, bn=True); ki += 1
    hwl, hsl = _fold_linear_bn(keys[ki], 1024, out_range, bn=False); ki += 1

    wl_pad = jnp.zeros((1024, _LOGIT_PAD), jnp.bfloat16).at[:, :out_range].set(hwl)
    # NOTE: padded logit columns come out as exactly 0.0; the wrapper slice to
    # the real range is mandatory before any downstream softmax/argmax.
    sl_pad = jnp.zeros((_LOGIT_PAD,), jnp.float32).at[:out_range].set(hsl)

    w1s.append(hw1); s1s.append(hs1.reshape(1, 1024))
    w2s.append(hw2); s2s.append(hs2.reshape(1, 1024))
    wls.append(wl_pad); sls.append(sl_pad.reshape(1, _LOGIT_PAD))

  params["heads"] = {
      "w1": jnp.stack(w1s), "s1": jnp.stack(s1s),
      "w2": jnp.stack(w2s), "s2": jnp.stack(s2s),
      "wl": jnp.stack(wls), "sl": jnp.stack(sls),
  }
  return params


def classify_forward(params, dic):
  B = dic[EM_KEYS[0]].shape[0]
  # Single gather over the concatenated table replaces 9 gathers + a
  # lane-sparse concat (plain-JAX glue ahead of the first pallas_call).
  idx = jnp.stack([dic[k] + params["em_offsets"][k] for k in EM_KEYS], axis=1)
  em_vec = jnp.take(params["em_table"], idx, axis=0).reshape(B, -1)  # [B, 288] bf16

  # Fused shared trunk (one pallas_call: 288->4096->2048, bf16 weight stream).
  w1, s1, w2, s2 = params["trunk"]
  x = trunk_fused(em_vec, w1, s1, w2, s2, tn=1024, tk=2048)          # [B, 2048] bf16

  # All four task heads in a single pallas_call (grid over heads x k-blocks).
  logits_all = heads_fused(x, params["heads"], tc=512)               # [4, B, 128] f32

  out = {}
  for i, name in enumerate(PRE_KEYS):
    out[name] = logits_all[i, :, :params["head_ranges"][name]]
  return out


# ---------------------------- Pure-JAX reference ------------------------------


def classify_reference(params, dic):
  """Reference with identical cast points (bf16 activations, f32 accum)."""
  B = dic[EM_KEYS[0]].shape[0]
  idx = jnp.stack([dic[k] + params["em_offsets"][k] for k in EM_KEYS], axis=1)
  em = jnp.take(params["em_table"], idx, axis=0).reshape(B, -1)

  w1, s1, w2, s2 = params["trunk"]
  h1 = jnp.maximum(jnp.dot(em.astype(jnp.float32), w1.astype(jnp.float32))
                   + s1[None, :], 0.0).astype(jnp.bfloat16)
  x = jnp.maximum(jnp.dot(h1.astype(jnp.float32), w2.astype(jnp.float32))
                  + s2[None, :], 0.0).astype(jnp.bfloat16)

  hp = params["heads"]
  out = {}
  for i, name in enumerate(PRE_KEYS):
    a = jnp.maximum(jnp.dot(x.astype(jnp.float32), hp["w1"][i].astype(jnp.float32))
                    + hp["s1"][i], 0.0).astype(jnp.bfloat16)
    b = jnp.maximum(jnp.dot(a.astype(jnp.float32), hp["w2"][i].astype(jnp.float32))
                    + hp["s2"][i], 0.0).astype(jnp.bfloat16)
    lg = jnp.dot(b.astype(jnp.float32), hp["wl"][i].astype(jnp.float32)) + hp["sl"][i]
    out[name] = lg[:, :params["head_ranges"][name]]
  return out


# --------------------------------- Main ---------------------------------------

if __name__ == "__main__":
  config = dict(
      embadding_dim=32,
      plat_form_range=5, biz_type_range=7,
      cate1_id_range=11, cate2_id_range=13, cate3_id_range=17,
      seller_uid_range=23, company_name_range=29,
      rvcr_prov_name_range=31, rvcr_city_name_range=37,
      payed_hour_range=24,                 # defined in __init__, unused in forward
      lgst_company_range=16, warehouse_id_range=24,
      shipped_prov_id_range=32, shipped_city_id_range=40,
  )
  B = 8  # multiple of 8 required by the (8,128) block constraint

  root = jax.random.PRNGKey(0)
  pkey, dkey = jax.random.split(root)
  params = build_params(config, pkey)

  dic = {}
  dkeys = jax.random.split(dkey, len(EM_KEYS))
  for i, name in enumerate(EM_KEYS):
    dic[name] = jax.random.randint(dkeys[i], (B,), 0,
                                   config[name + "_range"], dtype=jnp.int32)

  out = classify_forward(params, dic)
  out = jax.tree_util.tree_map(jax.block_until_ready, out)
  ref = classify_reference(params, dic)

  for name in PRE_KEYS:
    expected = (B, config[name + "_range"])
    assert out[name].shape == expected, (name, out[name].shape, expected)
    assert jnp.isfinite(out[name]).all(), name
    assert jnp.allclose(out[name], ref[name], rtol=5e-2, atol=5e-3), (
        name, float(jnp.abs(out[name] - ref[name]).max()))

  print("KERNEL_OK")
</pallas_src>

<mosaic_0001>
module attributes {stable_mosaic.version = 11 : i64} {
  func.func @_trunk_kernel(%arg0: i32, %arg1: i32, %arg2: memref<8x288xbf16, #tpu.memory_space<vmem>>, %arg3: memref<288x4096xbf16, #tpu.memory_space<vmem>>, %arg4: memref<1x4096xf32, #tpu.memory_space<vmem>>, %arg5: memref<2048x1024xbf16, #tpu.memory_space<vmem>>, %arg6: memref<1x1024xf32, #tpu.memory_space<vmem>>, %arg7: memref<8x1024xbf16, #tpu.memory_space<vmem>>, %arg8: memref<8x4096xbf16, #tpu.memory_space<vmem>>, %arg9: memref<8x1024xf32, #tpu.memory_space<vmem>>) attributes {dimension_semantics = [#tpu.dimension_semantics<parallel>, #tpu.dimension_semantics<arbitrary>], iteration_bounds = array<i64: 2, 2>, scalar_prefetch = 0 : i64, scratch_operands = 2 : i64, tpu.core_type = #tpu.core_type<tc>, window_params = [{pipeline_mode = #tpu.pipeline_mode<synchronous>, transform_indices = @transform_0, window_bounds = array<i64: 8, 288>}, {pipeline_mode = #tpu.pipeline_mode<synchronous>, transform_indices = @transform_1, window_bounds = array<i64: 288, 4096>}, {pipeline_mode = #tpu.pipeline_mode<synchronous>, transform_indices = @transform_2, window_bounds = array<i64: 1, 4096>}, {transform_indices = @transform_3, window_bounds = array<i64: 2048, 1024>}, {transform_indices = @transform_4, window_bounds = array<i64: 1, 1024>}, {transform_indices = @transform_5, window_bounds = array<i64: 8, 1024>}]} {
    %c0_i32 = arith.constant 0 : i32
    %0 = arith.cmpi eq, %arg1, %c0_i32 : i32
    %1 = arith.extui %0 : i1 to i32
    %c0_i32_0 = arith.constant 0 : i32
    %2 = arith.cmpi ne, %1, %c0_i32_0 : i32
    scf.if %2 {
      %c0_8 = arith.constant 0 : index
      %c0_9 = arith.constant 0 : index
      %15 = vector.load %arg2[%c0_8, %c0_9] : memref<8x288xbf16, #tpu.memory_space<vmem>>, vector<8x288xbf16>
      %c0_10 = arith.constant 0 : index
      %c0_11 = arith.constant 0 : index
      %16 = vector.load %arg3[%c0_10, %c0_11] : memref<288x4096xbf16, #tpu.memory_space<vmem>>, vector<288x4096xbf16>
      %cst_12 = arith.constant dense<0.000000e+00> : vector<8x4096xf32>
      %17 = tpu.matmul %15, %16, %cst_12 {dimension_numbers = #tpu.dot_dimension_numbers<[1], [0], [0], [1], [0, 0, 1, 1], [], []>} : vector<8x288xbf16>, vector<288x4096xbf16>, vector<8x4096xf32> -> vector<8x4096xf32>
      %c0_13 = arith.constant 0 : index
      %c0_14 = arith.constant 0 : index
      %18 = vector.load %arg4[%c0_13, %c0_14] : memref<1x4096xf32, #tpu.memory_space<vmem>>, vector<1x4096xf32>
      %19 = vector.broadcast %18 : vector<1x4096xf32> to vector<8x4096xf32>
      %20 = arith.addf %17, %19 : vector<8x4096xf32>
      %cst_15 = arith.constant 0.000000e+00 : f32
      %21 = vector.broadcast %cst_15 : f32 to vector<8x4096xf32>
      %22 = arith.maximumf %20, %21 : vector<8x4096xf32>
      %23 = arith.truncf %22 : vector<8x4096xf32> to vector<8x4096xbf16>
      %c0_16 = arith.constant 0 : index
      %c0_17 = arith.constant 0 : index
      %24 = vector.load %arg8[%c0_16, %c0_17] : memref<8x4096xbf16, #tpu.memory_space<vmem>>, vector<8x4096xbf16>
      tpu.vector_store %arg8[%c0_16, %c0_17], %23 {strides = array<i32>} : memref<8x4096xbf16, #tpu.memory_space<vmem>>, vector<8x4096xbf16>,
      %cst_18 = arith.constant 0.000000e+00 : f32
      %25 = vector.broadcast %cst_18 : f32 to vector<8x1024xf32>
      %c0_19 = arith.constant 0 : index
      %c0_20 = arith.constant 0 : index
      %26 = vector.load %arg9[%c0_19, %c0_20] : memref<8x1024xf32, #tpu.memory_space<vmem>>, vector<8x1024xf32>
      tpu.vector_store %arg9[%c0_19, %c0_20], %25 {strides = array<i32>} : memref<8x1024xf32, #tpu.memory_space<vmem>>, vector<8x1024xf32>,
    } else {
    }
    %c2048_i32 = arith.constant 2048 : i32
    %3 = arith.muli %arg1, %c2048_i32 : i32
    %4 = tpu.assume_multiple %3, 2048 : i32
    %c0 = arith.constant 0 : index
    %c0_1 = arith.constant 0 : index
    %5 = vector.load %arg9[%c0, %c0_1] : memref<8x1024xf32, #tpu.memory_space<vmem>>, vector<8x1024xf32>
    %c0_2 = arith.constant 0 : index
    %6 = arith.index_cast %4 : i32 to index
    %7 = vector.load %arg8[%c0_2, %6] : memref<8x4096xbf16, #tpu.memory_space<vmem>>, vector<8x2048xbf16>
    %c0_3 = arith.constant 0 : index
    %c0_4 = arith.constant 0 : index
    %8 = vector.load %arg5[%c0_3, %c0_4] : memref<2048x1024xbf16, #tpu.memory_space<vmem>>, vector<2048x1024xbf16>
    %cst = arith.constant dense<0.000000e+00> : vector<8x1024xf32>
    %9 = tpu.matmul %7, %8, %cst {dimension_numbers = #tpu.dot_dimension_numbers<[1], [0], [0], [1], [0, 0, 1, 1], [], []>} : vector<8x2048xbf16>, vector<2048x1024xbf16>, vector<8x1024xf32> -> vector<8x1024xf32>
    %10 = arith.addf %5, %9 : vector<8x1024xf32>
    %c0_5 = arith.constant 0 : index
    %c0_6 = arith.constant 0 : index
    %11 = vector.load %arg9[%c0_5, %c0_6] : memref<8x1024xf32, #tpu.memory_space<vmem>>, vector<8x1024xf32>
    tpu.vector_store %arg9[%c0_5, %c0_6], %10 {strides = array<i32>} : memref<8x1024xf32, #tpu.memory_space<vmem>>, vector<8x1024xf32>,
    %c1_i32 = arith.constant 1 : i32
    %12 = arith.cmpi eq, %arg1, %c1_i32 : i32
    %13 = arith.extui %12 : i1 to i32
    %c0_i32_7 = arith.constant 0 : i32
    %14 = arith.cmpi ne, %13, %c0_i32_7 : i32
    scf.if %14 {
      %c0_8 = arith.constant 0 : index
      %c0_9 = arith.constant 0 : index
      %15 = vector.load %arg9[%c0_8, %c0_9] : memref<8x1024xf32, #tpu.memory_space<vmem>>, vector<8x1024xf32>
      %c0_10 = arith.constant 0 : index
      %c0_11 = arith.constant 0 : index
      %16 = vector.load %arg6[%c0_10, %c0_11] : memref<1x1024xf32, #tpu.memory_space<vmem>>, vector<1x1024xf32>
      %17 = vector.broadcast %16 : vector<1x1024xf32> to vector<8x1024xf32>
      %18 = arith.addf %15, %17 : vector<8x1024xf32>
      %cst_12 = arith.constant 0.000000e+00 : f32
      %19 = vector.broadcast %cst_12 : f32 to vector<8x1024xf32>
      %20 = arith.maximumf %18, %19 : vector<8x1024xf32>
      %21 = arith.truncf %20 : vector<8x1024xf32> to vector<8x1024xbf16>
      %c0_13 = arith.constant 0 : index
      %c0_14 = arith.constant 0 : index
      %22 = vector.load %arg7[%c0_13, %c0_14] : memref<8x1024xbf16, #tpu.memory_space<vmem>>, vector<8x1024xbf16>
      tpu.vector_store %arg7[%c0_13, %c0_14], %21 {strides = array<i32>} : memref<8x1024xbf16, #tpu.memory_space<vmem>>, vector<8x1024xbf16>,
    } else {
    }
    return
  }
  func.func @transform_0(%arg0: i32, %arg1: i32) -> (i32, i32) {
    %c0_i32 = arith.constant 0 : i32
    %c0_i32_0 = arith.constant 0 : i32
    %c0_i32_1 = arith.constant 0 : i32
    return %c0_i32, %c0_i32_0 : i32, i32
  }
  func.func @transform_1(%arg0: i32, %arg1: i32) -> (i32, i32) {
    %c0_i32 = arith.constant 0 : i32
    %c0_i32_0 = arith.constant 0 : i32
    %c0_i32_1 = arith.constant 0 : i32
    return %c0_i32, %c0_i32_0 : i32, i32
  }
  func.func @transform_2(%arg0: i32, %arg1: i32) -> (i32, i32) {
    %c0_i32 = arith.constant 0 : i32
    %c0_i32_0 = arith.constant 0 : i32
    %c0_i32_1 = arith.constant 0 : i32
    return %c0_i32, %c0_i32_0 : i32, i32
  }
  func.func @transform_3(%arg0: i32, %arg1: i32) -> (i32, i32) {
    %c0_i32 = arith.constant 0 : i32
    return %arg1, %arg0 : i32, i32
  }
  func.func @transform_4(%arg0: i32, %arg1: i32) -> (i32, i32) {
    %c0_i32 = arith.constant 0 : i32
    %c0_i32_0 = arith.constant 0 : i32
    return %c0_i32, %arg0 : i32, i32
  }
  func.func @transform_5(%arg0: i32, %arg1: i32) -> (i32, i32) {
    %c0_i32 = arith.constant 0 : i32
    %c0_i32_0 = arith.constant 0 : i32
    return %c0_i32, %arg0 : i32, i32
  }
}

</mosaic_0001>

<llo_original>
// kernel: tpu_custom_call.1
$region0: #{tpu_custom_call.1}
  #allocation0 [shape = 'u32[]', space=smem, size = 0x4, offset = 0x4, fixed_abs, tag = 'smem constant byte address 0x4 - core index']
  #allocation1 [shape = 'u32[144,128]{1,0:T(1,128)}', space=vmem, size = 0x12000, scoped, tag = 'internal scratch']
  #allocation2 [shape = 'bf16[8,4096]{1,0:T(8,128)(2,1)}', space=vmem, size = 0x10000, scoped, tag = 'scratch operand']
  #allocation3 [shape = 'f32[8,1024]{1,0:T(8,128)}', space=vmem, size = 0x8000, scoped, tag = 'scratch operand']
  %s0 = inlined_call_operand.hbm [shape: bf16[8,288], index: 0, kind: input, shape index: {}]
  %s1 = inlined_call_operand.hbm [shape: bf16[288,4096], index: 1, kind: input, shape index: {}]
  %s2 = inlined_call_operand.hbm [shape: f32[1,4096], index: 2, kind: input, shape index: {}]
  %s3 = inlined_call_operand.hbm [shape: bf16[4096,2048], index: 3, kind: input, shape index: {}]
  %s4 = inlined_call_operand.hbm [shape: f32[1,2048], index: 4, kind: input, shape index: {}]
  %s5 = inlined_call_operand.hbm [shape: bf16[8,2048], index: 5, kind: output, shape index: {}]
  %s6 = sld [smem:[#allocation0]]
  $region81: #{tpu_custom_call.1} parent=0
    _
  %s8 = ssub.s32 1, %s6
  %s9 = scalar_select 0, %s8, %s6
  $region1: #{tpu_custom_call.1} parent=0
    #allocation4 [shape = 'u8[6144]{0}', space=vmem, size = 0x1800, scoped, tag = 'input window, operand 0, single buffered']
    #allocation5 [shape = 's32[2]{0}', space=sflag, size = 0x8, scoped, tag = 'scoped memory for tpu_custom_call.1']
    #allocation6 [shape = 's32[2]{0}', space=sflag, size = 0x8, scoped, tag = 'scoped memory for tpu_custom_call.1']
    #allocation7 [shape = 'u8[2359296]{0}', space=vmem, size = 0x240000, scoped, tag = 'input window, operand 1, single buffered']
    #allocation8 [shape = 's32[1]{0}', space=sflag, size = 0x4, scoped, tag = 'scoped memory for tpu_custom_call.1']
    #allocation9 [shape = 'u8[16384]{0}', space=vmem, size = 0x4000, scoped, tag = 'input window, operand 2, single buffered']
    #allocation10 [shape = 'u8[8388608]{0}', space=vmem, size = 0x800000, scoped, tag = 'input window, operand 3']
    #allocation11 [shape = 's32[2]{0}', space=sflag, size = 0x8, scoped, tag = 'scoped memory for tpu_custom_call.1']
    #allocation12 [shape = 'u8[8192]{0}', space=vmem, size = 0x2000, scoped, tag = 'input window, operand 4']
    #allocation13 [shape = 'u8[32768]{0}', space=vmem, size = 0x8000, scoped, tag = 'output window, operand 0']
    %10 = vsyncpa [#allocation5], 0
    %11 = vsyncpa [#allocation8], 0
    %12 = vsyncpa [#allocation11], 0
    %s13 = scalar_lea.sflag [#allocation11], 1
    %14 = vsyncpa %s13, 0
    %15 = vsyncpa [#allocation6], 0
    %s16 = scalar_lea.sflag [#allocation6], 1
    %17 = vsyncpa %s16, 0
    loop: start=0, step=1, limit=6
    $region2: #{tpu_custom_call.1} parent=1 // loop_pre_header
      _
    $region3: #{tpu_custom_call.1} parent=1 // loop_header
      %s19 = sphi 0, %s23
      %p20 = scmp.ge.s32.totalorder %s19, 6
      %s26 = sphi 0, %s38
      %s27 = sphi 0, %s34
      %s28 = sphi 0, %s26
      %s29 = sphi 0, %s27
      %s30 = sphi 0, %s28
      %s31 = sphi 0, %s29
      %s39 = sphi 0, %s39
      %s41 = sphi 0, %s39
      %s42 = sphi 0, %s41
      %s56 = sphi 0, %s42
      %s60 = sphi 0, %s60
      %s62 = sphi 0, %s60
      %s63 = sphi 0, %s62
      %s77 = sphi 0, %s63
      %s81 = sphi 0, %s81
      %s83 = sphi 0, %s81
      %s84 = sphi 0, %s83
      %s98 = sphi 0, %s84
      %s106 = sphi 0, %s108
      %s109 = sphi 0, %s106
      %s110 = sphi 0, %s109
      %s126 = sphi 0, %s110
      %s132 = sphi 0, %s134
      %s135 = sphi 0, %s132
      %s136 = sphi 0, %s135
      %s152 = sphi 0, %s136
      %s158 = sphi 0, %s160
      %s161 = sphi 0, %s158
      %s162 = sphi 0, %s161
      %s178 = sphi 0, %s162
    $region4: #{tpu_custom_call.1} parent=1 // loop_header_branch
      %22 = sbr.rel (%p20) target = $region8
    $region5: #{tpu_custom_call.1} parent=1 // loop_body
      %s24 = ssub.s32 %s19, 1
      %s25 = ssub.s32 %s19, 2
      %s32 = sadd.s32 1, %s27
      %p33 = scmp.ge.s32.totalorder %s32, 2
      %s34 = scalar_select %p33, 0, %s32
      %s35 = sadd.s32 1, %s26
      %s36 = scalar_select %p33, %s35, %s26
      %p37 = scmp.ge.s32.totalorder %s36, 2
      %s38 = scalar_select %p37, 0, %s36
      %s40 = sadd.s32 %s39, 1
      %p43 = scmp.eq.s32.totalorder %s19, 3
      %p44 = scmp.ne.s32.totalorder %s39, %s41
      %p45 = scmp.eq.s32.totalorder %s19, 0
      %p46 = por %p44, %p45
      %p47 = scmp.ne.s32.totalorder %s39, %s41
      %p48 = scmp.eq.s32.totalorder %s24, 3
      %p49 = por %p47, %p48
      %p50 = scmp.ne.s32.totalorder %s41, %s42
      %p51 = scmp.eq.s32.totalorder %s24, 0
      %p52 = por %p50, %p51
      %p53 = scmp.ne.s32.totalorder %s41, %s42
      %p54 = scmp.eq.s32.totalorder %s25, 3
      %p55 = por %p53, %p54
      %p57 = scmp.ne.s32.totalorder %s42, %s56
      %p58 = scmp.eq.s32.totalorder %s25, 0
      %p59 = por %p57, %p58
      %s61 = sadd.s32 %s60, 1
      %p64 = scmp.eq.s32.totalorder %s19, 3
      %p65 = scmp.ne.s32.totalorder %s60, %s62
      %p66 = scmp.eq.s32.totalorder %s19, 0
      %p67 = por %p65, %p66
      %p68 = scmp.ne.s32.totalorder %s60, %s62
      %p69 = scmp.eq.s32.totalorder %s24, 3
      %p70 = por %p68, %p69
      %p71 = scmp.ne.s32.totalorder %s62, %s63
      %p72 = scmp.eq.s32.totalorder %s24, 0
      %p73 = por %p71, %p72
      %p74 = scmp.ne.s32.totalorder %s62, %s63
      %p75 = scmp.eq.s32.totalorder %s25, 3
      %p76 = por %p74, %p75
      %p78 = scmp.ne.s32.totalorder %s63, %s77
      %p79 = scmp.eq.s32.totalorder %s25, 0
      %p80 = por %p78, %p79
      %s82 = sadd.s32 %s81, 1
      %p85 = scmp.eq.s32.totalorder %s19, 3
      %p86 = scmp.ne.s32.totalorder %s81, %s83
      %p87 = scmp.eq.s32.totalorder %s19, 0
      %p88 = por %p86, %p87
      %p89 = scmp.ne.s32.totalorder %s81, %s83
      %p90 = scmp.eq.s32.totalorder %s24, 3
      %p91 = por %p89, %p90
      %p92 = scmp.ne.s32.totalorder %s83, %s84
      %p93 = scmp.eq.s32.totalorder %s24, 0
      %p94 = por %p92, %p93
      %p95 = scmp.ne.s32.totalorder %s83, %s84
      %p96 = scmp.eq.s32.totalorder %s25, 3
      %p97 = por %p95, %p96
      %p99 = scmp.ne.s32.totalorder %s84, %s98
      %p100 = scmp.eq.s32.totalorder %s25, 0
      %p101 = por %p99, %p100
      %s102 = ssub.s32 %s27, %s34
      %s103 = ssub.s32 %s26, %s38
      %s104 = sor.u32 %s102, %s103
      %p105 = scmp.eq.s32.totalorder %s104, 0
      %s107 = sadd.s32 %s106, 1
      %s108 = scalar_select %p105, %s106, %s107
      %p111 = pneg %p105
      %p112 = scmp.eq.s32.totalorder %s19, 3
      %p113 = por %p111, %p112
      %p114 = scmp.ne.s32.totalorder %s106, %s109
      %p115 = scmp.eq.s32.totalorder %s19, 0
      %p116 = por %p114, %p115
      %p117 = scmp.ne.s32.totalorder %s106, %s109
      %p118 = scmp.eq.s32.totalorder %s24, 3
      %p119 = por %p117, %p118
      %p120 = scmp.ne.s32.totalorder %s109, %s110
      %p121 = scmp.eq.s32.totalorder %s24, 0
      %p122 = por %p120, %p121
      %p123 = scmp.ne.s32.totalorder %s109, %s110
      %p124 = scmp.eq.s32.totalorder %s25, 3
      %p125 = por %p123, %p124
      %p127 = scmp.ne.s32.totalorder %s110, %s126
      %p128 = scmp.eq.s32.totalorder %s25, 0
      %p129 = por %p127, %p128
      %s130 = ssub.s32 %s26, %s38
      %p131 = scmp.eq.s32.totalorder %s130, 0
      %s133 = sadd.s32 %s132, 1
      %s134 = scalar_select %p131, %s132, %s133
      %p137 = pneg %p131
      %p138 = scmp.eq.s32.totalorder %s19, 3
      %p139 = por %p137, %p138
      %p140 = scmp.ne.s32.totalorder %s132, %s135
      %p141 = scmp.eq.s32.totalorder %s19, 0
      %p142 = por %p140, %p141
      %p143 = scmp.ne.s32.totalorder %s132, %s135
      %p144 = scmp.eq.s32.totalorder %s24, 3
      %p145 = por %p143, %p144
      %p146 = scmp.ne.s32.totalorder %s135, %s136
      %p147 = scmp.eq.s32.totalorder %s24, 0
      %p148 = por %p146, %p147
      %p149 = scmp.ne.s32.totalorder %s135, %s136
      %p150 = scmp.eq.s32.totalorder %s25, 3
      %p151 = por %p149, %p150
      %p153 = scmp.ne.s32.totalorder %s136, %s152
      %p154 = scmp.eq.s32.totalorder %s25, 0
      %p155 = por %p153, %p154
      %s156 = ssub.s32 %s26, %s38
      %p157 = scmp.eq.s32.totalorder %s156, 0
      %s159 = sadd.s32 %s158, 1
      %s160 = scalar_select %p157, %s158, %s159
      %p163 = pneg %p157
      %p164 = scmp.eq.s32.totalorder %s19, 3
      %p165 = por %p163, %p164
      %p166 = scmp.ne.s32.totalorder %s158, %s161
      %p167 = scmp.eq.s32.totalorder %s19, 0
      %p168 = por %p166, %p167
      %p169 = scmp.ne.s32.totalorder %s158, %s161
      %p170 = scmp.eq.s32.totalorder %s24, 3
      %p171 = por %p169, %p170
      %p172 = scmp.ne.s32.totalorder %s161, %s162
      %p173 = scmp.eq.s32.totalorder %s24, 0
      %p174 = por %p172, %p173
      %p175 = scmp.ne.s32.totalorder %s161, %s162
      %p176 = scmp.eq.s32.totalorder %s25, 3
      %p177 = por %p175, %p176
      %p179 = scmp.ne.s32.totalorder %s162, %s178
      %p180 = scmp.eq.s32.totalorder %s25, 0
      %p181 = por %p179, %p180
      %p182 = scmp.le.s32.totalorder 1, %s19
      %p183 = scmp.lt.s32.totalorder %s19, 5
      %p184 = pnand %p182, %p183
      %p185 = pneg %p184
      // Predicated region
      $region9: #{tpu_custom_call.1} parent=5 // pred_check
        _
      $region10: #{tpu_custom_call.1} parent=5 // pred_check_branch
        %187 = sbr.rel (%p184) target = $region12
      $region11: #{tpu_custom_call.1} parent=5 // pred_region
        %s188 = ssub.s32 %s19, 1
        // Predicated region
        $region13: #{tpu_custom_call.1} parent=11 // pred_check
          %p189 = pneg %p52
        $region14: #{tpu_custom_call.1} parent=11 // pred_check_branch
          %191 = sbr.rel (%p189) target = $region16
        $region15: #{tpu_custom_call.1} parent=11 // pred_region
          %s193 = ssub.s32 192, 192
          %194 = vsyncadd [#allocation5], %s193
          %s196 = sshll.u32 [#allocation4], 4
          %s197 = int_to_ptr.vmem [resolvable:$true] %s196
          %199 = dma.hbm_to_vmem [thread:$0]  %s0, 192, %s197, [#allocation5]
        $region16: #{tpu_custom_call.1} parent=11 // pred_fallthru
          _
        // Predicated region
        $region17: #{tpu_custom_call.1} parent=11 // pred_check
          %p200 = pneg %p73
        $region18: #{tpu_custom_call.1} parent=11 // pred_check_branch
          %202 = sbr.rel (%p200) target = $region20
        $region19: #{tpu_custom_call.1} parent=11 // pred_region
          %s204 = ssub.s32 73728, 73728
          %205 = vsyncadd [#allocation8], %s204
          %s206 = sshll.u32 [#allocation7], 4
          %s207 = int_to_ptr.vmem [resolvable:$true] %s206
          %212 = dma.hbm_to_vmem [thread:$0]  %s1, 73728, %s207, [#allocation8], 2048, 2048, 128
        $region20: #{tpu_custom_call.1} parent=11 // pred_fallthru
          _
        // Predicated region
        $region21: #{tpu_custom_call.1} parent=11 // pred_check
          %p213 = pneg %p94
        $region22: #{tpu_custom_call.1} parent=11 // pred_check_branch
          %215 = sbr.rel (%p213) target = $region24
        $region23: #{tpu_custom_call.1} parent=11 // pred_region
          %s217 = ssub.s32 512, 512
          %218 = vsyncadd [#allocation8], %s217
          %s220 = sshll.u32 [#allocation9], 4
          %s221 = int_to_ptr.vmem [resolvable:$true] %s220
          %223 = dma.hbm_to_vmem [thread:$0]  %s2, 512, %s221, [#allocation8]
        $region24: #{tpu_custom_call.1} parent=11 // pred_fallthru
          _
      $region12: #{tpu_custom_call.1} parent=5 // pred_fallthru
        _
      %p224 = scmp.lt.s32.totalorder %s19, 4
      // Predicated region
      $region25: #{tpu_custom_call.1} parent=5 // pred_check
        %p225 = pneg %p224
      $region26: #{tpu_custom_call.1} parent=5 // pred_check_branch
        %227 = sbr.rel (%p225) target = $region28
      $region27: #{tpu_custom_call.1} parent=5 // pred_region
        // Predicated region
        $region29: #{tpu_custom_call.1} parent=27 // pred_check
          %p228 = pneg %p116
        $region30: #{tpu_custom_call.1} parent=27 // pred_check_branch
          %230 = sbr.rel (%p228) target = $region32
        $region31: #{tpu_custom_call.1} parent=27 // pred_region
          %s231 = sand.u32 %s19, 1
          %s232 = scalar_lea.sflag [#allocation11], %s231
          %s233 = sand.u32 %s106, 1
          %s234 = smul.addr %s233, 8192
          %s235 = scalar_lea.vmem [#allocation10], %s234
          %s236 = smul.u32 256, %s27
          %s237 = smul.u32 8, %s26
          %s239 = ssub.s32 131072, 131072
          %240 = vsyncadd %s232, %s239
          %s241 = smul.addr %s236, 16
          %s242 = sadd.s32 %s237, %s241
          %s243 = smul.addr %s242, 64
          %s244 = scalar_lea.hbm %s3, %s243
          %s245 = sshll.u32 %s235, 4
          %s246 = int_to_ptr.vmem [resolvable:$true] %s245
          %251 = dma.hbm_to_vmem [thread:$0]  %s244, 131072, %s246, %s232, 1024, 512, 32
        $region32: #{tpu_custom_call.1} parent=27 // pred_fallthru
          _
        // Predicated region
        $region33: #{tpu_custom_call.1} parent=27 // pred_check
          %p252 = pneg %p142
        $region34: #{tpu_custom_call.1} parent=27 // pred_check_branch
          %254 = sbr.rel (%p252) target = $region36
        $region35: #{tpu_custom_call.1} parent=27 // pred_region
          %s255 = sand.u32 %s19, 1
          %s256 = scalar_lea.sflag [#allocation11], %s255
          %s257 = sand.u32 %s132, 1
          %s258 = smul.addr %s257, 8
          %s259 = scalar_lea.vmem [#allocation12], %s258
          %s260 = smul.u32 8, %s26
          %s262 = ssub.s32 128, 128
          %263 = vsyncadd %s256, %s262
          %s264 = smul.addr %s260, 16
          %s265 = scalar_lea.hbm %s4, %s264
          %s267 = sshll.u32 %s259, 4
          %s268 = int_to_ptr.vmem [resolvable:$true] %s267
          %270 = dma.hbm_to_vmem [thread:$0]  %s265, 128, %s268, %s256
        $region36: #{tpu_custom_call.1} parent=27 // pred_fallthru
          _
      $region28: #{tpu_custom_call.1} parent=5 // pred_fallthru
        _
      %p271 = scmp.le.s32.totalorder 1, %s19
      %p272 = scmp.lt.s32.totalorder %s19, 5
      %p273 = pnand %p271, %p272
      %p274 = pneg %p273
      // Predicated region
      $region37: #{tpu_custom_call.1} parent=5 // pred_check
        _
      $region38: #{tpu_custom_call.1} parent=5 // pred_check_branch
        %276 = sbr.rel (%p273) target = $region40
      $region39: #{tpu_custom_call.1} parent=5 // pred_region
        %s277 = ssub.s32 %s19, 1
        // Predicated region
        $region41: #{tpu_custom_call.1} parent=39 // pred_check
          %p278 = pneg %p52
        $region42: #{tpu_custom_call.1} parent=39 // pred_check_branch
          %280 = sbr.rel (%p278) target = $region44
        $region43: #{tpu_custom_call.1} parent=39 // pred_region
          %281 = dma.done [#allocation5], 192
        $region44: #{tpu_custom_call.1} parent=39 // pred_fallthru
          _
        // Predicated region
        $region45: #{tpu_custom_call.1} parent=39 // pred_check
          %p282 = pneg %p73
        $region46: #{tpu_custom_call.1} parent=39 // pred_check_branch
          %284 = sbr.rel (%p282) target = $region48
        $region47: #{tpu_custom_call.1} parent=39 // pred_region
          %285 = dma.done [#allocation8], 73728
        $region48: #{tpu_custom_call.1} parent=39 // pred_fallthru
          _
        // Predicated region
        $region49: #{tpu_custom_call.1} parent=39 // pred_check
          %p286 = pneg %p94
        $region50: #{tpu_custom_call.1} parent=39 // pred_check_branch
          %288 = sbr.rel (%p286) target = $region52
        $region51: #{tpu_custom_call.1} parent=39 // pred_region
          %289 = dma.done [#allocation8], 512
        $region52: #{tpu_custom_call.1} parent=39 // pred_fallthru
          _
        %s290 = sand.u32 %s24, 1
        %s291 = scalar_lea.sflag [#allocation11], %s290
        %s292 = sand.u32 %s109, 1
        %s293 = smul.addr %s292, 8192
        %s294 = scalar_lea.vmem [#allocation10], %s293
        // Predicated region
        $region53: #{tpu_custom_call.1} parent=39 // pred_check
          %p295 = pneg %p122
        $region54: #{tpu_custom_call.1} parent=39 // pred_check_branch
          %297 = sbr.rel (%p295) target = $region56
        $region55: #{tpu_custom_call.1} parent=39 // pred_region
          %298 = dma.done %s291, 131072
        $region56: #{tpu_custom_call.1} parent=39 // pred_fallthru
          _
        %s299 = sand.u32 %s24, 1
        %s300 = scalar_lea.sflag [#allocation11], %s299
        %s301 = sand.u32 %s135, 1
        %s302 = smul.addr %s301, 8
        %s303 = scalar_lea.vmem [#allocation12], %s302
        // Predicated region
        $region57: #{tpu_custom_call.1} parent=39 // pred_check
          %p304 = pneg %p148
        $region58: #{tpu_custom_call.1} parent=39 // pred_check_branch
          %306 = sbr.rel (%p304) target = $region60
        $region59: #{tpu_custom_call.1} parent=39 // pred_region
          %307 = dma.done %s300, 128
        $region60: #{tpu_custom_call.1} parent=39 // pred_fallthru
          _
        %p308 = pneg %p52
        %p309 = pneg %p49
        %p310 = pneg %p73
        %p311 = pneg %p70
        %p312 = pneg %p94
        %p313 = pneg %p91
        %s314 = sand.u32 %s24, 1
        %s315 = scalar_lea.sflag [#allocation11], %s314
        %s316 = sand.u32 %s109, 1
        %s317 = smul.addr %s316, 8192
        %s318 = scalar_lea.vmem [#allocation10], %s317
        %p319 = pneg %p122
        %p320 = pneg %p119
        %s321 = sand.u32 %s24, 1
        %s322 = scalar_lea.sflag [#allocation11], %s321
        %s323 = sand.u32 %s135, 1
        %s324 = smul.addr %s323, 8
        %s325 = scalar_lea.vmem [#allocation12], %s324
        %p326 = pneg %p148
        %p327 = pneg %p145
        %p328 = pneg %p174
        %p329 = pneg %p171
        %s330 = sand.u32 %s161, 1
        %s331 = scalar_lea.sflag [#allocation6], %s330
        %s332 = sand.u32 %s161, 1
        %s333 = smul.addr %s332, 32
        %s334 = scalar_lea.vmem [#allocation13], %s333
        %s335 = smul.u32 256, %s29
        %s336 = smul.u32 8, %s28
        %s337 = smul.u32 8, %s28
        %s338 = smul.u32 8, %s28
        %p340 = scmp.eq.s32.totalorder %s29, 0
        // Predicated region
        $region61: #{tpu_custom_call.1} parent=39 // pred_check
          %p341 = pneg %p340
        $region62: #{tpu_custom_call.1} parent=39 // pred_check_branch
          %343 = sbr.rel (%p341) target = $region64
        $region63: #{tpu_custom_call.1} parent=39 // pred_region
          %v344 = vld [vmem:[#allocation4] sm:$0xff]
          %v345 = vld [vmem:[#allocation4 + $0x8] sm:$0xf]
          %v346 = vld [vmem:[#allocation7] sm:$0xff]
          %v347 = vld [vmem:[#allocation7 + $0x8] sm:$0xff]
          %v348 = vld [vmem:[#allocation7 + $0x10] sm:$0xff]
          %v349 = vld [vmem:[#allocation7 + $0x18] sm:$0xff]
          %v350 = vld [vmem:[#allocation7 + $0x20] sm:$0xff]
          %v351 = vld [vmem:[#allocation7 + $0x28] sm:$0xff]
          %v352 = vld [vmem:[#allocation7 + $0x30] sm:$0xff]
          %v353 = vld [vmem:[#allocation7 + $0x38] sm:$0xff]
          %v354 = vld [vmem:[#allocation7 + $0x40] sm:$0xff]
          %v355 = vld [vmem:[#allocation7 + $0x48] sm:$0xff]
          %v356 = vld [vmem:[#allocation7 + $0x50] sm:$0xff]
          %v357 = vld [vmem:[#allocation7 + $0x58] sm:$0xff]
          %v358 = vld [vmem:[#allocation7 + $0x60] sm:$0xff]
          %v359 = vld [vmem:[#allocation7 + $0x68] sm:$0xff]
          %v360 = vld [vmem:[#allocation7 + $0x70] sm:$0xff]
          %v361 = vld [vmem:[#allocation7 + $0x78] sm:$0xff]
          %v362 = vld [vmem:[#allocation7 + $0x80] sm:$0xff]
          %v363 = vld [vmem:[#allocation7 + $0x88] sm:$0xff]
          %v364 = vld [vmem:[#allocation7 + $0x90] sm:$0xff]
          %v365 = vld [vmem:[#allocation7 + $0x98] sm:$0xff]
          %v366 = vld [vmem:[#allocation7 + $0xa0] sm:$0xff]
          %v367 = vld [vmem:[#allocation7 + $0xa8] sm:$0xff]
          %v368 = vld [vmem:[#allocation7 + $0xb0] sm:$0xff]
          %v369 = vld [vmem:[#allocation7 + $0xb8] sm:$0xff]
          %v370 = vld [vmem:[#allocation7 + $0xc0] sm:$0xff]
          %v371 = vld [vmem:[#allocation7 + $0xc8] sm:$0xff]
          %v372 = vld [vmem:[#allocation7 + $0xd0] sm:$0xff]
          %v373 = vld [vmem:[#allocation7 + $0xd8] sm:$0xff]
          %v374 = vld [vmem:[#allocation7 + $0xe0] sm:$0xff]
          %v375 = vld [vmem:[#allocation7 + $0xe8] sm:$0xff]
          %v376 = vld [vmem:[#allocation7 + $0xf0] sm:$0xff]
          %v377 = vld [vmem:[#allocation7 + $0xf8] sm:$0xff]
          %v378 = vld [vmem:[#allocation7 + $0x100] sm:$0xff]
          %v379 = vld [vmem:[#allocation7 + $0x108] sm:$0xff]
          %v380 = vld [vmem:[#allocation7 + $0x110] sm:$0xff]
          %v381 = vld [vmem:[#allocation7 + $0x118] sm:$0xff]
          %v382 = vld [vmem:[#allocation7 + $0x120] sm:$0xff]
          %v383 = vld [vmem:[#allocation7 + $0x128] sm:$0xff]
          %v384 = vld [vmem:[#allocation7 + $0x130] sm:$0xff]
          %v385 = vld [vmem:[#allocation7 + $0x138] sm:$0xff]
          %v386 = vld [vmem:[#allocation7 + $0x140] sm:$0xff]
          %v387 = vld [vmem:[#allocation7 + $0x148] sm:$0xff]
          %v388 = vld [vmem:[#allocation7 + $0x150] sm:$0xff]
          %v389 = vld [vmem:[#allocation7 + $0x158] sm:$0xff]
          %v390 = vld [vmem:[#allocation7 + $0x160] sm:$0xff]
          %v391 = vld [vmem:[#allocation7 + $0x168] sm:$0xff]
          %v392 = vld [vmem:[#allocation7 + $0x170] sm:$0xff]
          %v393 = vld [vmem:[#allocation7 + $0x178] sm:$0xff]
          %v394 = vld [vmem:[#allocation7 + $0x180] sm:$0xff]
          %v395 = vld [vmem:[#allocation7 + $0x188] sm:$0xff]
          %v396 = vld [vmem:[#allocation7 + $0x190] sm:$0xff]
          %v397 = vld [vmem:[#allocation7 + $0x198] sm:$0xff]
          %v398 = vld [vmem:[#allocation7 + $0x1a0] sm:$0xff]
          %v399 = vld [vmem:[#allocation7 + $0x1a8] sm:$0xff]
          %v400 = vld [vmem:[#allocation7 + $0x1b0] sm:$0xff]
          %v401 = vld [vmem:[#allocation7 + $0x1b8] sm:$0xff]
          %v402 = vld [vmem:[#allocation7 + $0x1c0] sm:$0xff]
          %v403 = vld [vmem:[#allocation7 + $0x1c8] sm:$0xff]
          %v404 = vld [vmem:[#allocation7 + $0x1d0] sm:$0xff]
          %v405 = vld [vmem:[#allocation7 + $0x1d8] sm:$0xff]
          %v406 = vld [vmem:[#allocation7 + $0x1e0] sm:$0xff]
          %v407 = vld [vmem:[#allocation7 + $0x1e8] sm:$0xff]
          %v408 = vld [vmem:[#allocation7 + $0x1f0] sm:$0xff]
          %v409 = vld [vmem:[#allocation7 + $0x1f8] sm:$0xff]
          %v410 = vld [vmem:[#allocation7 + $0x200] sm:$0xff]
          %v411 = vld [vmem:[#allocation7 + $0x208] sm:$0xff]
          %v412 = vld [vmem:[#allocation7 + $0x210] sm:$0xff]
          %v413 = vld [vmem:[#allocation7 + $0x218] sm:$0xff]
          %v414 = vld [vmem:[#allocation7 + $0x220] sm:$0xff]
          %v415 = vld [vmem:[#allocation7 + $0x228] sm:$0xff]
          %v416 = vld [vmem:[#allocation7 + $0x230] sm:$0xff]
          %v417 = vld [vmem:[#allocation7 + $0x238] sm:$0xff]
          %v418 = vld [vmem:[#allocation7 + $0x240] sm:$0xff]
          %v419 = vld [vmem:[#allocation7 + $0x248] sm:$0xff]
          %v420 = vld [vmem:[#allocation7 + $0x250] sm:$0xff]
          %v421 = vld [vmem:[#allocation7 + $0x258] sm:$0xff]
          %v422 = vld [vmem:[#allocation7 + $0x260] sm:$0xff]
          %v423 = vld [vmem:[#allocation7 + $0x268] sm:$0xff]
          %v424 = vld [vmem:[#allocation7 + $0x270] sm:$0xff]
          %v425 = vld [vmem:[#allocation7 + $0x278] sm:$0xff]
          %v426 = vld [vmem:[#allocation7 + $0x280] sm:$0xff]
          %v427 = vld [vmem:[#allocation7 + $0x288] sm:$0xff]
          %v428 = vld [vmem:[#allocation7 + $0x290] sm:$0xff]
          %v429 = vld [vmem:[#allocation7 + $0x298] sm:$0xff]
          %v430 = vld [vmem:[#allocation7 + $0x2a0] sm:$0xff]
          %v431 = vld [vmem:[#allocation7 + $0x2a8] sm:$0xff]
          %v432 = vld [vmem:[#allocation7 + $0x2b0] sm:$0xff]
          %v433 = vld [vmem:[#allocation7 + $0x2b8] sm:$0xff]
          %v434 = vld [vmem:[#allocation7 + $0x2c0] sm:$0xff]
          %v435 = vld [vmem:[#allocation7 + $0x2c8] sm:$0xff]
          %v436 = vld [vmem:[#allocation7 + $0x2d0] sm:$0xff]
          %v437 = vld [vmem:[#allocation7 + $0x2d8] sm:$0xff]
          %v438 = vld [vmem:[#allocation7 + $0x2e0] sm:$0xff]
          %v439 = vld [vmem:[#allocation7 + $0x2e8] sm:$0xff]
          %v440 = vld [vmem:[#allocation7 + $0x2f0] sm:$0xff]
          %v441 = vld [vmem:[#allocation7 + $0x2f8] sm:$0xff]
          %v442 = vld [vmem:[#allocation7 + $0x300] sm:$0xff]
          %v443 = vld [vmem:[#allocation7 + $0x308] sm:$0xff]
          %v444 = vld [vmem:[#allocation7 + $0x310] sm:$0xff]
          %v445 = vld [vmem:[#allocation7 + $0x318] sm:$0xff]
          %v446 = vld [vmem:[#allocation7 + $0x320] sm:$0xff]
          %v447 = vld [vmem:[#allocation7 + $0x328] sm:$0xff]
          %v448 = vld [vmem:[#allocation7 + $0x330] sm:$0xff]
          %v449 = vld [vmem:[#allocation7 + $0x338] sm:$0xff]
          %v450 = vld [vmem:[#allocation7 + $0x340] sm:$0xff]
          %v451 = vld [vmem:[#allocation7 + $0x348] sm:$0xff]
          %v452 = vld [vmem:[#allocation7 + $0x350] sm:$0xff]
          %v453 = vld [vmem:[#allocation7 + $0x358] sm:$0xff]
          %v454 = vld [vmem:[#allocation7 + $0x360] sm:$0xff]
          %v455 = vld [vmem:[#allocation7 + $0x368] sm:$0xff]
          %v456 = vld [vmem:[#allocation7 + $0x370] sm:$0xff]
          %v457 = vld [vmem:[#allocation7 + $0x378] sm:$0xff]
          %v458 = vld [vmem:[#allocation7 + $0x380] sm:$0xff]
          %v459 = vld [vmem:[#allocation7 + $0x388] sm:$0xff]
          %v460 = vld [vmem:[#allocation7 + $0x390] sm:$0xff]
          %v461 = vld [vmem:[#allocation7 + $0x398] sm:$0xff]
          %v462 = vld [vmem:[#allocation7 + $0x3a0] sm:$0xff]
          %v463 = vld [vmem:[#allocation7 + $0x3a8] sm:$0xff]
          %v464 = vld [vmem:[#allocation7 + $0x3b0] sm:$0xff]
          %v465 = vld [vmem:[#allocation7 + $0x3b8] sm:$0xff]
          %v466 = vld [vmem:[#allocation7 + $0x3c0] sm:$0xff]
          %v467 = vld [vmem:[#allocation7 + $0x3c8] sm:$0xff]
          %v468 = vld [vmem:[#allocation7 + $0x3d0] sm:$0xff]
          %v469 = vld [vmem:[#allocation7 + $0x3d8] sm:$0xff]
          %v470 = vld [vmem:[#allocation7 + $0x3e0] sm:$0xff]
          %v471 = vld [vmem:[#allocation7 + $0x3e8] sm:$0xff]
          %v472 = vld [vmem:[#allocation7 + $0x3f0] sm:$0xff]
          %v473 = vld [vmem:[#allocation7 + $0x3f8] sm:$0xff]
          %v474 = vld [vmem:[#allocation7 + $0x400] sm:$0xff]
          %v475 = vld [vmem:[#allocation7 + $0x408] sm:$0xff]
          %v476 = vld [vmem:[#allocation7 + $0x410] sm:$0xff]
          %v477 = vld [vmem:[#allocation7 + $0x418] sm:$0xff]
          %v478 = vld [vmem:[#allocation7 + $0x420] sm:$0xff]
          %v479 = vld [vmem:[#allocation7 + $0x428] sm:$0xff]
          %v480 = vld [vmem:[#allocation7 + $0x430] sm:$0xff]
          %v481 = vld [vmem:[#allocation7 + $0x438] sm:$0xff]
          %v482 = vld [vmem:[#allocation7 + $0x440] sm:$0xff]
          %v483 = vld [vmem:[#allocation7 + $0x448] sm:$0xff]
          %v484 = vld [vmem:[#allocation7 + $0x450] sm:$0xff]
          %v485 = vld [vmem:[#allocation7 + $0x458] sm:$0xff]
          %v486 = vld [vmem:[#allocation7 + $0x460] sm:$0xff]
          %v487 = vld [vmem:[#allocation7 + $0x468] sm:$0xff]
          %v488 = vld [vmem:[#allocation7 + $0x470] sm:$0xff]
          %v489 = vld [vmem:[#allocation7 + $0x478] sm:$0xff]
          %v490 = vld [vmem:[#allocation7 + $0x480] sm:$0xff]
          %v491 = vld [vmem:[#allocation7 + $0x488] sm:$0xff]
          %v492 = vld [vmem:[#allocation7 + $0x490] sm:$0xff]
          %v493 = vld [vmem:[#allocation7 + $0x498] sm:$0xff]
          %v494 = vld [vmem:[#allocation7 + $0x4a0] sm:$0xff]
          %v495 = vld [vmem:[#allocation7 + $0x4a8] sm:$0xff]
          %v496 = vld [vmem:[#allocation7 + $0x4b0] sm:$0xff]
          %v497 = vld [vmem:[#allocation7 + $0x4b8] sm:$0xff]
          %v498 = vld [vmem:[#allocation7 + $0x4c0] sm:$0xff]
          %v499 = vld [vmem:[#allocation7 + $0x4c8] sm:$0xff]
          %v500 = vld [vmem:[#allocation7 + $0x4d0] sm:$0xff]
          %v501 = vld [vmem:[#allocation7 + $0x4d8] sm:$0xff]
          %v502 = vld [vmem:[#allocation7 + $0x4e0] sm:$0xff]
          %v503 = vld [vmem:[#allocation7 + $0x4e8] sm:$0xff]
          %v504 = vld [vmem:[#allocation7 + $0x4f0] sm:$0xff]
          %v505 = vld [vmem:[#allocation7 + $0x4f8] sm:$0xff]
          %v506 = vld [vmem:[#allocation7 + $0x500] sm:$0xff]
          %v507 = vld [vmem:[#allocation7 + $0x508] sm:$0xff]
          %v508 = vld [vmem:[#allocation7 + $0x510] sm:$0xff]
          %v509 = vld [vmem:[#allocation7 + $0x518] sm:$0xff]
          %v510 = vld [vmem:[#allocation7 + $0x520] sm:$0xff]
          %v511 = vld [vmem:[#allocation7 + $0x528] sm:$0xff]
          %v512 = vld [vmem:[#allocation7 + $0x530] sm:$0xff]
          %v513 = vld [vmem:[#allocation7 + $0x538] sm:$0xff]
          %v514 = vld [vmem:[#allocation7 + $0x540] sm:$0xff]
          %v515 = vld [vmem:[#allocation7 + $0x548] sm:$0xff]
          %v516 = vld [vmem:[#allocation7 + $0x550] sm:$0xff]
          %v517 = vld [vmem:[#allocation7 + $0x558] sm:$0xff]
          %v518 = vld [vmem:[#allocation7 + $0x560] sm:$0xff]
          %v519 = vld [vmem:[#allocation7 + $0x568] sm:$0xff]
          %v520 = vld [vmem:[#allocation7 + $0x570] sm:$0xff]
          %v521 = vld [vmem:[#allocation7 + $0x578] sm:$0xff]
          %v522 = vld [vmem:[#allocation7 + $0x580] sm:$0xff]
          %v523 = vld [vmem:[#allocation7 + $0x588] sm:$0xff]
          %v524 = vld [vmem:[#allocation7 + $0x590] sm:$0xff]
          %v525 = vld [vmem:[#allocation7 + $0x598] sm:$0xff]
          %v526 = vld [vmem:[#allocation7 + $0x5a0] sm:$0xff]
          %v527 = vld [vmem:[#allocation7 + $0x5a8] sm:$0xff]
          %v528 = vld [vmem:[#allocation7 + $0x5b0] sm:$0xff]
          %v529 = vld [vmem:[#allocation7 + $0x5b8] sm:$0xff]
          %v530 = vld [vmem:[#allocation7 + $0x5c0] sm:$0xff]
          %v531 = vld [vmem:[#allocation7 + $0x5c8] sm:$0xff]
          %v532 = vld [vmem:[#allocation7 + $0x5d0] sm:$0xff]
          %v533 = vld [vmem:[#allocation7 + $0x5d8] sm:$0xff]
          %v534 = vld [vmem:[#allocation7 + $0x5e0] sm:$0xff]
          %v535 = vld [vmem:[#allocation7 + $0x5e8] sm:$0xff]
          %v536 = vld [vmem:[#allocation7 + $0x5f0] sm:$0xff]
          %v537 = vld [vmem:[#allocation7 + $0x5f8] sm:$0xff]
          %v538 = vld [vmem:[#allocation7 + $0x600] sm:$0xff]
          %v539 = vld [vmem:[#allocation7 + $0x608] sm:$0xff]
          %v540 = vld [vmem:[#allocation7 + $0x610] sm:$0xff]
          %v541 = vld [vmem:[#allocation7 + $0x618] sm:$0xff]
          %v542 = vld [vmem:[#allocation7 + $0x620] sm:$0xff]
          %v543 = vld [vmem:[#allocation7 + $0x628] sm:$0xff]
          %v544 = vld [vmem:[#allocation7 + $0x630] sm:$0xff]
          %v545 = vld [vmem:[#allocation7 + $0x638] sm:$0xff]
          %v546 = vld [vmem:[#allocation7 + $0x640] sm:$0xff]
          %v547 = vld [vmem:[#allocation7 + $0x648] sm:$0xff]
          %v548 = vld [vmem:[#allocation7 + $0x650] sm:$0xff]
          %v549 = vld [vmem:[#allocation7 + $0x658] sm:$0xff]
          %v550 = vld [vmem:[#allocation7 + $0x660] sm:$0xff]
          %v551 = vld [vmem:[#allocation7 + $0x668] sm:$0xff]
          %v552 = vld [vmem:[#allocation7 + $0x670] sm:$0xff]
          %v553 = vld [vmem:[#allocation7 + $0x678] sm:$0xff]
          %v554 = vld [vmem:[#allocation7 + $0x680] sm:$0xff]
          %v555 = vld [vmem:[#allocation7 + $0x688] sm:$0xff]
          %v556 = vld [vmem:[#allocation7 + $0x690] sm:$0xff]
          %v557 = vld [vmem:[#allocation7 + $0x698] sm:$0xff]
          %v558 = vld [vmem:[#allocation7 + $0x6a0] sm:$0xff]
          %v559 = vld [vmem:[#allocation7 + $0x6a8] sm:$0xff]
          %v560 = vld [vmem:[#allocation7 + $0x6b0] sm:$0xff]
          %v561 = vld [vmem:[#allocation7 + $0x6b8] sm:$0xff]
          %v562 = vld [vmem:[#allocation7 + $0x6c0] sm:$0xff]
          %v563 = vld [vmem:[#allocation7 + $0x6c8] sm:$0xff]
          %v564 = vld [vmem:[#allocation7 + $0x6d0] sm:$0xff]
          %v565 = vld [vmem:[#allocation7 + $0x6d8] sm:$0xff]
          %v566 = vld [vmem:[#allocation7 + $0x6e0] sm:$0xff]
          %v567 = vld [vmem:[#allocation7 + $0x6e8] sm:$0xff]
          %v568 = vld [vmem:[#allocation7 + $0x6f0] sm:$0xff]
          %v569 = vld [vmem:[#allocation7 + $0x6f8] sm:$0xff]
          %v570 = vld [vmem:[#allocation7 + $0x700] sm:$0xff]
          %v571 = vld [vmem:[#allocation7 + $0x708] sm:$0xff]
          %v572 = vld [vmem:[#allocation7 + $0x710] sm:$0xff]
          %v573 = vld [vmem:[#allocation7 + $0x718] sm:$0xff]
          %v574 = vld [vmem:[#allocation7 + $0x720] sm:$0xff]
          %v575 = vld [vmem:[#allocation7 + $0x728] sm:$0xff]
          %v576 = vld [vmem:[#allocation7 + $0x730] sm:$0xff]
          %v577 = vld [vmem:[#allocation7 + $0x738] sm:$0xff]
          %v578 = vld [vmem:[#allocation7 + $0x740] sm:$0xff]
          %v579 = vld [vmem:[#allocation7 + $0x748] sm:$0xff]
          %v580 = vld [vmem:[#allocation7 + $0x750] sm:$0xff]
          %v581 = vld [vmem:[#allocation7 + $0x758] sm:$0xff]
          %v582 = vld [vmem:[#allocation7 + $0x760] sm:$0xff]
          %v583 = vld [vmem:[#allocation7 + $0x768] sm:$0xff]
          %v584 = vld [vmem:[#allocation7 + $0x770] sm:$0xff]
          %v585 = vld [vmem:[#allocation7 + $0x778] sm:$0xff]
          %v586 = vld [vmem:[#allocation7 + $0x780] sm:$0xff]
          %v587 = vld [vmem:[#allocation7 + $0x788] sm:$0xff]
          %v588 = vld [vmem:[#allocation7 + $0x790] sm:$0xff]
          %v589 = vld [vmem:[#allocation7 + $0x798] sm:$0xff]
          %v590 = vld [vmem:[#allocation7 + $0x7a0] sm:$0xff]
          %v591 = vld [vmem:[#allocation7 + $0x7a8] sm:$0xff]
          %v592 = vld [vmem:[#allocation7 + $0x7b0] sm:$0xff]
          %v593 = vld [vmem:[#allocation7 + $0x7b8] sm:$0xff]
          %v594 = vld [vmem:[#allocation7 + $0x7c0] sm:$0xff]
          %v595 = vld [vmem:[#allocation7 + $0x7c8] sm:$0xff]
          %v596 = vld [vmem:[#allocation7 + $0x7d0] sm:$0xff]
          %v597 = vld [vmem:[#allocation7 + $0x7d8] sm:$0xff]
          %v598 = vld [vmem:[#allocation7 + $0x7e0] sm:$0xff]
          %v599 = vld [vmem:[#allocation7 + $0x7e8] sm:$0xff]
          %v600 = vld [vmem:[#allocation7 + $0x7f0] sm:$0xff]
          %v601 = vld [vmem:[#allocation7 + $0x7f8] sm:$0xff]
          %v602 = vld [vmem:[#allocation7 + $0x800] sm:$0xff]
          %v603 = vld [vmem:[#allocation7 + $0x808] sm:$0xff]
          %v604 = vld [vmem:[#allocation7 + $0x810] sm:$0xff]
          %v605 = vld [vmem:[#allocation7 + $0x818] sm:$0xff]
          %v606 = vld [vmem:[#allocation7 + $0x820] sm:$0xff]
          %v607 = vld [vmem:[#allocation7 + $0x828] sm:$0xff]
          %v608 = vld [vmem:[#allocation7 + $0x830] sm:$0xff]
          %v609 = vld [vmem:[#allocation7 + $0x838] sm:$0xff]
          %v610 = vld [vmem:[#allocation7 + $0x840] sm:$0xff]
          %v611 = vld [vmem:[#allocation7 + $0x848] sm:$0xff]
          %v612 = vld [vmem:[#allocation7 + $0x850] sm:$0xff]
          %v613 = vld [vmem:[#allocation7 + $0x858] sm:$0xff]
          %v614 = vld [vmem:[#allocation7 + $0x860] sm:$0xff]
          %v615 = vld [vmem:[#allocation7 + $0x868] sm:$0xff]
          %v616 = vld [vmem:[#allocation7 + $0x870] sm:$0xff]
          %v617 = vld [vmem:[#allocation7 + $0x878] sm:$0xff]
          %v618 = vld [vmem:[#allocation7 + $0x880] sm:$0xff]
          %v619 = vld [vmem:[#allocation7 + $0x888] sm:$0xff]
          %v620 = vld [vmem:[#allocation7 + $0x890] sm:$0xff]
          %v621 = vld [vmem:[#allocation7 + $0x898] sm:$0xff]
          %v622 = vld [vmem:[#allocation7 + $0x8a0] sm:$0xff]
          %v623 = vld [vmem:[#allocation7 + $0x8a8] sm:$0xff]
          %v624 = vld [vmem:[#allocation7 + $0x8b0] sm:$0xff]
          %v625 = vld [vmem:[#allocation7 + $0x8b8] sm:$0xff]
          %v626 = vld [vmem:[#allocation7 + $0x8c0] sm:$0xff]
          %v627 = vld [vmem:[#allocation7 + $0x8c8] sm:$0xff]
          %v628 = vld [vmem:[#allocation7 + $0x8d0] sm:$0xff]
          %v629 = vld [vmem:[#allocation7 + $0x8d8] sm:$0xff]
          %v630 = vld [vmem:[#allocation7 + $0x8e0] sm:$0xff]
          %v631 = vld [vmem:[#allocation7 + $0x8e8] sm:$0xff]
          %v632 = vld [vmem:[#allocation7 + $0x8f0] sm:$0xff]
          %v633 = vld [vmem:[#allocation7 + $0x8f8] sm:$0xff]
          %v634 = vld [vmem:[#allocation7 + $0x900] sm:$0xff]
          %v635 = vld [vmem:[#allocation7 + $0x908] sm:$0xff]
          %v636 = vld [vmem:[#allocation7 + $0x910] sm:$0xff]
          %v637 = vld [vmem:[#allocation7 + $0x918] sm:$0xff]
          %v638 = vld [vmem:[#allocation7 + $0x920] sm:$0xff]
          %v639 = vld [vmem:[#allocation7 + $0x928] sm:$0xff]
          %v640 = vld [vmem:[#allocation7 + $0x930] sm:$0xff]
          %v641 = vld [vmem:[#allocation7 + $0x938] sm:$0xff]
          %v642 = vld [vmem:[#allocation7 + $0x940] sm:$0xff]
          %v643 = vld [vmem:[#allocation7 + $0x948] sm:$0xff]
          %v644 = vld [vmem:[#allocation7 + $0x950] sm:$0xff]
          %v645 = vld [vmem:[#allocation7 + $0x958] sm:$0xff]
          %v646 = vld [vmem:[#allocation7 + $0x960] sm:$0xff]
          %v647 = vld [vmem:[#allocation7 + $0x968] sm:$0xff]
          %v648 = vld [vmem:[#allocation7 + $0x970] sm:$0xff]
          %v649 = vld [vmem:[#allocation7 + $0x978] sm:$0xff]
          %v650 = vld [vmem:[#allocation7 + $0x980] sm:$0xff]
          %v651 = vld [vmem:[#allocation7 + $0x988] sm:$0xff]
          %v652 = vld [vmem:[#allocation7 + $0x990] sm:$0xff]
          %v653 = vld [vmem:[#allocation7 + $0x998] sm:$0xff]
          %v654 = vld [vmem:[#allocation7 + $0x9a0] sm:$0xff]
          %v655 = vld [vmem:[#allocation7 + $0x9a8] sm:$0xff]
          %v656 = vld [vmem:[#allocation7 + $0x9b0] sm:$0xff]
          %v657 = vld [vmem:[#allocation7 + $0x9b8] sm:$0xff]
          %v658 = vld [vmem:[#allocation7 + $0x9c0] sm:$0xff]
          %v659 = vld [vmem:[#allocation7 + $0x9c8] sm:$0xff]
          %v660 = vld [vmem:[#allocation7 + $0x9d0] sm:$0xff]
          %v661 = vld [vmem:[#allocation7 + $0x9d8] sm:$0xff]
          %v662 = vld [vmem:[#allocation7 + $0x9e0] sm:$0xff]
          %v663 = vld [vmem:[#allocation7 + $0x9e8] sm:$0xff]
          %v664 = vld [vmem:[#allocation7 + $0x9f0] sm:$0xff]
          %v665 = vld [vmem:[#allocation7 + $0x9f8] sm:$0xff]
          %v666 = vld [vmem:[#allocation7 + $0xa00] sm:$0xff]
          %v667 = vld [vmem:[#allocation7 + $0xa08] sm:$0xff]
          %v668 = vld [vmem:[#allocation7 + $0xa10] sm:$0xff]
          %v669 = vld [vmem:[#allocation7 + $0xa18] sm:$0xff]
          %v670 = vld [vmem:[#allocation7 + $0xa20] sm:$0xff]
          %v671 = vld [vmem:[#allocation7 + $0xa28] sm:$0xff]
          %v672 = vld [vmem:[#allocation7 + $0xa30] sm:$0xff]
          %v673 = vld [vmem:[#allocation7 + $0xa38] sm:$0xff]
          %v674 = vld [vmem:[#allocation7 + $0xa40] sm:$0xff]
          %v675 = vld [vmem:[#allocation7 + $0xa48] sm:$0xff]
          %v676 = vld [vmem:[#allocation7 + $0xa50] sm:$0xff]
          %v677 = vld [vmem:[#allocation7 + $0xa58] sm:$0xff]
          %v678 = vld [vmem:[#allocation7 + $0xa60] sm:$0xff]
          %v679 = vld [vmem:[#allocation7 + $0xa68] sm:$0xff]
          %v680 = vld [vmem:[#allocation7 + $0xa70] sm:$0xff]
          %v681 = vld [vmem:[#allocation7 + $0xa78] sm:$0xff]
          %v682 = vld [vmem:[#allocation7 + $0xa80] sm:$0xff]
          %v683 = vld [vmem:[#allocation7 + $0xa88] sm:$0xff]
          %v684 = vld [vmem:[#allocation7 + $0xa90] sm:$0xff]
          %v685 = vld [vmem:[#allocation7 + $0xa98] sm:$0xff]
          %v686 = vld [vmem:[#allocation7 + $0xaa0] sm:$0xff]
          %v687 = vld [vmem:[#allocation7 + $0xaa8] sm:$0xff]
          %v688 = vld [vmem:[#allocation7 + $0xab0] sm:$0xff]
          %v689 = vld [vmem:[#allocation7 + $0xab8] sm:$0xff]
          %v690 = vld [vmem:[#allocation7 + $0xac0] sm:$0xff]
          %v691 = vld [vmem:[#allocation7 + $0xac8] sm:$0xff]
          %v692 = vld [vmem:[#allocation7 + $0xad0] sm:$0xff]
          %v693 = vld [vmem:[#allocation7 + $0xad8] sm:$0xff]
          %v694 = vld [vmem:[#allocation7 + $0xae0] sm:$0xff]
          %v695 = vld [vmem:[#allocation7 + $0xae8] sm:$0xff]
          %v696 = vld [vmem:[#allocation7 + $0xaf0] sm:$0xff]
          %v697 = vld [vmem:[#allocation7 + $0xaf8] sm:$0xff]
          %v698 = vld [vmem:[#allocation7 + $0xb00] sm:$0xff]
          %v699 = vld [vmem:[#allocation7 + $0xb08] sm:$0xff]
          %v700 = vld [vmem:[#allocation7 + $0xb10] sm:$0xff]
          %v701 = vld [vmem:[#allocation7 + $0xb18] sm:$0xff]
          %v702 = vld [vmem:[#allocation7 + $0xb20] sm:$0xff]
          %v703 = vld [vmem:[#allocation7 + $0xb28] sm:$0xff]
          %v704 = vld [vmem:[#allocation7 + $0xb30] sm:$0xff]
          %v705 = vld [vmem:[#allocation7 + $0xb38] sm:$0xff]
          %v706 = vld [vmem:[#allocation7 + $0xb40] sm:$0xff]
          %v707 = vld [vmem:[#allocation7 + $0xb48] sm:$0xff]
          %v708 = vld [vmem:[#allocation7 + $0xb50] sm:$0xff]
          %v709 = vld [vmem:[#allocation7 + $0xb58] sm:$0xff]
          %v710 = vld [vmem:[#allocation7 + $0xb60] sm:$0xff]
          %v711 = vld [vmem:[#allocation7 + $0xb68] sm:$0xff]
          %v712 = vld [vmem:[#allocation7 + $0xb70] sm:$0xff]
          %v713 = vld [vmem:[#allocation7 + $0xb78] sm:$0xff]
          %v714 = vld [vmem:[#allocation7 + $0xb80] sm:$0xff]
          %v715 = vld [vmem:[#allocation7 + $0xb88] sm:$0xff]
          %v716 = vld [vmem:[#allocation7 + $0xb90] sm:$0xff]
          %v717 = vld [vmem:[#allocation7 + $0xb98] sm:$0xff]
          %v718 = vld [vmem:[#allocation7 + $0xba0] sm:$0xff]
          %v719 = vld [vmem:[#allocation7 + $0xba8] sm:$0xff]
          %v720 = vld [vmem:[#allocation7 + $0xbb0] sm:$0xff]
          %v721 = vld [vmem:[#allocation7 + $0xbb8] sm:$0xff]
          %v722 = vld [vmem:[#allocation7 + $0xbc0] sm:$0xff]
          %v723 = vld [vmem:[#allocation7 + $0xbc8] sm:$0xff]
          %v724 = vld [vmem:[#allocation7 + $0xbd0] sm:$0xff]
          %v725 = vld [vmem:[#allocation7 + $0xbd8] sm:$0xff]
          %v726 = vld [vmem:[#allocation7 + $0xbe0] sm:$0xff]
          %v727 = vld [vmem:[#allocation7 + $0xbe8] sm:$0xff]
          %v728 = vld [vmem:[#allocation7 + $0xbf0] sm:$0xff]
          %v729 = vld [vmem:[#allocation7 + $0xbf8] sm:$0xff]
          %v730 = vld [vmem:[#allocation7 + $0xc00] sm:$0xff]
          %v731 = vld [vmem:[#allocation7 + $0xc08] sm:$0xff]
          %v732 = vld [vmem:[#allocation7 + $0xc10] sm:$0xff]
          %v733 = vld [vmem:[#allocation7 + $0xc18] sm:$0xff]
          %v734 = vld [vmem:[#allocation7 + $0xc20] sm:$0xff]
          %v735 = vld [vmem:[#allocation7 + $0xc28] sm:$0xff]
          %v736 = vld [vmem:[#allocation7 + $0xc30] sm:$0xff]
          %v737 = vld [vmem:[#allocation7 + $0xc38] sm:$0xff]
          %v738 = vld [vmem:[#allocation7 + $0xc40] sm:$0xff]
          %v739 = vld [vmem:[#allocation7 + $0xc48] sm:$0xff]
          %v740 = vld [vmem:[#allocation7 + $0xc50] sm:$0xff]
          %v741 = vld [vmem:[#allocation7 + $0xc58] sm:$0xff]
          %v742 = vld [vmem:[#allocation7 + $0xc60] sm:$0xff]
          %v743 = vld [vmem:[#allocation7 + $0xc68] sm:$0xff]
          %v744 = vld [vmem:[#allocation7 + $0xc70] sm:$0xff]
          %v745 = vld [vmem:[#allocation7 + $0xc78] sm:$0xff]
          %v746 = vld [vmem:[#allocation7 + $0xc80] sm:$0xff]
          %v747 = vld [vmem:[#allocation7 + $0xc88] sm:$0xff]
          %v748 = vld [vmem:[#allocation7 + $0xc90] sm:$0xff]
          %v749 = vld [vmem:[#allocation7 + $0xc98] sm:$0xff]
          %v750 = vld [vmem:[#allocation7 + $0xca0] sm:$0xff]
          %v751 = vld [vmem:[#allocation7 + $0xca8] sm:$0xff]
          %v752 = vld [vmem:[#allocation7 + $0xcb0] sm:$0xff]
          %v753 = vld [vmem:[#allocation7 + $0xcb8] sm:$0xff]
          %v754 = vld [vmem:[#allocation7 + $0xcc0] sm:$0xff]
          %v755 = vld [vmem:[#allocation7 + $0xcc8] sm:$0xff]
          %v756 = vld [vmem:[#allocation7 + $0xcd0] sm:$0xff]
          %v757 = vld [vmem:[#allocation7 + $0xcd8] sm:$0xff]
          %v758 = vld [vmem:[#allocation7 + $0xce0] sm:$0xff]
          %v759 = vld [vmem:[#allocation7 + $0xce8] sm:$0xff]
          %v760 = vld [vmem:[#allocation7 + $0xcf0] sm:$0xff]
          %v761 = vld [vmem:[#allocation7 + $0xcf8] sm:$0xff]
          %v762 = vld [vmem:[#allocation7 + $0xd00] sm:$0xff]
          %v763 = vld [vmem:[#allocation7 + $0xd08] sm:$0xff]
          %v764 = vld [vmem:[#allocation7 + $0xd10] sm:$0xff]
          %v765 = vld [vmem:[#allocation7 + $0xd18] sm:$0xff]
          %v766 = vld [vmem:[#allocation7 + $0xd20] sm:$0xff]
          %v767 = vld [vmem:[#allocation7 + $0xd28] sm:$0xff]
          %v768 = vld [vmem:[#allocation7 + $0xd30] sm:$0xff]
          %v769 = vld [vmem:[#allocation7 + $0xd38] sm:$0xff]
          %v770 = vld [vmem:[#allocation7 + $0xd40] sm:$0xff]
          %v771 = vld [vmem:[#allocation7 + $0xd48] sm:$0xff]
          %v772 = vld [vmem:[#allocation7 + $0xd50] sm:$0xff]
          %v773 = vld [vmem:[#allocation7 + $0xd58] sm:$0xff]
          %v774 = vld [vmem:[#allocation7 + $0xd60] sm:$0xff]
          %v775 = vld [vmem:[#allocation7 + $0xd68] sm:$0xff]
          %v776 = vld [vmem:[#allocation7 + $0xd70] sm:$0xff]
          %v777 = vld [vmem:[#allocation7 + $0xd78] sm:$0xff]
          %v778 = vld [vmem:[#allocation7 + $0xd80] sm:$0xff]
          %v779 = vld [vmem:[#allocation7 + $0xd88] sm:$0xff]
          %v780 = vld [vmem:[#allocation7 + $0xd90] sm:$0xff]
          %v781 = vld [vmem:[#allocation7 + $0xd98] sm:$0xff]
          %v782 = vld [vmem:[#allocation7 + $0xda0] sm:$0xff]
          %v783 = vld [vmem:[#allocation7 + $0xda8] sm:$0xff]
          %v784 = vld [vmem:[#allocation7 + $0xdb0] sm:$0xff]
          %v785 = vld [vmem:[#allocation7 + $0xdb8] sm:$0xff]
          %v786 = vld [vmem:[#allocation7 + $0xdc0] sm:$0xff]
          %v787 = vld [vmem:[#allocation7 + $0xdc8] sm:$0xff]
          %v788 = vld [vmem:[#allocation7 + $0xdd0] sm:$0xff]
          %v789 = vld [vmem:[#allocation7 + $0xdd8] sm:$0xff]
          %v790 = vld [vmem:[#allocation7 + $0xde0] sm:$0xff]
          %v791 = vld [vmem:[#allocation7 + $0xde8] sm:$0xff]
          %v792 = vld [vmem:[#allocation7 + $0xdf0] sm:$0xff]
          %v793 = vld [vmem:[#allocation7 + $0xdf8] sm:$0xff]
          %v794 = vld [vmem:[#allocation7 + $0xe00] sm:$0xff]
          %v795 = vld [vmem:[#allocation7 + $0xe08] sm:$0xff]
          %v796 = vld [vmem:[#allocation7 + $0xe10] sm:$0xff]
          %v797 = vld [vmem:[#allocation7 + $0xe18] sm:$0xff]
          %v798 = vld [vmem:[#allocation7 + $0xe20] sm:$0xff]
          %v799 = vld [vmem:[#allocation7 + $0xe28] sm:$0xff]
          %v800 = vld [vmem:[#allocation7 + $0xe30] sm:$0xff]
          %v801 = vld [vmem:[#allocation7 + $0xe38] sm:$0xff]
          %v802 = vld [vmem:[#allocation7 + $0xe40] sm:$0xff]
          %v803 = vld [vmem:[#allocation7 + $0xe48] sm:$0xff]
          %v804 = vld [vmem:[#allocation7 + $0xe50] sm:$0xff]
          %v805 = vld [vmem:[#allocation7 + $0xe58] sm:$0xff]
          %v806 = vld [vmem:[#allocation7 + $0xe60] sm:$0xff]
          %v807 = vld [vmem:[#allocation7 + $0xe68] sm:$0xff]
          %v808 = vld [vmem:[#allocation7 + $0xe70] sm:$0xff]
          %v809 = vld [vmem:[#allocation7 + $0xe78] sm:$0xff]
          %v810 = vld [vmem:[#allocation7 + $0xe80] sm:$0xff]
          %v811 = vld [vmem:[#allocation7 + $0xe88] sm:$0xff]
          %v812 = vld [vmem:[#allocation7 + $0xe90] sm:$0xff]
          %v813 = vld [vmem:[#allocation7 + $0xe98] sm:$0xff]
          %v814 = vld [vmem:[#allocation7 + $0xea0] sm:$0xff]
          %v815 = vld [vmem:[#allocation7 + $0xea8] sm:$0xff]
          %v816 = vld [vmem:[#allocation7 + $0xeb0] sm:$0xff]
          %v817 = vld [vmem:[#allocation7 + $0xeb8] sm:$0xff]
          %v818 = vld [vmem:[#allocation7 + $0xec0] sm:$0xff]
          %v819 = vld [vmem:[#allocation7 + $0xec8] sm:$0xff]
          %v820 = vld [vmem:[#allocation7 + $0xed0] sm:$0xff]
          %v821 = vld [vmem:[#allocation7 + $0xed8] sm:$0xff]
          %v822 = vld [vmem:[#allocation7 + $0xee0] sm:$0xff]
          %v823 = vld [vmem:[#allocation7 + $0xee8] sm:$0xff]
          %v824 = vld [vmem:[#allocation7 + $0xef0] sm:$0xff]
          %v825 = vld [vmem:[#allocation7 + $0xef8] sm:$0xff]
          %v826 = vld [vmem:[#allocation7 + $0xf00] sm:$0xff]
          %v827 = vld [vmem:[#allocation7 + $0xf08] sm:$0xff]
          %v828 = vld [vmem:[#allocation7 + $0xf10] sm:$0xff]
          %v829 = vld [vmem:[#allocation7 + $0xf18] sm:$0xff]
          %v830 = vld [vmem:[#allocation7 + $0xf20] sm:$0xff]
          %v831 = vld [vmem:[#allocation7 + $0xf28] sm:$0xff]
          %v832 = vld [vmem:[#allocation7 + $0xf30] sm:$0xff]
          %v833 = vld [vmem:[#allocation7 + $0xf38] sm:$0xff]
          %v834 = vld [vmem:[#allocation7 + $0xf40] sm:$0xff]
          %v835 = vld [vmem:[#allocation7 + $0xf48] sm:$0xff]
          %v836 = vld [vmem:[#allocation7 + $0xf50] sm:$0xff]
          %v837 = vld [vmem:[#allocation7 + $0xf58] sm:$0xff]
          %v838 = vld [vmem:[#allocation7 + $0xf60] sm:$0xff]
          %v839 = vld [vmem:[#allocation7 + $0xf68] sm:$0xff]
          %v840 = vld [vmem:[#allocation7 + $0xf70] sm:$0xff]
          %v841 = vld [vmem:[#allocation7 + $0xf78] sm:$0xff]
          %v842 = vld [vmem:[#allocation7 + $0xf80] sm:$0xff]
          %v843 = vld [vmem:[#allocation7 + $0xf88] sm:$0xff]
          %v844 = vld [vmem:[#allocation7 + $0xf90] sm:$0xff]
          %v845 = vld [vmem:[#allocation7 + $0xf98] sm:$0xff]
          %v846 = vld [vmem:[#allocation7 + $0xfa0] sm:$0xff]
          %v847 = vld [vmem:[#allocation7 + $0xfa8] sm:$0xff]
          %v848 = vld [vmem:[#allocation7 + $0xfb0] sm:$0xff]
          %v849 = vld [vmem:[#allocation7 + $0xfb8] sm:$0xff]
          %v850 = vld [vmem:[#allocation7 + $0xfc0] sm:$0xff]
          %v851 = vld [vmem:[#allocation7 + $0xfc8] sm:$0xff]
          %v852 = vld [vmem:[#allocation7 + $0xfd0] sm:$0xff]
          %v853 = vld [vmem:[#allocation7 + $0xfd8] sm:$0xff]
          %v854 = vld [vmem:[#allocation7 + $0xfe0] sm:$0xff]
          %v855 = vld [vmem:[#allocation7 + $0xfe8] sm:$0xff]
          %v856 = vld [vmem:[#allocation7 + $0xff0] sm:$0xff]
          %v857 = vld [vmem:[#allocation7 + $0xff8] sm:$0xff]
          %v858 = vld [vmem:[#allocation7 + $0x1000] sm:$0xff]
          %v859 = vld [vmem:[#allocation7 + $0x1008] sm:$0xff]
          %v860 = vld [vmem:[#allocation7 + $0x1010] sm:$0xff]
          %v861 = vld [vmem:[#allocation7 + $0x1018] sm:$0xff]
          %v862 = vld [vmem:[#allocation7 + $0x1020] sm:$0xff]
          %v863 = vld [vmem:[#allocation7 + $0x1028] sm:$0xff]
          %v864 = vld [vmem:[#allocation7 + $0x1030] sm:$0xff]
          %v865 = vld [vmem:[#allocation7 + $0x1038] sm:$0xff]
          %v866 = vld [vmem:[#allocation7 + $0x1040] sm:$0xff]
          %v867 = vld [vmem:[#allocation7 + $0x1048] sm:$0xff]
          %v868 = vld [vmem:[#allocation7 + $0x1050] sm:$0xff]
          %v869 = vld [vmem:[#allocation7 + $0x1058] sm:$0xff]
          %v870 = vld [vmem:[#allocation7 + $0x1060] sm:$0xff]
          %v871 = vld [vmem:[#allocation7 + $0x1068] sm:$0xff]
          %v872 = vld [vmem:[#allocation7 + $0x1070] sm:$0xff]
          %v873 = vld [vmem:[#allocation7 + $0x1078] sm:$0xff]
          %v874 = vld [vmem:[#allocation7 + $0x1080] sm:$0xff]
          %v875 = vld [vmem:[#allocation7 + $0x1088] sm:$0xff]
          %v876 = vld [vmem:[#allocation7 + $0x1090] sm:$0xff]
          %v877 = vld [vmem:[#allocation7 + $0x1098] sm:$0xff]
          %v878 = vld [vmem:[#allocation7 + $0x10a0] sm:$0xff]
          %v879 = vld [vmem:[#allocation7 + $0x10a8] sm:$0xff]
          %v880 = vld [vmem:[#allocation7 + $0x10b0] sm:$0xff]
          %v881 = vld [vmem:[#allocation7 + $0x10b8] sm:$0xff]
          %v882 = vld [vmem:[#allocation7 + $0x10c0] sm:$0xff]
          %v883 = vld [vmem:[#allocation7 + $0x10c8] sm:$0xff]
          %v884 = vld [vmem:[#allocation7 + $0x10d0] sm:$0xff]
          %v885 = vld [vmem:[#allocation7 + $0x10d8] sm:$0xff]
          %v886 = vld [vmem:[#allocation7 + $0x10e0] sm:$0xff]
          %v887 = vld [vmem:[#allocation7 + $0x10e8] sm:$0xff]
          %v888 = vld [vmem:[#allocation7 + $0x10f0] sm:$0xff]
          %v889 = vld [vmem:[#allocation7 + $0x10f8] sm:$0xff]
          %v890 = vld [vmem:[#allocation7 + $0x1100] sm:$0xff]
          %v891 = vld [vmem:[#allocation7 + $0x1108] sm:$0xff]
          %v892 = vld [vmem:[#allocation7 + $0x1110] sm:$0xff]
          %v893 = vld [vmem:[#allocation7 + $0x1118] sm:$0xff]
          %v894 = vld [vmem:[#allocation7 + $0x1120] sm:$0xff]
          %v895 = vld [vmem:[#allocation7 + $0x1128] sm:$0xff]
          %v896 = vld [vmem:[#allocation7 + $0x1130] sm:$0xff]
          %v897 = vld [vmem:[#allocation7 + $0x1138] sm:$0xff]
          %v898 = vld [vmem:[#allocation7 + $0x1140] sm:$0xff]
          %v899 = vld [vmem:[#allocation7 + $0x1148] sm:$0xff]
          %v900 = vld [vmem:[#allocation7 + $0x1150] sm:$0xff]
          %v901 = vld [vmem:[#allocation7 + $0x1158] sm:$0xff]
          %v902 = vld [vmem:[#allocation7 + $0x1160] sm:$0xff]
          %v903 = vld [vmem:[#allocation7 + $0x1168] sm:$0xff]
          %v904 = vld [vmem:[#allocation7 + $0x1170] sm:$0xff]
          %v905 = vld [vmem:[#allocation7 + $0x1178] sm:$0xff]
          %v906 = vld [vmem:[#allocation7 + $0x1180] sm:$0xff]
          %v907 = vld [vmem:[#allocation7 + $0x1188] sm:$0xff]
          %v908 = vld [vmem:[#allocation7 + $0x1190] sm:$0xff]
          %v909 = vld [vmem:[#allocation7 + $0x1198] sm:$0xff]
          %v910 = vld [vmem:[#allocation7 + $0x11a0] sm:$0xff]
          %v911 = vld [vmem:[#allocation7 + $0x11a8] sm:$0xff]
          %v912 = vld [vmem:[#allocation7 + $0x11b0] sm:$0xff]
          %v913 = vld [vmem:[#allocation7 + $0x11b8] sm:$0xff]
          %v914 = vld [vmem:[#allocation7 + $0x11c0] sm:$0xff]
          %v915 = vld [vmem:[#allocation7 + $0x11c8] sm:$0xff]
          %v916 = vld [vmem:[#allocation7 + $0x11d0] sm:$0xff]
          %v917 = vld [vmem:[#allocation7 + $0x11d8] sm:$0xff]
          %v918 = vld [vmem:[#allocation7 + $0x11e0] sm:$0xff]
          %v919 = vld [vmem:[#allocation7 + $0x11e8] sm:$0xff]
          %v920 = vld [vmem:[#allocation7 + $0x11f0] sm:$0xff]
          %v921 = vld [vmem:[#allocation7 + $0x11f8] sm:$0xff]
          %v922 = vld [vmem:[#allocation9] sm:$0xff]
          %v923 = vld [vmem:[#allocation9 + $0x8] sm:$0xff]
          %v924 = vld [vmem:[#allocation9 + $0x10] sm:$0xff]
          %v925 = vld [vmem:[#allocation9 + $0x18] sm:$0xff]
          %v930 = vlaneseq
          %v931 = vshrl.u32 %v930, 7
          %v932 = vsub.s32 0, %v931
          %v933 = vrot.slane %v922, %v932
          %v934 = vlaneseq
          %v935 = vshrl.u32 %v934, 7
          %v936 = vsub.s32 1, %v935
          %v937 = vrot.slane %v922, %v936
          %v938 = vlaneseq
          %v939 = vshrl.u32 %v938, 7
          %v940 = vsub.s32 2, %v939
          %v941 = vrot.slane %v922, %v940
          %v942 = vlaneseq
          %v943 = vshrl.u32 %v942, 7
          %v944 = vsub.s32 3, %v943
          %v945 = vrot.slane %v922, %v944
          %v946 = vlaneseq
          %v947 = vshrl.u32 %v946, 7
          %v948 = vsub.s32 4, %v947
          %v949 = vrot.slane %v922, %v948
          %v950 = vlaneseq
          %v951 = vshrl.u32 %v950, 7
          %v952 = vsub.s32 5, %v951
          %v953 = vrot.slane %v922, %v952
          %v954 = vlaneseq
          %v955 = vshrl.u32 %v954, 7
          %v956 = vsub.s32 6, %v955
          %v957 = vrot.slane %v922, %v956
          %v958 = vlaneseq
          %v959 = vshrl.u32 %v958, 7
          %v960 = vsub.s32 7, %v959
          %v961 = vrot.slane %v922, %v960
          %v962 = vlaneseq
          %v963 = vshrl.u32 %v962, 7
          %v964 = vsub.s32 0, %v963
          %v965 = vrot.slane %v923, %v964
          %v966 = vlaneseq
          %v967 = vshrl.u32 %v966, 7
          %v968 = vsub.s32 1, %v967
          %v969 = vrot.slane %v923, %v968
          %v970 = vlaneseq
          %v971 = vshrl.u32 %v970, 7
          %v972 = vsub.s32 2, %v971
          %v973 = vrot.slane %v923, %v972
          %v974 = vlaneseq
          %v975 = vshrl.u32 %v974, 7
          %v976 = vsub.s32 3, %v975
          %v977 = vrot.slane %v923, %v976
          %v978 = vlaneseq
          %v979 = vshrl.u32 %v978, 7
          %v980 = vsub.s32 4, %v979
          %v981 = vrot.slane %v923, %v980
          %v982 = vlaneseq
          %v983 = vshrl.u32 %v982, 7
          %v984 = vsub.s32 5, %v983
          %v985 = vrot.slane %v923, %v984
          %v986 = vlaneseq
          %v987 = vshrl.u32 %v986, 7
          %v988 = vsub.s32 6, %v987
          %v989 = vrot.slane %v923, %v988
          %v990 = vlaneseq
          %v991 = vshrl.u32 %v990, 7
          %v992 = vsub.s32 7, %v991
          %v993 = vrot.slane %v923, %v992
          %v994 = vlaneseq
          %v995 = vshrl.u32 %v994, 7
          %v996 = vsub.s32 0, %v995
          %v997 = vrot.slane %v924, %v996
          %v998 = vlaneseq
          %v999 = vshrl.u32 %v998, 7
          %v1000 = vsub.s32 1, %v999
          %v1001 = vrot.slane %v924, %v1000
          %v1002 = vlaneseq
          %v1003 = vshrl.u32 %v1002, 7
          %v1004 = vsub.s32 2, %v1003
          %v1005 = vrot.slane %v924, %v1004
          %v1006 = vlaneseq
          %v1007 = vshrl.u32 %v1006, 7
          %v1008 = vsub.s32 3, %v1007
          %v1009 = vrot.slane %v924, %v1008
          %v1010 = vlaneseq
          %v1011 = vshrl.u32 %v1010, 7
          %v1012 = vsub.s32 4, %v1011
          %v1013 = vrot.slane %v924, %v1012
          %v1014 = vlaneseq
          %v1015 = vshrl.u32 %v1014, 7
          %v1016 = vsub.s32 5, %v1015
          %v1017 = vrot.slane %v924, %v1016
          %v1018 = vlaneseq
          %v1019 = vshrl.u32 %v1018, 7
          %v1020 = vsub.s32 6, %v1019
          %v1021 = vrot.slane %v924, %v1020
          %v1022 = vlaneseq
          %v1023 = vshrl.u32 %v1022, 7
          %v1024 = vsub.s32 7, %v1023
          %v1025 = vrot.slane %v924, %v1024
          %v1026 = vlaneseq
          %v1027 = vshrl.u32 %v1026, 7
          %v1028 = vsub.s32 0, %v1027
          %v1029 = vrot.slane %v925, %v1028
          %v1030 = vlaneseq
          %v1031 = vshrl.u32 %v1030, 7
          %v1032 = vsub.s32 1, %v1031
          %v1033 = vrot.slane %v925, %v1032
          %v1034 = vlaneseq
          %v1035 = vshrl.u32 %v1034, 7
          %v1036 = vsub.s32 2, %v1035
          %v1037 = vrot.slane %v925, %v1036
          %v1038 = vlaneseq
          %v1039 = vshrl.u32 %v1038, 7
          %v1040 = vsub.s32 3, %v1039
          %v1041 = vrot.slane %v925, %v1040
          %v1042 = vlaneseq
          %v1043 = vshrl.u32 %v1042, 7
          %v1044 = vsub.s32 4, %v1043
          %v1045 = vrot.slane %v925, %v1044
          %v1046 = vlaneseq
          %v1047 = vshrl.u32 %v1046, 7
          %v1048 = vsub.s32 5, %v1047
          %v1049 = vrot.slane %v925, %v1048
          %v1050 = vlaneseq
          %v1051 = vshrl.u32 %v1050, 7
          %v1052 = vsub.s32 6, %v1051
          %v1053 = vrot.slane %v925, %v1052
          %v1054 = vlaneseq
          %v1055 = vshrl.u32 %v1054, 7
          %v1056 = vsub.s32 7, %v1055
          %v1057 = vrot.slane %v925, %v1056
          %v1092 = vunpack.c.l.b16 %v344
          %v1093 = vunpack.c.h.b16 %v344
          %v1094 = vunpack.c.l.b16 %v345
          %v1095 = vpack.c.b16 %v1092, %v1092
          %v1096 = vpack.c.b16 %v1093, %v1093
          %v1097 = vpack.c.b16 %v1094, %v1094
          %v1676 = vunpack.c.l.b16 %v346
          %v1677 = vunpack.c.h.b16 %v346
          %v1678 = vunpack.c.l.b16 %v347
          %v1679 = vunpack.c.h.b16 %v347
          %v1680 = vunpack.c.l.b16 %v348
          %v1681 = vunpack.c.h.b16 %v348
          %v1682 = vunpack.c.l.b16 %v349
          %v1683 = vunpack.c.h.b16 %v349
          %v1684 = vunpack.c.l.b16 %v350
          %v1685 = vunpack.c.h.b16 %v350
          %v1686 = vunpack.c.l.b16 %v351
          %v1687 = vunpack.c.h.b16 %v351
          %v1688 = vunpack.c.l.b16 %v352
          %v1689 = vunpack.c.h.b16 %v352
          %v1690 = vunpack.c.l.b16 %v353
          %v1691 = vunpack.c.h.b16 %v353
          %v1692 = vunpack.c.l.b16 %v354
          %v1693 = vunpack.c.h.b16 %v354
          %v1694 = vunpack.c.l.b16 %v355
          %v1695 = vunpack.c.h.b16 %v355
          %v1696 = vunpack.c.l.b16 %v356
          %v1697 = vunpack.c.h.b16 %v356
          %v1698 = vunpack.c.l.b16 %v357
          %v1699 = vunpack.c.h.b16 %v357
          %v1700 = vunpack.c.l.b16 %v358
          %v1701 = vunpack.c.h.b16 %v358
          %v1702 = vunpack.c.l.b16 %v359
          %v1703 = vunpack.c.h.b16 %v359
          %v1704 = vunpack.c.l.b16 %v360
          %v1705 = vunpack.c.h.b16 %v360
          %v1706 = vunpack.c.l.b16 %v361
          %v1707 = vunpack.c.h.b16 %v361
          %v1708 = vunpack.c.l.b16 %v362
          %v1709 = vunpack.c.h.b16 %v362
          %v1710 = vunpack.c.l.b16 %v363
          %v1711 = vunpack.c.h.b16 %v363
          %v1712 = vunpack.c.l.b16 %v364
          %v1713 = vunpack.c.h.b16 %v364
          %v1714 = vunpack.c.l.b16 %v365
          %v1715 = vunpack.c.h.b16 %v365
          %v1716 = vunpack.c.l.b16 %v366
          %v1717 = vunpack.c.h.b16 %v366
          %v1718 = vunpack.c.l.b16 %v367
          %v1719 = vunpack.c.h.b16 %v367
          %v1720 = vunpack.c.l.b16 %v368
          %v1721 = vunpack.c.h.b16 %v368
          %v1722 = vunpack.c.l.b16 %v369
          %v1723 = vunpack.c.h.b16 %v369
          %v1724 = vunpack.c.l.b16 %v370
          %v1725 = vunpack.c.h.b16 %v370
          %v1726 = vunpack.c.l.b16 %v371
          %v1727 = vunpack.c.h.b16 %v371
          %v1728 = vunpack.c.l.b16 %v372
          %v1729 = vunpack.c.h.b16 %v372
          %v1730 = vunpack.c.l.b16 %v373
          %v1731 = vunpack.c.h.b16 %v373
          %v1732 = vunpack.c.l.b16 %v374
          %v1733 = vunpack.c.h.b16 %v374
          %v1734 = vunpack.c.l.b16 %v375
          %v1735 = vunpack.c.h.b16 %v375
          %v1736 = vunpack.c.l.b16 %v376
          %v1737 = vunpack.c.h.b16 %v376
          %v1738 = vunpack.c.l.b16 %v377
          %v1739 = vunpack.c.h.b16 %v377
          %v1740 = vunpack.c.l.b16 %v378
          %v1741 = vunpack.c.h.b16 %v378
          %v1742 = vunpack.c.l.b16 %v379
          %v1743 = vunpack.c.h.b16 %v379
          %v1744 = vunpack.c.l.b16 %v380
          %v1745 = vunpack.c.h.b16 %v380
          %v1746 = vunpack.c.l.b16 %v381
          %v1747 = vunpack.c.h.b16 %v381
          %v1748 = vunpack.c.l.b16 %v382
          %v1749 = vunpack.c.h.b16 %v382
          %v1750 = vunpack.c.l.b16 %v383
          %v1751 = vunpack.c.h.b16 %v383
          %v1752 = vunpack.c.l.b16 %v384
          %v1753 = vunpack.c.h.b16 %v384
          %v1754 = vunpack.c.l.b16 %v385
          %v1755 = vunpack.c.h.b16 %v385
          %v1756 = vunpack.c.l.b16 %v386
          %v1757 = vunpack.c.h.b16 %v386
          %v1758 = vunpack.c.l.b16 %v387
          %v1759 = vunpack.c.h.b16 %v387
          %v1760 = vunpack.c.l.b16 %v388
          %v1761 = vunpack.c.h.b16 %v388
          %v1762 = vunpack.c.l.b16 %v389
          %v1763 = vunpack.c.h.b16 %v389
          %v1764 = vunpack.c.l.b16 %v390
          %v1765 = vunpack.c.h.b16 %v390
          %v1766 = vunpack.c.l.b16 %v391
          %v1767 = vunpack.c.h.b16 %v391
          %v1768 = vunpack.c.l.b16 %v392
          %v1769 = vunpack.c.h.b16 %v392
          %v1770 = vunpack.c.l.b16 %v393
          %v1771 = vunpack.c.h.b16 %v393
          %v1772 = vunpack.c.l.b16 %v394
          %v1773 = vunpack.c.h.b16 %v394
          %v1774 = vunpack.c.l.b16 %v395
          %v1775 = vunpack.c.h.b16 %v395
          %v1776 = vunpack.c.l.b16 %v396
          %v1777 = vunpack.c.h.b16 %v396
          %v1778 = vunpack.c.l.b16 %v397
          %v1779 = vunpack.c.h.b16 %v397
          %v1780 = vunpack.c.l.b16 %v398
          %v1781 = vunpack.c.h.b16 %v398
          %v1782 = vunpack.c.l.b16 %v399
          %v1783 = vunpack.c.h.b16 %v399
          %v1784 = vunpack.c.l.b16 %v400
          %v1785 = vunpack.c.h.b16 %v400
          %v1786 = vunpack.c.l.b16 %v401
          %v1787 = vunpack.c.h.b16 %v401
          %v1788 = vunpack.c.l.b16 %v402
          %v1789 = vunpack.c.h.b16 %v402
          %v1790 = vunpack.c.l.b16 %v403
          %v1791 = vunpack.c.h.b16 %v403
          %v1792 = vunpack.c.l.b16 %v404
          %v1793 = vunpack.c.h.b16 %v404
          %v1794 = vunpack.c.l.b16 %v405
          %v1795 = vunpack.c.h.b16 %v405
          %v1796 = vunpack.c.l.b16 %v406
          %v1797 = vunpack.c.h.b16 %v406
          %v1798 = vunpack.c.l.b16 %v407
          %v1799 = vunpack.c.h.b16 %v407
          %v1800 = vunpack.c.l.b16 %v408
          %v1801 = vunpack.c.h.b16 %v408
          %v1802 = vunpack.c.l.b16 %v409
          %v1803 = vunpack.c.h.b16 %v409
          %v1804 = vunpack.c.l.b16 %v410
          %v1805 = vunpack.c.h.b16 %v410
          %v1806 = vunpack.c.l.b16 %v411
          %v1807 = vunpack.c.h.b16 %v411
          %v1808 = vunpack.c.l.b16 %v412
          %v1809 = vunpack.c.h.b16 %v412
          %v1810 = vunpack.c.l.b16 %v413
          %v1811 = vunpack.c.h.b16 %v413
          %v1812 = vunpack.c.l.b16 %v414
          %v1813 = vunpack.c.h.b16 %v414
          %v1814 = vunpack.c.l.b16 %v415
          %v1815 = vunpack.c.h.b16 %v415
          %v1816 = vunpack.c.l.b16 %v416
          %v1817 = vunpack.c.h.b16 %v416
          %v1818 = vunpack.c.l.b16 %v417
          %v1819 = vunpack.c.h.b16 %v417
          %v1820 = vunpack.c.l.b16 %v418
          %v1821 = vunpack.c.h.b16 %v418
          %v1822 = vunpack.c.l.b16 %v419
          %v1823 = vunpack.c.h.b16 %v419
          %v1824 = vunpack.c.l.b16 %v420
          %v1825 = vunpack.c.h.b16 %v420
          %v1826 = vunpack.c.l.b16 %v421
          %v1827 = vunpack.c.h.b16 %v421
          %v1828 = vunpack.c.l.b16 %v422
          %v1829 = vunpack.c.h.b16 %v422
          %v1830 = vunpack.c.l.b16 %v423
          %v1831 = vunpack.c.h.b16 %v423
          %v1832 = vunpack.c.l.b16 %v424
          %v1833 = vunpack.c.h.b16 %v424
          %v1834 = vunpack.c.l.b16 %v425
          %v1835 = vunpack.c.h.b16 %v425
          %v1836 = vunpack.c.l.b16 %v426
          %v1837 = vunpack.c.h.b16 %v426
          %v1838 = vunpack.c.l.b16 %v427
          %v1839 = vunpack.c.h.b16 %v427
          %v1840 = vunpack.c.l.b16 %v428
          %v1841 = vunpack.c.h.b16 %v428
          %v1842 = vunpack.c.l.b16 %v429
          %v1843 = vunpack.c.h.b16 %v429
          %v1844 = vunpack.c.l.b16 %v430
          %v1845 = vunpack.c.h.b16 %v430
          %v1846 = vunpack.c.l.b16 %v431
          %v1847 = vunpack.c.h.b16 %v431
          %v1848 = vunpack.c.l.b16 %v432
          %v1849 = vunpack.c.h.b16 %v432
          %v1850 = vunpack.c.l.b16 %v433
          %v1851 = vunpack.c.h.b16 %v433
          %v1852 = vunpack.c.l.b16 %v434
          %v1853 = vunpack.c.h.b16 %v434
          %v1854 = vunpack.c.l.b16 %v435
          %v1855 = vunpack.c.h.b16 %v435
          %v1856 = vunpack.c.l.b16 %v436
          %v1857 = vunpack.c.h.b16 %v436
          %v1858 = vunpack.c.l.b16 %v437
          %v1859 = vunpack.c.h.b16 %v437
          %v1860 = vunpack.c.l.b16 %v438
          %v1861 = vunpack.c.h.b16 %v438
          %v1862 = vunpack.c.l.b16 %v439
          %v1863 = vunpack.c.h.b16 %v439
          %v1864 = vunpack.c.l.b16 %v440
          %v1865 = vunpack.c.h.b16 %v440
          %v1866 = vunpack.c.l.b16 %v441
          %v1867 = vunpack.c.h.b16 %v441
          %v1868 = vunpack.c.l.b16 %v442
          %v1869 = vunpack.c.h.b16 %v442
          %v1870 = vunpack.c.l.b16 %v443
          %v1871 = vunpack.c.h.b16 %v443
          %v1872 = vunpack.c.l.b16 %v444
          %v1873 = vunpack.c.h.b16 %v444
          %v1874 = vunpack.c.l.b16 %v445
          %v1875 = vunpack.c.h.b16 %v445
          %v1876 = vunpack.c.l.b16 %v446
          %v1877 = vunpack.c.h.b16 %v446
          %v1878 = vunpack.c.l.b16 %v447
          %v1879 = vunpack.c.h.b16 %v447
          %v1880 = vunpack.c.l.b16 %v448
          %v1881 = vunpack.c.h.b16 %v448
          %v1882 = vunpack.c.l.b16 %v449
          %v1883 = vunpack.c.h.b16 %v449
          %v1884 = vunpack.c.l.b16 %v450
          %v1885 = vunpack.c.h.b16 %v450
          %v1886 = vunpack.c.l.b16 %v451
          %v1887 = vunpack.c.h.b16 %v451
          %v1888 = vunpack.c.l.b16 %v452
          %v1889 = vunpack.c.h.b16 %v452
          %v1890 = vunpack.c.l.b16 %v453
          %v1891 = vunpack.c.h.b16 %v453
          %v1892 = vunpack.c.l.b16 %v454
          %v1893 = vunpack.c.h.b16 %v454
          %v1894 = vunpack.c.l.b16 %v455
          %v1895 = vunpack.c.h.b16 %v455
          %v1896 = vunpack.c.l.b16 %v456
          %v1897 = vunpack.c.h.b16 %v456
          %v1898 = vunpack.c.l.b16 %v457
          %v1899 = vunpack.c.h.b16 %v457
          %v1900 = vunpack.c.l.b16 %v458
          %v1901 = vunpack.c.h.b16 %v458
          %v1902 = vunpack.c.l.b16 %v459
          %v1903 = vunpack.c.h.b16 %v459
          %v1904 = vunpack.c.l.b16 %v460
          %v1905 = vunpack.c.h.b16 %v460
          %v1906 = vunpack.c.l.b16 %v461
          %v1907 = vunpack.c.h.b16 %v461
          %v1908 = vunpack.c.l.b16 %v462
          %v1909 = vunpack.c.h.b16 %v462
          %v1910 = vunpack.c.l.b16 %v463
          %v1911 = vunpack.c.h.b16 %v463
          %v1912 = vunpack.c.l.b16 %v464
          %v1913 = vunpack.c.h.b16 %v464
          %v1914 = vunpack.c.l.b16 %v465
          %v1915 = vunpack.c.h.b16 %v465
          %v1916 = vunpack.c.l.b16 %v466
          %v1917 = vunpack.c.h.b16 %v466
          %v1918 = vunpack.c.l.b16 %v467
          %v1919 = vunpack.c.h.b16 %v467
          %v1920 = vunpack.c.l.b16 %v468
          %v1921 = vunpack.c.h.b16 %v468
          %v1922 = vunpack.c.l.b16 %v469
          %v1923 = vunpack.c.h.b16 %v469
          %v1924 = vunpack.c.l.b16 %v470
          %v1925 = vunpack.c.h.b16 %v470
          %v1926 = vunpack.c.l.b16 %v471
          %v1927 = vunpack.c.h.b16 %v471
          %v1928 = vunpack.c.l.b16 %v472
          %v1929 = vunpack.c.h.b16 %v472
          %v1930 = vunpack.c.l.b16 %v473
          %v1931 = vunpack.c.h.b16 %v473
          %v1932 = vunpack.c.l.b16 %v474
          %v1933 = vunpack.c.h.b16 %v474
          %v1934 = vunpack.c.l.b16 %v475
          %v1935 = vunpack.c.h.b16 %v475
          %v1936 = vunpack.c.l.b16 %v476
          %v1937 = vunpack.c.h.b16 %v476
          %v1938 = vunpack.c.l.b16 %v477
          %v1939 = vunpack.c.h.b16 %v477
          %v1940 = vunpack.c.l.b16 %v478
          %v1941 = vunpack.c.h.b16 %v478
          %v1942 = vunpack.c.l.b16 %v479
          %v1943 = vunpack.c.h.b16 %v479
          %v1944 = vunpack.c.l.b16 %v480
          %v1945 = vunpack.c.h.b16 %v480
          %v1946 = vunpack.c.l.b16 %v481
          %v1947 = vunpack.c.h.b16 %v481
          %v1948 = vunpack.c.l.b16 %v482
          %v1949 = vunpack.c.h.b16 %v482
          %v1950 = vunpack.c.l.b16 %v483
          %v1951 = vunpack.c.h.b16 %v483
          %v1952 = vunpack.c.l.b16 %v484
          %v1953 = vunpack.c.h.b16 %v484
          %v1954 = vunpack.c.l.b16 %v485
          %v1955 = vunpack.c.h.b16 %v485
          %v1956 = vunpack.c.l.b16 %v486
          %v1957 = vunpack.c.h.b16 %v486
          %v1958 = vunpack.c.l.b16 %v487
          %v1959 = vunpack.c.h.b16 %v487
          %v1960 = vunpack.c.l.b16 %v488
          %v1961 = vunpack.c.h.b16 %v488
          %v1962 = vunpack.c.l.b16 %v489
          %v1963 = vunpack.c.h.b16 %v489
          %v1964 = vunpack.c.l.b16 %v490
          %v1965 = vunpack.c.h.b16 %v490
          %v1966 = vunpack.c.l.b16 %v491
          %v1967 = vunpack.c.h.b16 %v491
          %v1968 = vunpack.c.l.b16 %v492
          %v1969 = vunpack.c.h.b16 %v492
          %v1970 = vunpack.c.l.b16 %v493
          %v1971 = vunpack.c.h.b16 %v493
          %v1972 = vunpack.c.l.b16 %v494
          %v1973 = vunpack.c.h.b16 %v494
          %v1974 = vunpack.c.l.b16 %v495
          %v1975 = vunpack.c.h.b16 %v495
          %v1976 = vunpack.c.l.b16 %v496
          %v1977 = vunpack.c.h.b16 %v496
          %v1978 = vunpack.c.l.b16 %v497
          %v1979 = vunpack.c.h.b16 %v497
          %v1980 = vunpack.c.l.b16 %v498
          %v1981 = vunpack.c.h.b16 %v498
          %v1982 = vunpack.c.l.b16 %v499
          %v1983 = vunpack.c.h.b16 %v499
          %v1984 = vunpack.c.l.b16 %v500
          %v1985 = vunpack.c.h.b16 %v500
          %v1986 = vunpack.c.l.b16 %v501
          %v1987 = vunpack.c.h.b16 %v501
          %v1988 = vunpack.c.l.b16 %v502
          %v1989 = vunpack.c.h.b16 %v502
          %v1990 = vunpack.c.l.b16 %v503
          %v1991 = vunpack.c.h.b16 %v503
          %v1992 = vunpack.c.l.b16 %v504
          %v1993 = vunpack.c.h.b16 %v504
          %v1994 = vunpack.c.l.b16 %v505
          %v1995 = vunpack.c.h.b16 %v505
          %v1996 = vunpack.c.l.b16 %v506
          %v1997 = vunpack.c.h.b16 %v506
          %v1998 = vunpack.c.l.b16 %v507
          %v1999 = vunpack.c.h.b16 %v507
          %v2000 = vunpack.c.l.b16 %v508
          %v2001 = vunpack.c.h.b16 %v508
          %v2002 = vunpack.c.l.b16 %v509
          %v2003 = vunpack.c.h.b16 %v509
          %v2004 = vunpack.c.l.b16 %v510
          %v2005 = vunpack.c.h.b16 %v510
          %v2006 = vunpack.c.l.b16 %v511
          %v2007 = vunpack.c.h.b16 %v511
          %v2008 = vunpack.c.l.b16 %v512
          %v2009 = vunpack.c.h.b16 %v512
          %v2010 = vunpack.c.l.b16 %v513
          %v2011 = vunpack.c.h.b16 %v513
          %v2012 = vunpack.c.l.b16 %v514
          %v2013 = vunpack.c.h.b16 %v514
          %v2014 = vunpack.c.l.b16 %v515
          %v2015 = vunpack.c.h.b16 %v515
          %v2016 = vunpack.c.l.b16 %v516
          %v2017 = vunpack.c.h.b16 %v516
          %v2018 = vunpack.c.l.b16 %v517
          %v2019 = vunpack.c.h.b16 %v517
          %v2020 = vunpack.c.l.b16 %v518
          %v2021 = vunpack.c.h.b16 %v518
          %v2022 = vunpack.c.l.b16 %v519
          %v2023 = vunpack.c.h.b16 %v519
          %v2024 = vunpack.c.l.b16 %v520
          %v2025 = vunpack.c.h.b16 %v520
          %v2026 = vunpack.c.l.b16 %v521
          %v2027 = vunpack.c.h.b16 %v521
          %v2028 = vunpack.c.l.b16 %v522
          %v2029 = vunpack.c.h.b16 %v522
          %v2030 = vunpack.c.l.b16 %v523
          %v2031 = vunpack.c.h.b16 %v523
          %v2032 = vunpack.c.l.b16 %v524
          %v2033 = vunpack.c.h.b16 %v524
          %v2034 = vunpack.c.l.b16 %v525
          %v2035 = vunpack.c.h.b16 %v525
          %v2036 = vunpack.c.l.b16 %v526
          %v2037 = vunpack.c.h.b16 %v526
          %v2038 = vunpack.c.l.b16 %v527
          %v2039 = vunpack.c.h.b16 %v527
          %v2040 = vunpack.c.l.b16 %v528
          %v2041 = vunpack.c.h.b16 %v528
          %v2042 = vunpack.c.l.b16 %v529
          %v2043 = vunpack.c.h.b16 %v529
          %v2044 = vunpack.c.l.b16 %v530
          %v2045 = vunpack.c.h.b16 %v530
          %v2046 = vunpack.c.l.b16 %v531
          %v2047 = vunpack.c.h.b16 %v531
          %v2048 = vunpack.c.l.b16 %v532
          %v2049 = vunpack.c.h.b16 %v532
          %v2050 = vunpack.c.l.b16 %v533
          %v2051 = vunpack.c.h.b16 %v533
          %v2052 = vunpack.c.l.b16 %v534
          %v2053 = vunpack.c.h.b16 %v534
          %v2054 = vunpack.c.l.b16 %v535
          %v2055 = vunpack.c.h.b16 %v535
          %v2056 = vunpack.c.l.b16 %v536
          %v2057 = vunpack.c.h.b16 %v536
          %v2058 = vunpack.c.l.b16 %v537
          %v2059 = vunpack.c.h.b16 %v537
          %v2060 = vunpack.c.l.b16 %v538
          %v2061 = vunpack.c.h.b16 %v538
          %v2062 = vunpack.c.l.b16 %v539
          %v2063 = vunpack.c.h.b16 %v539
          %v2064 = vunpack.c.l.b16 %v540
          %v2065 = vunpack.c.h.b16 %v540
          %v2066 = vunpack.c.l.b16 %v541
          %v2067 = vunpack.c.h.b16 %v541
          %v2068 = vunpack.c.l.b16 %v542
          %v2069 = vunpack.c.h.b16 %v542
          %v2070 = vunpack.c.l.b16 %v543
          %v2071 = vunpack.c.h.b16 %v543
          %v2072 = vunpack.c.l.b16 %v544
          %v2073 = vunpack.c.h.b16 %v544
          %v2074 = vunpack.c.l.b16 %v545
          %v2075 = vunpack.c.h.b16 %v545
          %v2076 = vunpack.c.l.b16 %v546
          %v2077 = vunpack.c.h.b16 %v546
          %v2078 = vunpack.c.l.b16 %v547
          %v2079 = vunpack.c.h.b16 %v547
          %v2080 = vunpack.c.l.b16 %v548
          %v2081 = vunpack.c.h.b16 %v548
          %v2082 = vunpack.c.l.b16 %v549
          %v2083 = vunpack.c.h.b16 %v549
          %v2084 = vunpack.c.l.b16 %v550
          %v2085 = vunpack.c.h.b16 %v550
          %v2086 = vunpack.c.l.b16 %v551
          %v2087 = vunpack.c.h.b16 %v551
          %v2088 = vunpack.c.l.b16 %v552
          %v2089 = vunpack.c.h.b16 %v552
          %v2090 = vunpack.c.l.b16 %v553
          %v2091 = vunpack.c.h.b16 %v553
          %v2092 = vunpack.c.l.b16 %v554
          %v2093 = vunpack.c.h.b16 %v554
          %v2094 = vunpack.c.l.b16 %v555
          %v2095 = vunpack.c.h.b16 %v555
          %v2096 = vunpack.c.l.b16 %v556
          %v2097 = vunpack.c.h.b16 %v556
          %v2098 = vunpack.c.l.b16 %v557
          %v2099 = vunpack.c.h.b16 %v557
          %v2100 = vunpack.c.l.b16 %v558
          %v2101 = vunpack.c.h.b16 %v558
          %v2102 = vunpack.c.l.b16 %v559
          %v2103 = vunpack.c.h.b16 %v559
          %v2104 = vunpack.c.l.b16 %v560
          %v2105 = vunpack.c.h.b16 %v560
          %v2106 = vunpack.c.l.b16 %v561
          %v2107 = vunpack.c.h.b16 %v561
          %v2108 = vunpack.c.l.b16 %v562
          %v2109 = vunpack.c.h.b16 %v562
          %v2110 = vunpack.c.l.b16 %v563
          %v2111 = vunpack.c.h.b16 %v563
          %v2112 = vunpack.c.l.b16 %v564
          %v2113 = vunpack.c.h.b16 %v564
          %v2114 = vunpack.c.l.b16 %v565
          %v2115 = vunpack.c.h.b16 %v565
          %v2116 = vunpack.c.l.b16 %v566
          %v2117 = vunpack.c.h.b16 %v566
          %v2118 = vunpack.c.l.b16 %v567
          %v2119 = vunpack.c.h.b16 %v567
          %v2120 = vunpack.c.l.b16 %v568
          %v2121 = vunpack.c.h.b16 %v568
          %v2122 = vunpack.c.l.b16 %v569
          %v2123 = vunpack.c.h.b16 %v569
          %v2124 = vunpack.c.l.b16 %v570
          %v2125 = vunpack.c.h.b16 %v570
          %v2126 = vunpack.c.l.b16 %v571
          %v2127 = vunpack.c.h.b16 %v571
          %v2128 = vunpack.c.l.b16 %v572
          %v2129 = vunpack.c.h.b16 %v572
          %v2130 = vunpack.c.l.b16 %v573
          %v2131 = vunpack.c.h.b16 %v573
          %v2132 = vunpack.c.l.b16 %v574
          %v2133 = vunpack.c.h.b16 %v574
          %v2134 = vunpack.c.l.b16 %v575
          %v2135 = vunpack.c.h.b16 %v575
          %v2136 = vunpack.c.l.b16 %v576
          %v2137 = vunpack.c.h.b16 %v576
          %v2138 = vunpack.c.l.b16 %v577
          %v2139 = vunpack.c.h.b16 %v577
          %v2140 = vunpack.c.l.b16 %v578
          %v2141 = vunpack.c.h.b16 %v578
          %v2142 = vunpack.c.l.b16 %v579
          %v2143 = vunpack.c.h.b16 %v579
          %v2144 = vunpack.c.l.b16 %v580
          %v2145 = vunpack.c.h.b16 %v580
          %v2146 = vunpack.c.l.b16 %v581
          %v2147 = vunpack.c.h.b16 %v581
          %v2148 = vunpack.c.l.b16 %v582
          %v2149 = vunpack.c.h.b16 %v582
          %v2150 = vunpack.c.l.b16 %v583
          %v2151 = vunpack.c.h.b16 %v583
          %v2152 = vunpack.c.l.b16 %v584
          %v2153 = vunpack.c.h.b16 %v584
          %v2154 = vunpack.c.l.b16 %v585
          %v2155 = vunpack.c.h.b16 %v585
          %v2156 = vunpack.c.l.b16 %v586
          %v2157 = vunpack.c.h.b16 %v586
          %v2158 = vunpack.c.l.b16 %v587
          %v2159 = vunpack.c.h.b16 %v587
          %v2160 = vunpack.c.l.b16 %v588
          %v2161 = vunpack.c.h.b16 %v588
          %v2162 = vunpack.c.l.b16 %v589
          %v2163 = vunpack.c.h.b16 %v589
          %v2164 = vunpack.c.l.b16 %v590
          %v2165 = vunpack.c.h.b16 %v590
          %v2166 = vunpack.c.l.b16 %v591
          %v2167 = vunpack.c.h.b16 %v591
          %v2168 = vunpack.c.l.b16 %v592
          %v2169 = vunpack.c.h.b16 %v592
          %v2170 = vunpack.c.l.b16 %v593
          %v2171 = vunpack.c.h.b16 %v593
          %v2172 = vunpack.c.l.b16 %v594
          %v2173 = vunpack.c.h.b16 %v594
          %v2174 = vunpack.c.l.b16 %v595
          %v2175 = vunpack.c.h.b16 %v595
          %v2176 = vunpack.c.l.b16 %v596
          %v2177 = vunpack.c.h.b16 %v596
          %v2178 = vunpack.c.l.b16 %v597
          %v2179 = vunpack.c.h.b16 %v597
          %v2180 = vunpack.c.l.b16 %v598
          %v2181 = vunpack.c.h.b16 %v598
          %v2182 = vunpack.c.l.b16 %v599
          %v2183 = vunpack.c.h.b16 %v599
          %v2184 = vunpack.c.l.b16 %v600
          %v2185 = vunpack.c.h.b16 %v600
          %v2186 = vunpack.c.l.b16 %v601
          %v2187 = vunpack.c.h.b16 %v601
          %v2188 = vunpack.c.l.b16 %v602
          %v2189 = vunpack.c.h.b16 %v602
          %v2190 = vunpack.c.l.b16 %v603
          %v2191 = vunpack.c.h.b16 %v603
          %v2192 = vunpack.c.l.b16 %v604
          %v2193 = vunpack.c.h.b16 %v604
          %v2194 = vunpack.c.l.b16 %v605
          %v2195 = vunpack.c.h.b16 %v605
          %v2196 = vunpack.c.l.b16 %v606
          %v2197 = vunpack.c.h.b16 %v606
          %v2198 = vunpack.c.l.b16 %v607
          %v2199 = vunpack.c.h.b16 %v607
          %v2200 = vunpack.c.l.b16 %v608
          %v2201 = vunpack.c.h.b16 %v608
          %v2202 = vunpack.c.l.b16 %v609
          %v2203 = vunpack.c.h.b16 %v609
          %v2204 = vunpack.c.l.b16 %v610
          %v2205 = vunpack.c.h.b16 %v610
          %v2206 = vunpack.c.l.b16 %v611
          %v2207 = vunpack.c.h.b16 %v611
          %v2208 = vunpack.c.l.b16 %v612
          %v2209 = vunpack.c.h.b16 %v612
          %v2210 = vunpack.c.l.b16 %v613
          %v2211 = vunpack.c.h.b16 %v613
          %v2212 = vunpack.c.l.b16 %v614
          %v2213 = vunpack.c.h.b16 %v614
          %v2214 = vunpack.c.l.b16 %v615
          %v2215 = vunpack.c.h.b16 %v615
          %v2216 = vunpack.c.l.b16 %v616
          %v2217 = vunpack.c.h.b16 %v616
          %v2218 = vunpack.c.l.b16 %v617
          %v2219 = vunpack.c.h.b16 %v617
          %v2220 = vunpack.c.l.b16 %v618
          %v2221 = vunpack.c.h.b16 %v618
          %v2222 = vunpack.c.l.b16 %v619
          %v2223 = vunpack.c.h.b16 %v619
          %v2224 = vunpack.c.l.b16 %v620
          %v2225 = vunpack.c.h.b16 %v620
          %v2226 = vunpack.c.l.b16 %v621
          %v2227 = vunpack.c.h.b16 %v621
          %v2228 = vunpack.c.l.b16 %v622
          %v2229 = vunpack.c.h.b16 %v622
          %v2230 = vunpack.c.l.b16 %v623
          %v2231 = vunpack.c.h.b16 %v623
          %v2232 = vunpack.c.l.b16 %v624
          %v2233 = vunpack.c.h.b16 %v624
          %v2234 = vunpack.c.l.b16 %v625
          %v2235 = vunpack.c.h.b16 %v625
          %v2236 = vunpack.c.l.b16 %v626
          %v2237 = vunpack.c.h.b16 %v626
          %v2238 = vunpack.c.l.b16 %v627
          %v2239 = vunpack.c.h.b16 %v627
          %v2240 = vunpack.c.l.b16 %v628
          %v2241 = vunpack.c.h.b16 %v628
          %v2242 = vunpack.c.l.b16 %v629
          %v2243 = vunpack.c.h.b16 %v629
          %v2244 = vunpack.c.l.b16 %v630
          %v2245 = vunpack.c.h.b16 %v630
          %v2246 = vunpack.c.l.b16 %v631
          %v2247 = vunpack.c.h.b16 %v631
          %v2248 = vunpack.c.l.b16 %v632
          %v2249 = vunpack.c.h.b16 %v632
          %v2250 = vunpack.c.l.b16 %v633
          %v2251 = vunpack.c.h.b16 %v633
          %v2252 = vunpack.c.l.b16 %v634
          %v2253 = vunpack.c.h.b16 %v634
          %v2254 = vunpack.c.l.b16 %v635
          %v2255 = vunpack.c.h.b16 %v635
          %v2256 = vunpack.c.l.b16 %v636
          %v2257 = vunpack.c.h.b16 %v636
          %v2258 = vunpack.c.l.b16 %v637
          %v2259 = vunpack.c.h.b16 %v637
          %v2260 = vunpack.c.l.b16 %v638
          %v2261 = vunpack.c.h.b16 %v638
          %v2262 = vunpack.c.l.b16 %v639
          %v2263 = vunpack.c.h.b16 %v639
          %v2264 = vunpack.c.l.b16 %v640
          %v2265 = vunpack.c.h.b16 %v640
          %v2266 = vunpack.c.l.b16 %v641
          %v2267 = vunpack.c.h.b16 %v641
          %v2268 = vunpack.c.l.b16 %v642
          %v2269 = vunpack.c.h.b16 %v642
          %v2270 = vunpack.c.l.b16 %v643
          %v2271 = vunpack.c.h.b16 %v643
          %v2272 = vunpack.c.l.b16 %v644
          %v2273 = vunpack.c.h.b16 %v644
          %v2274 = vunpack.c.l.b16 %v645
          %v2275 = vunpack.c.h.b16 %v645
          %v2276 = vunpack.c.l.b16 %v646
          %v2277 = vunpack.c.h.b16 %v646
          %v2278 = vunpack.c.l.b16 %v647
          %v2279 = vunpack.c.h.b16 %v647
          %v2280 = vunpack.c.l.b16 %v648
          %v2281 = vunpack.c.h.b16 %v648
          %v2282 = vunpack.c.l.b16 %v649
          %v2283 = vunpack.c.h.b16 %v649
          %v2284 = vunpack.c.l.b16 %v650
          %v2285 = vunpack.c.h.b16 %v650
          %v2286 = vunpack.c.l.b16 %v651
          %v2287 = vunpack.c.h.b16 %v651
          %v2288 = vunpack.c.l.b16 %v652
          %v2289 = vunpack.c.h.b16 %v652
          %v2290 = vunpack.c.l.b16 %v653
          %v2291 = vunpack.c.h.b16 %v653
          %v2292 = vunpack.c.l.b16 %v654
          %v2293 = vunpack.c.h.b16 %v654
          %v2294 = vunpack.c.l.b16 %v655
          %v2295 = vunpack.c.h.b16 %v655
          %v2296 = vunpack.c.l.b16 %v656
          %v2297 = vunpack.c.h.b16 %v656
          %v2298 = vunpack.c.l.b16 %v657
          %v2299 = vunpack.c.h.b16 %v657
          %v2300 = vunpack.c.l.b16 %v658
          %v2301 = vunpack.c.h.b16 %v658
          %v2302 = vunpack.c.l.b16 %v659
          %v2303 = vunpack.c.h.b16 %v659
          %v2304 = vunpack.c.l.b16 %v660
          %v2305 = vunpack.c.h.b16 %v660
          %v2306 = vunpack.c.l.b16 %v661
          %v2307 = vunpack.c.h.b16 %v661
          %v2308 = vunpack.c.l.b16 %v662
          %v2309 = vunpack.c.h.b16 %v662
          %v2310 = vunpack.c.l.b16 %v663
          %v2311 = vunpack.c.h.b16 %v663
          %v2312 = vunpack.c.l.b16 %v664
          %v2313 = vunpack.c.h.b16 %v664
          %v2314 = vunpack.c.l.b16 %v665
          %v2315 = vunpack.c.h.b16 %v665
          %v2316 = vunpack.c.l.b16 %v666
          %v2317 = vunpack.c.h.b16 %v666
          %v2318 = vunpack.c.l.b16 %v667
          %v2319 = vunpack.c.h.b16 %v667
          %v2320 = vunpack.c.l.b16 %v668
          %v2321 = vunpack.c.h.b16 %v668
          %v2322 = vunpack.c.l.b16 %v669
          %v2323 = vunpack.c.h.b16 %v669
          %v2324 = vunpack.c.l.b16 %v670
          %v2325 = vunpack.c.h.b16 %v670
          %v2326 = vunpack.c.l.b16 %v671
          %v2327 = vunpack.c.h.b16 %v671
          %v2328 = vunpack.c.l.b16 %v672
          %v2329 = vunpack.c.h.b16 %v672
          %v2330 = vunpack.c.l.b16 %v673
          %v2331 = vunpack.c.h.b16 %v673
          %v2332 = vunpack.c.l.b16 %v674
          %v2333 = vunpack.c.h.b16 %v674
          %v2334 = vunpack.c.l.b16 %v675
          %v2335 = vunpack.c.h.b16 %v675
          %v2336 = vunpack.c.l.b16 %v676
          %v2337 = vunpack.c.h.b16 %v676
          %v2338 = vunpack.c.l.b16 %v677
          %v2339 = vunpack.c.h.b16 %v677
          %v2340 = vunpack.c.l.b16 %v678
          %v2341 = vunpack.c.h.b16 %v678
          %v2342 = vunpack.c.l.b16 %v679
          %v2343 = vunpack.c.h.b16 %v679
          %v2344 = vunpack.c.l.b16 %v680
          %v2345 = vunpack.c.h.b16 %v680
          %v2346 = vunpack.c.l.b16 %v681
          %v2347 = vunpack.c.h.b16 %v681
          %v2348 = vunpack.c.l.b16 %v682
          %v2349 = vunpack.c.h.b16 %v682
          %v2350 = vunpack.c.l.b16 %v683
          %v2351 = vunpack.c.h.b16 %v683
          %v2352 = vunpack.c.l.b16 %v684
          %v2353 = vunpack.c.h.b16 %v684
          %v2354 = vunpack.c.l.b16 %v685
          %v2355 = vunpack.c.h.b16 %v685
          %v2356 = vunpack.c.l.b16 %v686
          %v2357 = vunpack.c.h.b16 %v686
          %v2358 = vunpack.c.l.b16 %v687
          %v2359 = vunpack.c.h.b16 %v687
          %v2360 = vunpack.c.l.b16 %v688
          %v2361 = vunpack.c.h.b16 %v688
          %v2362 = vunpack.c.l.b16 %v689
          %v2363 = vunpack.c.h.b16 %v689
          %v2364 = vunpack.c.l.b16 %v690
          %v2365 = vunpack.c.h.b16 %v690
          %v2366 = vunpack.c.l.b16 %v691
          %v2367 = vunpack.c.h.b16 %v691
          %v2368 = vunpack.c.l.b16 %v692
          %v2369 = vunpack.c.h.b16 %v692
          %v2370 = vunpack.c.l.b16 %v693
          %v2371 = vunpack.c.h.b16 %v693
          %v2372 = vunpack.c.l.b16 %v694
          %v2373 = vunpack.c.h.b16 %v694
          %v2374 = vunpack.c.l.b16 %v695
          %v2375 = vunpack.c.h.b16 %v695
          %v2376 = vunpack.c.l.b16 %v696
          %v2377 = vunpack.c.h.b16 %v696
          %v2378 = vunpack.c.l.b16 %v697
          %v2379 = vunpack.c.h.b16 %v697
          %v2380 = vunpack.c.l.b16 %v698
          %v2381 = vunpack.c.h.b16 %v698
          %v2382 = vunpack.c.l.b16 %v699
          %v2383 = vunpack.c.h.b16 %v699
          %v2384 = vunpack.c.l.b16 %v700
          %v2385 = vunpack.c.h.b16 %v700
          %v2386 = vunpack.c.l.b16 %v701
          %v2387 = vunpack.c.h.b16 %v701
          %v2388 = vunpack.c.l.b16 %v702
          %v2389 = vunpack.c.h.b16 %v702
          %v2390 = vunpack.c.l.b16 %v703
          %v2391 = vunpack.c.h.b16 %v703
          %v2392 = vunpack.c.l.b16 %v704
          %v2393 = vunpack.c.h.b16 %v704
          %v2394 = vunpack.c.l.b16 %v705
          %v2395 = vunpack.c.h.b16 %v705
          %v2396 = vunpack.c.l.b16 %v706
          %v2397 = vunpack.c.h.b16 %v706
          %v2398 = vunpack.c.l.b16 %v707
          %v2399 = vunpack.c.h.b16 %v707
          %v2400 = vunpack.c.l.b16 %v708
          %v2401 = vunpack.c.h.b16 %v708
          %v2402 = vunpack.c.l.b16 %v709
          %v2403 = vunpack.c.h.b16 %v709
          %v2404 = vunpack.c.l.b16 %v710
          %v2405 = vunpack.c.h.b16 %v710
          %v2406 = vunpack.c.l.b16 %v711
          %v2407 = vunpack.c.h.b16 %v711
          %v2408 = vunpack.c.l.b16 %v712
          %v2409 = vunpack.c.h.b16 %v712
          %v2410 = vunpack.c.l.b16 %v713
          %v2411 = vunpack.c.h.b16 %v713
          %v2412 = vunpack.c.l.b16 %v714
          %v2413 = vunpack.c.h.b16 %v714
          %v2414 = vunpack.c.l.b16 %v715
          %v2415 = vunpack.c.h.b16 %v715
          %v2416 = vunpack.c.l.b16 %v716
          %v2417 = vunpack.c.h.b16 %v716
          %v2418 = vunpack.c.l.b16 %v717
          %v2419 = vunpack.c.h.b16 %v717
          %v2420 = vunpack.c.l.b16 %v718
          %v2421 = vunpack.c.h.b16 %v718
          %v2422 = vunpack.c.l.b16 %v719
          %v2423 = vunpack.c.h.b16 %v719
          %v2424 = vunpack.c.l.b16 %v720
          %v2425 = vunpack.c.h.b16 %v720
          %v2426 = vunpack.c.l.b16 %v721
          %v2427 = vunpack.c.h.b16 %v721
          %v2428 = vunpack.c.l.b16 %v722
          %v2429 = vunpack.c.h.b16 %v722
          %v2430 = vunpack.c.l.b16 %v723
          %v2431 = vunpack.c.h.b16 %v723
          %v2432 = vunpack.c.l.b16 %v724
          %v2433 = vunpack.c.h.b16 %v724
          %v2434 = vunpack.c.l.b16 %v725
          %v2435 = vunpack.c.h.b16 %v725
          %v2436 = vunpack.c.l.b16 %v726
          %v2437 = vunpack.c.h.b16 %v726
          %v2438 = vunpack.c.l.b16 %v727
          %v2439 = vunpack.c.h.b16 %v727
          %v2440 = vunpack.c.l.b16 %v728
          %v2441 = vunpack.c.h.b16 %v728
          %v2442 = vunpack.c.l.b16 %v729
          %v2443 = vunpack.c.h.b16 %v729
          %v2444 = vunpack.c.l.b16 %v730
          %v2445 = vunpack.c.h.b16 %v730
          %v2446 = vunpack.c.l.b16 %v731
          %v2447 = vunpack.c.h.b16 %v731
          %v2448 = vunpack.c.l.b16 %v732
          %v2449 = vunpack.c.h.b16 %v732
          %v2450 = vunpack.c.l.b16 %v733
          %v2451 = vunpack.c.h.b16 %v733
          %v2452 = vunpack.c.l.b16 %v734
          %v2453 = vunpack.c.h.b16 %v734
          %v2454 = vunpack.c.l.b16 %v735
          %v2455 = vunpack.c.h.b16 %v735
          %v2456 = vunpack.c.l.b16 %v736
          %v2457 = vunpack.c.h.b16 %v736
          %v2458 = vunpack.c.l.b16 %v737
          %v2459 = vunpack.c.h.b16 %v737
          %v2460 = vunpack.c.l.b16 %v738
          %v2461 = vunpack.c.h.b16 %v738
          %v2462 = vunpack.c.l.b16 %v739
          %v2463 = vunpack.c.h.b16 %v739
          %v2464 = vunpack.c.l.b16 %v740
          %v2465 = vunpack.c.h.b16 %v740
          %v2466 = vunpack.c.l.b16 %v741
          %v2467 = vunpack.c.h.b16 %v741
          %v2468 = vunpack.c.l.b16 %v742
          %v2469 = vunpack.c.h.b16 %v742
          %v2470 = vunpack.c.l.b16 %v743
          %v2471 = vunpack.c.h.b16 %v743
          %v2472 = vunpack.c.l.b16 %v744
          %v2473 = vunpack.c.h.b16 %v744
          %v2474 = vunpack.c.l.b16 %v745
          %v2475 = vunpack.c.h.b16 %v745
          %v2476 = vunpack.c.l.b16 %v746
          %v2477 = vunpack.c.h.b16 %v746
          %v2478 = vunpack.c.l.b16 %v747
          %v2479 = vunpack.c.h.b16 %v747
          %v2480 = vunpack.c.l.b16 %v748
          %v2481 = vunpack.c.h.b16 %v748
          %v2482 = vunpack.c.l.b16 %v749
          %v2483 = vunpack.c.h.b16 %v749
          %v2484 = vunpack.c.l.b16 %v750
          %v2485 = vunpack.c.h.b16 %v750
          %v2486 = vunpack.c.l.b16 %v751
          %v2487 = vunpack.c.h.b16 %v751
          %v2488 = vunpack.c.l.b16 %v752
          %v2489 = vunpack.c.h.b16 %v752
          %v2490 = vunpack.c.l.b16 %v753
          %v2491 = vunpack.c.h.b16 %v753
          %v2492 = vunpack.c.l.b16 %v754
          %v2493 = vunpack.c.h.b16 %v754
          %v2494 = vunpack.c.l.b16 %v755
          %v2495 = vunpack.c.h.b16 %v755
          %v2496 = vunpack.c.l.b16 %v756
          %v2497 = vunpack.c.h.b16 %v756
          %v2498 = vunpack.c.l.b16 %v757
          %v2499 = vunpack.c.h.b16 %v757
          %v2500 = vunpack.c.l.b16 %v758
          %v2501 = vunpack.c.h.b16 %v758
          %v2502 = vunpack.c.l.b16 %v759
          %v2503 = vunpack.c.h.b16 %v759
          %v2504 = vunpack.c.l.b16 %v760
          %v2505 = vunpack.c.h.b16 %v760
          %v2506 = vunpack.c.l.b16 %v761
          %v2507 = vunpack.c.h.b16 %v761
          %v2508 = vunpack.c.l.b16 %v762
          %v2509 = vunpack.c.h.b16 %v762
          %v2510 = vunpack.c.l.b16 %v763
          %v2511 = vunpack.c.h.b16 %v763
          %v2512 = vunpack.c.l.b16 %v764
          %v2513 = vunpack.c.h.b16 %v764
          %v2514 = vunpack.c.l.b16 %v765
          %v2515 = vunpack.c.h.b16 %v765
          %v2516 = vunpack.c.l.b16 %v766
          %v2517 = vunpack.c.h.b16 %v766
          %v2518 = vunpack.c.l.b16 %v767
          %v2519 = vunpack.c.h.b16 %v767
          %v2520 = vunpack.c.l.b16 %v768
          %v2521 = vunpack.c.h.b16 %v768
          %v2522 = vunpack.c.l.b16 %v769
          %v2523 = vunpack.c.h.b16 %v769
          %v2524 = vunpack.c.l.b16 %v770
          %v2525 = vunpack.c.h.b16 %v770
          %v2526 = vunpack.c.l.b16 %v771
          %v2527 = vunpack.c.h.b16 %v771
          %v2528 = vunpack.c.l.b16 %v772
          %v2529 = vunpack.c.h.b16 %v772
          %v2530 = vunpack.c.l.b16 %v773
          %v2531 = vunpack.c.h.b16 %v773
          %v2532 = vunpack.c.l.b16 %v774
          %v2533 = vunpack.c.h.b16 %v774
          %v2534 = vunpack.c.l.b16 %v775
          %v2535 = vunpack.c.h.b16 %v775
          %v2536 = vunpack.c.l.b16 %v776
          %v2537 = vunpack.c.h.b16 %v776
          %v2538 = vunpack.c.l.b16 %v777
          %v2539 = vunpack.c.h.b16 %v777
          %v2540 = vunpack.c.l.b16 %v778
          %v2541 = vunpack.c.h.b16 %v778
          %v2542 = vunpack.c.l.b16 %v779
          %v2543 = vunpack.c.h.b16 %v779
          %v2544 = vunpack.c.l.b16 %v780
          %v2545 = vunpack.c.h.b16 %v780
          %v2546 = vunpack.c.l.b16 %v781
          %v2547 = vunpack.c.h.b16 %v781
          %v2548 = vunpack.c.l.b16 %v782
          %v2549 = vunpack.c.h.b16 %v782
          %v2550 = vunpack.c.l.b16 %v783
          %v2551 = vunpack.c.h.b16 %v783
          %v2552 = vunpack.c.l.b16 %v784
          %v2553 = vunpack.c.h.b16 %v784
          %v2554 = vunpack.c.l.b16 %v785
          %v2555 = vunpack.c.h.b16 %v785
          %v2556 = vunpack.c.l.b16 %v786
          %v2557 = vunpack.c.h.b16 %v786
          %v2558 = vunpack.c.l.b16 %v787
          %v2559 = vunpack.c.h.b16 %v787
          %v2560 = vunpack.c.l.b16 %v788
          %v2561 = vunpack.c.h.b16 %v788
          %v2562 = vunpack.c.l.b16 %v789
          %v2563 = vunpack.c.h.b16 %v789
          %v2564 = vunpack.c.l.b16 %v790
          %v2565 = vunpack.c.h.b16 %v790
          %v2566 = vunpack.c.l.b16 %v791
          %v2567 = vunpack.c.h.b16 %v791
          %v2568 = vunpack.c.l.b16 %v792
          %v2569 = vunpack.c.h.b16 %v792
          %v2570 = vunpack.c.l.b16 %v793
          %v2571 = vunpack.c.h.b16 %v793
          %v2572 = vunpack.c.l.b16 %v794
          %v2573 = vunpack.c.h.b16 %v794
          %v2574 = vunpack.c.l.b16 %v795
          %v2575 = vunpack.c.h.b16 %v795
          %v2576 = vunpack.c.l.b16 %v796
          %v2577 = vunpack.c.h.b16 %v796
          %v2578 = vunpack.c.l.b16 %v797
          %v2579 = vunpack.c.h.b16 %v797
          %v2580 = vunpack.c.l.b16 %v798
          %v2581 = vunpack.c.h.b16 %v798
          %v2582 = vunpack.c.l.b16 %v799
          %v2583 = vunpack.c.h.b16 %v799
          %v2584 = vunpack.c.l.b16 %v800
          %v2585 = vunpack.c.h.b16 %v800
          %v2586 = vunpack.c.l.b16 %v801
          %v2587 = vunpack.c.h.b16 %v801
          %v2588 = vunpack.c.l.b16 %v802
          %v2589 = vunpack.c.h.b16 %v802
          %v2590 = vunpack.c.l.b16 %v803
          %v2591 = vunpack.c.h.b16 %v803
          %v2592 = vunpack.c.l.b16 %v804
          %v2593 = vunpack.c.h.b16 %v804
          %v2594 = vunpack.c.l.b16 %v805
          %v2595 = vunpack.c.h.b16 %v805
          %v2596 = vunpack.c.l.b16 %v806
          %v2597 = vunpack.c.h.b16 %v806
          %v2598 = vunpack.c.l.b16 %v807
          %v2599 = vunpack.c.h.b16 %v807
          %v2600 = vunpack.c.l.b16 %v808
          %v2601 = vunpack.c.h.b16 %v808
          %v2602 = vunpack.c.l.b16 %v809
          %v2603 = vunpack.c.h.b16 %v809
          %v2604 = vunpack.c.l.b16 %v810
          %v2605 = vunpack.c.h.b16 %v810
          %v2606 = vunpack.c.l.b16 %v811
          %v2607 = vunpack.c.h.b16 %v811
          %v2608 = vunpack.c.l.b16 %v812
          %v2609 = vunpack.c.h.b16 %v812
          %v2610 = vunpack.c.l.b16 %v813
          %v2611 = vunpack.c.h.b16 %v813
          %v2612 = vunpack.c.l.b16 %v814
          %v2613 = vunpack.c.h.b16 %v814
          %v2614 = vunpack.c.l.b16 %v815
          %v2615 = vunpack.c.h.b16 %v815
          %v2616 = vunpack.c.l.b16 %v816
          %v2617 = vunpack.c.h.b16 %v816
          %v2618 = vunpack.c.l.b16 %v817
          %v2619 = vunpack.c.h.b16 %v817
          %v2620 = vunpack.c.l.b16 %v818
          %v2621 = vunpack.c.h.b16 %v818
          %v2622 = vunpack.c.l.b16 %v819
          %v2623 = vunpack.c.h.b16 %v819
          %v2624 = vunpack.c.l.b16 %v820
          %v2625 = vunpack.c.h.b16 %v820
          %v2626 = vunpack.c.l.b16 %v821
          %v2627 = vunpack.c.h.b16 %v821
          %v2628 = vunpack.c.l.b16 %v822
          %v2629 = vunpack.c.h.b16 %v822
          %v2630 = vunpack.c.l.b16 %v823
          %v2631 = vunpack.c.h.b16 %v823
          %v2632 = vunpack.c.l.b16 %v824
          %v2633 = vunpack.c.h.b16 %v824
          %v2634 = vunpack.c.l.b16 %v825
          %v2635 = vunpack.c.h.b16 %v825
          %v2636 = vunpack.c.l.b16 %v826
          %v2637 = vunpack.c.h.b16 %v826
          %v2638 = vunpack.c.l.b16 %v827
          %v2639 = vunpack.c.h.b16 %v827
          %v2640 = vunpack.c.l.b16 %v828
          %v2641 = vunpack.c.h.b16 %v828
          %v2642 = vunpack.c.l.b16 %v829
          %v2643 = vunpack.c.h.b16 %v829
          %v2644 = vunpack.c.l.b16 %v830
          %v2645 = vunpack.c.h.b16 %v830
          %v2646 = vunpack.c.l.b16 %v831
          %v2647 = vunpack.c.h.b16 %v831
          %v2648 = vunpack.c.l.b16 %v832
          %v2649 = vunpack.c.h.b16 %v832
          %v2650 = vunpack.c.l.b16 %v833
          %v2651 = vunpack.c.h.b16 %v833
          %v2652 = vunpack.c.l.b16 %v834
          %v2653 = vunpack.c.h.b16 %v834
          %v2654 = vunpack.c.l.b16 %v835
          %v2655 = vunpack.c.h.b16 %v835
          %v2656 = vunpack.c.l.b16 %v836
          %v2657 = vunpack.c.h.b16 %v836
          %v2658 = vunpack.c.l.b16 %v837
          %v2659 = vunpack.c.h.b16 %v837
          %v2660 = vunpack.c.l.b16 %v838
          %v2661 = vunpack.c.h.b16 %v838
          %v2662 = vunpack.c.l.b16 %v839
          %v2663 = vunpack.c.h.b16 %v839
          %v2664 = vunpack.c.l.b16 %v840
          %v2665 = vunpack.c.h.b16 %v840
          %v2666 = vunpack.c.l.b16 %v841
          %v2667 = vunpack.c.h.b16 %v841
          %v2668 = vunpack.c.l.b16 %v842
          %v2669 = vunpack.c.h.b16 %v842
          %v2670 = vunpack.c.l.b16 %v843
          %v2671 = vunpack.c.h.b16 %v843
          %v2672 = vunpack.c.l.b16 %v844
          %v2673 = vunpack.c.h.b16 %v844
          %v2674 = vunpack.c.l.b16 %v845
          %v2675 = vunpack.c.h.b16 %v845
          %v2676 = vunpack.c.l.b16 %v846
          %v2677 = vunpack.c.h.b16 %v846
          %v2678 = vunpack.c.l.b16 %v847
          %v2679 = vunpack.c.h.b16 %v847
          %v2680 = vunpack.c.l.b16 %v848
          %v2681 = vunpack.c.h.b16 %v848
          %v2682 = vunpack.c.l.b16 %v849
          %v2683 = vunpack.c.h.b16 %v849
          %v2684 = vunpack.c.l.b16 %v850
          %v2685 = vunpack.c.h.b16 %v850
          %v2686 = vunpack.c.l.b16 %v851
          %v2687 = vunpack.c.h.b16 %v851
          %v2688 = vunpack.c.l.b16 %v852
          %v2689 = vunpack.c.h.b16 %v852
          %v2690 = vunpack.c.l.b16 %v853
          %v2691 = vunpack.c.h.b16 %v853
          %v2692 = vunpack.c.l.b16 %v854
          %v2693 = vunpack.c.h.b16 %v854
          %v2694 = vunpack.c.l.b16 %v855
          %v2695 = vunpack.c.h.b16 %v855
          %v2696 = vunpack.c.l.b16 %v856
          %v2697 = vunpack.c.h.b16 %v856
          %v2698 = vunpack.c.l.b16 %v857
          %v2699 = vunpack.c.h.b16 %v857
          %v2700 = vunpack.c.l.b16 %v858
          %v2701 = vunpack.c.h.b16 %v858
          %v2702 = vunpack.c.l.b16 %v859
          %v2703 = vunpack.c.h.b16 %v859
          %v2704 = vunpack.c.l.b16 %v860
          %v2705 = vunpack.c.h.b16 %v860
          %v2706 = vunpack.c.l.b16 %v861
          %v2707 = vunpack.c.h.b16 %v861
          %v2708 = vunpack.c.l.b16 %v862
          %v2709 = vunpack.c.h.b16 %v862
          %v2710 = vunpack.c.l.b16 %v863
          %v2711 = vunpack.c.h.b16 %v863
          %v2712 = vunpack.c.l.b16 %v864
          %v2713 = vunpack.c.h.b16 %v864
          %v2714 = vunpack.c.l.b16 %v865
          %v2715 = vunpack.c.h.b16 %v865
          %v2716 = vunpack.c.l.b16 %v866
          %v2717 = vunpack.c.h.b16 %v866
          %v2718 = vunpack.c.l.b16 %v867
          %v2719 = vunpack.c.h.b16 %v867
          %v2720 = vunpack.c.l.b16 %v868
          %v2721 = vunpack.c.h.b16 %v868
          %v2722 = vunpack.c.l.b16 %v869
          %v2723 = vunpack.c.h.b16 %v869
          %v2724 = vunpack.c.l.b16 %v870
          %v2725 = vunpack.c.h.b16 %v870
          %v2726 = vunpack.c.l.b16 %v871
          %v2727 = vunpack.c.h.b16 %v871
          %v2728 = vunpack.c.l.b16 %v872
          %v2729 = vunpack.c.h.b16 %v872
          %v2730 = vunpack.c.l.b16 %v873
          %v2731 = vunpack.c.h.b16 %v873
          %v2732 = vunpack.c.l.b16 %v874
          %v2733 = vunpack.c.h.b16 %v874
          %v2734 = vunpack.c.l.b16 %v875
          %v2735 = vunpack.c.h.b16 %v875
          %v2736 = vunpack.c.l.b16 %v876
          %v2737 = vunpack.c.h.b16 %v876
          %v2738 = vunpack.c.l.b16 %v877
          %v2739 = vunpack.c.h.b16 %v877
          %v2740 = vunpack.c.l.b16 %v878
          %v2741 = vunpack.c.h.b16 %v878
          %v2742 = vunpack.c.l.b16 %v879
          %v2743 = vunpack.c.h.b16 %v879
          %v2744 = vunpack.c.l.b16 %v880
          %v2745 = vunpack.c.h.b16 %v880
          %v2746 = vunpack.c.l.b16 %v881
          %v2747 = vunpack.c.h.b16 %v881
          %v2748 = vunpack.c.l.b16 %v882
          %v2749 = vunpack.c.h.b16 %v882
          %v2750 = vunpack.c.l.b16 %v883
          %v2751 = vunpack.c.h.b16 %v883
          %v2752 = vunpack.c.l.b16 %v884
          %v2753 = vunpack.c.h.b16 %v884
          %v2754 = vunpack.c.l.b16 %v885
          %v2755 = vunpack.c.h.b16 %v885
          %v2756 = vunpack.c.l.b16 %v886
          %v2757 = vunpack.c.h.b16 %v886
          %v2758 = vunpack.c.l.b16 %v887
          %v2759 = vunpack.c.h.b16 %v887
          %v2760 = vunpack.c.l.b16 %v888
          %v2761 = vunpack.c.h.b16 %v888
          %v2762 = vunpack.c.l.b16 %v889
          %v2763 = vunpack.c.h.b16 %v889
          %v2764 = vunpack.c.l.b16 %v890
          %v2765 = vunpack.c.h.b16 %v890
          %v2766 = vunpack.c.l.b16 %v891
          %v2767 = vunpack.c.h.b16 %v891
          %v2768 = vunpack.c.l.b16 %v892
          %v2769 = vunpack.c.h.b16 %v892
          %v2770 = vunpack.c.l.b16 %v893
          %v2771 = vunpack.c.h.b16 %v893
          %v2772 = vunpack.c.l.b16 %v894
          %v2773 = vunpack.c.h.b16 %v894
          %v2774 = vunpack.c.l.b16 %v895
          %v2775 = vunpack.c.h.b16 %v895
          %v2776 = vunpack.c.l.b16 %v896
          %v2777 = vunpack.c.h.b16 %v896
          %v2778 = vunpack.c.l.b16 %v897
          %v2779 = vunpack.c.h.b16 %v897
          %v2780 = vunpack.c.l.b16 %v898
          %v2781 = vunpack.c.h.b16 %v898
          %v2782 = vunpack.c.l.b16 %v899
          %v2783 = vunpack.c.h.b16 %v899
          %v2784 = vunpack.c.l.b16 %v900
          %v2785 = vunpack.c.h.b16 %v900
          %v2786 = vunpack.c.l.b16 %v901
          %v2787 = vunpack.c.h.b16 %v901
          %v2788 = vunpack.c.l.b16 %v902
          %v2789 = vunpack.c.h.b16 %v902
          %v2790 = vunpack.c.l.b16 %v903
          %v2791 = vunpack.c.h.b16 %v903
          %v2792 = vunpack.c.l.b16 %v904
          %v2793 = vunpack.c.h.b16 %v904
          %v2794 = vunpack.c.l.b16 %v905
          %v2795 = vunpack.c.h.b16 %v905
          %v2796 = vunpack.c.l.b16 %v906
          %v2797 = vunpack.c.h.b16 %v906
          %v2798 = vunpack.c.l.b16 %v907
          %v2799 = vunpack.c.h.b16 %v907
          %v2800 = vunpack.c.l.b16 %v908
          %v2801 = vunpack.c.h.b16 %v908
          %v2802 = vunpack.c.l.b16 %v909
          %v2803 = vunpack.c.h.b16 %v909
          %v2804 = vunpack.c.l.b16 %v910
          %v2805 = vunpack.c.h.b16 %v910
          %v2806 = vunpack.c.l.b16 %v911
          %v2807 = vunpack.c.h.b16 %v911
          %v2808 = vunpack.c.l.b16 %v912
          %v2809 = vunpack.c.h.b16 %v912
          %v2810 = vunpack.c.l.b16 %v913
          %v2811 = vunpack.c.h.b16 %v913
          %v2812 = vunpack.c.l.b16 %v914
          %v2813 = vunpack.c.h.b16 %v914
          %v2814 = vunpack.c.l.b16 %v915
          %v2815 = vunpack.c.h.b16 %v915
          %v2816 = vunpack.c.l.b16 %v916
          %v2817 = vunpack.c.h.b16 %v916
          %v2818 = vunpack.c.l.b16 %v917
          %v2819 = vunpack.c.h.b16 %v917
          %v2820 = vunpack.c.l.b16 %v918
          %v2821 = vunpack.c.h.b16 %v918
          %v2822 = vunpack.c.l.b16 %v919
          %v2823 = vunpack.c.h.b16 %v919
          %v2824 = vunpack.c.l.b16 %v920
          %v2825 = vunpack.c.h.b16 %v920
          %v2826 = vunpack.c.l.b16 %v921
          %v2827 = vunpack.c.h.b16 %v921
          %v2828 = vpack.c.b16 %v1708, %v1676
          %v2829 = vpack.c.b16 %v1709, %v1677
          %v2830 = vpack.c.b16 %v1710, %v1678
          %v2831 = vpack.c.b16 %v1711, %v1679
          %v2832 = vpack.c.b16 %v1712, %v1680
          %v2833 = vpack.c.b16 %v1713, %v1681
          %v2834 = vpack.c.b16 %v1714, %v1682
          %v2835 = vpack.c.b16 %v1715, %v1683
          %v2836 = vpack.c.b16 %v1716, %v1684
          %v2837 = vpack.c.b16 %v1717, %v1685
          %v2838 = vpack.c.b16 %v1718, %v1686
          %v2839 = vpack.c.b16 %v1719, %v1687
          %v2840 = vpack.c.b16 %v1720, %v1688
          %v2841 = vpack.c.b16 %v1721, %v1689
          %v2842 = vpack.c.b16 %v1722, %v1690
          %v2843 = vpack.c.b16 %v1723, %v1691
          %v2844 = vpack.c.b16 %v1724, %v1692
          %v2845 = vpack.c.b16 %v1725, %v1693
          %v2846 = vpack.c.b16 %v1726, %v1694
          %v2847 = vpack.c.b16 %v1727, %v1695
          %v2848 = vpack.c.b16 %v1728, %v1696
          %v2849 = vpack.c.b16 %v1729, %v1697
          %v2850 = vpack.c.b16 %v1730, %v1698
          %v2851 = vpack.c.b16 %v1731, %v1699
          %v2852 = vpack.c.b16 %v1732, %v1700
          %v2853 = vpack.c.b16 %v1733, %v1701
          %v2854 = vpack.c.b16 %v1734, %v1702
          %v2855 = vpack.c.b16 %v1735, %v1703
          %v2856 = vpack.c.b16 %v1736, %v1704
          %v2857 = vpack.c.b16 %v1737, %v1705
          %v2858 = vpack.c.b16 %v1738, %v1706
          %v2859 = vpack.c.b16 %v1739, %v1707
          %v2860 = vpack.c.b16 %v1772, %v1740
          %v2861 = vpack.c.b16 %v1773, %v1741
          %v2862 = vpack.c.b16 %v1774, %v1742
          %v2863 = vpack.c.b16 %v1775, %v1743
          %v2864 = vpack.c.b16 %v1776, %v1744
          %v2865 = vpack.c.b16 %v1777, %v1745
          %v2866 = vpack.c.b16 %v1778, %v1746
          %v2867 = vpack.c.b16 %v1779, %v1747
          %v2868 = vpack.c.b16 %v1780, %v1748
          %v2869 = vpack.c.b16 %v1781, %v1749
          %v2870 = vpack.c.b16 %v1782, %v1750
          %v2871 = vpack.c.b16 %v1783, %v1751
          %v2872 = vpack.c.b16 %v1784, %v1752
          %v2873 = vpack.c.b16 %v1785, %v1753
          %v2874 = vpack.c.b16 %v1786, %v1754
          %v2875 = vpack.c.b16 %v1787, %v1755
          %v2876 = vpack.c.b16 %v1788, %v1756
          %v2877 = vpack.c.b16 %v1789, %v1757
          %v2878 = vpack.c.b16 %v1790, %v1758
          %v2879 = vpack.c.b16 %v1791, %v1759
          %v2880 = vpack.c.b16 %v1792, %v1760
          %v2881 = vpack.c.b16 %v1793, %v1761
          %v2882 = vpack.c.b16 %v1794, %v1762
          %v2883 = vpack.c.b16 %v1795, %v1763
          %v2884 = vpack.c.b16 %v1796, %v1764
          %v2885 = vpack.c.b16 %v1797, %v1765
          %v2886 = vpack.c.b16 %v1798, %v1766
          %v2887 = vpack.c.b16 %v1799, %v1767
          %v2888 = vpack.c.b16 %v1800, %v1768
          %v2889 = vpack.c.b16 %v1801, %v1769
          %v2890 = vpack.c.b16 %v1802, %v1770
          %v2891 = vpack.c.b16 %v1803, %v1771
          %v2892 = vpack.c.b16 %v1836, %v1804
          %v2893 = vpack.c.b16 %v1837, %v1805
          %v2894 = vpack.c.b16 %v1838, %v1806
          %v2895 = vpack.c.b16 %v1839, %v1807
          %v2896 = vpack.c.b16 %v1840, %v1808
          %v2897 = vpack.c.b16 %v1841, %v1809
          %v2898 = vpack.c.b16 %v1842, %v1810
          %v2899 = vpack.c.b16 %v1843, %v1811
          %v2900 = vpack.c.b16 %v1844, %v1812
          %v2901 = vpack.c.b16 %v1845, %v1813
          %v2902 = vpack.c.b16 %v1846, %v1814
          %v2903 = vpack.c.b16 %v1847, %v1815
          %v2904 = vpack.c.b16 %v1848, %v1816
          %v2905 = vpack.c.b16 %v1849, %v1817
          %v2906 = vpack.c.b16 %v1850, %v1818
          %v2907 = vpack.c.b16 %v1851, %v1819
          %v2908 = vpack.c.b16 %v1852, %v1820
          %v2909 = vpack.c.b16 %v1853, %v1821
          %v2910 = vpack.c.b16 %v1854, %v1822
          %v2911 = vpack.c.b16 %v1855, %v1823
          %v2912 = vpack.c.b16 %v1856, %v1824
          %v2913 = vpack.c.b16 %v1857, %v1825
          %v2914 = vpack.c.b16 %v1858, %v1826
          %v2915 = vpack.c.b16 %v1859, %v1827
          %v2916 = vpack.c.b16 %v1860, %v1828
          %v2917 = vpack.c.b16 %v1861, %v1829
          %v2918 = vpack.c.b16 %v1862, %v1830
          %v2919 = vpack.c.b16 %v1863, %v1831
          %v2920 = vpack.c.b16 %v1864, %v1832
          %v2921 = vpack.c.b16 %v1865, %v1833
          %v2922 = vpack.c.b16 %v1866, %v1834
          %v2923 = vpack.c.b16 %v1867, %v1835
          %v2924 = vpack.c.b16 %v1900, %v1868
          %v2925 = vpack.c.b16 %v1901, %v1869
          %v2926 = vpack.c.b16 %v1902, %v1870
          %v2927 = vpack.c.b16 %v1903, %v1871
          %v2928 = vpack.c.b16 %v1904, %v1872
          %v2929 = vpack.c.b16 %v1905, %v1873
          %v2930 = vpack.c.b16 %v1906, %v1874
          %v2931 = vpack.c.b16 %v1907, %v1875
          %v2932 = vpack.c.b16 %v1908, %v1876
          %v2933 = vpack.c.b16 %v1909, %v1877
          %v2934 = vpack.c.b16 %v1910, %v1878
          %v2935 = vpack.c.b16 %v1911, %v1879
          %v2936 = vpack.c.b16 %v1912, %v1880
          %v2937 = vpack.c.b16 %v1913, %v1881
          %v2938 = vpack.c.b16 %v1914, %v1882
          %v2939 = vpack.c.b16 %v1915, %v1883
          %v2940 = vpack.c.b16 %v1916, %v1884
          %v2941 = vpack.c.b16 %v1917, %v1885
          %v2942 = vpack.c.b16 %v1918, %v1886
          %v2943 = vpack.c.b16 %v1919, %v1887
          %v2944 = vpack.c.b16 %v1920, %v1888
          %v2945 = vpack.c.b16 %v1921, %v1889
          %v2946 = vpack.c.b16 %v1922, %v1890
          %v2947 = vpack.c.b16 %v1923, %v1891
          %v2948 = vpack.c.b16 %v1924, %v1892
          %v2949 = vpack.c.b16 %v1925, %v1893
          %v2950 = vpack.c.b16 %v1926, %v1894
          %v2951 = vpack.c.b16 %v1927, %v1895
          %v2952 = vpack.c.b16 %v1928, %v1896
          %v2953 = vpack.c.b16 %v1929, %v1897
          %v2954 = vpack.c.b16 %v1930, %v1898
          %v2955 = vpack.c.b16 %v1931, %v1899
          %v2956 = vpack.c.b16 %v1964, %v1932
          %v2957 = vpack.c.b16 %v1965, %v1933
          %v2958 = vpack.c.b16 %v1966, %v1934
          %v2959 = vpack.c.b16 %v1967, %v1935
          %v2960 = vpack.c.b16 %v1968, %v1936
          %v2961 = vpack.c.b16 %v1969, %v1937
          %v2962 = vpack.c.b16 %v1970, %v1938
          %v2963 = vpack.c.b16 %v1971, %v1939
          %v2964 = vpack.c.b16 %v1972, %v1940
          %v2965 = vpack.c.b16 %v1973, %v1941
          %v2966 = vpack.c.b16 %v1974, %v1942
          %v2967 = vpack.c.b16 %v1975, %v1943
          %v2968 = vpack.c.b16 %v1976, %v1944
          %v2969 = vpack.c.b16 %v1977, %v1945
          %v2970 = vpack.c.b16 %v1978, %v1946
          %v2971 = vpack.c.b16 %v1979, %v1947
          %v2972 = vpack.c.b16 %v1980, %v1948
          %v2973 = vpack.c.b16 %v1981, %v1949
          %v2974 = vpack.c.b16 %v1982, %v1950
          %v2975 = vpack.c.b16 %v1983, %v1951
          %v2976 = vpack.c.b16 %v1984, %v1952
          %v2977 = vpack.c.b16 %v1985, %v1953
          %v2978 = vpack.c.b16 %v1986, %v1954
          %v2979 = vpack.c.b16 %v1987, %v1955
          %v2980 = vpack.c.b16 %v1988, %v1956
          %v2981 = vpack.c.b16 %v1989, %v1957
          %v2982 = vpack.c.b16 %v1990, %v1958
          %v2983 = vpack.c.b16 %v1991, %v1959
          %v2984 = vpack.c.b16 %v1992, %v1960
          %v2985 = vpack.c.b16 %v1993, %v1961
          %v2986 = vpack.c.b16 %v1994, %v1962
          %v2987 = vpack.c.b16 %v1995, %v1963
          %v2988 = vpack.c.b16 %v2028, %v1996
          %v2989 = vpack.c.b16 %v2029, %v1997
          %v2990 = vpack.c.b16 %v2030, %v1998
          %v2991 = vpack.c.b16 %v2031, %v1999
          %v2992 = vpack.c.b16 %v2032, %v2000
          %v2993 = vpack.c.b16 %v2033, %v2001
          %v2994 = vpack.c.b16 %v2034, %v2002
          %v2995 = vpack.c.b16 %v2035, %v2003
          %v2996 = vpack.c.b16 %v2036, %v2004
          %v2997 = vpack.c.b16 %v2037, %v2005
          %v2998 = vpack.c.b16 %v2038, %v2006
          %v2999 = vpack.c.b16 %v2039, %v2007
          %v3000 = vpack.c.b16 %v2040, %v2008
          %v3001 = vpack.c.b16 %v2041, %v2009
          %v3002 = vpack.c.b16 %v2042, %v2010
          %v3003 = vpack.c.b16 %v2043, %v2011
          %v3004 = vpack.c.b16 %v2044, %v2012
          %v3005 = vpack.c.b16 %v2045, %v2013
          %v3006 = vpack.c.b16 %v2046, %v2014
          %v3007 = vpack.c.b16 %v2047, %v2015
          %v3008 = vpack.c.b16 %v2048, %v2016
          %v3009 = vpack.c.b16 %v2049, %v2017
          %v3010 = vpack.c.b16 %v2050, %v2018
          %v3011 = vpack.c.b16 %v2051, %v2019
          %v3012 = vpack.c.b16 %v2052, %v2020
          %v3013 = vpack.c.b16 %v2053, %v2021
          %v3014 = vpack.c.b16 %v2054, %v2022
          %v3015 = vpack.c.b16 %v2055, %v2023
          %v3016 = vpack.c.b16 %v2056, %v2024
          %v3017 = vpack.c.b16 %v2057, %v2025
          %v3018 = vpack.c.b16 %v2058, %v2026
          %v3019 = vpack.c.b16 %v2059, %v2027
          %v3020 = vpack.c.b16 %v2092, %v2060
          %v3021 = vpack.c.b16 %v2093, %v2061
          %v3022 = vpack.c.b16 %v2094, %v2062
          %v3023 = vpack.c.b16 %v2095, %v2063
          %v3024 = vpack.c.b16 %v2096, %v2064
          %v3025 = vpack.c.b16 %v2097, %v2065
          %v3026 = vpack.c.b16 %v2098, %v2066
          %v3027 = vpack.c.b16 %v2099, %v2067
          %v3028 = vpack.c.b16 %v2100, %v2068
          %v3029 = vpack.c.b16 %v2101, %v2069
          %v3030 = vpack.c.b16 %v2102, %v2070
          %v3031 = vpack.c.b16 %v2103, %v2071
          %v3032 = vpack.c.b16 %v2104, %v2072
          %v3033 = vpack.c.b16 %v2105, %v2073
          %v3034 = vpack.c.b16 %v2106, %v2074
          %v3035 = vpack.c.b16 %v2107, %v2075
          %v3036 = vpack.c.b16 %v2108, %v2076
          %v3037 = vpack.c.b16 %v2109, %v2077
          %v3038 = vpack.c.b16 %v2110, %v2078
          %v3039 = vpack.c.b16 %v2111, %v2079
          %v3040 = vpack.c.b16 %v2112, %v2080
          %v3041 = vpack.c.b16 %v2113, %v2081
          %v3042 = vpack.c.b16 %v2114, %v2082
          %v3043 = vpack.c.b16 %v2115, %v2083
          %v3044 = vpack.c.b16 %v2116, %v2084
          %v3045 = vpack.c.b16 %v2117, %v2085
          %v3046 = vpack.c.b16 %v2118, %v2086
          %v3047 = vpack.c.b16 %v2119, %v2087
          %v3048 = vpack.c.b16 %v2120, %v2088
          %v3049 = vpack.c.b16 %v2121, %v2089
          %v3050 = vpack.c.b16 %v2122, %v2090
          %v3051 = vpack.c.b16 %v2123, %v2091
          %v3052 = vpack.c.b16 %v2156, %v2124
          %v3053 = vpack.c.b16 %v2157, %v2125
          %v3054 = vpack.c.b16 %v2158, %v2126
          %v3055 = vpack.c.b16 %v2159, %v2127
          %v3056 = vpack.c.b16 %v2160, %v2128
          %v3057 = vpack.c.b16 %v2161, %v2129
          %v3058 = vpack.c.b16 %v2162, %v2130
          %v3059 = vpack.c.b16 %v2163, %v2131
          %v3060 = vpack.c.b16 %v2164, %v2132
          %v3061 = vpack.c.b16 %v2165, %v2133
          %v3062 = vpack.c.b16 %v2166, %v2134
          %v3063 = vpack.c.b16 %v2167, %v2135
          %v3064 = vpack.c.b16 %v2168, %v2136
          %v3065 = vpack.c.b16 %v2169, %v2137
          %v3066 = vpack.c.b16 %v2170, %v2138
          %v3067 = vpack.c.b16 %v2171, %v2139
          %v3068 = vpack.c.b16 %v2172, %v2140
          %v3069 = vpack.c.b16 %v2173, %v2141
          %v3070 = vpack.c.b16 %v2174, %v2142
          %v3071 = vpack.c.b16 %v2175, %v2143
          %v3072 = vpack.c.b16 %v2176, %v2144
          %v3073 = vpack.c.b16 %v2177, %v2145
          %v3074 = vpack.c.b16 %v2178, %v2146
          %v3075 = vpack.c.b16 %v2179, %v2147
          %v3076 = vpack.c.b16 %v2180, %v2148
          %v3077 = vpack.c.b16 %v2181, %v2149
          %v3078 = vpack.c.b16 %v2182, %v2150
          %v3079 = vpack.c.b16 %v2183, %v2151
          %v3080 = vpack.c.b16 %v2184, %v2152
          %v3081 = vpack.c.b16 %v2185, %v2153
          %v3082 = vpack.c.b16 %v2186, %v2154
          %v3083 = vpack.c.b16 %v2187, %v2155
          %v3084 = vpack.c.b16 %v2220, %v2188
          %v3085 = vpack.c.b16 %v2221, %v2189
          %v3086 = vpack.c.b16 %v2222, %v2190
          %v3087 = vpack.c.b16 %v2223, %v2191
          %v3088 = vpack.c.b16 %v2224, %v2192
          %v3089 = vpack.c.b16 %v2225, %v2193
          %v3090 = vpack.c.b16 %v2226, %v2194
          %v3091 = vpack.c.b16 %v2227, %v2195
          %v3092 = vpack.c.b16 %v2228, %v2196
          %v3093 = vpack.c.b16 %v2229, %v2197
          %v3094 = vpack.c.b16 %v2230, %v2198
          %v3095 = vpack.c.b16 %v2231, %v2199
          %v3096 = vpack.c.b16 %v2232, %v2200
          %v3097 = vpack.c.b16 %v2233, %v2201
          %v3098 = vpack.c.b16 %v2234, %v2202
          %v3099 = vpack.c.b16 %v2235, %v2203
          %v3100 = vpack.c.b16 %v2236, %v2204
          %v3101 = vpack.c.b16 %v2237, %v2205
          %v3102 = vpack.c.b16 %v2238, %v2206
          %v3103 = vpack.c.b16 %v2239, %v2207
          %v3104 = vpack.c.b16 %v2240, %v2208
          %v3105 = vpack.c.b16 %v2241, %v2209
          %v3106 = vpack.c.b16 %v2242, %v2210
          %v3107 = vpack.c.b16 %v2243, %v2211
          %v3108 = vpack.c.b16 %v2244, %v2212
          %v3109 = vpack.c.b16 %v2245, %v2213
          %v3110 = vpack.c.b16 %v2246, %v2214
          %v3111 = vpack.c.b16 %v2247, %v2215
          %v3112 = vpack.c.b16 %v2248, %v2216
          %v3113 = vpack.c.b16 %v2249, %v2217
          %v3114 = vpack.c.b16 %v2250, %v2218
          %v3115 = vpack.c.b16 %v2251, %v2219
          %v3116 = vpack.c.b16 %v2284, %v2252
          %v3117 = vpack.c.b16 %v2285, %v2253
          %v3118 = vpack.c.b16 %v2286, %v2254
          %v3119 = vpack.c.b16 %v2287, %v2255
          %v3120 = vpack.c.b16 %v2288, %v2256
          %v3121 = vpack.c.b16 %v2289, %v2257
          %v3122 = vpack.c.b16 %v2290, %v2258
          %v3123 = vpack.c.b16 %v2291, %v2259
          %v3124 = vpack.c.b16 %v2292, %v2260
          %v3125 = vpack.c.b16 %v2293, %v2261
          %v3126 = vpack.c.b16 %v2294, %v2262
          %v3127 = vpack.c.b16 %v2295, %v2263
          %v3128 = vpack.c.b16 %v2296, %v2264
          %v3129 = vpack.c.b16 %v2297, %v2265
          %v3130 = vpack.c.b16 %v2298, %v2266
          %v3131 = vpack.c.b16 %v2299, %v2267
          %v3132 = vpack.c.b16 %v2300, %v2268
          %v3133 = vpack.c.b16 %v2301, %v2269
          %v3134 = vpack.c.b16 %v2302, %v2270
          %v3135 = vpack.c.b16 %v2303, %v2271
          %v3136 = vpack.c.b16 %v2304, %v2272
          %v3137 = vpack.c.b16 %v2305, %v2273
          %v3138 = vpack.c.b16 %v2306, %v2274
          %v3139 = vpack.c.b16 %v2307, %v2275
          %v3140 = vpack.c.b16 %v2308, %v2276
          %v3141 = vpack.c.b16 %v2309, %v2277
          %v3142 = vpack.c.b16 %v2310, %v2278
          %v3143 = vpack.c.b16 %v2311, %v2279
          %v3144 = vpack.c.b16 %v2312, %v2280
          %v3145 = vpack.c.b16 %v2313, %v2281
          %v3146 = vpack.c.b16 %v2314, %v2282
          %v3147 = vpack.c.b16 %v2315, %v2283
          %v3148 = vpack.c.b16 %v2348, %v2316
          %v3149 = vpack.c.b16 %v2349, %v2317
          %v3150 = vpack.c.b16 %v2350, %v2318
          %v3151 = vpack.c.b16 %v2351, %v2319
          %v3152 = vpack.c.b16 %v2352, %v2320
          %v3153 = vpack.c.b16 %v2353, %v2321
          %v3154 = vpack.c.b16 %v2354, %v2322
          %v3155 = vpack.c.b16 %v2355, %v2323
          %v3156 = vpack.c.b16 %v2356, %v2324
          %v3157 = vpack.c.b16 %v2357, %v2325
          %v3158 = vpack.c.b16 %v2358, %v2326
          %v3159 = vpack.c.b16 %v2359, %v2327
          %v3160 = vpack.c.b16 %v2360, %v2328
          %v3161 = vpack.c.b16 %v2361, %v2329
          %v3162 = vpack.c.b16 %v2362, %v2330
          %v3163 = vpack.c.b16 %v2363, %v2331
          %v3164 = vpack.c.b16 %v2364, %v2332
          %v3165 = vpack.c.b16 %v2365, %v2333
          %v3166 = vpack.c.b16 %v2366, %v2334
          %v3167 = vpack.c.b16 %v2367, %v2335
          %v3168 = vpack.c.b16 %v2368, %v2336
          %v3169 = vpack.c.b16 %v2369, %v2337
          %v3170 = vpack.c.b16 %v2370, %v2338
          %v3171 = vpack.c.b16 %v2371, %v2339
          %v3172 = vpack.c.b16 %v2372, %v2340
          %v3173 = vpack.c.b16 %v2373, %v2341
          %v3174 = vpack.c.b16 %v2374, %v2342
          %v3175 = vpack.c.b16 %v2375, %v2343
          %v3176 = vpack.c.b16 %v2376, %v2344
          %v3177 = vpack.c.b16 %v2377, %v2345
          %v3178 = vpack.c.b16 %v2378, %v2346
          %v3179 = vpack.c.b16 %v2379, %v2347
          %v3180 = vpack.c.b16 %v2412, %v2380
          %v3181 = vpack.c.b16 %v2413, %v2381
          %v3182 = vpack.c.b16 %v2414, %v2382
          %v3183 = vpack.c.b16 %v2415, %v2383
          %v3184 = vpack.c.b16 %v2416, %v2384
          %v3185 = vpack.c.b16 %v2417, %v2385
          %v3186 = vpack.c.b16 %v2418, %v2386
          %v3187 = vpack.c.b16 %v2419, %v2387
          %v3188 = vpack.c.b16 %v2420, %v2388
          %v3189 = vpack.c.b16 %v2421, %v2389
          %v3190 = vpack.c.b16 %v2422, %v2390
          %v3191 = vpack.c.b16 %v2423, %v2391
          %v3192 = vpack.c.b16 %v2424, %v2392
          %v3193 = vpack.c.b16 %v2425, %v2393
          %v3194 = vpack.c.b16 %v2426, %v2394
          %v3195 = vpack.c.b16 %v2427, %v2395
          %v3196 = vpack.c.b16 %v2428, %v2396
          %v3197 = vpack.c.b16 %v2429, %v2397
          %v3198 = vpack.c.b16 %v2430, %v2398
          %v3199 = vpack.c.b16 %v2431, %v2399
          %v3200 = vpack.c.b16 %v2432, %v2400
          %v3201 = vpack.c.b16 %v2433, %v2401
          %v3202 = vpack.c.b16 %v2434, %v2402
          %v3203 = vpack.c.b16 %v2435, %v2403
          %v3204 = vpack.c.b16 %v2436, %v2404
          %v3205 = vpack.c.b16 %v2437, %v2405
          %v3206 = vpack.c.b16 %v2438, %v2406
          %v3207 = vpack.c.b16 %v2439, %v2407
          %v3208 = vpack.c.b16 %v2440, %v2408
          %v3209 = vpack.c.b16 %v2441, %v2409
          %v3210 = vpack.c.b16 %v2442, %v2410
          %v3211 = vpack.c.b16 %v2443, %v2411
          %v3212 = vpack.c.b16 %v2476, %v2444
          %v3213 = vpack.c.b16 %v2477, %v2445
          %v3214 = vpack.c.b16 %v2478, %v2446
          %v3215 = vpack.c.b16 %v2479, %v2447
          %v3216 = vpack.c.b16 %v2480, %v2448
          %v3217 = vpack.c.b16 %v2481, %v2449
          %v3218 = vpack.c.b16 %v2482, %v2450
          %v3219 = vpack.c.b16 %v2483, %v2451
          %v3220 = vpack.c.b16 %v2484, %v2452
          %v3221 = vpack.c.b16 %v2485, %v2453
          %v3222 = vpack.c.b16 %v2486, %v2454
          %v3223 = vpack.c.b16 %v2487, %v2455
          %v3224 = vpack.c.b16 %v2488, %v2456
          %v3225 = vpack.c.b16 %v2489, %v2457
          %v3226 = vpack.c.b16 %v2490, %v2458
          %v3227 = vpack.c.b16 %v2491, %v2459
          %v3228 = vpack.c.b16 %v2492, %v2460
          %v3229 = vpack.c.b16 %v2493, %v2461
          %v3230 = vpack.c.b16 %v2494, %v2462
          %v3231 = vpack.c.b16 %v2495, %v2463
          %v3232 = vpack.c.b16 %v2496, %v2464
          %v3233 = vpack.c.b16 %v2497, %v2465
          %v3234 = vpack.c.b16 %v2498, %v2466
          %v3235 = vpack.c.b16 %v2499, %v2467
          %v3236 = vpack.c.b16 %v2500, %v2468
          %v3237 = vpack.c.b16 %v2501, %v2469
          %v3238 = vpack.c.b16 %v2502, %v2470
          %v3239 = vpack.c.b16 %v2503, %v2471
          %v3240 = vpack.c.b16 %v2504, %v2472
          %v3241 = vpack.c.b16 %v2505, %v2473
          %v3242 = vpack.c.b16 %v2506, %v2474
          %v3243 = vpack.c.b16 %v2507, %v2475
          %v3244 = vpack.c.b16 %v2540, %v2508
          %v3245 = vpack.c.b16 %v2541, %v2509
          %v3246 = vpack.c.b16 %v2542, %v2510
          %v3247 = vpack.c.b16 %v2543, %v2511
          %v3248 = vpack.c.b16 %v2544, %v2512
          %v3249 = vpack.c.b16 %v2545, %v2513
          %v3250 = vpack.c.b16 %v2546, %v2514
          %v3251 = vpack.c.b16 %v2547, %v2515
          %v3252 = vpack.c.b16 %v2548, %v2516
          %v3253 = vpack.c.b16 %v2549, %v2517
          %v3254 = vpack.c.b16 %v2550, %v2518
          %v3255 = vpack.c.b16 %v2551, %v2519
          %v3256 = vpack.c.b16 %v2552, %v2520
          %v3257 = vpack.c.b16 %v2553, %v2521
          %v3258 = vpack.c.b16 %v2554, %v2522
          %v3259 = vpack.c.b16 %v2555, %v2523
          %v3260 = vpack.c.b16 %v2556, %v2524
          %v3261 = vpack.c.b16 %v2557, %v2525
          %v3262 = vpack.c.b16 %v2558, %v2526
          %v3263 = vpack.c.b16 %v2559, %v2527
          %v3264 = vpack.c.b16 %v2560, %v2528
          %v3265 = vpack.c.b16 %v2561, %v2529
          %v3266 = vpack.c.b16 %v2562, %v2530
          %v3267 = vpack.c.b16 %v2563, %v2531
          %v3268 = vpack.c.b16 %v2564, %v2532
          %v3269 = vpack.c.b16 %v2565, %v2533
          %v3270 = vpack.c.b16 %v2566, %v2534
          %v3271 = vpack.c.b16 %v2567, %v2535
          %v3272 = vpack.c.b16 %v2568, %v2536
          %v3273 = vpack.c.b16 %v2569, %v2537
          %v3274 = vpack.c.b16 %v2570, %v2538
          %v3275 = vpack.c.b16 %v2571, %v2539
          %v3276 = vpack.c.b16 %v2604, %v2572
          %v3277 = vpack.c.b16 %v2605, %v2573
          %v3278 = vpack.c.b16 %v2606, %v2574
          %v3279 = vpack.c.b16 %v2607, %v2575
          %v3280 = vpack.c.b16 %v2608, %v2576
          %v3281 = vpack.c.b16 %v2609, %v2577
          %v3282 = vpack.c.b16 %v2610, %v2578
          %v3283 = vpack.c.b16 %v2611, %v2579
          %v3284 = vpack.c.b16 %v2612, %v2580
          %v3285 = vpack.c.b16 %v2613, %v2581
          %v3286 = vpack.c.b16 %v2614, %v2582
          %v3287 = vpack.c.b16 %v2615, %v2583
          %v3288 = vpack.c.b16 %v2616, %v2584
          %v3289 = vpack.c.b16 %v2617, %v2585
          %v3290 = vpack.c.b16 %v2618, %v2586
          %v3291 = vpack.c.b16 %v2619, %v2587
          %v3292 = vpack.c.b16 %v2620, %v2588
          %v3293 = vpack.c.b16 %v2621, %v2589
          %v3294 = vpack.c.b16 %v2622, %v2590
          %v3295 = vpack.c.b16 %v2623, %v2591
          %v3296 = vpack.c.b16 %v2624, %v2592
          %v3297 = vpack.c.b16 %v2625, %v2593
          %v3298 = vpack.c.b16 %v2626, %v2594
          %v3299 = vpack.c.b16 %v2627, %v2595
          %v3300 = vpack.c.b16 %v2628, %v2596
          %v3301 = vpack.c.b16 %v2629, %v2597
          %v3302 = vpack.c.b16 %v2630, %v2598
          %v3303 = vpack.c.b16 %v2631, %v2599
          %v3304 = vpack.c.b16 %v2632, %v2600
          %v3305 = vpack.c.b16 %v2633, %v2601
          %v3306 = vpack.c.b16 %v2634, %v2602
          %v3307 = vpack.c.b16 %v2635, %v2603
          %v3308 = vpack.c.b16 %v2668, %v2636
          %v3309 = vpack.c.b16 %v2669, %v2637
          %v3310 = vpack.c.b16 %v2670, %v2638
          %v3311 = vpack.c.b16 %v2671, %v2639
          %v3312 = vpack.c.b16 %v2672, %v2640
          %v3313 = vpack.c.b16 %v2673, %v2641
          %v3314 = vpack.c.b16 %v2674, %v2642
          %v3315 = vpack.c.b16 %v2675, %v2643
          %v3316 = vpack.c.b16 %v2676, %v2644
          %v3317 = vpack.c.b16 %v2677, %v2645
          %v3318 = vpack.c.b16 %v2678, %v2646
          %v3319 = vpack.c.b16 %v2679, %v2647
          %v3320 = vpack.c.b16 %v2680, %v2648
          %v3321 = vpack.c.b16 %v2681, %v2649
          %v3322 = vpack.c.b16 %v2682, %v2650
          %v3323 = vpack.c.b16 %v2683, %v2651
          %v3324 = vpack.c.b16 %v2684, %v2652
          %v3325 = vpack.c.b16 %v2685, %v2653
          %v3326 = vpack.c.b16 %v2686, %v2654
          %v3327 = vpack.c.b16 %v2687, %v2655
          %v3328 = vpack.c.b16 %v2688, %v2656
          %v3329 = vpack.c.b16 %v2689, %v2657
          %v3330 = vpack.c.b16 %v2690, %v2658
          %v3331 = vpack.c.b16 %v2691, %v2659
          %v3332 = vpack.c.b16 %v2692, %v2660
          %v3333 = vpack.c.b16 %v2693, %v2661
          %v3334 = vpack.c.b16 %v2694, %v2662
          %v3335 = vpack.c.b16 %v2695, %v2663
          %v3336 = vpack.c.b16 %v2696, %v2664
          %v3337 = vpack.c.b16 %v2697, %v2665
          %v3338 = vpack.c.b16 %v2698, %v2666
          %v3339 = vpack.c.b16 %v2699, %v2667
          %v3340 = vpack.c.b16 %v2732, %v2700
          %v3341 = vpack.c.b16 %v2733, %v2701
          %v3342 = vpack.c.b16 %v2734, %v2702
          %v3343 = vpack.c.b16 %v2735, %v2703
          %v3344 = vpack.c.b16 %v2736, %v2704
          %v3345 = vpack.c.b16 %v2737, %v2705
          %v3346 = vpack.c.b16 %v2738, %v2706
          %v3347 = vpack.c.b16 %v2739, %v2707
          %v3348 = vpack.c.b16 %v2740, %v2708
          %v3349 = vpack.c.b16 %v2741, %v2709
          %v3350 = vpack.c.b16 %v2742, %v2710
          %v3351 = vpack.c.b16 %v2743, %v2711
          %v3352 = vpack.c.b16 %v2744, %v2712
          %v3353 = vpack.c.b16 %v2745, %v2713
          %v3354 = vpack.c.b16 %v2746, %v2714
          %v3355 = vpack.c.b16 %v2747, %v2715
          %v3356 = vpack.c.b16 %v2748, %v2716
          %v3357 = vpack.c.b16 %v2749, %v2717
          %v3358 = vpack.c.b16 %v2750, %v2718
          %v3359 = vpack.c.b16 %v2751, %v2719
          %v3360 = vpack.c.b16 %v2752, %v2720
          %v3361 = vpack.c.b16 %v2753, %v2721
          %v3362 = vpack.c.b16 %v2754, %v2722
          %v3363 = vpack.c.b16 %v2755, %v2723
          %v3364 = vpack.c.b16 %v2756, %v2724
          %v3365 = vpack.c.b16 %v2757, %v2725
          %v3366 = vpack.c.b16 %v2758, %v2726
          %v3367 = vpack.c.b16 %v2759, %v2727
          %v3368 = vpack.c.b16 %v2760, %v2728
          %v3369 = vpack.c.b16 %v2761, %v2729
          %v3370 = vpack.c.b16 %v2762, %v2730
          %v3371 = vpack.c.b16 %v2763, %v2731
          %v3372 = vpack.c.b16 %v2796, %v2764
          %v3373 = vpack.c.b16 %v2797, %v2765
          %v3374 = vpack.c.b16 %v2798, %v2766
          %v3375 = vpack.c.b16 %v2799, %v2767
          %v3376 = vpack.c.b16 %v2800, %v2768
          %v3377 = vpack.c.b16 %v2801, %v2769
          %v3378 = vpack.c.b16 %v2802, %v2770
          %v3379 = vpack.c.b16 %v2803, %v2771
          %v3380 = vpack.c.b16 %v2804, %v2772
          %v3381 = vpack.c.b16 %v2805, %v2773
          %v3382 = vpack.c.b16 %v2806, %v2774
          %v3383 = vpack.c.b16 %v2807, %v2775
          %v3384 = vpack.c.b16 %v2808, %v2776
          %v3385 = vpack.c.b16 %v2809, %v2777
          %v3386 = vpack.c.b16 %v2810, %v2778
          %v3387 = vpack.c.b16 %v2811, %v2779
          %v3388 = vpack.c.b16 %v2812, %v2780
          %v3389 = vpack.c.b16 %v2813, %v2781
          %v3390 = vpack.c.b16 %v2814, %v2782
          %v3391 = vpack.c.b16 %v2815, %v2783
          %v3392 = vpack.c.b16 %v2816, %v2784
          %v3393 = vpack.c.b16 %v2817, %v2785
          %v3394 = vpack.c.b16 %v2818, %v2786
          %v3395 = vpack.c.b16 %v2819, %v2787
          %v3396 = vpack.c.b16 %v2820, %v2788
          %v3397 = vpack.c.b16 %v2821, %v2789
          %v3398 = vpack.c.b16 %v2822, %v2790
          %v3399 = vpack.c.b16 %v2823, %v2791
          %v3400 = vpack.c.b16 %v2824, %v2792
          %v3401 = vpack.c.b16 %v2825, %v2793
          %v3402 = vpack.c.b16 %v2826, %v2794
          %v3403 = vpack.c.b16 %v2827, %v2795
          %vm3980 = vcmask 261120
          %v3982 = vsel %vm3980, %v1097, 0
          %3984 = vmatprep.subr.bf16.mxu0 %v2829
          %3985 = vmatpush1.bf16.msra.mxu0 %v2828
          %3986 = vmatprep.subr.bf16.mxu0 %v2861
          %3987 = vmatpush1.bf16.msra.mxu0 %v2860
          %3988 = vmatprep.subr.bf16.mxu0 %v2893
          %3989 = vmatpush1.bf16.msra.mxu0 %v2892
          %3990 = vmatprep.subr.bf16.mxu0 %v2925
          %3991 = vmatpush1.bf16.msra.mxu0 %v2924
          %3992 = vmatprep.subr.bf16.mxu0 %v2957
          %3993 = vmatpush1.bf16.msra.mxu0 %v2956
          %3994 = vmatprep.subr.bf16.mxu0 %v2989
          %3995 = vmatpush1.bf16.msra.mxu0 %v2988
          %3996 = vmatprep.subr.bf16.mxu0 %v3021
          %3997 = vmatpush1.bf16.msra.mxu0 %v3020
          %3998 = vmatprep.subr.bf16.mxu0 %v3053
          %3999 = vmatpush1.bf16.msra.mxu0 %v3052
          %4000 = vmatprep.subr.bf16.mxu0 %v3085
          %4001 = vmatpush1.bf16.msra.mxu0 %v3084
          %4002 = vmatprep.subr.bf16.mxu0 %v3117
          %4003 = vmatpush1.bf16.msra.mxu0 %v3116
          %4004 = vmatprep.subr.bf16.mxu0 %v3149
          %4005 = vmatpush1.bf16.msra.mxu0 %v3148
          %4006 = vmatprep.subr.bf16.mxu0 %v3181
          %4007 = vmatpush1.bf16.msra.mxu0 %v3180
          %4008 = vmatprep.subr.bf16.mxu0 %v3213
          %4009 = vmatpush1.bf16.msra.mxu0 %v3212
          %4010 = vmatprep.subr.bf16.mxu0 %v3245
          %4011 = vmatpush1.bf16.msra.mxu0 %v3244
          %4012 = vmatprep.subr.bf16.mxu0 %v3277
          %4013 = vmatpush1.bf16.msra.mxu0 %v3276
          %4014 = vmatprep.subr.bf16.mxu0 %v3309
          %4015 = vmatpush1.bf16.msra.mxu0 %v3308
          %4016 = vmatprep.mubr.bf16.mxu0 %v1096
          %4017 = vmatmul.mubr.bf16.gmra.mrb[0].mxu0 %v1095
          %v4018 = vpop.f32.mrb[0].mxu0
          %v4019 = vadd.f32 %v933, %v4018
          %v4020 = vpop.f32.mrb[0].mxu0
          %v4021 = vadd.f32 %v937, %v4020
          %v4022 = vpop.f32.mrb[0].mxu0
          %v4023 = vpop.f32.mrb[0].mxu0
          %4024 = vdwg.mxu0
          %4025 = vmatprep.subr.bf16.mxu0 %v3341
          %4026 = vmatpush1.bf16.msra.mxu0 %v3340
          %4027 = vmatprep.subr.bf16.mxu0 %v3373
          %4028 = vmatpush1.bf16.msra.mxu0 %v3372
          %4029 = vmatprep.subr.bf16.mxu0 0
          %4030 = vmatpush1.bf16.msra.mxu0 0
          %4031 = vmatprep.subr.bf16.mxu0 0
          %4032 = vmatpush1.bf16.msra.mxu0 0
          %4033 = vmatprep.subr.bf16.mxu0 0
          %4034 = vmatpush1.bf16.msra.mxu0 0
          %4035 = vmatprep.subr.bf16.mxu0 0
          %4036 = vmatpush1.bf16.msra.mxu0 0
          %4037 = vmatprep.subr.bf16.mxu0 0
          %4038 = vmatpush1.bf16.msra.mxu0 0
          %4039 = vmatprep.subr.bf16.mxu0 0
          %4040 = vmatpush1.bf16.msra.mxu0 0
          %4041 = vmatprep.subr.bf16.mxu0 0
          %4042 = vmatpush1.bf16.msra.mxu0 0
          %4043 = vmatprep.subr.bf16.mxu0 0
          %4044 = vmatpush1.bf16.msra.mxu0 0
          %4045 = vmatprep.subr.bf16.mxu0 0
          %4046 = vmatpush1.bf16.msra.mxu0 0
          %4047 = vmatprep.subr.bf16.mxu0 0
          %4048 = vmatpush1.bf16.msra.mxu0 0
          %4049 = vmatprep.subr.bf16.mxu0 0
          %4050 = vmatpush1.bf16.msra.mxu0 0
          %4051 = vmatprep.subr.bf16.mxu0 0
          %4052 = vmatpush1.bf16.msra.mxu0 0
          %4053 = vmatprep.subr.bf16.mxu0 0
          %4054 = vmatpush1.bf16.msra.mxu0 0
          %4055 = vmatprep.subr.bf16.mxu0 0
          %4056 = vmatpush1.bf16.msra.mxu0 0
          %4057 = vmatprep.mubr.bf16.mxu0 0
          %4058 = vmatmul.mubr.bf16.gmra.mrb[0].mxu0 %v3982
          %v4059 = vpop.f32.mrb[0].mxu0
          %v4060 = vadd.f32 %v4019, %v4059
          %v4061 = vpop.f32.mrb[0].mxu0
          %v4062 = vadd.f32 %v4021, %v4061
          %v4063 = vpop.f32.mrb[0].mxu0
          %v4064 = vpop.f32.mrb[0].mxu0
          %4065 = vdwg.mxu0
          %4066 = vmatprep.subr.bf16.mxu0 %v2831
          %4067 = vmatpush1.bf16.msra.mxu0 %v2830
          %4068 = vmatprep.subr.bf16.mxu0 %v2863
          %4069 = vmatpush1.bf16.msra.mxu0 %v2862
          %4070 = vmatprep.subr.bf16.mxu0 %v2895
          %4071 = vmatpush1.bf16.msra.mxu0 %v2894
          %4072 = vmatprep.subr.bf16.mxu0 %v2927
          %4073 = vmatpush1.bf16.msra.mxu0 %v2926
          %4074 = vmatprep.subr.bf16.mxu0 %v2959
          %4075 = vmatpush1.bf16.msra.mxu0 %v2958
          %4076 = vmatprep.subr.bf16.mxu0 %v2991
          %4077 = vmatpush1.bf16.msra.mxu0 %v2990
          %4078 = vmatprep.subr.bf16.mxu0 %v3023
          %4079 = vmatpush1.bf16.msra.mxu0 %v3022
          %4080 = vmatprep.subr.bf16.mxu0 %v3055
          %4081 = vmatpush1.bf16.msra.mxu0 %v3054
          %4082 = vmatprep.subr.bf16.mxu0 %v3087
          %4083 = vmatpush1.bf16.msra.mxu0 %v3086
          %4084 = vmatprep.subr.bf16.mxu0 %v3119
          %4085 = vmatpush1.bf16.msra.mxu0 %v3118
          %4086 = vmatprep.subr.bf16.mxu0 %v3151
          %4087 = vmatpush1.bf16.msra.mxu0 %v3150
          %4088 = vmatprep.subr.bf16.mxu0 %v3183
          %4089 = vmatpush1.bf16.msra.mxu0 %v3182
          %4090 = vmatprep.subr.bf16.mxu0 %v3215
          %4091 = vmatpush1.bf16.msra.mxu0 %v3214
          %4092 = vmatprep.subr.bf16.mxu0 %v3247
          %4093 = vmatpush1.bf16.msra.mxu0 %v3246
          %4094 = vmatprep.subr.bf16.mxu0 %v3279
          %4095 = vmatpush1.bf16.msra.mxu0 %v3278
          %4096 = vmatprep.subr.bf16.mxu0 %v3311
          %4097 = vmatpush1.bf16.msra.mxu0 %v3310
          %4098 = vmatprep.mubr.bf16.mxu0 %v1096
          %4099 = vmatmul.mubr.bf16.gmra.mrb[0].mxu0 %v1095
          %v4100 = vpop.f32.mrb[0].mxu0
          %v4101 = vadd.f32 %v941, %v4100
          %v4102 = vpop.f32.mrb[0].mxu0
          %v4103 = vadd.f32 %v945, %v4102
          %v4104 = vpop.f32.mrb[0].mxu0
          %v4105 = vpop.f32.mrb[0].mxu0
          %4106 = vdwg.mxu0
          %4107 = vmatprep.subr.bf16.mxu0 %v3343
          %4108 = vmatpush1.bf16.msra.mxu0 %v3342
          %4109 = vmatprep.subr.bf16.mxu0 %v3375
          %4110 = vmatpush1.bf16.msra.mxu0 %v3374
          %4111 = vmatprep.subr.bf16.mxu0 0
          %4112 = vmatpush1.bf16.msra.mxu0 0
          %4113 = vmatprep.subr.bf16.mxu0 0
          %4114 = vmatpush1.bf16.msra.mxu0 0
          %4115 = vmatprep.subr.bf16.mxu0 0
          %4116 = vmatpush1.bf16.msra.mxu0 0
          %4117 = vmatprep.subr.bf16.mxu0 0
          %4118 = vmatpush1.bf16.msra.mxu0 0
          %4119 = vmatprep.subr.bf16.mxu0 0
          %4120 = vmatpush1.bf16.msra.mxu0 0
          %4121 = vmatprep.subr.bf16.mxu0 0
          %4122 = vmatpush1.bf16.msra.mxu0 0
          %4123 = vmatprep.subr.bf16.mxu0 0
          %4124 = vmatpush1.bf16.msra.mxu0 0
          %4125 = vmatprep.subr.bf16.mxu0 0
          %4126 = vmatpush1.bf16.msra.mxu0 0
          %4127 = vmatprep.subr.bf16.mxu0 0
          %4128 = vmatpush1.bf16.msra.mxu0 0
          %4129 = vmatprep.subr.bf16.mxu0 0
          %4130 = vmatpush1.bf16.msra.mxu0 0
          %4131 = vmatprep.subr.bf16.mxu0 0
          %4132 = vmatpush1.bf16.msra.mxu0 0
          %4133 = vmatprep.subr.bf16.mxu0 0
          %4134 = vmatpush1.bf16.msra.mxu0 0
          %4135 = vmatprep.subr.bf16.mxu0 0
          %4136 = vmatpush1.bf16.msra.mxu0 0
          %4137 = vmatprep.subr.bf16.mxu0 0
          %4138 = vmatpush1.bf16.msra.mxu0 0
          %4139 = vmatprep.mubr.bf16.mxu0 0
          %4140 = vmatmul.mubr.bf16.gmra.mrb[0].mxu0 %v3982
          %v4141 = vpop.f32.mrb[0].mxu0
          %v4142 = vadd.f32 %v4101, %v4141
          %v4143 = vpop.f32.mrb[0].mxu0
          %v4144 = vadd.f32 %v4103, %v4143
          %v4145 = vpop.f32.mrb[0].mxu0
          %v4146 = vpop.f32.mrb[0].mxu0
          %4147 = vdwg.mxu0
          %4148 = vmatprep.subr.bf16.mxu0 %v2833
          %4149 = vmatpush1.bf16.msra.mxu0 %v2832
          %4150 = vmatprep.subr.bf16.mxu0 %v2865
          %4151 = vmatpush1.bf16.msra.mxu0 %v2864
          %4152 = vmatprep.subr.bf16.mxu0 %v2897
          %4153 = vmatpush1.bf16.msra.mxu0 %v2896
          %4154 = vmatprep.subr.bf16.mxu0 %v2929
          %4155 = vmatpush1.bf16.msra.mxu0 %v2928
          %4156 = vmatprep.subr.bf16.mxu0 %v2961
          %4157 = vmatpush1.bf16.msra.mxu0 %v2960
          %4158 = vmatprep.subr.bf16.mxu0 %v2993
          %4159 = vmatpush1.bf16.msra.mxu0 %v2992
          %4160 = vmatprep.subr.bf16.mxu0 %v3025
          %4161 = vmatpush1.bf16.msra.mxu0 %v3024
          %4162 = vmatprep.subr.bf16.mxu0 %v3057
          %4163 = vmatpush1.bf16.msra.mxu0 %v3056
          %4164 = vmatprep.subr.bf16.mxu0 %v3089
          %4165 = vmatpush1.bf16.msra.mxu0 %v3088
          %4166 = vmatprep.subr.bf16.mxu0 %v3121
          %4167 = vmatpush1.bf16.msra.mxu0 %v3120
          %4168 = vmatprep.subr.bf16.mxu0 %v3153
          %4169 = vmatpush1.bf16.msra.mxu0 %v3152
          %4170 = vmatprep.subr.bf16.mxu0 %v3185
          %4171 = vmatpush1.bf16.msra.mxu0 %v3184
          %4172 = vmatprep.subr.bf16.mxu0 %v3217
          %4173 = vmatpush1.bf16.msra.mxu0 %v3216
          %4174 = vmatprep.subr.bf16.mxu0 %v3249
          %4175 = vmatpush1.bf16.msra.mxu0 %v3248
          %4176 = vmatprep.subr.bf16.mxu0 %v3281
          %4177 = vmatpush1.bf16.msra.mxu0 %v3280
          %4178 = vmatprep.subr.bf16.mxu0 %v3313
          %4179 = vmatpush1.bf16.msra.mxu0 %v3312
          %4180 = vmatprep.mubr.bf16.mxu0 %v1096
          %4181 = vmatmul.mubr.bf16.gmra.mrb[0].mxu0 %v1095
          %v4182 = vpop.f32.mrb[0].mxu0
          %v4183 = vadd.f32 %v949, %v4182
          %v4184 = vpop.f32.mrb[0].mxu0
          %v4185 = vadd.f32 %v953, %v4184
          %v4186 = vpop.f32.mrb[0].mxu0
          %v4187 = vpop.f32.mrb[0].mxu0
          %4188 = vdwg.mxu0
          %4189 = vmatprep.subr.bf16.mxu0 %v3345
          %4190 = vmatpush1.bf16.msra.mxu0 %v3344
          %4191 = vmatprep.subr.bf16.mxu0 %v3377
          %4192 = vmatpush1.bf16.msra.mxu0 %v3376
          %4193 = vmatprep.subr.bf16.mxu0 0
          %4194 = vmatpush1.bf16.msra.mxu0 0
          %4195 = vmatprep.subr.bf16.mxu0 0
          %4196 = vmatpush1.bf16.msra.mxu0 0
          %4197 = vmatprep.subr.bf16.mxu0 0
          %4198 = vmatpush1.bf16.msra.mxu0 0
          %4199 = vmatprep.subr.bf16.mxu0 0
          %4200 = vmatpush1.bf16.msra.mxu0 0
          %4201 = vmatprep.subr.bf16.mxu0 0
          %4202 = vmatpush1.bf16.msra.mxu0 0
          %4203 = vmatprep.subr.bf16.mxu0 0
          %4204 = vmatpush1.bf16.msra.mxu0 0
          %4205 = vmatprep.subr.bf16.mxu0 0
          %4206 = vmatpush1.bf16.msra.mxu0 0
          %4207 = vmatprep.subr.bf16.mxu0 0
          %4208 = vmatpush1.bf16.msra.mxu0 0
          %4209 = vmatprep.subr.bf16.mxu0 0
          %4210 = vmatpush1.bf16.msra.mxu0 0
          %4211 = vmatprep.subr.bf16.mxu0 0
          %4212 = vmatpush1.bf16.msra.mxu0 0
          %4213 = vmatprep.subr.bf16.mxu0 0
          %4214 = vmatpush1.bf16.msra.mxu0 0
          %4215 = vmatprep.subr.bf16.mxu0 0
          %4216 = vmatpush1.bf16.msra.mxu0 0
          %4217 = vmatprep.subr.bf16.mxu0 0
          %4218 = vmatpush1.bf16.msra.mxu0 0
          %4219 = vmatprep.subr.bf16.mxu0 0
          %4220 = vmatpush1.bf16.msra.mxu0 0
          %4221 = vmatprep.mubr.bf16.mxu0 0
          %4222 = vmatmul.mubr.bf16.gmra.mrb[0].mxu0 %v3982
          %v4223 = vpop.f32.mrb[0].mxu0
          %v4224 = vadd.f32 %v4183, %v4223
          %v4225 = vpop.f32.mrb[0].mxu0
          %v4226 = vadd.f32 %v4185, %v4225
          %v4227 = vpop.f32.mrb[0].mxu0
          %v4228 = vpop.f32.mrb[0].mxu0
          %4229 = vdwg.mxu0
          %4230 = vmatprep.subr.bf16.mxu0 %v2835
          %4231 = vmatpush1.bf16.msra.mxu0 %v2834
          %4232 = vmatprep.subr.bf16.mxu0 %v2867
          %4233 = vmatpush1.bf16.msra.mxu0 %v2866
          %4234 = vmatprep.subr.bf16.mxu0 %v2899
          %4235 = vmatpush1.bf16.msra.mxu0 %v2898
          %4236 = vmatprep.subr.bf16.mxu0 %v2931
          %4237 = vmatpush1.bf16.msra.mxu0 %v2930
          %4238 = vmatprep.subr.bf16.mxu0 %v2963
          %4239 = vmatpush1.bf16.msra.mxu0 %v2962
          %4240 = vmatprep.subr.bf16.mxu0 %v2995
          %4241 = vmatpush1.bf16.msra.mxu0 %v2994
          %4242 = vmatprep.subr.bf16.mxu0 %v3027
          %4243 = vmatpush1.bf16.msra.mxu0 %v3026
          %4244 = vmatprep.subr.bf16.mxu0 %v3059
          %4245 = vmatpush1.bf16.msra.mxu0 %v3058
          %4246 = vmatprep.subr.bf16.mxu0 %v3091
          %4247 = vmatpush1.bf16.msra.mxu0 %v3090
          %4248 = vmatprep.subr.bf16.mxu0 %v3123
          %4249 = vmatpush1.bf16.msra.mxu0 %v3122
          %4250 = vmatprep.subr.bf16.mxu0 %v3155
          %4251 = vmatpush1.bf16.msra.mxu0 %v3154
          %4252 = vmatprep.subr.bf16.mxu0 %v3187
          %4253 = vmatpush1.bf16.msra.mxu0 %v3186
          %4254 = vmatprep.subr.bf16.mxu0 %v3219
          %4255 = vmatpush1.bf16.msra.mxu0 %v3218
          %4256 = vmatprep.subr.bf16.mxu0 %v3251
          %4257 = vmatpush1.bf16.msra.mxu0 %v3250
          %4258 = vmatprep.subr.bf16.mxu0 %v3283
          %4259 = vmatpush1.bf16.msra.mxu0 %v3282
          %4260 = vmatprep.subr.bf16.mxu0 %v3315
          %4261 = vmatpush1.bf16.msra.mxu0 %v3314
          %4262 = vmatprep.mubr.bf16.mxu0 %v1096
          %4263 = vmatmul.mubr.bf16.gmra.mrb[0].mxu0 %v1095
          %v4264 = vpop.f32.mrb[0].mxu0
          %v4265 = vadd.f32 %v957, %v4264
          %v4266 = vpop.f32.mrb[0].mxu0
          %v4267 = vadd.f32 %v961, %v4266
          %v4268 = vpop.f32.mrb[0].mxu0
          %v4269 = vpop.f32.mrb[0].mxu0
          %4270 = vdwg.mxu0
          %4271 = vmatprep.subr.bf16.mxu0 %v3347
          %4272 = vmatpush1.bf16.msra.mxu0 %v3346
          %4273 = vmatprep.subr.bf16.mxu0 %v3379
          %4274 = vmatpush1.bf16.msra.mxu0 %v3378
          %4275 = vmatprep.subr.bf16.mxu0 0
          %4276 = vmatpush1.bf16.msra.mxu0 0
          %4277 = vmatprep.subr.bf16.mxu0 0
          %4278 = vmatpush1.bf16.msra.mxu0 0
          %4279 = vmatprep.subr.bf16.mxu0 0
          %4280 = vmatpush1.bf16.msra.mxu0 0
          %4281 = vmatprep.subr.bf16.mxu0 0
          %4282 = vmatpush1.bf16.msra.mxu0 0
          %4283 = vmatprep.subr.bf16.mxu0 0
          %4284 = vmatpush1.bf16.msra.mxu0 0
          %4285 = vmatprep.subr.bf16.mxu0 0
          %4286 = vmatpush1.bf16.msra.mxu0 0
          %4287 = vmatprep.subr.bf16.mxu0 0
          %4288 = vmatpush1.bf16.msra.mxu0 0
          %4289 = vmatprep.subr.bf16.mxu0 0
          %4290 = vmatpush1.bf16.msra.mxu0 0
          %4291 = vmatprep.subr.bf16.mxu0 0
          %4292 = vmatpush1.bf16.msra.mxu0 0
          %4293 = vmatprep.subr.bf16.mxu0 0
          %4294 = vmatpush1.bf16.msra.mxu0 0
          %4295 = vmatprep.subr.bf16.mxu0 0
          %4296 = vmatpush1.bf16.msra.mxu0 0
          %4297 = vmatprep.subr.bf16.mxu0 0
          %4298 = vmatpush1.bf16.msra.mxu0 0
          %4299 = vmatprep.subr.bf16.mxu0 0
          %4300 = vmatpush1.bf16.msra.mxu0 0
          %4301 = vmatprep.subr.bf16.mxu0 0
          %4302 = vmatpush1.bf16.msra.mxu0 0
          %4303 = vmatprep.mubr.bf16.mxu0 0
          %4304 = vmatmul.mubr.bf16.gmra.mrb[0].mxu0 %v3982
          %v4305 = vpop.f32.mrb[0].mxu0
          %v4306 = vadd.f32 %v4265, %v4305
          %v4307 = vpop.f32.mrb[0].mxu0
          %v4308 = vadd.f32 %v4267, %v4307
          %v4309 = vpop.f32.mrb[0].mxu0
          %v4310 = vpop.f32.mrb[0].mxu0
          %4311 = vdwg.mxu0
          %4312 = vmatprep.subr.bf16.mxu0 %v2837
          %4313 = vmatpush1.bf16.msra.mxu0 %v2836
          %4314 = vmatprep.subr.bf16.mxu0 %v2869
          %4315 = vmatpush1.bf16.msra.mxu0 %v2868
          %4316 = vmatprep.subr.bf16.mxu0 %v2901
          %4317 = vmatpush1.bf16.msra.mxu0 %v2900
          %4318 = vmatprep.subr.bf16.mxu0 %v2933
          %4319 = vmatpush1.bf16.msra.mxu0 %v2932
          %4320 = vmatprep.subr.bf16.mxu0 %v2965
          %4321 = vmatpush1.bf16.msra.mxu0 %v2964
          %4322 = vmatprep.subr.bf16.mxu0 %v2997
          %4323 = vmatpush1.bf16.msra.mxu0 %v2996
          %4324 = vmatprep.subr.bf16.mxu0 %v3029
          %4325 = vmatpush1.bf16.msra.mxu0 %v3028
          %4326 = vmatprep.subr.bf16.mxu0 %v3061
          %4327 = vmatpush1.bf16.msra.mxu0 %v3060
          %4328 = vmatprep.subr.bf16.mxu0 %v3093
          %4329 = vmatpush1.bf16.msra.mxu0 %v3092
          %4330 = vmatprep.subr.bf16.mxu0 %v3125
          %4331 = vmatpush1.bf16.msra.mxu0 %v3124
          %4332 = vmatprep.subr.bf16.mxu0 %v3157
          %4333 = vmatpush1.bf16.msra.mxu0 %v3156
          %4334 = vmatprep.subr.bf16.mxu0 %v3189
          %4335 = vmatpush1.bf16.msra.mxu0 %v3188
          %4336 = vmatprep.subr.bf16.mxu0 %v3221
          %4337 = vmatpush1.bf16.msra.mxu0 %v3220
          %4338 = vmatprep.subr.bf16.mxu0 %v3253
          %4339 = vmatpush1.bf16.msra.mxu0 %v3252
          %4340 = vmatprep.subr.bf16.mxu0 %v3285
          %4341 = vmatpush1.bf16.msra.mxu0 %v3284
          %4342 = vmatprep.subr.bf16.mxu0 %v3317
          %4343 = vmatpush1.bf16.msra.mxu0 %v3316
          %4344 = vmatprep.mubr.bf16.mxu0 %v1096
          %4345 = vmatmul.mubr.bf16.gmra.mrb[0].mxu0 %v1095
          %v4346 = vpop.f32.mrb[0].mxu0
          %v4347 = vadd.f32 %v965, %v4346
          %v4348 = vpop.f32.mrb[0].mxu0
          %v4349 = vadd.f32 %v969, %v4348
          %v4350 = vpop.f32.mrb[0].mxu0
          %v4351 = vpop.f32.mrb[0].mxu0
          %4352 = vdwg.mxu0
          %4353 = vmatprep.subr.bf16.mxu0 %v3349
          %4354 = vmatpush1.bf16.msra.mxu0 %v3348
          %4355 = vmatprep.subr.bf16.mxu0 %v3381
          %4356 = vmatpush1.bf16.msra.mxu0 %v3380
          %4357 = vmatprep.subr.bf16.mxu0 0
          %4358 = vmatpush1.bf16.msra.mxu0 0
          %4359 = vmatprep.subr.bf16.mxu0 0
          %4360 = vmatpush1.bf16.msra.mxu0 0
          %4361 = vmatprep.subr.bf16.mxu0 0
          %4362 = vmatpush1.bf16.msra.mxu0 0
          %4363 = vmatprep.subr.bf16.mxu0 0
          %4364 = vmatpush1.bf16.msra.mxu0 0
          %4365 = vmatprep.subr.bf16.mxu0 0
          %4366 = vmatpush1.bf16.msra.mxu0 0
          %4367 = vmatprep.subr.bf16.mxu0 0
          %4368 = vmatpush1.bf16.msra.mxu0 0
          %4369 = vmatprep.subr.bf16.mxu0 0
          %4370 = vmatpush1.bf16.msra.mxu0 0
          %4371 = vmatprep.subr.bf16.mxu0 0
          %4372 = vmatpush1.bf16.msra.mxu0 0
          %4373 = vmatprep.subr.bf16.mxu0 0
          %4374 = vmatpush1.bf16.msra.mxu0 0
          %4375 = vmatprep.subr.bf16.mxu0 0
          %4376 = vmatpush1.bf16.msra.mxu0 0
          %4377 = vmatprep.subr.bf16.mxu0 0
          %4378 = vmatpush1.bf16.msra.mxu0 0
          %4379 = vmatprep.subr.bf16.mxu0 0
          %4380 = vmatpush1.bf16.msra.mxu0 0
          %4381 = vmatprep.subr.bf16.mxu0 0
          %4382 = vmatpush1.bf16.msra.mxu0 0
          %4383 = vmatprep.subr.bf16.mxu0 0
          %4384 = vmatpush1.bf16.msra.mxu0 0
          %4385 = vmatprep.mubr.bf16.mxu0 0
          %4386 = vmatmul.mubr.bf16.gmra.mrb[0].mxu0 %v3982
          %v4387 = vpop.f32.mrb[0].mxu0
          %v4388 = vadd.f32 %v4347, %v4387
          %v4389 = vpop.f32.mrb[0].mxu0
          %v4390 = vadd.f32 %v4349, %v4389
          %v4391 = vpop.f32.mrb[0].mxu0
          %v4392 = vpop.f32.mrb[0].mxu0
          %4393 = vdwg.mxu0
          %4394 = vmatprep.subr.bf16.mxu0 %v2839
          %4395 = vmatpush1.bf16.msra.mxu0 %v2838
          %4396 = vmatprep.subr.bf16.mxu0 %v2871
          %4397 = vmatpush1.bf16.msra.mxu0 %v2870
          %4398 = vmatprep.subr.bf16.mxu0 %v2903
          %4399 = vmatpush1.bf16.msra.mxu0 %v2902
          %4400 = vmatprep.subr.bf16.mxu0 %v2935
          %4401 = vmatpush1.bf16.msra.mxu0 %v2934
          %4402 = vmatprep.subr.bf16.mxu0 %v2967
          %4403 = vmatpush1.bf16.msra.mxu0 %v2966
          %4404 = vmatprep.subr.bf16.mxu0 %v2999
          %4405 = vmatpush1.bf16.msra.mxu0 %v2998
          %4406 = vmatprep.subr.bf16.mxu0 %v3031
          %4407 = vmatpush1.bf16.msra.mxu0 %v3030
          %4408 = vmatprep.subr.bf16.mxu0 %v3063
          %4409 = vmatpush1.bf16.msra.mxu0 %v3062
          %4410 = vmatprep.subr.bf16.mxu0 %v3095
          %4411 = vmatpush1.bf16.msra.mxu0 %v3094
          %4412 = vmatprep.subr.bf16.mxu0 %v3127
          %4413 = vmatpush1.bf16.msra.mxu0 %v3126
          %4414 = vmatprep.subr.bf16.mxu0 %v3159
          %4415 = vmatpush1.bf16.msra.mxu0 %v3158
          %4416 = vmatprep.subr.bf16.mxu0 %v3191
          %4417 = vmatpush1.bf16.msra.mxu0 %v3190
          %4418 = vmatprep.subr.bf16.mxu0 %v3223
          %4419 = vmatpush1.bf16.msra.mxu0 %v3222
          %4420 = vmatprep.subr.bf16.mxu0 %v3255
          %4421 = vmatpush1.bf16.msra.mxu0 %v3254
          %4422 = vmatprep.subr.bf16.mxu0 %v3287
          %4423 = vmatpush1.bf16.msra.mxu0 %v3286
          %4424 = vmatprep.subr.bf16.mxu0 %v3319
          %4425 = vmatpush1.bf16.msra.mxu0 %v3318
          %4426 = vmatprep.mubr.bf16.mxu0 %v1096
          %4427 = vmatmul.mubr.bf16.gmra.mrb[0].mxu0 %v1095
          %v4428 = vpop.f32.mrb[0].mxu0
          %v4429 = vadd.f32 %v973, %v4428
          %v4430 = vpop.f32.mrb[0].mxu0
          %v4431 = vadd.f32 %v977, %v4430
          %v4432 = vpop.f32.mrb[0].mxu0
          %v4433 = vpop.f32.mrb[0].mxu0
          %4434 = vdwg.mxu0
          %4435 = vmatprep.subr.bf16.mxu0 %v3351
          %4436 = vmatpush1.bf16.msra.mxu0 %v3350
          %4437 = vmatprep.subr.bf16.mxu0 %v3383
          %4438 = vmatpush1.bf16.msra.mxu0 %v3382
          %4439 = vmatprep.subr.bf16.mxu0 0
          %4440 = vmatpush1.bf16.msra.mxu0 0
          %4441 = vmatprep.subr.bf16.mxu0 0
          %4442 = vmatpush1.bf16.msra.mxu0 0
          %4443 = vmatprep.subr.bf16.mxu0 0
          %4444 = vmatpush1.bf16.msra.mxu0 0
          %4445 = vmatprep.subr.bf16.mxu0 0
          %4446 = vmatpush1.bf16.msra.mxu0 0
          %4447 = vmatprep.subr.bf16.mxu0 0
          %4448 = vmatpush1.bf16.msra.mxu0 0
          %4449 = vmatprep.subr.bf16.mxu0 0
          %4450 = vmatpush1.bf16.msra.mxu0 0
          %4451 = vmatprep.subr.bf16.mxu0 0
          %4452 = vmatpush1.bf16.msra.mxu0 0
          %4453 = vmatprep.subr.bf16.mxu0 0
          %4454 = vmatpush1.bf16.msra.mxu0 0
          %4455 = vmatprep.subr.bf16.mxu0 0
          %4456 = vmatpush1.bf16.msra.mxu0 0
          %4457 = vmatprep.subr.bf16.mxu0 0
          %4458 = vmatpush1.bf16.msra.mxu0 0
          %4459 = vmatprep.subr.bf16.mxu0 0
          %4460 = vmatpush1.bf16.msra.mxu0 0
          %4461 = vmatprep.subr.bf16.mxu0 0
          %4462 = vmatpush1.bf16.msra.mxu0 0
          %4463 = vmatprep.subr.bf16.mxu0 0
          %4464 = vmatpush1.bf16.msra.mxu0 0
          %4465 = vmatprep.subr.bf16.mxu0 0
          %4466 = vmatpush1.bf16.msra.mxu0 0
          %4467 = vmatprep.mubr.bf16.mxu0 0
          %4468 = vmatmul.mubr.bf16.gmra.mrb[0].mxu0 %v3982
          %v4469 = vpop.f32.mrb[0].mxu0
          %v4470 = vadd.f32 %v4429, %v4469
          %v4471 = vpop.f32.mrb[0].mxu0
          %v4472 = vadd.f32 %v4431, %v4471
          %v4473 = vpop.f32.mrb[0].mxu0
          %v4474 = vpop.f32.mrb[0].mxu0
          %4475 = vdwg.mxu0
          %4476 = vmatprep.subr.bf16.mxu0 %v2841
          %4477 = vmatpush1.bf16.msra.mxu0 %v2840
          %4478 = vmatprep.subr.bf16.mxu0 %v2873
          %4479 = vmatpush1.bf16.msra.mxu0 %v2872
          %4480 = vmatprep.subr.bf16.mxu0 %v2905
          %4481 = vmatpush1.bf16.msra.mxu0 %v2904
          %4482 = vmatprep.subr.bf16.mxu0 %v2937
          %4483 = vmatpush1.bf16.msra.mxu0 %v2936
          %4484 = vmatprep.subr.bf16.mxu0 %v2969
          %4485 = vmatpush1.bf16.msra.mxu0 %v2968
          %4486 = vmatprep.subr.bf16.mxu0 %v3001
          %4487 = vmatpush1.bf16.msra.mxu0 %v3000
          %4488 = vmatprep.subr.bf16.mxu0 %v3033
          %4489 = vmatpush1.bf16.msra.mxu0 %v3032
          %4490 = vmatprep.subr.bf16.mxu0 %v3065
          %4491 = vmatpush1.bf16.msra.mxu0 %v3064
          %4492 = vmatprep.subr.bf16.mxu0 %v3097
          %4493 = vmatpush1.bf16.msra.mxu0 %v3096
          %4494 = vmatprep.subr.bf16.mxu0 %v3129
          %4495 = vmatpush1.bf16.msra.mxu0 %v3128
          %4496 = vmatprep.subr.bf16.mxu0 %v3161
          %4497 = vmatpush1.bf16.msra.mxu0 %v3160
          %4498 = vmatprep.subr.bf16.mxu0 %v3193
          %4499 = vmatpush1.bf16.msra.mxu0 %v3192
          %4500 = vmatprep.subr.bf16.mxu0 %v3225
          %4501 = vmatpush1.bf16.msra.mxu0 %v3224
          %4502 = vmatprep.subr.bf16.mxu0 %v3257
          %4503 = vmatpush1.bf16.msra.mxu0 %v3256
          %4504 = vmatprep.subr.bf16.mxu0 %v3289
          %4505 = vmatpush1.bf16.msra.mxu0 %v3288
          %4506 = vmatprep.subr.bf16.mxu0 %v3321
          %4507 = vmatpush1.bf16.msra.mxu0 %v3320
          %4508 = vmatprep.mubr.bf16.mxu0 %v1096
          %4509 = vmatmul.mubr.bf16.gmra.mrb[0].mxu0 %v1095
          %v4510 = vpop.f32.mrb[0].mxu0
          %v4511 = vadd.f32 %v981, %v4510
          %v4512 = vpop.f32.mrb[0].mxu0
          %v4513 = vadd.f32 %v985, %v4512
          %v4514 = vpop.f32.mrb[0].mxu0
          %v4515 = vpop.f32.mrb[0].mxu0
          %4516 = vdwg.mxu0
          %4517 = vmatprep.subr.bf16.mxu0 %v3353
          %4518 = vmatpush1.bf16.msra.mxu0 %v3352
          %4519 = vmatprep.subr.bf16.mxu0 %v3385
          %4520 = vmatpush1.bf16.msra.mxu0 %v3384
          %4521 = vmatprep.subr.bf16.mxu0 0
          %4522 = vmatpush1.bf16.msra.mxu0 0
          %4523 = vmatprep.subr.bf16.mxu0 0
          %4524 = vmatpush1.bf16.msra.mxu0 0
          %4525 = vmatprep.subr.bf16.mxu0 0
          %4526 = vmatpush1.bf16.msra.mxu0 0
          %4527 = vmatprep.subr.bf16.mxu0 0
          %4528 = vmatpush1.bf16.msra.mxu0 0
          %4529 = vmatprep.subr.bf16.mxu0 0
          %4530 = vmatpush1.bf16.msra.mxu0 0
          %4531 = vmatprep.subr.bf16.mxu0 0
          %4532 = vmatpush1.bf16.msra.mxu0 0
          %4533 = vmatprep.subr.bf16.mxu0 0
          %4534 = vmatpush1.bf16.msra.mxu0 0
          %4535 = vmatprep.subr.bf16.mxu0 0
          %4536 = vmatpush1.bf16.msra.mxu0 0
          %4537 = vmatprep.subr.bf16.mxu0 0
          %4538 = vmatpush1.bf16.msra.mxu0 0
          %4539 = vmatprep.subr.bf16.mxu0 0
          %4540 = vmatpush1.bf16.msra.mxu0 0
          %4541 = vmatprep.subr.bf16.mxu0 0
          %4542 = vmatpush1.bf16.msra.mxu0 0
          %4543 = vmatprep.subr.bf16.mxu0 0
          %4544 = vmatpush1.bf16.msra.mxu0 0
          %4545 = vmatprep.subr.bf16.mxu0 0
          %4546 = vmatpush1.bf16.msra.mxu0 0
          %4547 = vmatprep.subr.bf16.mxu0 0
          %4548 = vmatpush1.bf16.msra.mxu0 0
          %4549 = vmatprep.mubr.bf16.mxu0 0
          %4550 = vmatmul.mubr.bf16.gmra.mrb[0].mxu0 %v3982
          %v4551 = vpop.f32.mrb[0].mxu0
          %v4552 = vadd.f32 %v4511, %v4551
          %v4553 = vpop.f32.mrb[0].mxu0
          %v4554 = vadd.f32 %v4513, %v4553
          %v4555 = vpop.f32.mrb[0].mxu0
          %v4556 = vpop.f32.mrb[0].mxu0
          %4557 = vdwg.mxu0
          %4558 = vmatprep.subr.bf16.mxu0 %v2843
          %4559 = vmatpush1.bf16.msra.mxu0 %v2842
          %4560 = vmatprep.subr.bf16.mxu0 %v2875
          %4561 = vmatpush1.bf16.msra.mxu0 %v2874
          %4562 = vmatprep.subr.bf16.mxu0 %v2907
          %4563 = vmatpush1.bf16.msra.mxu0 %v2906
          %4564 = vmatprep.subr.bf16.mxu0 %v2939
          %4565 = vmatpush1.bf16.msra.mxu0 %v2938
          %4566 = vmatprep.subr.bf16.mxu0 %v2971
          %4567 = vmatpush1.bf16.msra.mxu0 %v2970
          %4568 = vmatprep.subr.bf16.mxu0 %v3003
          %4569 = vmatpush1.bf16.msra.mxu0 %v3002
          %4570 = vmatprep.subr.bf16.mxu0 %v3035
          %4571 = vmatpush1.bf16.msra.mxu0 %v3034
          %4572 = vmatprep.subr.bf16.mxu0 %v3067
          %4573 = vmatpush1.bf16.msra.mxu0 %v3066
          %4574 = vmatprep.subr.bf16.mxu0 %v3099
          %4575 = vmatpush1.bf16.msra.mxu0 %v3098
          %4576 = vmatprep.subr.bf16.mxu0 %v3131
          %4577 = vmatpush1.bf16.msra.mxu0 %v3130
          %4578 = vmatprep.subr.bf16.mxu0 %v3163
          %4579 = vmatpush1.bf16.msra.mxu0 %v3162
          %4580 = vmatprep.subr.bf16.mxu0 %v3195
          %4581 = vmatpush1.bf16.msra.mxu0 %v3194
          %4582 = vmatprep.subr.bf16.mxu0 %v3227
          %4583 = vmatpush1.bf16.msra.mxu0 %v3226
          %4584 = vmatprep.subr.bf16.mxu0 %v3259
          %4585 = vmatpush1.bf16.msra.mxu0 %v3258
          %4586 = vmatprep.subr.bf16.mxu0 %v3291
          %4587 = vmatpush1.bf16.msra.mxu0 %v3290
          %4588 = vmatprep.subr.bf16.mxu0 %v3323
          %4589 = vmatpush1.bf16.msra.mxu0 %v3322
          %4590 = vmatprep.mubr.bf16.mxu0 %v1096
          %4591 = vmatmul.mubr.bf16.gmra.mrb[0].mxu0 %v1095
          %v4592 = vpop.f32.mrb[0].mxu0
          %v4593 = vadd.f32 %v989, %v4592
          %v4594 = vpop.f32.mrb[0].mxu0
          %v4595 = vadd.f32 %v993, %v4594
          %v4596 = vpop.f32.mrb[0].mxu0
          %v4597 = vpop.f32.mrb[0].mxu0
          %4598 = vdwg.mxu0
          %4599 = vmatprep.subr.bf16.mxu0 %v3355
          %4600 = vmatpush1.bf16.msra.mxu0 %v3354
          %4601 = vmatprep.subr.bf16.mxu0 %v3387
          %4602 = vmatpush1.bf16.msra.mxu0 %v3386
          %4603 = vmatprep.subr.bf16.mxu0 0
          %4604 = vmatpush1.bf16.msra.mxu0 0
          %4605 = vmatprep.subr.bf16.mxu0 0
          %4606 = vmatpush1.bf16.msra.mxu0 0
          %4607 = vmatprep.subr.bf16.mxu0 0
          %4608 = vmatpush1.bf16.msra.mxu0 0
          %4609 = vmatprep.subr.bf16.mxu0 0
          %4610 = vmatpush1.bf16.msra.mxu0 0
          %4611 = vmatprep.subr.bf16.mxu0 0
          %4612 = vmatpush1.bf16.msra.mxu0 0
          %4613 = vmatprep.subr.bf16.mxu0 0
          %4614 = vmatpush1.bf16.msra.mxu0 0
          %4615 = vmatprep.subr.bf16.mxu0 0
          %4616 = vmatpush1.bf16.msra.mxu0 0
          %4617 = vmatprep.subr.bf16.mxu0 0
          %4618 = vmatpush1.bf16.msra.mxu0 0
          %4619 = vmatprep.subr.bf16.mxu0 0
          %4620 = vmatpush1.bf16.msra.mxu0 0
          %4621 = vmatprep.subr.bf16.mxu0 0
          %4622 = vmatpush1.bf16.msra.mxu0 0
          %4623 = vmatprep.subr.bf16.mxu0 0
          %4624 = vmatpush1.bf16.msra.mxu0 0
          %4625 = vmatprep.subr.bf16.mxu0 0
          %4626 = vmatpush1.bf16.msra.mxu0 0
          %4627 = vmatprep.subr.bf16.mxu0 0
          %4628 = vmatpush1.bf16.msra.mxu0 0
          %4629 = vmatprep.subr.bf16.mxu0 0
          %4630 = vmatpush1.bf16.msra.mxu0 0
          %4631 = vmatprep.mubr.bf16.mxu0 0
          %4632 = vmatmul.mubr.bf16.gmra.mrb[0].mxu0 %v3982
          %v4633 = vpop.f32.mrb[0].mxu0
          %v4634 = vadd.f32 %v4593, %v4633
          %v4635 = vpop.f32.mrb[0].mxu0
          %v4636 = vadd.f32 %v4595, %v4635
          %v4637 = vpop.f32.mrb[0].mxu0
          %v4638 = vpop.f32.mrb[0].mxu0
          %4639 = vdwg.mxu0
          %4640 = vmatprep.subr.bf16.mxu0 %v2845
          %4641 = vmatpush1.bf16.msra.mxu0 %v2844
          %4642 = vmatprep.subr.bf16.mxu0 %v2877
          %4643 = vmatpush1.bf16.msra.mxu0 %v2876
          %4644 = vmatprep.subr.bf16.mxu0 %v2909
          %4645 = vmatpush1.bf16.msra.mxu0 %v2908
          %4646 = vmatprep.subr.bf16.mxu0 %v2941
          %4647 = vmatpush1.bf16.msra.mxu0 %v2940
          %4648 = vmatprep.subr.bf16.mxu0 %v2973
          %4649 = vmatpush1.bf16.msra.mxu0 %v2972
          %4650 = vmatprep.subr.bf16.mxu0 %v3005
          %4651 = vmatpush1.bf16.msra.mxu0 %v3004
          %4652 = vmatprep.subr.bf16.mxu0 %v3037
          %4653 = vmatpush1.bf16.msra.mxu0 %v3036
          %4654 = vmatprep.subr.bf16.mxu0 %v3069
          %4655 = vmatpush1.bf16.msra.mxu0 %v3068
          %4656 = vmatprep.subr.bf16.mxu0 %v3101
          %4657 = vmatpush1.bf16.msra.mxu0 %v3100
          %4658 = vmatprep.subr.bf16.mxu0 %v3133
          %4659 = vmatpush1.bf16.msra.mxu0 %v3132
          %4660 = vmatprep.subr.bf16.mxu0 %v3165
          %4661 = vmatpush1.bf16.msra.mxu0 %v3164
          %4662 = vmatprep.subr.bf16.mxu0 %v3197
          %4663 = vmatpush1.bf16.msra.mxu0 %v3196
          %4664 = vmatprep.subr.bf16.mxu0 %v3229
          %4665 = vmatpush1.bf16.msra.mxu0 %v3228
          %4666 = vmatprep.subr.bf16.mxu0 %v3261
          %4667 = vmatpush1.bf16.msra.mxu0 %v3260
          %4668 = vmatprep.subr.bf16.mxu0 %v3293
          %4669 = vmatpush1.bf16.msra.mxu0 %v3292
          %4670 = vmatprep.subr.bf16.mxu0 %v3325
          %4671 = vmatpush1.bf16.msra.mxu0 %v3324
          %4672 = vmatprep.mubr.bf16.mxu0 %v1096
          %4673 = vmatmul.mubr.bf16.gmra.mrb[0].mxu0 %v1095
          %v4674 = vpop.f32.mrb[0].mxu0
          %v4675 = vadd.f32 %v997, %v4674
          %v4676 = vpop.f32.mrb[0].mxu0
          %v4677 = vadd.f32 %v1001, %v4676
          %v4678 = vpop.f32.mrb[0].mxu0
          %v4679 = vpop.f32.mrb[0].mxu0
          %4680 = vdwg.mxu0
          %4681 = vmatprep.subr.bf16.mxu0 %v3357
          %4682 = vmatpush1.bf16.msra.mxu0 %v3356
          %4683 = vmatprep.subr.bf16.mxu0 %v3389
          %4684 = vmatpush1.bf16.msra.mxu0 %v3388
          %4685 = vmatprep.subr.bf16.mxu0 0
          %4686 = vmatpush1.bf16.msra.mxu0 0
          %4687 = vmatprep.subr.bf16.mxu0 0
          %4688 = vmatpush1.bf16.msra.mxu0 0
          %4689 = vmatprep.subr.bf16.mxu0 0
          %4690 = vmatpush1.bf16.msra.mxu0 0
          %4691 = vmatprep.subr.bf16.mxu0 0
          %4692 = vmatpush1.bf16.msra.mxu0 0
          %4693 = vmatprep.subr.bf16.mxu0 0
          %4694 = vmatpush1.bf16.msra.mxu0 0
          %4695 = vmatprep.subr.bf16.mxu0 0
          %4696 = vmatpush1.bf16.msra.mxu0 0
          %4697 = vmatprep.subr.bf16.mxu0 0
          %4698 = vmatpush1.bf16.msra.mxu0 0
          %4699 = vmatprep.subr.bf16.mxu0 0
          %4700 = vmatpush1.bf16.msra.mxu0 0
          %4701 = vmatprep.subr.bf16.mxu0 0
          %4702 = vmatpush1.bf16.msra.mxu0 0
          %4703 = vmatprep.subr.bf16.mxu0 0
          %4704 = vmatpush1.bf16.msra.mxu0 0
          %4705 = vmatprep.subr.bf16.mxu0 0
          %4706 = vmatpush1.bf16.msra.mxu0 0
          %4707 = vmatprep.subr.bf16.mxu0 0
          %4708 = vmatpush1.bf16.msra.mxu0 0
          %4709 = vmatprep.subr.bf16.mxu0 0
          %4710 = vmatpush1.bf16.msra.mxu0 0
          %4711 = vmatprep.subr.bf16.mxu0 0
          %4712 = vmatpush1.bf16.msra.mxu0 0
          %4713 = vmatprep.mubr.bf16.mxu0 0
          %4714 = vmatmul.mubr.bf16.gmra.mrb[0].mxu0 %v3982
          %v4715 = vpop.f32.mrb[0].mxu0
          %v4716 = vadd.f32 %v4675, %v4715
          %v4717 = vpop.f32.mrb[0].mxu0
          %v4718 = vadd.f32 %v4677, %v4717
          %v4719 = vpop.f32.mrb[0].mxu0
          %v4720 = vpop.f32.mrb[0].mxu0
          %4721 = vdwg.mxu0
          %4722 = vmatprep.subr.bf16.mxu0 %v2847
          %4723 = vmatpush1.bf16.msra.mxu0 %v2846
          %4724 = vmatprep.subr.bf16.mxu0 %v2879
          %4725 = vmatpush1.bf16.msra.mxu0 %v2878
          %4726 = vmatprep.subr.bf16.mxu0 %v2911
          %4727 = vmatpush1.bf16.msra.mxu0 %v2910
          %4728 = vmatprep.subr.bf16.mxu0 %v2943
          %4729 = vmatpush1.bf16.msra.mxu0 %v2942
          %4730 = vmatprep.subr.bf16.mxu0 %v2975
          %4731 = vmatpush1.bf16.msra.mxu0 %v2974
          %4732 = vmatprep.subr.bf16.mxu0 %v3007
          %4733 = vmatpush1.bf16.msra.mxu0 %v3006
          %4734 = vmatprep.subr.bf16.mxu0 %v3039
          %4735 = vmatpush1.bf16.msra.mxu0 %v3038
          %4736 = vmatprep.subr.bf16.mxu0 %v3071
          %4737 = vmatpush1.bf16.msra.mxu0 %v3070
          %4738 = vmatprep.subr.bf16.mxu0 %v3103
          %4739 = vmatpush1.bf16.msra.mxu0 %v3102
          %4740 = vmatprep.subr.bf16.mxu0 %v3135
          %4741 = vmatpush1.bf16.msra.mxu0 %v3134
          %4742 = vmatprep.subr.bf16.mxu0 %v3167
          %4743 = vmatpush1.bf16.msra.mxu0 %v3166
          %4744 = vmatprep.subr.bf16.mxu0 %v3199
          %4745 = vmatpush1.bf16.msra.mxu0 %v3198
          %4746 = vmatprep.subr.bf16.mxu0 %v3231
          %4747 = vmatpush1.bf16.msra.mxu0 %v3230
          %4748 = vmatprep.subr.bf16.mxu0 %v3263
          %4749 = vmatpush1.bf16.msra.mxu0 %v3262
          %4750 = vmatprep.subr.bf16.mxu0 %v3295
          %4751 = vmatpush1.bf16.msra.mxu0 %v3294
          %4752 = vmatprep.subr.bf16.mxu0 %v3327
          %4753 = vmatpush1.bf16.msra.mxu0 %v3326
          %4754 = vmatprep.mubr.bf16.mxu0 %v1096
          %4755 = vmatmul.mubr.bf16.gmra.mrb[0].mxu0 %v1095
          %v4756 = vpop.f32.mrb[0].mxu0
          %v4757 = vadd.f32 %v1005, %v4756
          %v4758 = vpop.f32.mrb[0].mxu0
          %v4759 = vadd.f32 %v1009, %v4758
          %v4760 = vpop.f32.mrb[0].mxu0
          %v4761 = vpop.f32.mrb[0].mxu0
          %4762 = vdwg.mxu0
          %4763 = vmatprep.subr.bf16.mxu0 %v3359
          %4764 = vmatpush1.bf16.msra.mxu0 %v3358
          %4765 = vmatprep.subr.bf16.mxu0 %v3391
          %4766 = vmatpush1.bf16.msra.mxu0 %v3390
          %4767 = vmatprep.subr.bf16.mxu0 0
          %4768 = vmatpush1.bf16.msra.mxu0 0
          %4769 = vmatprep.subr.bf16.mxu0 0
          %4770 = vmatpush1.bf16.msra.mxu0 0
          %4771 = vmatprep.subr.bf16.mxu0 0
          %4772 = vmatpush1.bf16.msra.mxu0 0
          %4773 = vmatprep.subr.bf16.mxu0 0
          %4774 = vmatpush1.bf16.msra.mxu0 0
          %4775 = vmatprep.subr.bf16.mxu0 0
          %4776 = vmatpush1.bf16.msra.mxu0 0
          %4777 = vmatprep.subr.bf16.mxu0 0
          %4778 = vmatpush1.bf16.msra.mxu0 0
          %4779 = vmatprep.subr.bf16.mxu0 0
          %4780 = vmatpush1.bf16.msra.mxu0 0
          %4781 = vmatprep.subr.bf16.mxu0 0
          %4782 = vmatpush1.bf16.msra.mxu0 0
          %4783 = vmatprep.subr.bf16.mxu0 0
          %4784 = vmatpush1.bf16.msra.mxu0 0
          %4785 = vmatprep.subr.bf16.mxu0 0
          %4786 = vmatpush1.bf16.msra.mxu0 0
          %4787 = vmatprep.subr.bf16.mxu0 0
          %4788 = vmatpush1.bf16.msra.mxu0 0
          %4789 = vmatprep.subr.bf16.mxu0 0
          %4790 = vmatpush1.bf16.msra.mxu0 0
          %4791 = vmatprep.subr.bf16.mxu0 0
          %4792 = vmatpush1.bf16.msra.mxu0 0
          %4793 = vmatprep.subr.bf16.mxu0 0
          %4794 = vmatpush1.bf16.msra.mxu0 0
          %4795 = vmatprep.mubr.bf16.mxu0 0
          %4796 = vmatmul.mubr.bf16.gmra.mrb[0].mxu0 %v3982
          %v4797 = vpop.f32.mrb[0].mxu0
          %v4798 = vadd.f32 %v4757, %v4797
          %v4799 = vpop.f32.mrb[0].mxu0
          %v4800 = vadd.f32 %v4759, %v4799
          %v4801 = vpop.f32.mrb[0].mxu0
          %v4802 = vpop.f32.mrb[0].mxu0
          %4803 = vdwg.mxu0
          %4804 = vmatprep.subr.bf16.mxu0 %v2849
          %4805 = vmatpush1.bf16.msra.mxu0 %v2848
          %4806 = vmatprep.subr.bf16.mxu0 %v2881
          %4807 = vmatpush1.bf16.msra.mxu0 %v2880
          %4808 = vmatprep.subr.bf16.mxu0 %v2913
          %4809 = vmatpush1.bf16.msra.mxu0 %v2912
          %4810 = vmatprep.subr.bf16.mxu0 %v2945
          %4811 = vmatpush1.bf16.msra.mxu0 %v2944
          %4812 = vmatprep.subr.bf16.mxu0 %v2977
          %4813 = vmatpush1.bf16.msra.mxu0 %v2976
          %4814 = vmatprep.subr.bf16.mxu0 %v3009
          %4815 = vmatpush1.bf16.msra.mxu0 %v3008
          %4816 = vmatprep.subr.bf16.mxu0 %v3041
          %4817 = vmatpush1.bf16.msra.mxu0 %v3040
          %4818 = vmatprep.subr.bf16.mxu0 %v3073
          %4819 = vmatpush1.bf16.msra.mxu0 %v3072
          %4820 = vmatprep.subr.bf16.mxu0 %v3105
          %4821 = vmatpush1.bf16.msra.mxu0 %v3104
          %4822 = vmatprep.subr.bf16.mxu0 %v3137
          %4823 = vmatpush1.bf16.msra.mxu0 %v3136
          %4824 = vmatprep.subr.bf16.mxu0 %v3169
          %4825 = vmatpush1.bf16.msra.mxu0 %v3168
          %4826 = vmatprep.subr.bf16.mxu0 %v3201
          %4827 = vmatpush1.bf16.msra.mxu0 %v3200
          %4828 = vmatprep.subr.bf16.mxu0 %v3233
          %4829 = vmatpush1.bf16.msra.mxu0 %v3232
          %4830 = vmatprep.subr.bf16.mxu0 %v3265
          %4831 = vmatpush1.bf16.msra.mxu0 %v3264
          %4832 = vmatprep.subr.bf16.mxu0 %v3297
          %4833 = vmatpush1.bf16.msra.mxu0 %v3296
          %4834 = vmatprep.subr.bf16.mxu0 %v3329
          %4835 = vmatpush1.bf16.msra.mxu0 %v3328
          %4836 = vmatprep.mubr.bf16.mxu0 %v1096
          %4837 = vmatmul.mubr.bf16.gmra.mrb[0].mxu0 %v1095
          %v4838 = vpop.f32.mrb[0].mxu0
          %v4839 = vadd.f32 %v1013, %v4838
          %v4840 = vpop.f32.mrb[0].mxu0
          %v4841 = vadd.f32 %v1017, %v4840
          %v4842 = vpop.f32.mrb[0].mxu0
          %v4843 = vpop.f32.mrb[0].mxu0
          %4844 = vdwg.mxu0
          %4845 = vmatprep.subr.bf16.mxu0 %v3361
          %4846 = vmatpush1.bf16.msra.mxu0 %v3360
          %4847 = vmatprep.subr.bf16.mxu0 %v3393
          %4848 = vmatpush1.bf16.msra.mxu0 %v3392
          %4849 = vmatprep.subr.bf16.mxu0 0
          %4850 = vmatpush1.bf16.msra.mxu0 0
          %4851 = vmatprep.subr.bf16.mxu0 0
          %4852 = vmatpush1.bf16.msra.mxu0 0
          %4853 = vmatprep.subr.bf16.mxu0 0
          %4854 = vmatpush1.bf16.msra.mxu0 0
          %4855 = vmatprep.subr.bf16.mxu0 0
          %4856 = vmatpush1.bf16.msra.mxu0 0
          %4857 = vmatprep.subr.bf16.mxu0 0
          %4858 = vmatpush1.bf16.msra.mxu0 0
          %4859 = vmatprep.subr.bf16.mxu0 0
          %4860 = vmatpush1.bf16.msra.mxu0 0
          %4861 = vmatprep.subr.bf16.mxu0 0
          %4862 = vmatpush1.bf16.msra.mxu0 0
          %4863 = vmatprep.subr.bf16.mxu0 0
          %4864 = vmatpush1.bf16.msra.mxu0 0
          %4865 = vmatprep.subr.bf16.mxu0 0
          %4866 = vmatpush1.bf16.msra.mxu0 0
          %4867 = vmatprep.subr.bf16.mxu0 0
          %4868 = vmatpush1.bf16.msra.mxu0 0
          %4869 = vmatprep.subr.bf16.mxu0 0
          %4870 = vmatpush1.bf16.msra.mxu0 0
          %4871 = vmatprep.subr.bf16.mxu0 0
          %4872 = vmatpush1.bf16.msra.mxu0 0
          %4873 = vmatprep.subr.bf16.mxu0 0
          %4874 = vmatpush1.bf16.msra.mxu0 0
          %4875 = vmatprep.subr.bf16.mxu0 0
          %4876 = vmatpush1.bf16.msra.mxu0 0
          %4877 = vmatprep.mubr.bf16.mxu0 0
          %4878 = vmatmul.mubr.bf16.gmra.mrb[0].mxu0 %v3982
          %v4879 = vpop.f32.mrb[0].mxu0
          %v4880 = vadd.f32 %v4839, %v4879
          %v4881 = vpop.f32.mrb[0].mxu0
          %v4882 = vadd.f32 %v4841, %v4881
          %v4883 = vpop.f32.mrb[0].mxu0
          %v4884 = vpop.f32.mrb[0].mxu0
          %4885 = vdwg.mxu0
          %4886 = vmatprep.subr.bf16.mxu0 %v2851
          %4887 = vmatpush1.bf16.msra.mxu0 %v2850
          %4888 = vmatprep.subr.bf16.mxu0 %v2883
          %4889 = vmatpush1.bf16.msra.mxu0 %v2882
          %4890 = vmatprep.subr.bf16.mxu0 %v2915
          %4891 = vmatpush1.bf16.msra.mxu0 %v2914
          %4892 = vmatprep.subr.bf16.mxu0 %v2947
          %4893 = vmatpush1.bf16.msra.mxu0 %v2946
          %4894 = vmatprep.subr.bf16.mxu0 %v2979
          %4895 = vmatpush1.bf16.msra.mxu0 %v2978
          %4896 = vmatprep.subr.bf16.mxu0 %v3011
          %4897 = vmatpush1.bf16.msra.mxu0 %v3010
          %4898 = vmatprep.subr.bf16.mxu0 %v3043
          %4899 = vmatpush1.bf16.msra.mxu0 %v3042
          %4900 = vmatprep.subr.bf16.mxu0 %v3075
          %4901 = vmatpush1.bf16.msra.mxu0 %v3074
          %4902 = vmatprep.subr.bf16.mxu0 %v3107
          %4903 = vmatpush1.bf16.msra.mxu0 %v3106
          %4904 = vmatprep.subr.bf16.mxu0 %v3139
          %4905 = vmatpush1.bf16.msra.mxu0 %v3138
          %4906 = vmatprep.subr.bf16.mxu0 %v3171
          %4907 = vmatpush1.bf16.msra.mxu0 %v3170
          %4908 = vmatprep.subr.bf16.mxu0 %v3203
          %4909 = vmatpush1.bf16.msra.mxu0 %v3202
          %4910 = vmatprep.subr.bf16.mxu0 %v3235
          %4911 = vmatpush1.bf16.msra.mxu0 %v3234
          %4912 = vmatprep.subr.bf16.mxu0 %v3267
          %4913 = vmatpush1.bf16.msra.mxu0 %v3266
          %4914 = vmatprep.subr.bf16.mxu0 %v3299
          %4915 = vmatpush1.bf16.msra.mxu0 %v3298
          %4916 = vmatprep.subr.bf16.mxu0 %v3331
          %4917 = vmatpush1.bf16.msra.mxu0 %v3330
          %4918 = vmatprep.mubr.bf16.mxu0 %v1096
          %4919 = vmatmul.mubr.bf16.gmra.mrb[0].mxu0 %v1095
          %v4920 = vpop.f32.mrb[0].mxu0
          %v4921 = vadd.f32 %v1021, %v4920
          %v4922 = vpop.f32.mrb[0].mxu0
          %v4923 = vadd.f32 %v1025, %v4922
          %v4924 = vpop.f32.mrb[0].mxu0
          %v4925 = vpop.f32.mrb[0].mxu0
          %4926 = vdwg.mxu0
          %4927 = vmatprep.subr.bf16.mxu0 %v3363
          %4928 = vmatpush1.bf16.msra.mxu0 %v3362
          %4929 = vmatprep.subr.bf16.mxu0 %v3395
          %4930 = vmatpush1.bf16.msra.mxu0 %v3394
          %4931 = vmatprep.subr.bf16.mxu0 0
          %4932 = vmatpush1.bf16.msra.mxu0 0
          %4933 = vmatprep.subr.bf16.mxu0 0
          %4934 = vmatpush1.bf16.msra.mxu0 0
          %4935 = vmatprep.subr.bf16.mxu0 0
          %4936 = vmatpush1.bf16.msra.mxu0 0
          %4937 = vmatprep.subr.bf16.mxu0 0
          %4938 = vmatpush1.bf16.msra.mxu0 0
          %4939 = vmatprep.subr.bf16.mxu0 0
          %4940 = vmatpush1.bf16.msra.mxu0 0
          %4941 = vmatprep.subr.bf16.mxu0 0
          %4942 = vmatpush1.bf16.msra.mxu0 0
          %4943 = vmatprep.subr.bf16.mxu0 0
          %4944 = vmatpush1.bf16.msra.mxu0 0
          %4945 = vmatprep.subr.bf16.mxu0 0
          %4946 = vmatpush1.bf16.msra.mxu0 0
          %4947 = vmatprep.subr.bf16.mxu0 0
          %4948 = vmatpush1.bf16.msra.mxu0 0
          %4949 = vmatprep.subr.bf16.mxu0 0
          %4950 = vmatpush1.bf16.msra.mxu0 0
          %4951 = vmatprep.subr.bf16.mxu0 0
          %4952 = vmatpush1.bf16.msra.mxu0 0
          %4953 = vmatprep.subr.bf16.mxu0 0
          %4954 = vmatpush1.bf16.msra.mxu0 0
          %4955 = vmatprep.subr.bf16.mxu0 0
          %4956 = vmatpush1.bf16.msra.mxu0 0
          %4957 = vmatprep.subr.bf16.mxu0 0
          %4958 = vmatpush1.bf16.msra.mxu0 0
          %4959 = vmatprep.mubr.bf16.mxu0 0
          %4960 = vmatmul.mubr.bf16.gmra.mrb[0].mxu0 %v3982
          %v4961 = vpop.f32.mrb[0].mxu0
          %v4962 = vadd.f32 %v4921, %v4961
          %v4963 = vpop.f32.mrb[0].mxu0
          %v4964 = vadd.f32 %v4923, %v4963
          %v4965 = vpop.f32.mrb[0].mxu0
          %v4966 = vpop.f32.mrb[0].mxu0
          %4967 = vdwg.mxu0
          %4968 = vmatprep.subr.bf16.mxu0 %v2853
          %4969 = vmatpush1.bf16.msra.mxu0 %v2852
          %4970 = vmatprep.subr.bf16.mxu0 %v2885
          %4971 = vmatpush1.bf16.msra.mxu0 %v2884
          %4972 = vmatprep.subr.bf16.mxu0 %v2917
          %4973 = vmatpush1.bf16.msra.mxu0 %v2916
          %4974 = vmatprep.subr.bf16.mxu0 %v2949
          %4975 = vmatpush1.bf16.msra.mxu0 %v2948
          %4976 = vmatprep.subr.bf16.mxu0 %v2981
          %4977 = vmatpush1.bf16.msra.mxu0 %v2980
          %4978 = vmatprep.subr.bf16.mxu0 %v3013
          %4979 = vmatpush1.bf16.msra.mxu0 %v3012
          %4980 = vmatprep.subr.bf16.mxu0 %v3045
          %4981 = vmatpush1.bf16.msra.mxu0 %v3044
          %4982 = vmatprep.subr.bf16.mxu0 %v3077
          %4983 = vmatpush1.bf16.msra.mxu0 %v3076
          %4984 = vmatprep.subr.bf16.mxu0 %v3109
          %4985 = vmatpush1.bf16.msra.mxu0 %v3108
          %4986 = vmatprep.subr.bf16.mxu0 %v3141
          %4987 = vmatpush1.bf16.msra.mxu0 %v3140
          %4988 = vmatprep.subr.bf16.mxu0 %v3173
          %4989 = vmatpush1.bf16.msra.mxu0 %v3172
          %4990 = vmatprep.subr.bf16.mxu0 %v3205
          %4991 = vmatpush1.bf16.msra.mxu0 %v3204
          %4992 = vmatprep.subr.bf16.mxu0 %v3237
          %4993 = vmatpush1.bf16.msra.mxu0 %v3236
          %4994 = vmatprep.subr.bf16.mxu0 %v3269
          %4995 = vmatpush1.bf16.msra.mxu0 %v3268
          %4996 = vmatprep.subr.bf16.mxu0 %v3301
          %4997 = vmatpush1.bf16.msra.mxu0 %v3300
          %4998 = vmatprep.subr.bf16.mxu0 %v3333
          %4999 = vmatpush1.bf16.msra.mxu0 %v3332
          %5000 = vmatprep.mubr.bf16.mxu0 %v1096
          %5001 = vmatmul.mubr.bf16.gmra.mrb[0].mxu0 %v1095
          %v5002 = vpop.f32.mrb[0].mxu0
          %v5003 = vadd.f32 %v1029, %v5002
          %v5004 = vpop.f32.mrb[0].mxu0
          %v5005 = vadd.f32 %v1033, %v5004
          %v5006 = vpop.f32.mrb[0].mxu0
          %v5007 = vpop.f32.mrb[0].mxu0
          %5008 = vdwg.mxu0
          %5009 = vmatprep.subr.bf16.mxu0 %v3365
          %5010 = vmatpush1.bf16.msra.mxu0 %v3364
          %5011 = vmatprep.subr.bf16.mxu0 %v3397
          %5012 = vmatpush1.bf16.msra.mxu0 %v3396
          %5013 = vmatprep.subr.bf16.mxu0 0
          %5014 = vmatpush1.bf16.msra.mxu0 0
          %5015 = vmatprep.subr.bf16.mxu0 0
          %5016 = vmatpush1.bf16.msra.mxu0 0
          %5017 = vmatprep.subr.bf16.mxu0 0
          %5018 = vmatpush1.bf16.msra.mxu0 0
          %5019 = vmatprep.subr.bf16.mxu0 0
          %5020 = vmatpush1.bf16.msra.mxu0 0
          %5021 = vmatprep.subr.bf16.mxu0 0
          %5022 = vmatpush1.bf16.msra.mxu0 0
          %5023 = vmatprep.subr.bf16.mxu0 0
          %5024 = vmatpush1.bf16.msra.mxu0 0
          %5025 = vmatprep.subr.bf16.mxu0 0
          %5026 = vmatpush1.bf16.msra.mxu0 0
          %5027 = vmatprep.subr.bf16.mxu0 0
          %5028 = vmatpush1.bf16.msra.mxu0 0
          %5029 = vmatprep.subr.bf16.mxu0 0
          %5030 = vmatpush1.bf16.msra.mxu0 0
          %5031 = vmatprep.subr.bf16.mxu0 0
          %5032 = vmatpush1.bf16.msra.mxu0 0
          %5033 = vmatprep.subr.bf16.mxu0 0
          %5034 = vmatpush1.bf16.msra.mxu0 0
          %5035 = vmatprep.subr.bf16.mxu0 0
          %5036 = vmatpush1.bf16.msra.mxu0 0
          %5037 = vmatprep.subr.bf16.mxu0 0
          %5038 = vmatpush1.bf16.msra.mxu0 0
          %5039 = vmatprep.subr.bf16.mxu0 0
          %5040 = vmatpush1.bf16.msra.mxu0 0
          %5041 = vmatprep.mubr.bf16.mxu0 0
          %5042 = vmatmul.mubr.bf16.gmra.mrb[0].mxu0 %v3982
          %v5043 = vpop.f32.mrb[0].mxu0
          %v5044 = vadd.f32 %v5003, %v5043
          %v5045 = vpop.f32.mrb[0].mxu0
          %v5046 = vadd.f32 %v5005, %v5045
          %v5047 = vpop.f32.mrb[0].mxu0
          %v5048 = vpop.f32.mrb[0].mxu0
          %5049 = vdwg.mxu0
          %5050 = vmatprep.subr.bf16.mxu0 %v2855
          %5051 = vmatpush1.bf16.msra.mxu0 %v2854
          %5052 = vmatprep.subr.bf16.mxu0 %v2887
          %5053 = vmatpush1.bf16.msra.mxu0 %v2886
          %5054 = vmatprep.subr.bf16.mxu0 %v2919
          %5055 = vmatpush1.bf16.msra.mxu0 %v2918
          %5056 = vmatprep.subr.bf16.mxu0 %v2951
          %5057 = vmatpush1.bf16.msra.mxu0 %v2950
          %5058 = vmatprep.subr.bf16.mxu0 %v2983
          %5059 = vmatpush1.bf16.msra.mxu0 %v2982
          %5060 = vmatprep.subr.bf16.mxu0 %v3015
          %5061 = vmatpush1.bf16.msra.mxu0 %v3014
          %5062 = vmatprep.subr.bf16.mxu0 %v3047
          %5063 = vmatpush1.bf16.msra.mxu0 %v3046
          %5064 = vmatprep.subr.bf16.mxu0 %v3079
          %5065 = vmatpush1.bf16.msra.mxu0 %v3078
          %5066 = vmatprep.subr.bf16.mxu0 %v3111
          %5067 = vmatpush1.bf16.msra.mxu0 %v3110
          %5068 = vmatprep.subr.bf16.mxu0 %v3143
          %5069 = vmatpush1.bf16.msra.mxu0 %v3142
          %5070 = vmatprep.subr.bf16.mxu0 %v3175
          %5071 = vmatpush1.bf16.msra.mxu0 %v3174
          %5072 = vmatprep.subr.bf16.mxu0 %v3207
          %5073 = vmatpush1.bf16.msra.mxu0 %v3206
          %5074 = vmatprep.subr.bf16.mxu0 %v3239
          %5075 = vmatpush1.bf16.msra.mxu0 %v3238
          %5076 = vmatprep.subr.bf16.mxu0 %v3271
          %5077 = vmatpush1.bf16.msra.mxu0 %v3270
          %5078 = vmatprep.subr.bf16.mxu0 %v3303
          %5079 = vmatpush1.bf16.msra.mxu0 %v3302
          %5080 = vmatprep.subr.bf16.mxu0 %v3335
          %5081 = vmatpush1.bf16.msra.mxu0 %v3334
          %5082 = vmatprep.mubr.bf16.mxu0 %v1096
          %5083 = vmatmul.mubr.bf16.gmra.mrb[0].mxu0 %v1095
          %v5084 = vpop.f32.mrb[0].mxu0
          %v5085 = vadd.f32 %v1037, %v5084
          %v5086 = vpop.f32.mrb[0].mxu0
          %v5087 = vadd.f32 %v1041, %v5086
          %v5088 = vpop.f32.mrb[0].mxu0
          %v5089 = vpop.f32.mrb[0].mxu0
          %5090 = vdwg.mxu0
          %5091 = vmatprep.subr.bf16.mxu0 %v3367
          %5092 = vmatpush1.bf16.msra.mxu0 %v3366
          %5093 = vmatprep.subr.bf16.mxu0 %v3399
          %5094 = vmatpush1.bf16.msra.mxu0 %v3398
          %5095 = vmatprep.subr.bf16.mxu0 0
          %5096 = vmatpush1.bf16.msra.mxu0 0
          %5097 = vmatprep.subr.bf16.mxu0 0
          %5098 = vmatpush1.bf16.msra.mxu0 0
          %5099 = vmatprep.subr.bf16.mxu0 0
          %5100 = vmatpush1.bf16.msra.mxu0 0
          %5101 = vmatprep.subr.bf16.mxu0 0
          %5102 = vmatpush1.bf16.msra.mxu0 0
          %5103 = vmatprep.subr.bf16.mxu0 0
          %5104 = vmatpush1.bf16.msra.mxu0 0
          %5105 = vmatprep.subr.bf16.mxu0 0
          %5106 = vmatpush1.bf16.msra.mxu0 0
          %5107 = vmatprep.subr.bf16.mxu0 0
          %5108 = vmatpush1.bf16.msra.mxu0 0
          %5109 = vmatprep.subr.bf16.mxu0 0
          %5110 = vmatpush1.bf16.msra.mxu0 0
          %5111 = vmatprep.subr.bf16.mxu0 0
          %5112 = vmatpush1.bf16.msra.mxu0 0
          %5113 = vmatprep.subr.bf16.mxu0 0
          %5114 = vmatpush1.bf16.msra.mxu0 0
          %5115 = vmatprep.subr.bf16.mxu0 0
          %5116 = vmatpush1.bf16.msra.mxu0 0
          %5117 = vmatprep.subr.bf16.mxu0 0
          %5118 = vmatpush1.bf16.msra.mxu0 0
          %5119 = vmatprep.subr.bf16.mxu0 0
          %5120 = vmatpush1.bf16.msra.mxu0 0
          %5121 = vmatprep.subr.bf16.mxu0 0
          %5122 = vmatpush1.bf16.msra.mxu0 0
          %5123 = vmatprep.mubr.bf16.mxu0 0
          %5124 = vmatmul.mubr.bf16.gmra.mrb[0].mxu0 %v3982
          %v5125 = vpop.f32.mrb[0].mxu0
          %v5126 = vadd.f32 %v5085, %v5125
          %v5127 = vpop.f32.mrb[0].mxu0
          %v5128 = vadd.f32 %v5087, %v5127
          %v5129 = vpop.f32.mrb[0].mxu0
          %v5130 = vpop.f32.mrb[0].mxu0
          %5131 = vdwg.mxu0
          %5132 = vmatprep.subr.bf16.mxu0 %v2857
          %5133 = vmatpush1.bf16.msra.mxu0 %v2856
          %5134 = vmatprep.subr.bf16.mxu0 %v2889
          %5135 = vmatpush1.bf16.msra.mxu0 %v2888
          %5136 = vmatprep.subr.bf16.mxu0 %v2921
          %5137 = vmatpush1.bf16.msra.mxu0 %v2920
          %5138 = vmatprep.subr.bf16.mxu0 %v2953
          %5139 = vmatpush1.bf16.msra.mxu0 %v2952
          %5140 = vmatprep.subr.bf16.mxu0 %v2985
          %5141 = vmatpush1.bf16.msra.mxu0 %v2984
          %5142 = vmatprep.subr.bf16.mxu0 %v3017
          %5143 = vmatpush1.bf16.msra.mxu0 %v3016
          %5144 = vmatprep.subr.bf16.mxu0 %v3049
          %5145 = vmatpush1.bf16.msra.mxu0 %v3048
          %5146 = vmatprep.subr.bf16.mxu0 %v3081
          %5147 = vmatpush1.bf16.msra.mxu0 %v3080
          %5148 = vmatprep.subr.bf16.mxu0 %v3113
          %5149 = vmatpush1.bf16.msra.mxu0 %v3112
          %5150 = vmatprep.subr.bf16.mxu0 %v3145
          %5151 = vmatpush1.bf16.msra.mxu0 %v3144
          %5152 = vmatprep.subr.bf16.mxu0 %v3177
          %5153 = vmatpush1.bf16.msra.mxu0 %v3176
          %5154 = vmatprep.subr.bf16.mxu0 %v3209
          %5155 = vmatpush1.bf16.msra.mxu0 %v3208
          %5156 = vmatprep.subr.bf16.mxu0 %v3241
          %5157 = vmatpush1.bf16.msra.mxu0 %v3240
          %5158 = vmatprep.subr.bf16.mxu0 %v3273
          %5159 = vmatpush1.bf16.msra.mxu0 %v3272
          %5160 = vmatprep.subr.bf16.mxu0 %v3305
          %5161 = vmatpush1.bf16.msra.mxu0 %v3304
          %5162 = vmatprep.subr.bf16.mxu0 %v3337
          %5163 = vmatpush1.bf16.msra.mxu0 %v3336
          %5164 = vmatprep.mubr.bf16.mxu0 %v1096
          %5165 = vmatmul.mubr.bf16.gmra.mrb[0].mxu0 %v1095
          %v5166 = vpop.f32.mrb[0].mxu0
          %v5167 = vadd.f32 %v1045, %v5166
          %v5168 = vpop.f32.mrb[0].mxu0
          %v5169 = vadd.f32 %v1049, %v5168
          %v5170 = vpop.f32.mrb[0].mxu0
          %v5171 = vpop.f32.mrb[0].mxu0
          %5172 = vdwg.mxu0
          %5173 = vmatprep.subr.bf16.mxu0 %v3369
          %5174 = vmatpush1.bf16.msra.mxu0 %v3368
          %5175 = vmatprep.subr.bf16.mxu0 %v3401
          %5176 = vmatpush1.bf16.msra.mxu0 %v3400
          %5177 = vmatprep.subr.bf16.mxu0 0
          %5178 = vmatpush1.bf16.msra.mxu0 0
          %5179 = vmatprep.subr.bf16.mxu0 0
          %5180 = vmatpush1.bf16.msra.mxu0 0
          %5181 = vmatprep.subr.bf16.mxu0 0
          %5182 = vmatpush1.bf16.msra.mxu0 0
          %5183 = vmatprep.subr.bf16.mxu0 0
          %5184 = vmatpush1.bf16.msra.mxu0 0
          %5185 = vmatprep.subr.bf16.mxu0 0
          %5186 = vmatpush1.bf16.msra.mxu0 0
          %5187 = vmatprep.subr.bf16.mxu0 0
          %5188 = vmatpush1.bf16.msra.mxu0 0
          %5189 = vmatprep.subr.bf16.mxu0 0
          %5190 = vmatpush1.bf16.msra.mxu0 0
          %5191 = vmatprep.subr.bf16.mxu0 0
          %5192 = vmatpush1.bf16.msra.mxu0 0
          %5193 = vmatprep.subr.bf16.mxu0 0
          %5194 = vmatpush1.bf16.msra.mxu0 0
          %5195 = vmatprep.subr.bf16.mxu0 0
          %5196 = vmatpush1.bf16.msra.mxu0 0
          %5197 = vmatprep.subr.bf16.mxu0 0
          %5198 = vmatpush1.bf16.msra.mxu0 0
          %5199 = vmatprep.subr.bf16.mxu0 0
          %5200 = vmatpush1.bf16.msra.mxu0 0
          %5201 = vmatprep.subr.bf16.mxu0 0
          %5202 = vmatpush1.bf16.msra.mxu0 0
          %5203 = vmatprep.subr.bf16.mxu0 0
          %5204 = vmatpush1.bf16.msra.mxu0 0
          %5205 = vmatprep.mubr.bf16.mxu0 0
          %5206 = vmatmul.mubr.bf16.gmra.mrb[0].mxu0 %v3982
          %v5207 = vpop.f32.mrb[0].mxu0
          %v5208 = vadd.f32 %v5167, %v5207
          %v5209 = vpop.f32.mrb[0].mxu0
          %v5210 = vadd.f32 %v5169, %v5209
          %v5211 = vpop.f32.mrb[0].mxu0
          %v5212 = vpop.f32.mrb[0].mxu0
          %5213 = vdwg.mxu0
          %5214 = vmatprep.subr.bf16.mxu0 %v2859
          %5215 = vmatpush1.bf16.msra.mxu0 %v2858
          %5216 = vmatprep.subr.bf16.mxu0 %v2891
          %5217 = vmatpush1.bf16.msra.mxu0 %v2890
          %5218 = vmatprep.subr.bf16.mxu0 %v2923
          %5219 = vmatpush1.bf16.msra.mxu0 %v2922
          %5220 = vmatprep.subr.bf16.mxu0 %v2955
          %5221 = vmatpush1.bf16.msra.mxu0 %v2954
          %5222 = vmatprep.subr.bf16.mxu0 %v2987
          %5223 = vmatpush1.bf16.msra.mxu0 %v2986
          %5224 = vmatprep.subr.bf16.mxu0 %v3019
          %5225 = vmatpush1.bf16.msra.mxu0 %v3018
          %5226 = vmatprep.subr.bf16.mxu0 %v3051
          %5227 = vmatpush1.bf16.msra.mxu0 %v3050
          %5228 = vmatprep.subr.bf16.mxu0 %v3083
          %5229 = vmatpush1.bf16.msra.mxu0 %v3082
          %5230 = vmatprep.subr.bf16.mxu0 %v3115
          %5231 = vmatpush1.bf16.msra.mxu0 %v3114
          %5232 = vmatprep.subr.bf16.mxu0 %v3147
          %5233 = vmatpush1.bf16.msra.mxu0 %v3146
          %5234 = vmatprep.subr.bf16.mxu0 %v3179
          %5235 = vmatpush1.bf16.msra.mxu0 %v3178
          %5236 = vmatprep.subr.bf16.mxu0 %v3211
          %5237 = vmatpush1.bf16.msra.mxu0 %v3210
          %5238 = vmatprep.subr.bf16.mxu0 %v3243
          %5239 = vmatpush1.bf16.msra.mxu0 %v3242
          %5240 = vmatprep.subr.bf16.mxu0 %v3275
          %5241 = vmatpush1.bf16.msra.mxu0 %v3274
          %5242 = vmatprep.subr.bf16.mxu0 %v3307
          %5243 = vmatpush1.bf16.msra.mxu0 %v3306
          %5244 = vmatprep.subr.bf16.mxu0 %v3339
          %5245 = vmatpush1.bf16.msra.mxu0 %v3338
          %5246 = vmatprep.mubr.bf16.mxu0 %v1096
          %5247 = vmatmul.mubr.bf16.gmra.mrb[0].mxu0 %v1095
          %v5248 = vpop.f32.mrb[0].mxu0
          %v5249 = vadd.f32 %v1053, %v5248
          %v5250 = vpop.f32.mrb[0].mxu0
          %v5251 = vadd.f32 %v1057, %v5250
          %v5252 = vpop.f32.mrb[0].mxu0
          %v5253 = vpop.f32.mrb[0].mxu0
          %5254 = vdwg.mxu0
          %5255 = vmatprep.subr.bf16.mxu0 %v3371
          %5256 = vmatpush1.bf16.msra.mxu0 %v3370
          %5257 = vmatprep.subr.bf16.mxu0 %v3403
          %5258 = vmatpush1.bf16.msra.mxu0 %v3402
          %5259 = vmatprep.subr.bf16.mxu0 0
          %5260 = vmatpush1.bf16.msra.mxu0 0
          %5261 = vmatprep.subr.bf16.mxu0 0
          %5262 = vmatpush1.bf16.msra.mxu0 0
          %5263 = vmatprep.subr.bf16.mxu0 0
          %5264 = vmatpush1.bf16.msra.mxu0 0
          %5265 = vmatprep.subr.bf16.mxu0 0
          %5266 = vmatpush1.bf16.msra.mxu0 0
          %5267 = vmatprep.subr.bf16.mxu0 0
          %5268 = vmatpush1.bf16.msra.mxu0 0
          %5269 = vmatprep.subr.bf16.mxu0 0
          %5270 = vmatpush1.bf16.msra.mxu0 0
          %5271 = vmatprep.subr.bf16.mxu0 0
          %5272 = vmatpush1.bf16.msra.mxu0 0
          %5273 = vmatprep.subr.bf16.mxu0 0
          %5274 = vmatpush1.bf16.msra.mxu0 0
          %5275 = vmatprep.subr.bf16.mxu0 0
          %5276 = vmatpush1.bf16.msra.mxu0 0
          %5277 = vmatprep.subr.bf16.mxu0 0
          %5278 = vmatpush1.bf16.msra.mxu0 0
          %5279 = vmatprep.subr.bf16.mxu0 0
          %5280 = vmatpush1.bf16.msra.mxu0 0
          %5281 = vmatprep.subr.bf16.mxu0 0
          %5282 = vmatpush1.bf16.msra.mxu0 0
          %5283 = vmatprep.subr.bf16.mxu0 0
          %5284 = vmatpush1.bf16.msra.mxu0 0
          %5285 = vmatprep.subr.bf16.mxu0 0
          %5286 = vmatpush1.bf16.msra.mxu0 0
          %5287 = vmatprep.mubr.bf16.mxu0 0
          %5288 = vmatmul.mubr.bf16.gmra.mrb[0].mxu0 %v3982
          %v5289 = vpop.f32.mrb[0].mxu0
          %v5290 = vadd.f32 %v5249, %v5289
          %v5291 = vpop.f32.mrb[0].mxu0
          %v5292 = vadd.f32 %v5251, %v5291
          %v5293 = vpop.f32.mrb[0].mxu0
          %v5294 = vpop.f32.mrb[0].mxu0
          %5295 = vdwg.mxu0
          %v5296 = vmax.f32 %v4060, 0.0
          %v5297 = vmax.f32 %v4062, 0.0
          %v5298 = vmax.f32 %v4142, 0.0
          %v5299 = vmax.f32 %v4144, 0.0
          %v5300 = vmax.f32 %v4224, 0.0
          %v5301 = vmax.f32 %v4226, 0.0
          %v5302 = vmax.f32 %v4306, 0.0
          %v5303 = vmax.f32 %v4308, 0.0
          %v5304 = vmax.f32 %v4388, 0.0
          %v5305 = vmax.f32 %v4390, 0.0
          %v5306 = vmax.f32 %v4470, 0.0
          %v5307 = vmax.f32 %v4472, 0.0
          %v5308 = vmax.f32 %v4552, 0.0
          %v5309 = vmax.f32 %v4554, 0.0
          %v5310 = vmax.f32 %v4634, 0.0
          %v5311 = vmax.f32 %v4636, 0.0
          %v5312 = vmax.f32 %v4716, 0.0
          %v5313 = vmax.f32 %v4718, 0.0
          %v5314 = vmax.f32 %v4798, 0.0
          %v5315 = vmax.f32 %v4800, 0.0
          %v5316 = vmax.f32 %v4880, 0.0
          %v5317 = vmax.f32 %v4882, 0.0
          %v5318 = vmax.f32 %v4962, 0.0
          %v5319 = vmax.f32 %v4964, 0.0
          %v5320 = vmax.f32 %v5044, 0.0
          %v5321 = vmax.f32 %v5046, 0.0
          %v5322 = vmax.f32 %v5126, 0.0
          %v5323 = vmax.f32 %v5128, 0.0
          %v5324 = vmax.f32 %v5208, 0.0
          %v5325 = vmax.f32 %v5210, 0.0
          %v5326 = vmax.f32 %v5290, 0.0
          %v5327 = vmax.f32 %v5292, 0.0
          %v5328 = vpack.c.bf16 %v5296, %v5296
          %v5329 = vpack.c.bf16 %v5297, %v5297
          %v5330 = vpack.c.bf16 %v5298, %v5298
          %v5331 = vpack.c.bf16 %v5299, %v5299
          %v5332 = vpack.c.bf16 %v5300, %v5300
          %v5333 = vpack.c.bf16 %v5301, %v5301
          %v5334 = vpack.c.bf16 %v5302, %v5302
          %v5335 = vpack.c.bf16 %v5303, %v5303
          %v5336 = vpack.c.bf16 %v5304, %v5304
          %v5337 = vpack.c.bf16 %v5305, %v5305
          %v5338 = vpack.c.bf16 %v5306, %v5306
          %v5339 = vpack.c.bf16 %v5307, %v5307
          %v5340 = vpack.c.bf16 %v5308, %v5308
          %v5341 = vpack.c.bf16 %v5309, %v5309
          %v5342 = vpack.c.bf16 %v5310, %v5310
          %v5343 = vpack.c.bf16 %v5311, %v5311
          %v5344 = vpack.c.bf16 %v5312, %v5312
          %v5345 = vpack.c.bf16 %v5313, %v5313
          %v5346 = vpack.c.bf16 %v5314, %v5314
          %v5347 = vpack.c.bf16 %v5315, %v5315
          %v5348 = vpack.c.bf16 %v5316, %v5316
          %v5349 = vpack.c.bf16 %v5317, %v5317
          %v5350 = vpack.c.bf16 %v5318, %v5318
          %v5351 = vpack.c.bf16 %v5319, %v5319
          %v5352 = vpack.c.bf16 %v5320, %v5320
          %v5353 = vpack.c.bf16 %v5321, %v5321
          %v5354 = vpack.c.bf16 %v5322, %v5322
          %v5355 = vpack.c.bf16 %v5323, %v5323
          %v5356 = vpack.c.bf16 %v5324, %v5324
          %v5357 = vpack.c.bf16 %v5325, %v5325
          %v5358 = vpack.c.bf16 %v5326, %v5326
          %v5359 = vpack.c.bf16 %v5327, %v5327
          %v5392 = vunpack.c.l.b16 %v5328
          %v5393 = vunpack.c.l.b16 %v5329
          %v5394 = vunpack.c.l.b16 %v5330
          %v5395 = vunpack.c.l.b16 %v5331
          %v5396 = vunpack.c.l.b16 %v5332
          %v5397 = vunpack.c.l.b16 %v5333
          %v5398 = vunpack.c.l.b16 %v5334
          %v5399 = vunpack.c.l.b16 %v5335
          %v5400 = vunpack.c.l.b16 %v5336
          %v5401 = vunpack.c.l.b16 %v5337
          %v5402 = vunpack.c.l.b16 %v5338
          %v5403 = vunpack.c.l.b16 %v5339
          %v5404 = vunpack.c.l.b16 %v5340
          %v5405 = vunpack.c.l.b16 %v5341
          %v5406 = vunpack.c.l.b16 %v5342
          %v5407 = vunpack.c.l.b16 %v5343
          %v5408 = vunpack.c.l.b16 %v5344
          %v5409 = vunpack.c.l.b16 %v5345
          %v5410 = vunpack.c.l.b16 %v5346
          %v5411 = vunpack.c.l.b16 %v5347
          %v5412 = vunpack.c.l.b16 %v5348
          %v5413 = vunpack.c.l.b16 %v5349
          %v5414 = vunpack.c.l.b16 %v5350
          %v5415 = vunpack.c.l.b16 %v5351
          %v5416 = vunpack.c.l.b16 %v5352
          %v5417 = vunpack.c.l.b16 %v5353
          %v5418 = vunpack.c.l.b16 %v5354
          %v5419 = vunpack.c.l.b16 %v5355
          %v5420 = vunpack.c.l.b16 %v5356
          %v5421 = vunpack.c.l.b16 %v5357
          %v5422 = vunpack.c.l.b16 %v5358
          %v5423 = vunpack.c.l.b16 %v5359
          %v5424 = vpack.c.b16 %v5393, %v5392
          %v5425 = vpack.c.b16 %v5395, %v5394
          %v5426 = vpack.c.b16 %v5397, %v5396
          %v5427 = vpack.c.b16 %v5399, %v5398
          %v5428 = vpack.c.b16 %v5401, %v5400
          %v5429 = vpack.c.b16 %v5403, %v5402
          %v5430 = vpack.c.b16 %v5405, %v5404
          %v5431 = vpack.c.b16 %v5407, %v5406
          %v5432 = vpack.c.b16 %v5409, %v5408
          %v5433 = vpack.c.b16 %v5411, %v5410
          %v5434 = vpack.c.b16 %v5413, %v5412
          %v5435 = vpack.c.b16 %v5415, %v5414
          %v5436 = vpack.c.b16 %v5417, %v5416
          %v5437 = vpack.c.b16 %v5419, %v5418
          %v5438 = vpack.c.b16 %v5421, %v5420
          %v5439 = vpack.c.b16 %v5423, %v5422
          %5456 = vst [vmem:[#allocation2] sm:$0xff] %v5424
          %5457 = vst [vmem:[#allocation2 + $0x8] sm:$0xff] %v5425
          %5458 = vst [vmem:[#allocation2 + $0x10] sm:$0xff] %v5426
          %5459 = vst [vmem:[#allocation2 + $0x18] sm:$0xff] %v5427
          %5460 = vst [vmem:[#allocation2 + $0x20] sm:$0xff] %v5428
          %5461 = vst [vmem:[#allocation2 + $0x28] sm:$0xff] %v5429
          %5462 = vst [vmem:[#allocation2 + $0x30] sm:$0xff] %v5430
          %5463 = vst [vmem:[#allocation2 + $0x38] sm:$0xff] %v5431
          %5464 = vst [vmem:[#allocation2 + $0x40] sm:$0xff] %v5432
          %5465 = vst [vmem:[#allocation2 + $0x48] sm:$0xff] %v5433
          %5466 = vst [vmem:[#allocation2 + $0x50] sm:$0xff] %v5434
          %5467 = vst [vmem:[#allocation2 + $0x58] sm:$0xff] %v5435
          %5468 = vst [vmem:[#allocation2 + $0x60] sm:$0xff] %v5436
          %5469 = vst [vmem:[#allocation2 + $0x68] sm:$0xff] %v5437
          %5470 = vst [vmem:[#allocation2 + $0x70] sm:$0xff] %v5438
          %5471 = vst [vmem:[#allocation2 + $0x78] sm:$0xff] %v5439
          %5472 = vst [vmem:[#allocation3] sm:$0xff] 0.0
          %5473 = vst [vmem:[#allocation3 + $0x8] sm:$0xff] 0.0
          %5474 = vst [vmem:[#allocation3 + $0x10] sm:$0xff] 0.0
          %5475 = vst [vmem:[#allocation3 + $0x18] sm:$0xff] 0.0
          %5476 = vst [vmem:[#allocation3 + $0x20] sm:$0xff] 0.0
          %5477 = vst [vmem:[#allocation3 + $0x28] sm:$0xff] 0.0
          %5478 = vst [vmem:[#allocation3 + $0x30] sm:$0xff] 0.0
          %5479 = vst [vmem:[#allocation3 + $0x38] sm:$0xff] 0.0
        $region64: #{tpu_custom_call.1} parent=39 // pred_fallthru
          _
        %s5480 = smul.u32 %s29, 2048
        %v5481 = vld [vmem:[#allocation3] sm:$0xff]
        %v5482 = vld [vmem:[#allocation3 + $0x8] sm:$0xff]
        %v5483 = vld [vmem:[#allocation3 + $0x10] sm:$0xff]
        %v5484 = vld [vmem:[#allocation3 + $0x18] sm:$0xff]
        %v5485 = vld [vmem:[#allocation3 + $0x20] sm:$0xff]
        %v5486 = vld [vmem:[#allocation3 + $0x28] sm:$0xff]
        %v5487 = vld [vmem:[#allocation3 + $0x30] sm:$0xff]
        %v5488 = vld [vmem:[#allocation3 + $0x38] sm:$0xff]
        %s5489 = sshra.s32 %s5480, 7
        %s5490 = sand.u32 %s5480, 127
        %s5491 = smul.addr %s5489, 4
        %s5492 = scalar_lea.vmem [#allocation2], %s5491
        %v5493 = vld [vmem:[%s5492] sm:$0xff]
        %v5494 = vld [vmem:[%s5492 + $0x8] sm:$0xff]
        %v5495 = vld [vmem:[%s5492 + $0x10] sm:$0xff]
        %v5496 = vld [vmem:[%s5492 + $0x18] sm:$0xff]
        %v5497 = vld [vmem:[%s5492 + $0x20] sm:$0xff]
        %v5498 = vld [vmem:[%s5492 + $0x28] sm:$0xff]
        %v5499 = vld [vmem:[%s5492 + $0x30] sm:$0xff]
        %v5500 = vld [vmem:[%s5492 + $0x38] sm:$0xff]
        %v5501 = vld [vmem:[%s294] sm:$0xff]
        %v5502 = vld [vmem:[%s294 + $0x8] sm:$0xff]
        %v5503 = vld [vmem:[%s294 + $0x10] sm:$0xff]
        %v5504 = vld [vmem:[%s294 + $0x18] sm:$0xff]
        %v5505 = vld [vmem:[%s294 + $0x20] sm:$0xff]
        %v5506 = vld [vmem:[%s294 + $0x28] sm:$0xff]
        %v5507 = vld [vmem:[%s294 + $0x30] sm:$0xff]
        %v5508 = vld [vmem:[%s294 + $0x38] sm:$0xff]
        %v5509 = vld [vmem:[%s294 + $0x40] sm:$0xff]
        %v5510 = vld [vmem:[%s294 + $0x48] sm:$0xff]
        %v5511 = vld [vmem:[%s294 + $0x50] sm:$0xff]
        %v5512 = vld [vmem:[%s294 + $0x58] sm:$0xff]
        %v5513 = vld [vmem:[%s294 + $0x60] sm:$0xff]
        %v5514 = vld [vmem:[%s294 + $0x68] sm:$0xff]
        %v5515 = vld [vmem:[%s294 + $0x70] sm:$0xff]
        %v5516 = vld [vmem:[%s294 + $0x78] sm:$0xff]
        %v5517 = vld [vmem:[%s294 + $0x80] sm:$0xff]
        %v5518 = vld [vmem:[%s294 + $0x88] sm:$0xff]
        %v5519 = vld [vmem:[%s294 + $0x90] sm:$0xff]
        %v5520 = vld [vmem:[%s294 + $0x98] sm:$0xff]
        %v5521 = vld [vmem:[%s294 + $0xa0] sm:$0xff]
        %v5522 = vld [vmem:[%s294 + $0xa8] sm:$0xff]
        %v5523 = vld [vmem:[%s294 + $0xb0] sm:$0xff]
        %v5524 = vld [vmem:[%s294 + $0xb8] sm:$0xff]
        %v5525 = vld [vmem:[%s294 + $0xc0] sm:$0xff]
        %v5526 = vld [vmem:[%s294 + $0xc8] sm:$0xff]
        %v5527 = vld [vmem:[%s294 + $0xd0] sm:$0xff]
        %v5528 = vld [vmem:[%s294 + $0xd8] sm:$0xff]
        %v5529 = vld [vmem:[%s294 + $0xe0] sm:$0xff]
        %v5530 = vld [vmem:[%s294 + $0xe8] sm:$0xff]
        %v5531 = vld [vmem:[%s294 + $0xf0] sm:$0xff]
        %v5532 = vld [vmem:[%s294 + $0xf8] sm:$0xff]
        %v5533 = vld [vmem:[%s294 + $0x100] sm:$0xff]
        %v5534 = vld [vmem:[%s294 + $0x108] sm:$0xff]
        %v5535 = vld [vmem:[%s294 + $0x110] sm:$0xff]
        %v5536 = vld [vmem:[%s294 + $0x118] sm:$0xff]
        %v5537 = vld [vmem:[%s294 + $0x120] sm:$0xff]
        %v5538 = vld [vmem:[%s294 + $0x128] sm:$0xff]
        %v5539 = vld [vmem:[%s294 + $0x130] sm:$0xff]
        %v5540 = vld [vmem:[%s294 + $0x138] sm:$0xff]
        %v5541 = vld [vmem:[%s294 + $0x140] sm:$0xff]
        %v5542 = vld [vmem:[%s294 + $0x148] sm:$0xff]
        %v5543 = vld [vmem:[%s294 + $0x150] sm:$0xff]
        %v5544 = vld [vmem:[%s294 + $0x158] sm:$0xff]
        %v5545 = vld [vmem:[%s294 + $0x160] sm:$0xff]
        %v5546 = vld [vmem:[%s294 + $0x168] sm:$0xff]
        %v5547 = vld [vmem:[%s294 + $0x170] sm:$0xff]
        %v5548 = vld [vmem:[%s294 + $0x178] sm:$0xff]
        %v5549 = vld [vmem:[%s294 + $0x180] sm:$0xff]
        %v5550 = vld [vmem:[%s294 + $0x188] sm:$0xff]
        %v5551 = vld [vmem:[%s294 + $0x190] sm:$0xff]
        %v5552 = vld [vmem:[%s294 + $0x198] sm:$0xff]
        %v5553 = vld [vmem:[%s294 + $0x1a0] sm:$0xff]
        %v5554 = vld [vmem:[%s294 + $0x1a8] sm:$0xff]
        %v5555 = vld [vmem:[%s294 + $0x1b0] sm:$0xff]
        %v5556 = vld [vmem:[%s294 + $0x1b8] sm:$0xff]
        %v5557 = vld [vmem:[%s294 + $0x1c0] sm:$0xff]
        %v5558 = vld [vmem:[%s294 + $0x1c8] sm:$0xff]
        %v5559 = vld [vmem:[%s294 + $0x1d0] sm:$0xff]
        %v5560 = vld [vmem:[%s294 + $0x1d8] sm:$0xff]
        %v5561 = vld [vmem:[%s294 + $0x1e0] sm:$0xff]
        %v5562 = vld [vmem:[%s294 + $0x1e8] sm:$0xff]
        %v5563 = vld [vmem:[%s294 + $0x1f0] sm:$0xff]
        %v5564 = vld [vmem:[%s294 + $0x1f8] sm:$0xff]
        %v5565 = vld [vmem:[%s294 + $0x200] sm:$0xff]
        %v5566 = vld [vmem:[%s294 + $0x208] sm:$0xff]
        %v5567 = vld [vmem:[%s294 + $0x210] sm:$0xff]
        %v5568 = vld [vmem:[%s294 + $0x218] sm:$0xff]
        %v5569 = vld [vmem:[%s294 + $0x220] sm:$0xff]
        %v5570 = vld [vmem:[%s294 + $0x228] sm:$0xff]
        %v5571 = vld [vmem:[%s294 + $0x230] sm:$0xff]
        %v5572 = vld [vmem:[%s294 + $0x238] sm:$0xff]
        %v5573 = vld [vmem:[%s294 + $0x240] sm:$0xff]
        %v5574 = vld [vmem:[%s294 + $0x248] sm:$0xff]
        %v5575 = vld [vmem:[%s294 + $0x250] sm:$0xff]
        %v5576 = vld [vmem:[%s294 + $0x258] sm:$0xff]
        %v5577 = vld [vmem:[%s294 + $0x260] sm:$0xff]
        %v5578 = vld [vmem:[%s294 + $0x268] sm:$0xff]
        %v5579 = vld [vmem:[%s294 + $0x270] sm:$0xff]
        %v5580 = vld [vmem:[%s294 + $0x278] sm:$0xff]
        %v5581 = vld [vmem:[%s294 + $0x280] sm:$0xff]
        %v5582 = vld [vmem:[%s294 + $0x288] sm:$0xff]
        %v5583 = vld [vmem:[%s294 + $0x290] sm:$0xff]
        %v5584 = vld [vmem:[%s294 + $0x298] sm:$0xff]
        %v5585 = vld [vmem:[%s294 + $0x2a0] sm:$0xff]
        %v5586 = vld [vmem:[%s294 + $0x2a8] sm:$0xff]
        %v5587 = vld [vmem:[%s294 + $0x2b0] sm:$0xff]
        %v5588 = vld [vmem:[%s294 + $0x2b8] sm:$0xff]
        %v5589 = vld [vmem:[%s294 + $0x2c0] sm:$0xff]
        %v5590 = vld [vmem:[%s294 + $0x2c8] sm:$0xff]
        %v5591 = vld [vmem:[%s294 + $0x2d0] sm:$0xff]
        %v5592 = vld [vmem:[%s294 + $0x2d8] sm:$0xff]
        %v5593 = vld [vmem:[%s294 + $0x2e0] sm:$0xff]
        %v5594 = vld [vmem:[%s294 + $0x2e8] sm:$0xff]
        %v5595 = vld [vmem:[%s294 + $0x2f0] sm:$0xff]
        %v5596 = vld [vmem:[%s294 + $0x2f8] sm:$0xff]
        %v5597 = vld [vmem:[%s294 + $0x300] sm:$0xff]
        %v5598 = vld [vmem:[%s294 + $0x308] sm:$0xff]
        %v5599 = vld [vmem:[%s294 + $0x310] sm:$0xff]
        %v5600 = vld [vmem:[%s294 + $0x318] sm:$0xff]
        %v5601 = vld [vmem:[%s294 + $0x320] sm:$0xff]
        %v5602 = vld [vmem:[%s294 + $0x328] sm:$0xff]
        %v5603 = vld [vmem:[%s294 + $0x330] sm:$0xff]
        %v5604 = vld [vmem:[%s294 + $0x338] sm:$0xff]
        %v5605 = vld [vmem:[%s294 + $0x340] sm:$0xff]
        %v5606 = vld [vmem:[%s294 + $0x348] sm:$0xff]
        %v5607 = vld [vmem:[%s294 + $0x350] sm:$0xff]
        %v5608 = vld [vmem:[%s294 + $0x358] sm:$0xff]
        %v5609 = vld [vmem:[%s294 + $0x360] sm:$0xff]
        %v5610 = vld [vmem:[%s294 + $0x368] sm:$0xff]
        %v5611 = vld [vmem:[%s294 + $0x370] sm:$0xff]
        %v5612 = vld [vmem:[%s294 + $0x378] sm:$0xff]
        %v5613 = vld [vmem:[%s294 + $0x380] sm:$0xff]
        %v5614 = vld [vmem:[%s294 + $0x388] sm:$0xff]
        %v5615 = vld [vmem:[%s294 + $0x390] sm:$0xff]
        %v5616 = vld [vmem:[%s294 + $0x398] sm:$0xff]
        %v5617 = vld [vmem:[%s294 + $0x3a0] sm:$0xff]
        %v5618 = vld [vmem:[%s294 + $0x3a8] sm:$0xff]
        %v5619 = vld [vmem:[%s294 + $0x3b0] sm:$0xff]
        %v5620 = vld [vmem:[%s294 + $0x3b8] sm:$0xff]
        %v5621 = vld [vmem:[%s294 + $0x3c0] sm:$0xff]
        %v5622 = vld [vmem:[%s294 + $0x3c8] sm:$0xff]
        %v5623 = vld [vmem:[%s294 + $0x3d0] sm:$0xff]
        %v5624 = vld [vmem:[%s294 + $0x3d8] sm:$0xff]
        %v5625 = vld [vmem:[%s294 + $0x3e0] sm:$0xff]
        %v5626 = vld [vmem:[%s294 + $0x3e8] sm:$0xff]
        %v5627 = vld [vmem:[%s294 + $0x3f0] sm:$0xff]
        %v5628 = vld [vmem:[%s294 + $0x3f8] sm:$0xff]
        %v5629 = vld [vmem:[%s294 + $0x400] sm:$0xff]
        %v5630 = vld [vmem:[%s294 + $0x408] sm:$0xff]
        %v5631 = vld [vmem:[%s294 + $0x410] sm:$0xff]
        %v5632 = vld [vmem:[%s294 + $0x418] sm:$0xff]
        %v5633 = vld [vmem:[%s294 + $0x420] sm:$0xff]
        %v5634 = vld [vmem:[%s294 + $0x428] sm:$0xff]
        %v5635 = vld [vmem:[%s294 + $0x430] sm:$0xff]
        %v5636 = vld [vmem:[%s294 + $0x438] sm:$0xff]
        %v5637 = vld [vmem:[%s294 + $0x440] sm:$0xff]
        %v5638 = vld [vmem:[%s294 + $0x448] sm:$0xff]
        %v5639 = vld [vmem:[%s294 + $0x450] sm:$0xff]
        %v5640 = vld [vmem:[%s294 + $0x458] sm:$0xff]
        %v5641 = vld [vmem:[%s294 + $0x460] sm:$0xff]
        %v5642 = vld [vmem:[%s294 + $0x468] sm:$0xff]
        %v5643 = vld [vmem:[%s294 + $0x470] sm:$0xff]
        %v5644 = vld [vmem:[%s294 + $0x478] sm:$0xff]
        %v5645 = vld [vmem:[%s294 + $0x480] sm:$0xff]
        %v5646 = vld [vmem:[%s294 + $0x488] sm:$0xff]
        %v5647 = vld [vmem:[%s294 + $0x490] sm:$0xff]
        %v5648 = vld [vmem:[%s294 + $0x498] sm:$0xff]
        %v5649 = vld [vmem:[%s294 + $0x4a0] sm:$0xff]
        %v5650 = vld [vmem:[%s294 + $0x4a8] sm:$0xff]
        %v5651 = vld [vmem:[%s294 + $0x4b0] sm:$0xff]
        %v5652 = vld [vmem:[%s294 + $0x4b8] sm:$0xff]
        %v5653 = vld [vmem:[%s294 + $0x4c0] sm:$0xff]
        %v5654 = vld [vmem:[%s294 + $0x4c8] sm:$0xff]
        %v5655 = vld [vmem:[%s294 + $0x4d0] sm:$0xff]
        %v5656 = vld [vmem:[%s294 + $0x4d8] sm:$0xff]
        %v5657 = vld [vmem:[%s294 + $0x4e0] sm:$0xff]
        %v5658 = vld [vmem:[%s294 + $0x4e8] sm:$0xff]
        %v5659 = vld [vmem:[%s294 + $0x4f0] sm:$0xff]
        %v5660 = vld [vmem:[%s294 + $0x4f8] sm:$0xff]
        %v5661 = vld [vmem:[%s294 + $0x500] sm:$0xff]
        %v5662 = vld [vmem:[%s294 + $0x508] sm:$0xff]
        %v5663 = vld [vmem:[%s294 + $0x510] sm:$0xff]
        %v5664 = vld [vmem:[%s294 + $0x518] sm:$0xff]
        %v5665 = vld [vmem:[%s294 + $0x520] sm:$0xff]
        %v5666 = vld [vmem:[%s294 + $0x528] sm:$0xff]
        %v5667 = vld [vmem:[%s294 + $0x530] sm:$0xff]
        %v5668 = vld [vmem:[%s294 + $0x538] sm:$0xff]
        %v5669 = vld [vmem:[%s294 + $0x540] sm:$0xff]
        %v5670 = vld [vmem:[%s294 + $0x548] sm:$0xff]
        %v5671 = vld [vmem:[%s294 + $0x550] sm:$0xff]
        %v5672 = vld [vmem:[%s294 + $0x558] sm:$0xff]
        %v5673 = vld [vmem:[%s294 + $0x560] sm:$0xff]
        %v5674 = vld [vmem:[%s294 + $0x568] sm:$0xff]
        %v5675 = vld [vmem:[%s294 + $0x570] sm:$0xff]
        %v5676 = vld [vmem:[%s294 + $0x578] sm:$0xff]
        %v5677 = vld [vmem:[%s294 + $0x580] sm:$0xff]
        %v5678 = vld [vmem:[%s294 + $0x588] sm:$0xff]
        %v5679 = vld [vmem:[%s294 + $0x590] sm:$0xff]
        %v5680 = vld [vmem:[%s294 + $0x598] sm:$0xff]
        %v5681 = vld [vmem:[%s294 + $0x5a0] sm:$0xff]
        %v5682 = vld [vmem:[%s294 + $0x5a8] sm:$0xff]
        %v5683 = vld [vmem:[%s294 + $0x5b0] sm:$0xff]
        %v5684 = vld [vmem:[%s294 + $0x5b8] sm:$0xff]
        %v5685 = vld [vmem:[%s294 + $0x5c0] sm:$0xff]
        %v5686 = vld [vmem:[%s294 + $0x5c8] sm:$0xff]
        %v5687 = vld [vmem:[%s294 + $0x5d0] sm:$0xff]
        %v5688 = vld [vmem:[%s294 + $0x5d8] sm:$0xff]
        %v5689 = vld [vmem:[%s294 + $0x5e0] sm:$0xff]
        %v5690 = vld [vmem:[%s294 + $0x5e8] sm:$0xff]
        %v5691 = vld [vmem:[%s294 + $0x5f0] sm:$0xff]
        %v5692 = vld [vmem:[%s294 + $0x5f8] sm:$0xff]
        %v5693 = vld [vmem:[%s294 + $0x600] sm:$0xff]
        %v5694 = vld [vmem:[%s294 + $0x608] sm:$0xff]
        %v5695 = vld [vmem:[%s294 + $0x610] sm:$0xff]
        %v5696 = vld [vmem:[%s294 + $0x618] sm:$0xff]
        %v5697 = vld [vmem:[%s294 + $0x620] sm:$0xff]
        %v5698 = vld [vmem:[%s294 + $0x628] sm:$0xff]
        %v5699 = vld [vmem:[%s294 + $0x630] sm:$0xff]
        %v5700 = vld [vmem:[%s294 + $0x638] sm:$0xff]
        %v5701 = vld [vmem:[%s294 + $0x640] sm:$0xff]
        %v5702 = vld [vmem:[%s294 + $0x648] sm:$0xff]
        %v5703 = vld [vmem:[%s294 + $0x650] sm:$0xff]
        %v5704 = vld [vmem:[%s294 + $0x658] sm:$0xff]
        %v5705 = vld [vmem:[%s294 + $0x660] sm:$0xff]
        %v5706 = vld [vmem:[%s294 + $0x668] sm:$0xff]
        %v5707 = vld [vmem:[%s294 + $0x670] sm:$0xff]
        %v5708 = vld [vmem:[%s294 + $0x678] sm:$0xff]
        %v5709 = vld [vmem:[%s294 + $0x680] sm:$0xff]
        %v5710 = vld [vmem:[%s294 + $0x688] sm:$0xff]
        %v5711 = vld [vmem:[%s294 + $0x690] sm:$0xff]
        %v5712 = vld [vmem:[%s294 + $0x698] sm:$0xff]
        %v5713 = vld [vmem:[%s294 + $0x6a0] sm:$0xff]
        %v5714 = vld [vmem:[%s294 + $0x6a8] sm:$0xff]
        %v5715 = vld [vmem:[%s294 + $0x6b0] sm:$0xff]
        %v5716 = vld [vmem:[%s294 + $0x6b8] sm:$0xff]
        %v5717 = vld [vmem:[%s294 + $0x6c0] sm:$0xff]
        %v5718 = vld [vmem:[%s294 + $0x6c8] sm:$0xff]
        %v5719 = vld [vmem:[%s294 + $0x6d0] sm:$0xff]
        %v5720 = vld [vmem:[%s294 + $0x6d8] sm:$0xff]
        %v5721 = vld [vmem:[%s294 + $0x6e0] sm:$0xff]
        %v5722 = vld [vmem:[%s294 + $0x6e8] sm:$0xff]
        %v5723 = vld [vmem:[%s294 + $0x6f0] sm:$0xff]
        %v5724 = vld [vmem:[%s294 + $0x6f8] sm:$0xff]
        %v5725 = vld [vmem:[%s294 + $0x700] sm:$0xff]
        %v5726 = vld [vmem:[%s294 + $0x708] sm:$0xff]
        %v5727 = vld [vmem:[%s294 + $0x710] sm:$0xff]
        %v5728 = vld [vmem:[%s294 + $0x718] sm:$0xff]
        %v5729 = vld [vmem:[%s294 + $0x720] sm:$0xff]
        %v5730 = vld [vmem:[%s294 + $0x728] sm:$0xff]
        %v5731 = vld [vmem:[%s294 + $0x730] sm:$0xff]
        %v5732 = vld [vmem:[%s294 + $0x738] sm:$0xff]
        %v5733 = vld [vmem:[%s294 + $0x740] sm:$0xff]
        %v5734 = vld [vmem:[%s294 + $0x748] sm:$0xff]
        %v5735 = vld [vmem:[%s294 + $0x750] sm:$0xff]
        %v5736 = vld [vmem:[%s294 + $0x758] sm:$0xff]
        %v5737 = vld [vmem:[%s294 + $0x760] sm:$0xff]
        %v5738 = vld [vmem:[%s294 + $0x768] sm:$0xff]
        %v5739 = vld [vmem:[%s294 + $0x770] sm:$0xff]
        %v5740 = vld [vmem:[%s294 + $0x778] sm:$0xff]
        %v5741 = vld [vmem:[%s294 + $0x780] sm:$0xff]
        %v5742 = vld [vmem:[%s294 + $0x788] sm:$0xff]
        %v5743 = vld [vmem:[%s294 + $0x790] sm:$0xff]
        %v5744 = vld [vmem:[%s294 + $0x798] sm:$0xff]
        %v5745 = vld [vmem:[%s294 + $0x7a0] sm:$0xff]
        %v5746 = vld [vmem:[%s294 + $0x7a8] sm:$0xff]
        %v5747 = vld [vmem:[%s294 + $0x7b0] sm:$0xff]
        %v5748 = vld [vmem:[%s294 + $0x7b8] sm:$0xff]
        %v5749 = vld [vmem:[%s294 + $0x7c0] sm:$0xff]
        %v5750 = vld [vmem:[%s294 + $0x7c8] sm:$0xff]
        %v5751 = vld [vmem:[%s294 + $0x7d0] sm:$0xff]
        %v5752 = vld [vmem:[%s294 + $0x7d8] sm:$0xff]
        %v5753 = vld [vmem:[%s294 + $0x7e0] sm:$0xff]
        %v5754 = vld [vmem:[%s294 + $0x7e8] sm:$0xff]
        %v5755 = vld [vmem:[%s294 + $0x7f0] sm:$0xff]
        %v5756 = vld [vmem:[%s294 + $0x7f8] sm:$0xff]
        %v5757 = vld [vmem:[%s294 + $0x800] sm:$0xff]
        %v5758 = vld [vmem:[%s294 + $0x808] sm:$0xff]
        %v5759 = vld [vmem:[%s294 + $0x810] sm:$0xff]
        %v5760 = vld [vmem:[%s294 + $0x818] sm:$0xff]
        %v5761 = vld [vmem:[%s294 + $0x820] sm:$0xff]
        %v5762 = vld [vmem:[%s294 + $0x828] sm:$0xff]
        %v5763 = vld [vmem:[%s294 + $0x830] sm:$0xff]
        %v5764 = vld [vmem:[%s294 + $0x838] sm:$0xff]
        %v5765 = vld [vmem:[%s294 + $0x840] sm:$0xff]
        %v5766 = vld [vmem:[%s294 + $0x848] sm:$0xff]
        %v5767 = vld [vmem:[%s294 + $0x850] sm:$0xff]
        %v5768 = vld [vmem:[%s294 + $0x858] sm:$0xff]
        %v5769 = vld [vmem:[%s294 + $0x860] sm:$0xff]
        %v5770 = vld [vmem:[%s294 + $0x868] sm:$0xff]
        %v5771 = vld [vmem:[%s294 + $0x870] sm:$0xff]
        %v5772 = vld [vmem:[%s294 + $0x878] sm:$0xff]
        %v5773 = vld [vmem:[%s294 + $0x880] sm:$0xff]
        %v5774 = vld [vmem:[%s294 + $0x888] sm:$0xff]
        %v5775 = vld [vmem:[%s294 + $0x890] sm:$0xff]
        %v5776 = vld [vmem:[%s294 + $0x898] sm:$0xff]
        %v5777 = vld [vmem:[%s294 + $0x8a0] sm:$0xff]
        %v5778 = vld [vmem:[%s294 + $0x8a8] sm:$0xff]
        %v5779 = vld [vmem:[%s294 + $0x8b0] sm:$0xff]
        %v5780 = vld [vmem:[%s294 + $0x8b8] sm:$0xff]
        %v5781 = vld [vmem:[%s294 + $0x8c0] sm:$0xff]
        %v5782 = vld [vmem:[%s294 + $0x8c8] sm:$0xff]
        %v5783 = vld [vmem:[%s294 + $0x8d0] sm:$0xff]
        %v5784 = vld [vmem:[%s294 + $0x8d8] sm:$0xff]
        %v5785 = vld [vmem:[%s294 + $0x8e0] sm:$0xff]
        %v5786 = vld [vmem:[%s294 + $0x8e8] sm:$0xff]
        %v5787 = vld [vmem:[%s294 + $0x8f0] sm:$0xff]
        %v5788 = vld [vmem:[%s294 + $0x8f8] sm:$0xff]
        %v5789 = vld [vmem:[%s294 + $0x900] sm:$0xff]
        %v5790 = vld [vmem:[%s294 + $0x908] sm:$0xff]
        %v5791 = vld [vmem:[%s294 + $0x910] sm:$0xff]
        %v5792 = vld [vmem:[%s294 + $0x918] sm:$0xff]
        %v5793 = vld [vmem:[%s294 + $0x920] sm:$0xff]
        %v5794 = vld [vmem:[%s294 + $0x928] sm:$0xff]
        %v5795 = vld [vmem:[%s294 + $0x930] sm:$0xff]
        %v5796 = vld [vmem:[%s294 + $0x938] sm:$0xff]
        %v5797 = vld [vmem:[%s294 + $0x940] sm:$0xff]
        %v5798 = vld [vmem:[%s294 + $0x948] sm:$0xff]
        %v5799 = vld [vmem:[%s294 + $0x950] sm:$0xff]
        %v5800 = vld [vmem:[%s294 + $0x958] sm:$0xff]
        %v5801 = vld [vmem:[%s294 + $0x960] sm:$0xff]
        %v5802 = vld [vmem:[%s294 + $0x968] sm:$0xff]
        %v5803 = vld [vmem:[%s294 + $0x970] sm:$0xff]
        %v5804 = vld [vmem:[%s294 + $0x978] sm:$0xff]
        %v5805 = vld [vmem:[%s294 + $0x980] sm:$0xff]
        %v5806 = vld [vmem:[%s294 + $0x988] sm:$0xff]
        %v5807 = vld [vmem:[%s294 + $0x990] sm:$0xff]
        %v5808 = vld [vmem:[%s294 + $0x998] sm:$0xff]
        %v5809 = vld [vmem:[%s294 + $0x9a0] sm:$0xff]
        %v5810 = vld [vmem:[%s294 + $0x9a8] sm:$0xff]
        %v5811 = vld [vmem:[%s294 + $0x9b0] sm:$0xff]
        %v5812 = vld [vmem:[%s294 + $0x9b8] sm:$0xff]
        %v5813 = vld [vmem:[%s294 + $0x9c0] sm:$0xff]
        %v5814 = vld [vmem:[%s294 + $0x9c8] sm:$0xff]
        %v5815 = vld [vmem:[%s294 + $0x9d0] sm:$0xff]
        %v5816 = vld [vmem:[%s294 + $0x9d8] sm:$0xff]
        %v5817 = vld [vmem:[%s294 + $0x9e0] sm:$0xff]
        %v5818 = vld [vmem:[%s294 + $0x9e8] sm:$0xff]
        %v5819 = vld [vmem:[%s294 + $0x9f0] sm:$0xff]
        %v5820 = vld [vmem:[%s294 + $0x9f8] sm:$0xff]
        %v5821 = vld [vmem:[%s294 + $0xa00] sm:$0xff]
        %v5822 = vld [vmem:[%s294 + $0xa08] sm:$0xff]
        %v5823 = vld [vmem:[%s294 + $0xa10] sm:$0xff]
        %v5824 = vld [vmem:[%s294 + $0xa18] sm:$0xff]
        %v5825 = vld [vmem:[%s294 + $0xa20] sm:$0xff]
        %v5826 = vld [vmem:[%s294 + $0xa28] sm:$0xff]
        %v5827 = vld [vmem:[%s294 + $0xa30] sm:$0xff]
        %v5828 = vld [vmem:[%s294 + $0xa38] sm:$0xff]
        %v5829 = vld [vmem:[%s294 + $0xa40] sm:$0xff]
        %v5830 = vld [vmem:[%s294 + $0xa48] sm:$0xff]
        %v5831 = vld [vmem:[%s294 + $0xa50] sm:$0xff]
        %v5832 = vld [vmem:[%s294 + $0xa58] sm:$0xff]
        %v5833 = vld [vmem:[%s294 + $0xa60] sm:$0xff]
        %v5834 = vld [vmem:[%s294 + $0xa68] sm:$0xff]
        %v5835 = vld [vmem:[%s294 + $0xa70] sm:$0xff]
        %v5836 = vld [vmem:[%s294 + $0xa78] sm:$0xff]
        %v5837 = vld [vmem:[%s294 + $0xa80] sm:$0xff]
        %v5838 = vld [vmem:[%s294 + $0xa88] sm:$0xff]
        %v5839 = vld [vmem:[%s294 + $0xa90] sm:$0xff]
        %v5840 = vld [vmem:[%s294 + $0xa98] sm:$0xff]
        %v5841 = vld [vmem:[%s294 + $0xaa0] sm:$0xff]
        %v5842 = vld [vmem:[%s294 + $0xaa8] sm:$0xff]
        %v5843 = vld [vmem:[%s294 + $0xab0] sm:$0xff]
        %v5844 = vld [vmem:[%s294 + $0xab8] sm:$0xff]
        %v5845 = vld [vmem:[%s294 + $0xac0] sm:$0xff]
        %v5846 = vld [vmem:[%s294 + $0xac8] sm:$0xff]
        %v5847 = vld [vmem:[%s294 + $0xad0] sm:$0xff]
        %v5848 = vld [vmem:[%s294 + $0xad8] sm:$0xff]
        %v5849 = vld [vmem:[%s294 + $0xae0] sm:$0xff]
        %v5850 = vld [vmem:[%s294 + $0xae8] sm:$0xff]
        %v5851 = vld [vmem:[%s294 + $0xaf0] sm:$0xff]
        %v5852 = vld [vmem:[%s294 + $0xaf8] sm:$0xff]
        %v5853 = vld [vmem:[%s294 + $0xb00] sm:$0xff]
        %v5854 = vld [vmem:[%s294 + $0xb08] sm:$0xff]
        %v5855 = vld [vmem:[%s294 + $0xb10] sm:$0xff]
        %v5856 = vld [vmem:[%s294 + $0xb18] sm:$0xff]
        %v5857 = vld [vmem:[%s294 + $0xb20] sm:$0xff]
        %v5858 = vld [vmem:[%s294 + $0xb28] sm:$0xff]
        %v5859 = vld [vmem:[%s294 + $0xb30] sm:$0xff]
        %v5860 = vld [vmem:[%s294 + $0xb38] sm:$0xff]
        %v5861 = vld [vmem:[%s294 + $0xb40] sm:$0xff]
        %v5862 = vld [vmem:[%s294 + $0xb48] sm:$0xff]
        %v5863 = vld [vmem:[%s294 + $0xb50] sm:$0xff]
        %v5864 = vld [vmem:[%s294 + $0xb58] sm:$0xff]
        %v5865 = vld [vmem:[%s294 + $0xb60] sm:$0xff]
        %v5866 = vld [vmem:[%s294 + $0xb68] sm:$0xff]
        %v5867 = vld [vmem:[%s294 + $0xb70] sm:$0xff]
        %v5868 = vld [vmem:[%s294 + $0xb78] sm:$0xff]
        %v5869 = vld [vmem:[%s294 + $0xb80] sm:$0xff]
        %v5870 = vld [vmem:[%s294 + $0xb88] sm:$0xff]
        %v5871 = vld [vmem:[%s294 + $0xb90] sm:$0xff]
        %v5872 = vld [vmem:[%s294 + $0xb98] sm:$0xff]
        %v5873 = vld [vmem:[%s294 + $0xba0] sm:$0xff]
        %v5874 = vld [vmem:[%s294 + $0xba8] sm:$0xff]
        %v5875 = vld [vmem:[%s294 + $0xbb0] sm:$0xff]
        %v5876 = vld [vmem:[%s294 + $0xbb8] sm:$0xff]
        %v5877 = vld [vmem:[%s294 + $0xbc0] sm:$0xff]
        %v5878 = vld [vmem:[%s294 + $0xbc8] sm:$0xff]
        %v5879 = vld [vmem:[%s294 + $0xbd0] sm:$0xff]
        %v5880 = vld [vmem:[%s294 + $0xbd8] sm:$0xff]
        %v5881 = vld [vmem:[%s294 + $0xbe0] sm:$0xff]
        %v5882 = vld [vmem:[%s294 + $0xbe8] sm:$0xff]
        %v5883 = vld [vmem:[%s294 + $0xbf0] sm:$0xff]
        %v5884 = vld [vmem:[%s294 + $0xbf8] sm:$0xff]
        %v5885 = vld [vmem:[%s294 + $0xc00] sm:$0xff]
        %v5886 = vld [vmem:[%s294 + $0xc08] sm:$0xff]
        %v5887 = vld [vmem:[%s294 + $0xc10] sm:$0xff]
        %v5888 = vld [vmem:[%s294 + $0xc18] sm:$0xff]
        %v5889 = vld [vmem:[%s294 + $0xc20] sm:$0xff]
        %v5890 = vld [vmem:[%s294 + $0xc28] sm:$0xff]
        %v5891 = vld [vmem:[%s294 + $0xc30] sm:$0xff]
        %v5892 = vld [vmem:[%s294 + $0xc38] sm:$0xff]
        %v5893 = vld [vmem:[%s294 + $0xc40] sm:$0xff]
        %v5894 = vld [vmem:[%s294 + $0xc48] sm:$0xff]
        %v5895 = vld [vmem:[%s294 + $0xc50] sm:$0xff]
        %v5896 = vld [vmem:[%s294 + $0xc58] sm:$0xff]
        %v5897 = vld [vmem:[%s294 + $0xc60] sm:$0xff]
        %v5898 = vld [vmem:[%s294 + $0xc68] sm:$0xff]
        %v5899 = vld [vmem:[%s294 + $0xc70] sm:$0xff]
        %v5900 = vld [vmem:[%s294 + $0xc78] sm:$0xff]
        %v5901 = vld [vmem:[%s294 + $0xc80] sm:$0xff]
        %v5902 = vld [vmem:[%s294 + $0xc88] sm:$0xff]
        %v5903 = vld [vmem:[%s294 + $0xc90] sm:$0xff]
        %v5904 = vld [vmem:[%s294 + $0xc98] sm:$0xff]
        %v5905 = vld [vmem:[%s294 + $0xca0] sm:$0xff]
        %v5906 = vld [vmem:[%s294 + $0xca8] sm:$0xff]
        %v5907 = vld [vmem:[%s294 + $0xcb0] sm:$0xff]
        %v5908 = vld [vmem:[%s294 + $0xcb8] sm:$0xff]
        %v5909 = vld [vmem:[%s294 + $0xcc0] sm:$0xff]
        %v5910 = vld [vmem:[%s294 + $0xcc8] sm:$0xff]
        %v5911 = vld [vmem:[%s294 + $0xcd0] sm:$0xff]
        %v5912 = vld [vmem:[%s294 + $0xcd8] sm:$0xff]
        %v5913 = vld [vmem:[%s294 + $0xce0] sm:$0xff]
        %v5914 = vld [vmem:[%s294 + $0xce8] sm:$0xff]
        %v5915 = vld [vmem:[%s294 + $0xcf0] sm:$0xff]
        %v5916 = vld [vmem:[%s294 + $0xcf8] sm:$0xff]
        %v5917 = vld [vmem:[%s294 + $0xd00] sm:$0xff]
        %v5918 = vld [vmem:[%s294 + $0xd08] sm:$0xff]
        %v5919 = vld [vmem:[%s294 + $0xd10] sm:$0xff]
        %v5920 = vld [vmem:[%s294 + $0xd18] sm:$0xff]
        %v5921 = vld [vmem:[%s294 + $0xd20] sm:$0xff]
        %v5922 = vld [vmem:[%s294 + $0xd28] sm:$0xff]
        %v5923 = vld [vmem:[%s294 + $0xd30] sm:$0xff]
        %v5924 = vld [vmem:[%s294 + $0xd38] sm:$0xff]
        %v5925 = vld [vmem:[%s294 + $0xd40] sm:$0xff]
        %v5926 = vld [vmem:[%s294 + $0xd48] sm:$0xff]
        %v5927 = vld [vmem:[%s294 + $0xd50] sm:$0xff]
        %v5928 = vld [vmem:[%s294 + $0xd58] sm:$0xff]
        %v5929 = vld [vmem:[%s294 + $0xd60] sm:$0xff]
        %v5930 = vld [vmem:[%s294 + $0xd68] sm:$0xff]
        %v5931 = vld [vmem:[%s294 + $0xd70] sm:$0xff]
        %v5932 = vld [vmem:[%s294 + $0xd78] sm:$0xff]
        %v5933 = vld [vmem:[%s294 + $0xd80] sm:$0xff]
        %v5934 = vld [vmem:[%s294 + $0xd88] sm:$0xff]
        %v5935 = vld [vmem:[%s294 + $0xd90] sm:$0xff]
        %v5936 = vld [vmem:[%s294 + $0xd98] sm:$0xff]
        %v5937 = vld [vmem:[%s294 + $0xda0] sm:$0xff]
        %v5938 = vld [vmem:[%s294 + $0xda8] sm:$0xff]
        %v5939 = vld [vmem:[%s294 + $0xdb0] sm:$0xff]
        %v5940 = vld [vmem:[%s294 + $0xdb8] sm:$0xff]
        %v5941 = vld [vmem:[%s294 + $0xdc0] sm:$0xff]
        %v5942 = vld [vmem:[%s294 + $0xdc8] sm:$0xff]
        %v5943 = vld [vmem:[%s294 + $0xdd0] sm:$0xff]
        %v5944 = vld [vmem:[%s294 + $0xdd8] sm:$0xff]
        %v5945 = vld [vmem:[%s294 + $0xde0] sm:$0xff]
        %v5946 = vld [vmem:[%s294 + $0xde8] sm:$0xff]
        %v5947 = vld [vmem:[%s294 + $0xdf0] sm:$0xff]
        %v5948 = vld [vmem:[%s294 + $0xdf8] sm:$0xff]
        %v5949 = vld [vmem:[%s294 + $0xe00] sm:$0xff]
        %v5950 = vld [vmem:[%s294 + $0xe08] sm:$0xff]
        %v5951 = vld [vmem:[%s294 + $0xe10] sm:$0xff]
        %v5952 = vld [vmem:[%s294 + $0xe18] sm:$0xff]
        %v5953 = vld [vmem:[%s294 + $0xe20] sm:$0xff]
        %v5954 = vld [vmem:[%s294 + $0xe28] sm:$0xff]
        %v5955 = vld [vmem:[%s294 + $0xe30] sm:$0xff]
        %v5956 = vld [vmem:[%s294 + $0xe38] sm:$0xff]
        %v5957 = vld [vmem:[%s294 + $0xe40] sm:$0xff]
        %v5958 = vld [vmem:[%s294 + $0xe48] sm:$0xff]
        %v5959 = vld [vmem:[%s294 + $0xe50] sm:$0xff]
        %v5960 = vld [vmem:[%s294 + $0xe58] sm:$0xff]
        %v5961 = vld [vmem:[%s294 + $0xe60] sm:$0xff]
        %v5962 = vld [vmem:[%s294 + $0xe68] sm:$0xff]
        %v5963 = vld [vmem:[%s294 + $0xe70] sm:$0xff]
        %v5964 = vld [vmem:[%s294 + $0xe78] sm:$0xff]
        %v5965 = vld [vmem:[%s294 + $0xe80] sm:$0xff]
        %v5966 = vld [vmem:[%s294 + $0xe88] sm:$0xff]
        %v5967 = vld [vmem:[%s294 + $0xe90] sm:$0xff]
        %v5968 = vld [vmem:[%s294 + $0xe98] sm:$0xff]
        %v5969 = vld [vmem:[%s294 + $0xea0] sm:$0xff]
        %v5970 = vld [vmem:[%s294 + $0xea8] sm:$0xff]
        %v5971 = vld [vmem:[%s294 + $0xeb0] sm:$0xff]
        %v5972 = vld [vmem:[%s294 + $0xeb8] sm:$0xff]
        %v5973 = vld [vmem:[%s294 + $0xec0] sm:$0xff]
        %v5974 = vld [vmem:[%s294 + $0xec8] sm:$0xff]
        %v5975 = vld [vmem:[%s294 + $0xed0] sm:$0xff]
        %v5976 = vld [vmem:[%s294 + $0xed8] sm:$0xff]
        %v5977 = vld [vmem:[%s294 + $0xee0] sm:$0xff]
        %v5978 = vld [vmem:[%s294 + $0xee8] sm:$0xff]
        %v5979 = vld [vmem:[%s294 + $0xef0] sm:$0xff]
        %v5980 = vld [vmem:[%s294 + $0xef8] sm:$0xff]
        %v5981 = vld [vmem:[%s294 + $0xf00] sm:$0xff]
        %v5982 = vld [vmem:[%s294 + $0xf08] sm:$0xff]
        %v5983 = vld [vmem:[%s294 + $0xf10] sm:$0xff]
        %v5984 = vld [vmem:[%s294 + $0xf18] sm:$0xff]
        %v5985 = vld [vmem:[%s294 + $0xf20] sm:$0xff]
        %v5986 = vld [vmem:[%s294 + $0xf28] sm:$0xff]
        %v5987 = vld [vmem:[%s294 + $0xf30] sm:$0xff]
        %v5988 = vld [vmem:[%s294 + $0xf38] sm:$0xff]
        %v5989 = vld [vmem:[%s294 + $0xf40] sm:$0xff]
        %v5990 = vld [vmem:[%s294 + $0xf48] sm:$0xff]
        %v5991 = vld [vmem:[%s294 + $0xf50] sm:$0xff]
        %v5992 = vld [vmem:[%s294 + $0xf58] sm:$0xff]
        %v5993 = vld [vmem:[%s294 + $0xf60] sm:$0xff]
        %v5994 = vld [vmem:[%s294 + $0xf68] sm:$0xff]
        %v5995 = vld [vmem:[%s294 + $0xf70] sm:$0xff]
        %v5996 = vld [vmem:[%s294 + $0xf78] sm:$0xff]
        %v5997 = vld [vmem:[%s294 + $0xf80] sm:$0xff]
        %v5998 = vld [vmem:[%s294 + $0xf88] sm:$0xff]
        %v5999 = vld [vmem:[%s294 + $0xf90] sm:$0xff]
        %v6000 = vld [vmem:[%s294 + $0xf98] sm:$0xff]
        %v6001 = vld [vmem:[%s294 + $0xfa0] sm:$0xff]
        %v6002 = vld [vmem:[%s294 + $0xfa8] sm:$0xff]
        %v6003 = vld [vmem:[%s294 + $0xfb0] sm:$0xff]
        %v6004 = vld [vmem:[%s294 + $0xfb8] sm:$0xff]
        %v6005 = vld [vmem:[%s294 + $0xfc0] sm:$0xff]
        %v6006 = vld [vmem:[%s294 + $0xfc8] sm:$0xff]
        %v6007 = vld [vmem:[%s294 + $0xfd0] sm:$0xff]
        %v6008 = vld [vmem:[%s294 + $0xfd8] sm:$0xff]
        %v6009 = vld [vmem:[%s294 + $0xfe0] sm:$0xff]
        %v6010 = vld [vmem:[%s294 + $0xfe8] sm:$0xff]
        %v6011 = vld [vmem:[%s294 + $0xff0] sm:$0xff]
        %v6012 = vld [vmem:[%s294 + $0xff8] sm:$0xff]
        %v6013 = vld [vmem:[%s294 + $0x1000] sm:$0xff]
        %v6014 = vld [vmem:[%s294 + $0x1008] sm:$0xff]
        %v6015 = vld [vmem:[%s294 + $0x1010] sm:$0xff]
        %v6016 = vld [vmem:[%s294 + $0x1018] sm:$0xff]
        %v6017 = vld [vmem:[%s294 + $0x1020] sm:$0xff]
        %v6018 = vld [vmem:[%s294 + $0x1028] sm:$0xff]
        %v6019 = vld [vmem:[%s294 + $0x1030] sm:$0xff]
        %v6020 = vld [vmem:[%s294 + $0x1038] sm:$0xff]
        %v6021 = vld [vmem:[%s294 + $0x1040] sm:$0xff]
        %v6022 = vld [vmem:[%s294 + $0x1048] sm:$0xff]
        %v6023 = vld [vmem:[%s294 + $0x1050] sm:$0xff]
        %v6024 = vld [vmem:[%s294 + $0x1058] sm:$0xff]
        %v6025 = vld [vmem:[%s294 + $0x1060] sm:$0xff]
        %v6026 = vld [vmem:[%s294 + $0x1068] sm:$0xff]
        %v6027 = vld [vmem:[%s294 + $0x1070] sm:$0xff]
        %v6028 = vld [vmem:[%s294 + $0x1078] sm:$0xff]
        %v6029 = vld [vmem:[%s294 + $0x1080] sm:$0xff]
        %v6030 = vld [vmem:[%s294 + $0x1088] sm:$0xff]
        %v6031 = vld [vmem:[%s294 + $0x1090] sm:$0xff]
        %v6032 = vld [vmem:[%s294 + $0x1098] sm:$0xff]
        %v6033 = vld [vmem:[%s294 + $0x10a0] sm:$0xff]
        %v6034 = vld [vmem:[%s294 + $0x10a8] sm:$0xff]
        %v6035 = vld [vmem:[%s294 + $0x10b0] sm:$0xff]
        %v6036 = vld [vmem:[%s294 + $0x10b8] sm:$0xff]
        %v6037 = vld [vmem:[%s294 + $0x10c0] sm:$0xff]
        %v6038 = vld [vmem:[%s294 + $0x10c8] sm:$0xff]
        %v6039 = vld [vmem:[%s294 + $0x10d0] sm:$0xff]
        %v6040 = vld [vmem:[%s294 + $0x10d8] sm:$0xff]
        %v6041 = vld [vmem:[%s294 + $0x10e0] sm:$0xff]
        %v6042 = vld [vmem:[%s294 + $0x10e8] sm:$0xff]
        %v6043 = vld [vmem:[%s294 + $0x10f0] sm:$0xff]
        %v6044 = vld [vmem:[%s294 + $0x10f8] sm:$0xff]
        %v6045 = vld [vmem:[%s294 + $0x1100] sm:$0xff]
        %v6046 = vld [vmem:[%s294 + $0x1108] sm:$0xff]
        %v6047 = vld [vmem:[%s294 + $0x1110] sm:$0xff]
        %v6048 = vld [vmem:[%s294 + $0x1118] sm:$0xff]
        %v6049 = vld [vmem:[%s294 + $0x1120] sm:$0xff]
        %v6050 = vld [vmem:[%s294 + $0x1128] sm:$0xff]
        %v6051 = vld [vmem:[%s294 + $0x1130] sm:$0xff]
        %v6052 = vld [vmem:[%s294 + $0x1138] sm:$0xff]
        %v6053 = vld [vmem:[%s294 + $0x1140] sm:$0xff]
        %v6054 = vld [vmem:[%s294 + $0x1148] sm:$0xff]
        %v6055 = vld [vmem:[%s294 + $0x1150] sm:$0xff]
        %v6056 = vld [vmem:[%s294 + $0x1158] sm:$0xff]
        %v6057 = vld [vmem:[%s294 + $0x1160] sm:$0xff]
        %v6058 = vld [vmem:[%s294 + $0x1168] sm:$0xff]
        %v6059 = vld [vmem:[%s294 + $0x1170] sm:$0xff]
        %v6060 = vld [vmem:[%s294 + $0x1178] sm:$0xff]
        %v6061 = vld [vmem:[%s294 + $0x1180] sm:$0xff]
        %v6062 = vld [vmem:[%s294 + $0x1188] sm:$0xff]
        %v6063 = vld [vmem:[%s294 + $0x1190] sm:$0xff]
        %v6064 = vld [vmem:[%s294 + $0x1198] sm:$0xff]
        %v6065 = vld [vmem:[%s294 + $0x11a0] sm:$0xff]
        %v6066 = vld [vmem:[%s294 + $0x11a8] sm:$0xff]
        %v6067 = vld [vmem:[%s294 + $0x11b0] sm:$0xff]
        %v6068 = vld [vmem:[%s294 + $0x11b8] sm:$0xff]
        %v6069 = vld [vmem:[%s294 + $0x11c0] sm:$0xff]
        %v6070 = vld [vmem:[%s294 + $0x11c8] sm:$0xff]
        %v6071 = vld [vmem:[%s294 + $0x11d0] sm:$0xff]
        %v6072 = vld [vmem:[%s294 + $0x11d8] sm:$0xff]
        %v6073 = vld [vmem:[%s294 + $0x11e0] sm:$0xff]
        %v6074 = vld [vmem:[%s294 + $0x11e8] sm:$0xff]
        %v6075 = vld [vmem:[%s294 + $0x11f0] sm:$0xff]
        %v6076 = vld [vmem:[%s294 + $0x11f8] sm:$0xff]
        %v6077 = vld [vmem:[%s294 + $0x1200] sm:$0xff]
        %v6078 = vld [vmem:[%s294 + $0x1208] sm:$0xff]
        %v6079 = vld [vmem:[%s294 + $0x1210] sm:$0xff]
        %v6080 = vld [vmem:[%s294 + $0x1218] sm:$0xff]
        %v6081 = vld [vmem:[%s294 + $0x1220] sm:$0xff]
        %v6082 = vld [vmem:[%s294 + $0x1228] sm:$0xff]
        %v6083 = vld [vmem:[%s294 + $0x1230] sm:$0xff]
        %v6084 = vld [vmem:[%s294 + $0x1238] sm:$0xff]
        %v6085 = vld [vmem:[%s294 + $0x1240] sm:$0xff]
        %v6086 = vld [vmem:[%s294 + $0x1248] sm:$0xff]
        %v6087 = vld [vmem:[%s294 + $0x1250] sm:$0xff]
        %v6088 = vld [vmem:[%s294 + $0x1258] sm:$0xff]
        %v6089 = vld [vmem:[%s294 + $0x1260] sm:$0xff]
        %v6090 = vld [vmem:[%s294 + $0x1268] sm:$0xff]
        %v6091 = vld [vmem:[%s294 + $0x1270] sm:$0xff]
        %v6092 = vld [vmem:[%s294 + $0x1278] sm:$0xff]
        %v6093 = vld [vmem:[%s294 + $0x1280] sm:$0xff]
        %v6094 = vld [vmem:[%s294 + $0x1288] sm:$0xff]
        %v6095 = vld [vmem:[%s294 + $0x1290] sm:$0xff]
        %v6096 = vld [vmem:[%s294 + $0x1298] sm:$0xff]
        %v6097 = vld [vmem:[%s294 + $0x12a0] sm:$0xff]
        %v6098 = vld [vmem:[%s294 + $0x12a8] sm:$0xff]
        %v6099 = vld [vmem:[%s294 + $0x12b0] sm:$0xff]
        %v6100 = vld [vmem:[%s294 + $0x12b8] sm:$0xff]
        %v6101 = vld [vmem:[%s294 + $0x12c0] sm:$0xff]
        %v6102 = vld [vmem:[%s294 + $0x12c8] sm:$0xff]
        %v6103 = vld [vmem:[%s294 + $0x12d0] sm:$0xff]
        %v6104 = vld [vmem:[%s294 + $0x12d8] sm:$0xff]
        %v6105 = vld [vmem:[%s294 + $0x12e0] sm:$0xff]
        %v6106 = vld [vmem:[%s294 + $0x12e8] sm:$0xff]
        %v6107 = vld [vmem:[%s294 + $0x12f0] sm:$0xff]
        %v6108 = vld [vmem:[%s294 + $0x12f8] sm:$0xff]
        %v6109 = vld [vmem:[%s294 + $0x1300] sm:$0xff]
        %v6110 = vld [vmem:[%s294 + $0x1308] sm:$0xff]
        %v6111 = vld [vmem:[%s294 + $0x1310] sm:$0xff]
        %v6112 = vld [vmem:[%s294 + $0x1318] sm:$0xff]
        %v6113 = vld [vmem:[%s294 + $0x1320] sm:$0xff]
        %v6114 = vld [vmem:[%s294 + $0x1328] sm:$0xff]
        %v6115 = vld [vmem:[%s294 + $0x1330] sm:$0xff]
        %v6116 = vld [vmem:[%s294 + $0x1338] sm:$0xff]
        %v6117 = vld [vmem:[%s294 + $0x1340] sm:$0xff]
        %v6118 = vld [vmem:[%s294 + $0x1348] sm:$0xff]
        %v6119 = vld [vmem:[%s294 + $0x1350] sm:$0xff]
        %v6120 = vld [vmem:[%s294 + $0x1358] sm:$0xff]
        %v6121 = vld [vmem:[%s294 + $0x1360] sm:$0xff]
        %v6122 = vld [vmem:[%s294 + $0x1368] sm:$0xff]
        %v6123 = vld [vmem:[%s294 + $0x1370] sm:$0xff]
        %v6124 = vld [vmem:[%s294 + $0x1378] sm:$0xff]
        %v6125 = vld [vmem:[%s294 + $0x1380] sm:$0xff]
        %v6126 = vld [vmem:[%s294 + $0x1388] sm:$0xff]
        %v6127 = vld [vmem:[%s294 + $0x1390] sm:$0xff]
        %v6128 = vld [vmem:[%s294 + $0x1398] sm:$0xff]
        %v6129 = vld [vmem:[%s294 + $0x13a0] sm:$0xff]
        %v6130 = vld [vmem:[%s294 + $0x13a8] sm:$0xff]
        %v6131 = vld [vmem:[%s294 + $0x13b0] sm:$0xff]
        %v6132 = vld [vmem:[%s294 + $0x13b8] sm:$0xff]
        %v6133 = vld [vmem:[%s294 + $0x13c0] sm:$0xff]
        %v6134 = vld [vmem:[%s294 + $0x13c8] sm:$0xff]
        %v6135 = vld [vmem:[%s294 + $0x13d0] sm:$0xff]
        %v6136 = vld [vmem:[%s294 + $0x13d8] sm:$0xff]
        %v6137 = vld [vmem:[%s294 + $0x13e0] sm:$0xff]
        %v6138 = vld [vmem:[%s294 + $0x13e8] sm:$0xff]
        %v6139 = vld [vmem:[%s294 + $0x13f0] sm:$0xff]
        %v6140 = vld [vmem:[%s294 + $0x13f8] sm:$0xff]
        %v6141 = vld [vmem:[%s294 + $0x1400] sm:$0xff]
        %v6142 = vld [vmem:[%s294 + $0x1408] sm:$0xff]
        %v6143 = vld [vmem:[%s294 + $0x1410] sm:$0xff]
        %v6144 = vld [vmem:[%s294 + $0x1418] sm:$0xff]
        %v6145 = vld [vmem:[%s294 + $0x1420] sm:$0xff]
        %v6146 = vld [vmem:[%s294 + $0x1428] sm:$0xff]
        %v6147 = vld [vmem:[%s294 + $0x1430] sm:$0xff]
        %v6148 = vld [vmem:[%s294 + $0x1438] sm:$0xff]
        %v6149 = vld [vmem:[%s294 + $0x1440] sm:$0xff]
        %v6150 = vld [vmem:[%s294 + $0x1448] sm:$0xff]
        %v6151 = vld [vmem:[%s294 + $0x1450] sm:$0xff]
        %v6152 = vld [vmem:[%s294 + $0x1458] sm:$0xff]
        %v6153 = vld [vmem:[%s294 + $0x1460] sm:$0xff]
        %v6154 = vld [vmem:[%s294 + $0x1468] sm:$0xff]
        %v6155 = vld [vmem:[%s294 + $0x1470] sm:$0xff]
        %v6156 = vld [vmem:[%s294 + $0x1478] sm:$0xff]
        %v6157 = vld [vmem:[%s294 + $0x1480] sm:$0xff]
        %v6158 = vld [vmem:[%s294 + $0x1488] sm:$0xff]
        %v6159 = vld [vmem:[%s294 + $0x1490] sm:$0xff]
        %v6160 = vld [vmem:[%s294 + $0x1498] sm:$0xff]
        %v6161 = vld [vmem:[%s294 + $0x14a0] sm:$0xff]
        %v6162 = vld [vmem:[%s294 + $0x14a8] sm:$0xff]
        %v6163 = vld [vmem:[%s294 + $0x14b0] sm:$0xff]
        %v6164 = vld [vmem:[%s294 + $0x14b8] sm:$0xff]
        %v6165 = vld [vmem:[%s294 + $0x14c0] sm:$0xff]
        %v6166 = vld [vmem:[%s294 + $0x14c8] sm:$0xff]
        %v6167 = vld [vmem:[%s294 + $0x14d0] sm:$0xff]
        %v6168 = vld [vmem:[%s294 + $0x14d8] sm:$0xff]
        %v6169 = vld [vmem:[%s294 + $0x14e0] sm:$0xff]
        %v6170 = vld [vmem:[%s294 + $0x14e8] sm:$0xff]
        %v6171 = vld [vmem:[%s294 + $0x14f0] sm:$0xff]
        %v6172 = vld [vmem:[%s294 + $0x14f8] sm:$0xff]
        %v6173 = vld [vmem:[%s294 + $0x1500] sm:$0xff]
        %v6174 = vld [vmem:[%s294 + $0x1508] sm:$0xff]
        %v6175 = vld [vmem:[%s294 + $0x1510] sm:$0xff]
        %v6176 = vld [vmem:[%s294 + $0x1518] sm:$0xff]
        %v6177 = vld [vmem:[%s294 + $0x1520] sm:$0xff]
        %v6178 = vld [vmem:[%s294 + $0x1528] sm:$0xff]
        %v6179 = vld [vmem:[%s294 + $0x1530] sm:$0xff]
        %v6180 = vld [vmem:[%s294 + $0x1538] sm:$0xff]
        %v6181 = vld [vmem:[%s294 + $0x1540] sm:$0xff]
        %v6182 = vld [vmem:[%s294 + $0x1548] sm:$0xff]
        %v6183 = vld [vmem:[%s294 + $0x1550] sm:$0xff]
        %v6184 = vld [vmem:[%s294 + $0x1558] sm:$0xff]
        %v6185 = vld [vmem:[%s294 + $0x1560] sm:$0xff]
        %v6186 = vld [vmem:[%s294 + $0x1568] sm:$0xff]
        %v6187 = vld [vmem:[%s294 + $0x1570] sm:$0xff]
        %v6188 = vld [vmem:[%s294 + $0x1578] sm:$0xff]
        %v6189 = vld [vmem:[%s294 + $0x1580] sm:$0xff]
        %v6190 = vld [vmem:[%s294 + $0x1588] sm:$0xff]
        %v6191 = vld [vmem:[%s294 + $0x1590] sm:$0xff]
        %v6192 = vld [vmem:[%s294 + $0x1598] sm:$0xff]
        %v6193 = vld [vmem:[%s294 + $0x15a0] sm:$0xff]
        %v6194 = vld [vmem:[%s294 + $0x15a8] sm:$0xff]
        %v6195 = vld [vmem:[%s294 + $0x15b0] sm:$0xff]
        %v6196 = vld [vmem:[%s294 + $0x15b8] sm:$0xff]
        %v6197 = vld [vmem:[%s294 + $0x15c0] sm:$0xff]
        %v6198 = vld [vmem:[%s294 + $0x15c8] sm:$0xff]
        %v6199 = vld [vmem:[%s294 + $0x15d0] sm:$0xff]
        %v6200 = vld [vmem:[%s294 + $0x15d8] sm:$0xff]
        %v6201 = vld [vmem:[%s294 + $0x15e0] sm:$0xff]
        %v6202 = vld [vmem:[%s294 + $0x15e8] sm:$0xff]
        %v6203 = vld [vmem:[%s294 + $0x15f0] sm:$0xff]
        %v6204 = vld [vmem:[%s294 + $0x15f8] sm:$0xff]
        %v6205 = vld [vmem:[%s294 + $0x1600] sm:$0xff]
        %v6206 = vld [vmem:[%s294 + $0x1608] sm:$0xff]
        %v6207 = vld [vmem:[%s294 + $0x1610] sm:$0xff]
        %v6208 = vld [vmem:[%s294 + $0x1618] sm:$0xff]
        %v6209 = vld [vmem:[%s294 + $0x1620] sm:$0xff]
        %v6210 = vld [vmem:[%s294 + $0x1628] sm:$0xff]
        %v6211 = vld [vmem:[%s294 + $0x1630] sm:$0xff]
        %v6212 = vld [vmem:[%s294 + $0x1638] sm:$0xff]
        %v6213 = vld [vmem:[%s294 + $0x1640] sm:$0xff]
        %v6214 = vld [vmem:[%s294 + $0x1648] sm:$0xff]
        %v6215 = vld [vmem:[%s294 + $0x1650] sm:$0xff]
        %v6216 = vld [vmem:[%s294 + $0x1658] sm:$0xff]
        %v6217 = vld [vmem:[%s294 + $0x1660] sm:$0xff]
        %v6218 = vld [vmem:[%s294 + $0x1668] sm:$0xff]
        %v6219 = vld [vmem:[%s294 + $0x1670] sm:$0xff]
        %v6220 = vld [vmem:[%s294 + $0x1678] sm:$0xff]
        %v6221 = vld [vmem:[%s294 + $0x1680] sm:$0xff]
        %v6222 = vld [vmem:[%s294 + $0x1688] sm:$0xff]
        %v6223 = vld [vmem:[%s294 + $0x1690] sm:$0xff]
        %v6224 = vld [vmem:[%s294 + $0x1698] sm:$0xff]
        %v6225 = vld [vmem:[%s294 + $0x16a0] sm:$0xff]
        %v6226 = vld [vmem:[%s294 + $0x16a8] sm:$0xff]
        %v6227 = vld [vmem:[%s294 + $0x16b0] sm:$0xff]
        %v6228 = vld [vmem:[%s294 + $0x16b8] sm:$0xff]
        %v6229 = vld [vmem:[%s294 + $0x16c0] sm:$0xff]
        %v6230 = vld [vmem:[%s294 + $0x16c8] sm:$0xff]
        %v6231 = vld [vmem:[%s294 + $0x16d0] sm:$0xff]
        %v6232 = vld [vmem:[%s294 + $0x16d8] sm:$0xff]
        %v6233 = vld [vmem:[%s294 + $0x16e0] sm:$0xff]
        %v6234 = vld [vmem:[%s294 + $0x16e8] sm:$0xff]
        %v6235 = vld [vmem:[%s294 + $0x16f0] sm:$0xff]
        %v6236 = vld [vmem:[%s294 + $0x16f8] sm:$0xff]
        %v6237 = vld [vmem:[%s294 + $0x1700] sm:$0xff]
        %v6238 = vld [vmem:[%s294 + $0x1708] sm:$0xff]
        %v6239 = vld [vmem:[%s294 + $0x1710] sm:$0xff]
        %v6240 = vld [vmem:[%s294 + $0x1718] sm:$0xff]
        %v6241 = vld [vmem:[%s294 + $0x1720] sm:$0xff]
        %v6242 = vld [vmem:[%s294 + $0x1728] sm:$0xff]
        %v6243 = vld [vmem:[%s294 + $0x1730] sm:$0xff]
        %v6244 = vld [vmem:[%s294 + $0x1738] sm:$0xff]
        %v6245 = vld [vmem:[%s294 + $0x1740] sm:$0xff]
        %v6246 = vld [vmem:[%s294 + $0x1748] sm:$0xff]
        %v6247 = vld [vmem:[%s294 + $0x1750] sm:$0xff]
        %v6248 = vld [vmem:[%s294 + $0x1758] sm:$0xff]
        %v6249 = vld [vmem:[%s294 + $0x1760] sm:$0xff]
        %v6250 = vld [vmem:[%s294 + $0x1768] sm:$0xff]
        %v6251 = vld [vmem:[%s294 + $0x1770] sm:$0xff]
        %v6252 = vld [vmem:[%s294 + $0x1778] sm:$0xff]
        %v6253 = vld [vmem:[%s294 + $0x1780] sm:$0xff]
        %v6254 = vld [vmem:[%s294 + $0x1788] sm:$0xff]
        %v6255 = vld [vmem:[%s294 + $0x1790] sm:$0xff]
        %v6256 = vld [vmem:[%s294 + $0x1798] sm:$0xff]
        %v6257 = vld [vmem:[%s294 + $0x17a0] sm:$0xff]
        %v6258 = vld [vmem:[%s294 + $0x17a8] sm:$0xff]
        %v6259 = vld [vmem:[%s294 + $0x17b0] sm:$0xff]
        %v6260 = vld [vmem:[%s294 + $0x17b8] sm:$0xff]
        %v6261 = vld [vmem:[%s294 + $0x17c0] sm:$0xff]
        %v6262 = vld [vmem:[%s294 + $0x17c8] sm:$0xff]
        %v6263 = vld [vmem:[%s294 + $0x17d0] sm:$0xff]
        %v6264 = vld [vmem:[%s294 + $0x17d8] sm:$0xff]
        %v6265 = vld [vmem:[%s294 + $0x17e0] sm:$0xff]
        %v6266 = vld [vmem:[%s294 + $0x17e8] sm:$0xff]
        %v6267 = vld [vmem:[%s294 + $0x17f0] sm:$0xff]
        %v6268 = vld [vmem:[%s294 + $0x17f8] sm:$0xff]
        %v6269 = vld [vmem:[%s294 + $0x1800] sm:$0xff]
        %v6270 = vld [vmem:[%s294 + $0x1808] sm:$0xff]
        %v6271 = vld [vmem:[%s294 + $0x1810] sm:$0xff]
        %v6272 = vld [vmem:[%s294 + $0x1818] sm:$0xff]
        %v6273 = vld [vmem:[%s294 + $0x1820] sm:$0xff]
        %v6274 = vld [vmem:[%s294 + $0x1828] sm:$0xff]
        %v6275 = vld [vmem:[%s294 + $0x1830] sm:$0xff]
        %v6276 = vld [vmem:[%s294 + $0x1838] sm:$0xff]
        %v6277 = vld [vmem:[%s294 + $0x1840] sm:$0xff]
        %v6278 = vld [vmem:[%s294 + $0x1848] sm:$0xff]
        %v6279 = vld [vmem:[%s294 + $0x1850] sm:$0xff]
        %v6280 = vld [vmem:[%s294 + $0x1858] sm:$0xff]
        %v6281 = vld [vmem:[%s294 + $0x1860] sm:$0xff]
        %v6282 = vld [vmem:[%s294 + $0x1868] sm:$0xff]
        %v6283 = vld [vmem:[%s294 + $0x1870] sm:$0xff]
        %v6284 = vld [vmem:[%s294 + $0x1878] sm:$0xff]
        %v6285 = vld [vmem:[%s294 + $0x1880] sm:$0xff]
        %v6286 = vld [vmem:[%s294 + $0x1888] sm:$0xff]
        %v6287 = vld [vmem:[%s294 + $0x1890] sm:$0xff]
        %v6288 = vld [vmem:[%s294 + $0x1898] sm:$0xff]
        %v6289 = vld [vmem:[%s294 + $0x18a0] sm:$0xff]
        %v6290 = vld [vmem:[%s294 + $0x18a8] sm:$0xff]
        %v6291 = vld [vmem:[%s294 + $0x18b0] sm:$0xff]
        %v6292 = vld [vmem:[%s294 + $0x18b8] sm:$0xff]
        %v6293 = vld [vmem:[%s294 + $0x18c0] sm:$0xff]
        %v6294 = vld [vmem:[%s294 + $0x18c8] sm:$0xff]
        %v6295 = vld [vmem:[%s294 + $0x18d0] sm:$0xff]
        %v6296 = vld [vmem:[%s294 + $0x18d8] sm:$0xff]
        %v6297 = vld [vmem:[%s294 + $0x18e0] sm:$0xff]
        %v6298 = vld [vmem:[%s294 + $0x18e8] sm:$0xff]
        %v6299 = vld [vmem:[%s294 + $0x18f0] sm:$0xff]
        %v6300 = vld [vmem:[%s294 + $0x18f8] sm:$0xff]
        %v6301 = vld [vmem:[%s294 + $0x1900] sm:$0xff]
        %v6302 = vld [vmem:[%s294 + $0x1908] sm:$0xff]
        %v6303 = vld [vmem:[%s294 + $0x1910] sm:$0xff]
        %v6304 = vld [vmem:[%s294 + $0x1918] sm:$0xff]
        %v6305 = vld [vmem:[%s294 + $0x1920] sm:$0xff]
        %v6306 = vld [vmem:[%s294 + $0x1928] sm:$0xff]
        %v6307 = vld [vmem:[%s294 + $0x1930] sm:$0xff]
        %v6308 = vld [vmem:[%s294 + $0x1938] sm:$0xff]
        %v6309 = vld [vmem:[%s294 + $0x1940] sm:$0xff]
        %v6310 = vld [vmem:[%s294 + $0x1948] sm:$0xff]
        %v6311 = vld [vmem:[%s294 + $0x1950] sm:$0xff]
        %v6312 = vld [vmem:[%s294 + $0x1958] sm:$0xff]
        %v6313 = vld [vmem:[%s294 + $0x1960] sm:$0xff]
        %v6314 = vld [vmem:[%s294 + $0x1968] sm:$0xff]
        %v6315 = vld [vmem:[%s294 + $0x1970] sm:$0xff]
        %v6316 = vld [vmem:[%s294 + $0x1978] sm:$0xff]
        %v6317 = vld [vmem:[%s294 + $0x1980] sm:$0xff]
        %v6318 = vld [vmem:[%s294 + $0x1988] sm:$0xff]
        %v6319 = vld [vmem:[%s294 + $0x1990] sm:$0xff]
        %v6320 = vld [vmem:[%s294 + $0x1998] sm:$0xff]
        %v6321 = vld [vmem:[%s294 + $0x19a0] sm:$0xff]
        %v6322 = vld [vmem:[%s294 + $0x19a8] sm:$0xff]
        %v6323 = vld [vmem:[%s294 + $0x19b0] sm:$0xff]
        %v6324 = vld [vmem:[%s294 + $0x19b8] sm:$0xff]
        %v6325 = vld [vmem:[%s294 + $0x19c0] sm:$0xff]
        %v6326 = vld [vmem:[%s294 + $0x19c8] sm:$0xff]
        %v6327 = vld [vmem:[%s294 + $0x19d0] sm:$0xff]
        %v6328 = vld [vmem:[%s294 + $0x19d8] sm:$0xff]
        %v6329 = vld [vmem:[%s294 + $0x19e0] sm:$0xff]
        %v6330 = vld [vmem:[%s294 + $0x19e8] sm:$0xff]
        %v6331 = vld [vmem:[%s294 + $0x19f0] sm:$0xff]
        %v6332 = vld [vmem:[%s294 + $0x19f8] sm:$0xff]
        %v6333 = vld [vmem:[%s294 + $0x1a00] sm:$0xff]
        %v6334 = vld [vmem:[%s294 + $0x1a08] sm:$0xff]
        %v6335 = vld [vmem:[%s294 + $0x1a10] sm:$0xff]
        %v6336 = vld [vmem:[%s294 + $0x1a18] sm:$0xff]
        %v6337 = vld [vmem:[%s294 + $0x1a20] sm:$0xff]
        %v6338 = vld [vmem:[%s294 + $0x1a28] sm:$0xff]
        %v6339 = vld [vmem:[%s294 + $0x1a30] sm:$0xff]
        %v6340 = vld [vmem:[%s294 + $0x1a38] sm:$0xff]
        %v6341 = vld [vmem:[%s294 + $0x1a40] sm:$0xff]
        %v6342 = vld [vmem:[%s294 + $0x1a48] sm:$0xff]
        %v6343 = vld [vmem:[%s294 + $0x1a50] sm:$0xff]
        %v6344 = vld [vmem:[%s294 + $0x1a58] sm:$0xff]
        %v6345 = vld [vmem:[%s294 + $0x1a60] sm:$0xff]
        %v6346 = vld [vmem:[%s294 + $0x1a68] sm:$0xff]
        %v6347 = vld [vmem:[%s294 + $0x1a70] sm:$0xff]
        %v6348 = vld [vmem:[%s294 + $0x1a78] sm:$0xff]
        %v6349 = vld [vmem:[%s294 + $0x1a80] sm:$0xff]
        %v6350 = vld [vmem:[%s294 + $0x1a88] sm:$0xff]
        %v6351 = vld [vmem:[%s294 + $0x1a90] sm:$0xff]
        %v6352 = vld [vmem:[%s294 + $0x1a98] sm:$0xff]
        %v6353 = vld [vmem:[%s294 + $0x1aa0] sm:$0xff]
        %v6354 = vld [vmem:[%s294 + $0x1aa8] sm:$0xff]
        %v6355 = vld [vmem:[%s294 + $0x1ab0] sm:$0xff]
        %v6356 = vld [vmem:[%s294 + $0x1ab8] sm:$0xff]
        %v6357 = vld [vmem:[%s294 + $0x1ac0] sm:$0xff]
        %v6358 = vld [vmem:[%s294 + $0x1ac8] sm:$0xff]
        %v6359 = vld [vmem:[%s294 + $0x1ad0] sm:$0xff]
        %v6360 = vld [vmem:[%s294 + $0x1ad8] sm:$0xff]
        %v6361 = vld [vmem:[%s294 + $0x1ae0] sm:$0xff]
        %v6362 = vld [vmem:[%s294 + $0x1ae8] sm:$0xff]
        %v6363 = vld [vmem:[%s294 + $0x1af0] sm:$0xff]
        %v6364 = vld [vmem:[%s294 + $0x1af8] sm:$0xff]
        %v6365 = vld [vmem:[%s294 + $0x1b00] sm:$0xff]
        %v6366 = vld [vmem:[%s294 + $0x1b08] sm:$0xff]
        %v6367 = vld [vmem:[%s294 + $0x1b10] sm:$0xff]
        %v6368 = vld [vmem:[%s294 + $0x1b18] sm:$0xff]
        %v6369 = vld [vmem:[%s294 + $0x1b20] sm:$0xff]
        %v6370 = vld [vmem:[%s294 + $0x1b28] sm:$0xff]
        %v6371 = vld [vmem:[%s294 + $0x1b30] sm:$0xff]
        %v6372 = vld [vmem:[%s294 + $0x1b38] sm:$0xff]
        %v6373 = vld [vmem:[%s294 + $0x1b40] sm:$0xff]
        %v6374 = vld [vmem:[%s294 + $0x1b48] sm:$0xff]
        %v6375 = vld [vmem:[%s294 + $0x1b50] sm:$0xff]
        %v6376 = vld [vmem:[%s294 + $0x1b58] sm:$0xff]
        %v6377 = vld [vmem:[%s294 + $0x1b60] sm:$0xff]
        %v6378 = vld [vmem:[%s294 + $0x1b68] sm:$0xff]
        %v6379 = vld [vmem:[%s294 + $0x1b70] sm:$0xff]
        %v6380 = vld [vmem:[%s294 + $0x1b78] sm:$0xff]
        %v6381 = vld [vmem:[%s294 + $0x1b80] sm:$0xff]
        %v6382 = vld [vmem:[%s294 + $0x1b88] sm:$0xff]
        %v6383 = vld [vmem:[%s294 + $0x1b90] sm:$0xff]
        %v6384 = vld [vmem:[%s294 + $0x1b98] sm:$0xff]
        %v6385 = vld [vmem:[%s294 + $0x1ba0] sm:$0xff]
        %v6386 = vld [vmem:[%s294 + $0x1ba8] sm:$0xff]
        %v6387 = vld [vmem:[%s294 + $0x1bb0] sm:$0xff]
        %v6388 = vld [vmem:[%s294 + $0x1bb8] sm:$0xff]
        %v6389 = vld [vmem:[%s294 + $0x1bc0] sm:$0xff]
        %v6390 = vld [vmem:[%s294 + $0x1bc8] sm:$0xff]
        %v6391 = vld [vmem:[%s294 + $0x1bd0] sm:$0xff]
        %v6392 = vld [vmem:[%s294 + $0x1bd8] sm:$0xff]
        %v6393 = vld [vmem:[%s294 + $0x1be0] sm:$0xff]
        %v6394 = vld [vmem:[%s294 + $0x1be8] sm:$0xff]
        %v6395 = vld [vmem:[%s294 + $0x1bf0] sm:$0xff]
        %v6396 = vld [vmem:[%s294 + $0x1bf8] sm:$0xff]
        %v6397 = vld [vmem:[%s294 + $0x1c00] sm:$0xff]
        %v6398 = vld [vmem:[%s294 + $0x1c08] sm:$0xff]
        %v6399 = vld [vmem:[%s294 + $0x1c10] sm:$0xff]
        %v6400 = vld [vmem:[%s294 + $0x1c18] sm:$0xff]
        %v6401 = vld [vmem:[%s294 + $0x1c20] sm:$0xff]
        %v6402 = vld [vmem:[%s294 + $0x1c28] sm:$0xff]
        %v6403 = vld [vmem:[%s294 + $0x1c30] sm:$0xff]
        %v6404 = vld [vmem:[%s294 + $0x1c38] sm:$0xff]
        %v6405 = vld [vmem:[%s294 + $0x1c40] sm:$0xff]
        %v6406 = vld [vmem:[%s294 + $0x1c48] sm:$0xff]
        %v6407 = vld [vmem:[%s294 + $0x1c50] sm:$0xff]
        %v6408 = vld [vmem:[%s294 + $0x1c58] sm:$0xff]
        %v6409 = vld [vmem:[%s294 + $0x1c60] sm:$0xff]
        %v6410 = vld [vmem:[%s294 + $0x1c68] sm:$0xff]
        %v6411 = vld [vmem:[%s294 + $0x1c70] sm:$0xff]
        %v6412 = vld [vmem:[%s294 + $0x1c78] sm:$0xff]
        %v6413 = vld [vmem:[%s294 + $0x1c80] sm:$0xff]
        %v6414 = vld [vmem:[%s294 + $0x1c88] sm:$0xff]
        %v6415 = vld [vmem:[%s294 + $0x1c90] sm:$0xff]
        %v6416 = vld [vmem:[%s294 + $0x1c98] sm:$0xff]
        %v6417 = vld [vmem:[%s294 + $0x1ca0] sm:$0xff]
        %v6418 = vld [vmem:[%s294 + $0x1ca8] sm:$0xff]
        %v6419 = vld [vmem:[%s294 + $0x1cb0] sm:$0xff]
        %v6420 = vld [vmem:[%s294 + $0x1cb8] sm:$0xff]
        %v6421 = vld [vmem:[%s294 + $0x1cc0] sm:$0xff]
        %v6422 = vld [vmem:[%s294 + $0x1cc8] sm:$0xff]
        %v6423 = vld [vmem:[%s294 + $0x1cd0] sm:$0xff]
        %v6424 = vld [vmem:[%s294 + $0x1cd8] sm:$0xff]
        %v6425 = vld [vmem:[%s294 + $0x1ce0] sm:$0xff]
        %v6426 = vld [vmem:[%s294 + $0x1ce8] sm:$0xff]
        %v6427 = vld [vmem:[%s294 + $0x1cf0] sm:$0xff]
        %v6428 = vld [vmem:[%s294 + $0x1cf8] sm:$0xff]
        %v6429 = vld [vmem:[%s294 + $0x1d00] sm:$0xff]
        %v6430 = vld [vmem:[%s294 + $0x1d08] sm:$0xff]
        %v6431 = vld [vmem:[%s294 + $0x1d10] sm:$0xff]
        %v6432 = vld [vmem:[%s294 + $0x1d18] sm:$0xff]
        %v6433 = vld [vmem:[%s294 + $0x1d20] sm:$0xff]
        %v6434 = vld [vmem:[%s294 + $0x1d28] sm:$0xff]
        %v6435 = vld [vmem:[%s294 + $0x1d30] sm:$0xff]
        %v6436 = vld [vmem:[%s294 + $0x1d38] sm:$0xff]
        %v6437 = vld [vmem:[%s294 + $0x1d40] sm:$0xff]
        %v6438 = vld [vmem:[%s294 + $0x1d48] sm:$0xff]
        %v6439 = vld [vmem:[%s294 + $0x1d50] sm:$0xff]
        %v6440 = vld [vmem:[%s294 + $0x1d58] sm:$0xff]
        %v6441 = vld [vmem:[%s294 + $0x1d60] sm:$0xff]
        %v6442 = vld [vmem:[%s294 + $0x1d68] sm:$0xff]
        %v6443 = vld [vmem:[%s294 + $0x1d70] sm:$0xff]
        %v6444 = vld [vmem:[%s294 + $0x1d78] sm:$0xff]
        %v6445 = vld [vmem:[%s294 + $0x1d80] sm:$0xff]
        %v6446 = vld [vmem:[%s294 + $0x1d88] sm:$0xff]
        %v6447 = vld [vmem:[%s294 + $0x1d90] sm:$0xff]
        %v6448 = vld [vmem:[%s294 + $0x1d98] sm:$0xff]
        %v6449 = vld [vmem:[%s294 + $0x1da0] sm:$0xff]
        %v6450 = vld [vmem:[%s294 + $0x1da8] sm:$0xff]
        %v6451 = vld [vmem:[%s294 + $0x1db0] sm:$0xff]
        %v6452 = vld [vmem:[%s294 + $0x1db8] sm:$0xff]
        %v6453 = vld [vmem:[%s294 + $0x1dc0] sm:$0xff]
        %v6454 = vld [vmem:[%s294 + $0x1dc8] sm:$0xff]
        %v6455 = vld [vmem:[%s294 + $0x1dd0] sm:$0xff]
        %v6456 = vld [vmem:[%s294 + $0x1dd8] sm:$0xff]
        %v6457 = vld [vmem:[%s294 + $0x1de0] sm:$0xff]
        %v6458 = vld [vmem:[%s294 + $0x1de8] sm:$0xff]
        %v6459 = vld [vmem:[%s294 + $0x1df0] sm:$0xff]
        %v6460 = vld [vmem:[%s294 + $0x1df8] sm:$0xff]
        %v6461 = vld [vmem:[%s294 + $0x1e00] sm:$0xff]
        %v6462 = vld [vmem:[%s294 + $0x1e08] sm:$0xff]
        %v6463 = vld [vmem:[%s294 + $0x1e10] sm:$0xff]
        %v6464 = vld [vmem:[%s294 + $0x1e18] sm:$0xff]
        %v6465 = vld [vmem:[%s294 + $0x1e20] sm:$0xff]
        %v6466 = vld [vmem:[%s294 + $0x1e28] sm:$0xff]
        %v6467 = vld [vmem:[%s294 + $0x1e30] sm:$0xff]
        %v6468 = vld [vmem:[%s294 + $0x1e38] sm:$0xff]
        %v6469 = vld [vmem:[%s294 + $0x1e40] sm:$0xff]
        %v6470 = vld [vmem:[%s294 + $0x1e48] sm:$0xff]
        %v6471 = vld [vmem:[%s294 + $0x1e50] sm:$0xff]
        %v6472 = vld [vmem:[%s294 + $0x1e58] sm:$0xff]
        %v6473 = vld [vmem:[%s294 + $0x1e60] sm:$0xff]
        %v6474 = vld [vmem:[%s294 + $0x1e68] sm:$0xff]
        %v6475 = vld [vmem:[%s294 + $0x1e70] sm:$0xff]
        %v6476 = vld [vmem:[%s294 + $0x1e78] sm:$0xff]
        %v6477 = vld [vmem:[%s294 + $0x1e80] sm:$0xff]
        %v6478 = vld [vmem:[%s294 + $0x1e88] sm:$0xff]
        %v6479 = vld [vmem:[%s294 + $0x1e90] sm:$0xff]
        %v6480 = vld [vmem:[%s294 + $0x1e98] sm:$0xff]
        %v6481 = vld [vmem:[%s294 + $0x1ea0] sm:$0xff]
        %v6482 = vld [vmem:[%s294 + $0x1ea8] sm:$0xff]
        %v6483 = vld [vmem:[%s294 + $0x1eb0] sm:$0xff]
        %v6484 = vld [vmem:[%s294 + $0x1eb8] sm:$0xff]
        %v6485 = vld [vmem:[%s294 + $0x1ec0] sm:$0xff]
        %v6486 = vld [vmem:[%s294 + $0x1ec8] sm:$0xff]
        %v6487 = vld [vmem:[%s294 + $0x1ed0] sm:$0xff]
        %v6488 = vld [vmem:[%s294 + $0x1ed8] sm:$0xff]
        %v6489 = vld [vmem:[%s294 + $0x1ee0] sm:$0xff]
        %v6490 = vld [vmem:[%s294 + $0x1ee8] sm:$0xff]
        %v6491 = vld [vmem:[%s294 + $0x1ef0] sm:$0xff]
        %v6492 = vld [vmem:[%s294 + $0x1ef8] sm:$0xff]
        %v6493 = vld [vmem:[%s294 + $0x1f00] sm:$0xff]
        %v6494 = vld [vmem:[%s294 + $0x1f08] sm:$0xff]
        %v6495 = vld [vmem:[%s294 + $0x1f10] sm:$0xff]
        %v6496 = vld [vmem:[%s294 + $0x1f18] sm:$0xff]
        %v6497 = vld [vmem:[%s294 + $0x1f20] sm:$0xff]
        %v6498 = vld [vmem:[%s294 + $0x1f28] sm:$0xff]
        %v6499 = vld [vmem:[%s294 + $0x1f30] sm:$0xff]
        %v6500 = vld [vmem:[%s294 + $0x1f38] sm:$0xff]
        %v6501 = vld [vmem:[%s294 + $0x1f40] sm:$0xff]
        %v6502 = vld [vmem:[%s294 + $0x1f48] sm:$0xff]
        %v6503 = vld [vmem:[%s294 + $0x1f50] sm:$0xff]
        %v6504 = vld [vmem:[%s294 + $0x1f58] sm:$0xff]
        %v6505 = vld [vmem:[%s294 + $0x1f60] sm:$0xff]
        %v6506 = vld [vmem:[%s294 + $0x1f68] sm:$0xff]
        %v6507 = vld [vmem:[%s294 + $0x1f70] sm:$0xff]
        %v6508 = vld [vmem:[%s294 + $0x1f78] sm:$0xff]
        %v6509 = vld [vmem:[%s294 + $0x1f80] sm:$0xff]
        %v6510 = vld [vmem:[%s294 + $0x1f88] sm:$0xff]
        %v6511 = vld [vmem:[%s294 + $0x1f90] sm:$0xff]
        %v6512 = vld [vmem:[%s294 + $0x1f98] sm:$0xff]
        %v6513 = vld [vmem:[%s294 + $0x1fa0] sm:$0xff]
        %v6514 = vld [vmem:[%s294 + $0x1fa8] sm:$0xff]
        %v6515 = vld [vmem:[%s294 + $0x1fb0] sm:$0xff]
        %v6516 = vld [vmem:[%s294 + $0x1fb8] sm:$0xff]
        %v6517 = vld [vmem:[%s294 + $0x1fc0] sm:$0xff]
        %v6518 = vld [vmem:[%s294 + $0x1fc8] sm:$0xff]
        %v6519 = vld [vmem:[%s294 + $0x1fd0] sm:$0xff]
        %v6520 = vld [vmem:[%s294 + $0x1fd8] sm:$0xff]
        %v6521 = vld [vmem:[%s294 + $0x1fe0] sm:$0xff]
        %v6522 = vld [vmem:[%s294 + $0x1fe8] sm:$0xff]
        %v6523 = vld [vmem:[%s294 + $0x1ff0] sm:$0xff]
        %v6524 = vld [vmem:[%s294 + $0x1ff8] sm:$0xff]
        %v6533 = vunpack.c.l.b16 %v5493
        %v6534 = vunpack.c.h.b16 %v5493
        %v6535 = vunpack.c.l.b16 %v5494
        %v6536 = vunpack.c.h.b16 %v5494
        %v6537 = vunpack.c.l.b16 %v5495
        %v6538 = vunpack.c.h.b16 %v5495
        %v6539 = vunpack.c.l.b16 %v5496
        %v6540 = vunpack.c.h.b16 %v5496
        %v6541 = vunpack.c.l.b16 %v5497
        %v6542 = vunpack.c.h.b16 %v5497
        %v6543 = vunpack.c.l.b16 %v5498
        %v6544 = vunpack.c.h.b16 %v5498
        %v6545 = vunpack.c.l.b16 %v5499
        %v6546 = vunpack.c.h.b16 %v5499
        %v6547 = vunpack.c.l.b16 %v5500
        %v6548 = vunpack.c.h.b16 %v5500
        %v6549 = vpack.c.b16 %v6533, %v6533
        %v6550 = vpack.c.b16 %v6534, %v6534
        %v6551 = vpack.c.b16 %v6535, %v6535
        %v6552 = vpack.c.b16 %v6536, %v6536
        %v6553 = vpack.c.b16 %v6537, %v6537
        %v6554 = vpack.c.b16 %v6538, %v6538
        %v6555 = vpack.c.b16 %v6539, %v6539
        %v6556 = vpack.c.b16 %v6540, %v6540
        %v6557 = vpack.c.b16 %v6541, %v6541
        %v6558 = vpack.c.b16 %v6542, %v6542
        %v6559 = vpack.c.b16 %v6543, %v6543
        %v6560 = vpack.c.b16 %v6544, %v6544
        %v6561 = vpack.c.b16 %v6545, %v6545
        %v6562 = vpack.c.b16 %v6546, %v6546
        %v6563 = vpack.c.b16 %v6547, %v6547
        %v6564 = vpack.c.b16 %v6548, %v6548
        %v7605 = vunpack.c.l.b16 %v5501
        %v7606 = vunpack.c.h.b16 %v5501
        %v7607 = vunpack.c.l.b16 %v5502
        %v7608 = vunpack.c.h.b16 %v5502
        %v7609 = vunpack.c.l.b16 %v5503
        %v7610 = vunpack.c.h.b16 %v5503
        %v7611 = vunpack.c.l.b16 %v5504
        %v7612 = vunpack.c.h.b16 %v5504
        %v7613 = vunpack.c.l.b16 %v5505
        %v7614 = vunpack.c.h.b16 %v5505
        %v7615 = vunpack.c.l.b16 %v5506
        %v7616 = vunpack.c.h.b16 %v5506
        %v7617 = vunpack.c.l.b16 %v5507
        %v7618 = vunpack.c.h.b16 %v5507
        %v7619 = vunpack.c.l.b16 %v5508
        %v7620 = vunpack.c.h.b16 %v5508
        %v7621 = vunpack.c.l.b16 %v5509
        %v7622 = vunpack.c.h.b16 %v5509
        %v7623 = vunpack.c.l.b16 %v5510
        %v7624 = vunpack.c.h.b16 %v5510
        %v7625 = vunpack.c.l.b16 %v5511
        %v7626 = vunpack.c.h.b16 %v5511
        %v7627 = vunpack.c.l.b16 %v5512
        %v7628 = vunpack.c.h.b16 %v5512
        %v7629 = vunpack.c.l.b16 %v5513
        %v7630 = vunpack.c.h.b16 %v5513
        %v7631 = vunpack.c.l.b16 %v5514
        %v7632 = vunpack.c.h.b16 %v5514
        %v7633 = vunpack.c.l.b16 %v5515
        %v7634 = vunpack.c.h.b16 %v5515
        %v7635 = vunpack.c.l.b16 %v5516
        %v7636 = vunpack.c.h.b16 %v5516
        %v7637 = vunpack.c.l.b16 %v5517
        %v7638 = vunpack.c.h.b16 %v5517
        %v7639 = vunpack.c.l.b16 %v5518
        %v7640 = vunpack.c.h.b16 %v5518
        %v7641 = vunpack.c.l.b16 %v5519
        %v7642 = vunpack.c.h.b16 %v5519
        %v7643 = vunpack.c.l.b16 %v5520
        %v7644 = vunpack.c.h.b16 %v5520
        %v7645 = vunpack.c.l.b16 %v5521
        %v7646 = vunpack.c.h.b16 %v5521
        %v7647 = vunpack.c.l.b16 %v5522
        %v7648 = vunpack.c.h.b16 %v5522
        %v7649 = vunpack.c.l.b16 %v5523
        %v7650 = vunpack.c.h.b16 %v5523
        %v7651 = vunpack.c.l.b16 %v5524
        %v7652 = vunpack.c.h.b16 %v5524
        %v7653 = vunpack.c.l.b16 %v5525
        %v7654 = vunpack.c.h.b16 %v5525
        %v7655 = vunpack.c.l.b16 %v5526
        %v7656 = vunpack.c.h.b16 %v5526
        %v7657 = vunpack.c.l.b16 %v5527
        %v7658 = vunpack.c.h.b16 %v5527
        %v7659 = vunpack.c.l.b16 %v5528
        %v7660 = vunpack.c.h.b16 %v5528
        %v7661 = vunpack.c.l.b16 %v5529
        %v7662 = vunpack.c.h.b16 %v5529
        %v7663 = vunpack.c.l.b16 %v5530
        %v7664 = vunpack.c.h.b16 %v5530
        %v7665 = vunpack.c.l.b16 %v5531
        %v7666 = vunpack.c.h.b16 %v5531
        %v7667 = vunpack.c.l.b16 %v5532
        %v7668 = vunpack.c.h.b16 %v5532
        %v7669 = vunpack.c.l.b16 %v5533
        %v7670 = vunpack.c.h.b16 %v5533
        %v7671 = vunpack.c.l.b16 %v5534
        %v7672 = vunpack.c.h.b16 %v5534
        %v7673 = vunpack.c.l.b16 %v5535
        %v7674 = vunpack.c.h.b16 %v5535
        %v7675 = vunpack.c.l.b16 %v5536
        %v7676 = vunpack.c.h.b16 %v5536
        %v7677 = vunpack.c.l.b16 %v5537
        %v7678 = vunpack.c.h.b16 %v5537
        %v7679 = vunpack.c.l.b16 %v5538
        %v7680 = vunpack.c.h.b16 %v5538
        %v7681 = vunpack.c.l.b16 %v5539
        %v7682 = vunpack.c.h.b16 %v5539
        %v7683 = vunpack.c.l.b16 %v5540
        %v7684 = vunpack.c.h.b16 %v5540
        %v7685 = vunpack.c.l.b16 %v5541
        %v7686 = vunpack.c.h.b16 %v5541
        %v7687 = vunpack.c.l.b16 %v5542
        %v7688 = vunpack.c.h.b16 %v5542
        %v7689 = vunpack.c.l.b16 %v5543
        %v7690 = vunpack.c.h.b16 %v5543
        %v7691 = vunpack.c.l.b16 %v5544
        %v7692 = vunpack.c.h.b16 %v5544
        %v7693 = vunpack.c.l.b16 %v5545
        %v7694 = vunpack.c.h.b16 %v5545
        %v7695 = vunpack.c.l.b16 %v5546
        %v7696 = vunpack.c.h.b16 %v5546
        %v7697 = vunpack.c.l.b16 %v5547
        %v7698 = vunpack.c.h.b16 %v5547
        %v7699 = vunpack.c.l.b16 %v5548
        %v7700 = vunpack.c.h.b16 %v5548
        %v7701 = vunpack.c.l.b16 %v5549
        %v7702 = vunpack.c.h.b16 %v5549
        %v7703 = vunpack.c.l.b16 %v5550
        %v7704 = vunpack.c.h.b16 %v5550
        %v7705 = vunpack.c.l.b16 %v5551
        %v7706 = vunpack.c.h.b16 %v5551
        %v7707 = vunpack.c.l.b16 %v5552
        %v7708 = vunpack.c.h.b16 %v5552
        %v7709 = vunpack.c.l.b16 %v5553
        %v7710 = vunpack.c.h.b16 %v5553
        %v7711 = vunpack.c.l.b16 %v5554
        %v7712 = vunpack.c.h.b16 %v5554
        %v7713 = vunpack.c.l.b16 %v5555
        %v7714 = vunpack.c.h.b16 %v5555
        %v7715 = vunpack.c.l.b16 %v5556
        %v7716 = vunpack.c.h.b16 %v5556
        %v7717 = vunpack.c.l.b16 %v5557
        %v7718 = vunpack.c.h.b16 %v5557
        %v7719 = vunpack.c.l.b16 %v5558
        %v7720 = vunpack.c.h.b16 %v5558
        %v7721 = vunpack.c.l.b16 %v5559
        %v7722 = vunpack.c.h.b16 %v5559
        %v7723 = vunpack.c.l.b16 %v5560
        %v7724 = vunpack.c.h.b16 %v5560
        %v7725 = vunpack.c.l.b16 %v5561
        %v7726 = vunpack.c.h.b16 %v5561
        %v7727 = vunpack.c.l.b16 %v5562
        %v7728 = vunpack.c.h.b16 %v5562
        %v7729 = vunpack.c.l.b16 %v5563
        %v7730 = vunpack.c.h.b16 %v5563
        %v7731 = vunpack.c.l.b16 %v5564
        %v7732 = vunpack.c.h.b16 %v5564
        %v7733 = vunpack.c.l.b16 %v5565
        %v7734 = vunpack.c.h.b16 %v5565
        %v7735 = vunpack.c.l.b16 %v5566
        %v7736 = vunpack.c.h.b16 %v5566
        %v7737 = vunpack.c.l.b16 %v5567
        %v7738 = vunpack.c.h.b16 %v5567
        %v7739 = vunpack.c.l.b16 %v5568
        %v7740 = vunpack.c.h.b16 %v5568
        %v7741 = vunpack.c.l.b16 %v5569
        %v7742 = vunpack.c.h.b16 %v5569
        %v7743 = vunpack.c.l.b16 %v5570
        %v7744 = vunpack.c.h.b16 %v5570
        %v7745 = vunpack.c.l.b16 %v5571
        %v7746 = vunpack.c.h.b16 %v5571
        %v7747 = vunpack.c.l.b16 %v5572
        %v7748 = vunpack.c.h.b16 %v5572
        %v7749 = vunpack.c.l.b16 %v5573
        %v7750 = vunpack.c.h.b16 %v5573
        %v7751 = vunpack.c.l.b16 %v5574
        %v7752 = vunpack.c.h.b16 %v5574
        %v7753 = vunpack.c.l.b16 %v5575
        %v7754 = vunpack.c.h.b16 %v5575
        %v7755 = vunpack.c.l.b16 %v5576
        %v7756 = vunpack.c.h.b16 %v5576
        %v7757 = vunpack.c.l.b16 %v5577
        %v7758 = vunpack.c.h.b16 %v5577
        %v7759 = vunpack.c.l.b16 %v5578
        %v7760 = vunpack.c.h.b16 %v5578
        %v7761 = vunpack.c.l.b16 %v5579
        %v7762 = vunpack.c.h.b16 %v5579
        %v7763 = vunpack.c.l.b16 %v5580
        %v7764 = vunpack.c.h.b16 %v5580
        %v7765 = vunpack.c.l.b16 %v5581
        %v7766 = vunpack.c.h.b16 %v5581
        %v7767 = vunpack.c.l.b16 %v5582
        %v7768 = vunpack.c.h.b16 %v5582
        %v7769 = vunpack.c.l.b16 %v5583
        %v7770 = vunpack.c.h.b16 %v5583
        %v7771 = vunpack.c.l.b16 %v5584
        %v7772 = vunpack.c.h.b16 %v5584
        %v7773 = vunpack.c.l.b16 %v5585
        %v7774 = vunpack.c.h.b16 %v5585
        %v7775 = vunpack.c.l.b16 %v5586
        %v7776 = vunpack.c.h.b16 %v5586
        %v7777 = vunpack.c.l.b16 %v5587
        %v7778 = vunpack.c.h.b16 %v5587
        %v7779 = vunpack.c.l.b16 %v5588
        %v7780 = vunpack.c.h.b16 %v5588
        %v7781 = vunpack.c.l.b16 %v5589
        %v7782 = vunpack.c.h.b16 %v5589
        %v7783 = vunpack.c.l.b16 %v5590
        %v7784 = vunpack.c.h.b16 %v5590
        %v7785 = vunpack.c.l.b16 %v5591
        %v7786 = vunpack.c.h.b16 %v5591
        %v7787 = vunpack.c.l.b16 %v5592
        %v7788 = vunpack.c.h.b16 %v5592
        %v7789 = vunpack.c.l.b16 %v5593
        %v7790 = vunpack.c.h.b16 %v5593
        %v7791 = vunpack.c.l.b16 %v5594
        %v7792 = vunpack.c.h.b16 %v5594
        %v7793 = vunpack.c.l.b16 %v5595
        %v7794 = vunpack.c.h.b16 %v5595
        %v7795 = vunpack.c.l.b16 %v5596
        %v7796 = vunpack.c.h.b16 %v5596
        %v7797 = vunpack.c.l.b16 %v5597
        %v7798 = vunpack.c.h.b16 %v5597
        %v7799 = vunpack.c.l.b16 %v5598
        %v7800 = vunpack.c.h.b16 %v5598
        %v7801 = vunpack.c.l.b16 %v5599
        %v7802 = vunpack.c.h.b16 %v5599
        %v7803 = vunpack.c.l.b16 %v5600
        %v7804 = vunpack.c.h.b16 %v5600
        %v7805 = vunpack.c.l.b16 %v5601
        %v7806 = vunpack.c.h.b16 %v5601
        %v7807 = vunpack.c.l.b16 %v5602
        %v7808 = vunpack.c.h.b16 %v5602
        %v7809 = vunpack.c.l.b16 %v5603
        %v7810 = vunpack.c.h.b16 %v5603
        %v7811 = vunpack.c.l.b16 %v5604
        %v7812 = vunpack.c.h.b16 %v5604
        %v7813 = vunpack.c.l.b16 %v5605
        %v7814 = vunpack.c.h.b16 %v5605
        %v7815 = vunpack.c.l.b16 %v5606
        %v7816 = vunpack.c.h.b16 %v5606
        %v7817 = vunpack.c.l.b16 %v5607
        %v7818 = vunpack.c.h.b16 %v5607
        %v7819 = vunpack.c.l.b16 %v5608
        %v7820 = vunpack.c.h.b16 %v5608
        %v7821 = vunpack.c.l.b16 %v5609
        %v7822 = vunpack.c.h.b16 %v5609
        %v7823 = vunpack.c.l.b16 %v5610
        %v7824 = vunpack.c.h.b16 %v5610
        %v7825 = vunpack.c.l.b16 %v5611
        %v7826 = vunpack.c.h.b16 %v5611
        %v7827 = vunpack.c.l.b16 %v5612
        %v7828 = vunpack.c.h.b16 %v5612
        %v7829 = vunpack.c.l.b16 %v5613
        %v7830 = vunpack.c.h.b16 %v5613
        %v7831 = vunpack.c.l.b16 %v5614
        %v7832 = vunpack.c.h.b16 %v5614
        %v7833 = vunpack.c.l.b16 %v5615
        %v7834 = vunpack.c.h.b16 %v5615
        %v7835 = vunpack.c.l.b16 %v5616
        %v7836 = vunpack.c.h.b16 %v5616
        %v7837 = vunpack.c.l.b16 %v5617
        %v7838 = vunpack.c.h.b16 %v5617
        %v7839 = vunpack.c.l.b16 %v5618
        %v7840 = vunpack.c.h.b16 %v5618
        %v7841 = vunpack.c.l.b16 %v5619
        %v7842 = vunpack.c.h.b16 %v5619
        %v7843 = vunpack.c.l.b16 %v5620
        %v7844 = vunpack.c.h.b16 %v5620
        %v7845 = vunpack.c.l.b16 %v5621
        %v7846 = vunpack.c.h.b16 %v5621
        %v7847 = vunpack.c.l.b16 %v5622
        %v7848 = vunpack.c.h.b16 %v5622
        %v7849 = vunpack.c.l.b16 %v5623
        %v7850 = vunpack.c.h.b16 %v5623
        %v7851 = vunpack.c.l.b16 %v5624
        %v7852 = vunpack.c.h.b16 %v5624
        %v7853 = vunpack.c.l.b16 %v5625
        %v7854 = vunpack.c.h.b16 %v5625
        %v7855 = vunpack.c.l.b16 %v5626
        %v7856 = vunpack.c.h.b16 %v5626
        %v7857 = vunpack.c.l.b16 %v5627
        %v7858 = vunpack.c.h.b16 %v5627
        %v7859 = vunpack.c.l.b16 %v5628
        %v7860 = vunpack.c.h.b16 %v5628
        %v7861 = vunpack.c.l.b16 %v5629
        %v7862 = vunpack.c.h.b16 %v5629
        %v7863 = vunpack.c.l.b16 %v5630
        %v7864 = vunpack.c.h.b16 %v5630
        %v7865 = vunpack.c.l.b16 %v5631
        %v7866 = vunpack.c.h.b16 %v5631
        %v7867 = vunpack.c.l.b16 %v5632
        %v7868 = vunpack.c.h.b16 %v5632
        %v7869 = vunpack.c.l.b16 %v5633
        %v7870 = vunpack.c.h.b16 %v5633
        %v7871 = vunpack.c.l.b16 %v5634
        %v7872 = vunpack.c.h.b16 %v5634
        %v7873 = vunpack.c.l.b16 %v5635
        %v7874 = vunpack.c.h.b16 %v5635
        %v7875 = vunpack.c.l.b16 %v5636
        %v7876 = vunpack.c.h.b16 %v5636
        %v7877 = vunpack.c.l.b16 %v5637
        %v7878 = vunpack.c.h.b16 %v5637
        %v7879 = vunpack.c.l.b16 %v5638
        %v7880 = vunpack.c.h.b16 %v5638
        %v7881 = vunpack.c.l.b16 %v5639
        %v7882 = vunpack.c.h.b16 %v5639
        %v7883 = vunpack.c.l.b16 %v5640
        %v7884 = vunpack.c.h.b16 %v5640
        %v7885 = vunpack.c.l.b16 %v5641
        %v7886 = vunpack.c.h.b16 %v5641
        %v7887 = vunpack.c.l.b16 %v5642
        %v7888 = vunpack.c.h.b16 %v5642
        %v7889 = vunpack.c.l.b16 %v5643
        %v7890 = vunpack.c.h.b16 %v5643
        %v7891 = vunpack.c.l.b16 %v5644
        %v7892 = vunpack.c.h.b16 %v5644
        %v7893 = vunpack.c.l.b16 %v5645
        %v7894 = vunpack.c.h.b16 %v5645
        %v7895 = vunpack.c.l.b16 %v5646
        %v7896 = vunpack.c.h.b16 %v5646
        %v7897 = vunpack.c.l.b16 %v5647
        %v7898 = vunpack.c.h.b16 %v5647
        %v7899 = vunpack.c.l.b16 %v5648
        %v7900 = vunpack.c.h.b16 %v5648
        %v7901 = vunpack.c.l.b16 %v5649
        %v7902 = vunpack.c.h.b16 %v5649
        %v7903 = vunpack.c.l.b16 %v5650
        %v7904 = vunpack.c.h.b16 %v5650
        %v7905 = vunpack.c.l.b16 %v5651
        %v7906 = vunpack.c.h.b16 %v5651
        %v7907 = vunpack.c.l.b16 %v5652
        %v7908 = vunpack.c.h.b16 %v5652
        %v7909 = vunpack.c.l.b16 %v5653
        %v7910 = vunpack.c.h.b16 %v5653
        %v7911 = vunpack.c.l.b16 %v5654
        %v7912 = vunpack.c.h.b16 %v5654
        %v7913 = vunpack.c.l.b16 %v5655
        %v7914 = vunpack.c.h.b16 %v5655
        %v7915 = vunpack.c.l.b16 %v5656
        %v7916 = vunpack.c.h.b16 %v5656
        %v7917 = vunpack.c.l.b16 %v5657
        %v7918 = vunpack.c.h.b16 %v5657
        %v7919 = vunpack.c.l.b16 %v5658
        %v7920 = vunpack.c.h.b16 %v5658
        %v7921 = vunpack.c.l.b16 %v5659
        %v7922 = vunpack.c.h.b16 %v5659
        %v7923 = vunpack.c.l.b16 %v5660
        %v7924 = vunpack.c.h.b16 %v5660
        %v7925 = vunpack.c.l.b16 %v5661
        %v7926 = vunpack.c.h.b16 %v5661
        %v7927 = vunpack.c.l.b16 %v5662
        %v7928 = vunpack.c.h.b16 %v5662
        %v7929 = vunpack.c.l.b16 %v5663
        %v7930 = vunpack.c.h.b16 %v5663
        %v7931 = vunpack.c.l.b16 %v5664
        %v7932 = vunpack.c.h.b16 %v5664
        %v7933 = vunpack.c.l.b16 %v5665
        %v7934 = vunpack.c.h.b16 %v5665
        %v7935 = vunpack.c.l.b16 %v5666
        %v7936 = vunpack.c.h.b16 %v5666
        %v7937 = vunpack.c.l.b16 %v5667
        %v7938 = vunpack.c.h.b16 %v5667
        %v7939 = vunpack.c.l.b16 %v5668
        %v7940 = vunpack.c.h.b16 %v5668
        %v7941 = vunpack.c.l.b16 %v5669
        %v7942 = vunpack.c.h.b16 %v5669
        %v7943 = vunpack.c.l.b16 %v5670
        %v7944 = vunpack.c.h.b16 %v5670
        %v7945 = vunpack.c.l.b16 %v5671
        %v7946 = vunpack.c.h.b16 %v5671
        %v7947 = vunpack.c.l.b16 %v5672
        %v7948 = vunpack.c.h.b16 %v5672
        %v7949 = vunpack.c.l.b16 %v5673
        %v7950 = vunpack.c.h.b16 %v5673
        %v7951 = vunpack.c.l.b16 %v5674
        %v7952 = vunpack.c.h.b16 %v5674
        %v7953 = vunpack.c.l.b16 %v5675
        %v7954 = vunpack.c.h.b16 %v5675
        %v7955 = vunpack.c.l.b16 %v5676
        %v7956 = vunpack.c.h.b16 %v5676
        %v7957 = vunpack.c.l.b16 %v5677
        %v7958 = vunpack.c.h.b16 %v5677
        %v7959 = vunpack.c.l.b16 %v5678
        %v7960 = vunpack.c.h.b16 %v5678
        %v7961 = vunpack.c.l.b16 %v5679
        %v7962 = vunpack.c.h.b16 %v5679
        %v7963 = vunpack.c.l.b16 %v5680
        %v7964 = vunpack.c.h.b16 %v5680
        %v7965 = vunpack.c.l.b16 %v5681
        %v7966 = vunpack.c.h.b16 %v5681
        %v7967 = vunpack.c.l.b16 %v5682
        %v7968 = vunpack.c.h.b16 %v5682
        %v7969 = vunpack.c.l.b16 %v5683
        %v7970 = vunpack.c.h.b16 %v5683
        %v7971 = vunpack.c.l.b16 %v5684
        %v7972 = vunpack.c.h.b16 %v5684
        %v7973 = vunpack.c.l.b16 %v5685
        %v7974 = vunpack.c.h.b16 %v5685
        %v7975 = vunpack.c.l.b16 %v5686
        %v7976 = vunpack.c.h.b16 %v5686
        %v7977 = vunpack.c.l.b16 %v5687
        %v7978 = vunpack.c.h.b16 %v5687
        %v7979 = vunpack.c.l.b16 %v5688
        %v7980 = vunpack.c.h.b16 %v5688
        %v7981 = vunpack.c.l.b16 %v5689
        %v7982 = vunpack.c.h.b16 %v5689
        %v7983 = vunpack.c.l.b16 %v5690
        %v7984 = vunpack.c.h.b16 %v5690
        %v7985 = vunpack.c.l.b16 %v5691
        %v7986 = vunpack.c.h.b16 %v5691
        %v7987 = vunpack.c.l.b16 %v5692
        %v7988 = vunpack.c.h.b16 %v5692
        %v7989 = vunpack.c.l.b16 %v5693
        %v7990 = vunpack.c.h.b16 %v5693
        %v7991 = vunpack.c.l.b16 %v5694
        %v7992 = vunpack.c.h.b16 %v5694
        %v7993 = vunpack.c.l.b16 %v5695
        %v7994 = vunpack.c.h.b16 %v5695
        %v7995 = vunpack.c.l.b16 %v5696
        %v7996 = vunpack.c.h.b16 %v5696
        %v7997 = vunpack.c.l.b16 %v5697
        %v7998 = vunpack.c.h.b16 %v5697
        %v7999 = vunpack.c.l.b16 %v5698
        %v8000 = vunpack.c.h.b16 %v5698
        %v8001 = vunpack.c.l.b16 %v5699
        %v8002 = vunpack.c.h.b16 %v5699
        %v8003 = vunpack.c.l.b16 %v5700
        %v8004 = vunpack.c.h.b16 %v5700
        %v8005 = vunpack.c.l.b16 %v5701
        %v8006 = vunpack.c.h.b16 %v5701
        %v8007 = vunpack.c.l.b16 %v5702
        %v8008 = vunpack.c.h.b16 %v5702
        %v8009 = vunpack.c.l.b16 %v5703
        %v8010 = vunpack.c.h.b16 %v5703
        %v8011 = vunpack.c.l.b16 %v5704
        %v8012 = vunpack.c.h.b16 %v5704
        %v8013 = vunpack.c.l.b16 %v5705
        %v8014 = vunpack.c.h.b16 %v5705
        %v8015 = vunpack.c.l.b16 %v5706
        %v8016 = vunpack.c.h.b16 %v5706
        %v8017 = vunpack.c.l.b16 %v5707
        %v8018 = vunpack.c.h.b16 %v5707
        %v8019 = vunpack.c.l.b16 %v5708
        %v8020 = vunpack.c.h.b16 %v5708
        %v8021 = vunpack.c.l.b16 %v5709
        %v8022 = vunpack.c.h.b16 %v5709
        %v8023 = vunpack.c.l.b16 %v5710
        %v8024 = vunpack.c.h.b16 %v5710
        %v8025 = vunpack.c.l.b16 %v5711
        %v8026 = vunpack.c.h.b16 %v5711
        %v8027 = vunpack.c.l.b16 %v5712
        %v8028 = vunpack.c.h.b16 %v5712
        %v8029 = vunpack.c.l.b16 %v5713
        %v8030 = vunpack.c.h.b16 %v5713
        %v8031 = vunpack.c.l.b16 %v5714
        %v8032 = vunpack.c.h.b16 %v5714
        %v8033 = vunpack.c.l.b16 %v5715
        %v8034 = vunpack.c.h.b16 %v5715
        %v8035 = vunpack.c.l.b16 %v5716
        %v8036 = vunpack.c.h.b16 %v5716
        %v8037 = vunpack.c.l.b16 %v5717
        %v8038 = vunpack.c.h.b16 %v5717
        %v8039 = vunpack.c.l.b16 %v5718
        %v8040 = vunpack.c.h.b16 %v5718
        %v8041 = vunpack.c.l.b16 %v5719
        %v8042 = vunpack.c.h.b16 %v5719
        %v8043 = vunpack.c.l.b16 %v5720
        %v8044 = vunpack.c.h.b16 %v5720
        %v8045 = vunpack.c.l.b16 %v5721
        %v8046 = vunpack.c.h.b16 %v5721
        %v8047 = vunpack.c.l.b16 %v5722
        %v8048 = vunpack.c.h.b16 %v5722
        %v8049 = vunpack.c.l.b16 %v5723
        %v8050 = vunpack.c.h.b16 %v5723
        %v8051 = vunpack.c.l.b16 %v5724
        %v8052 = vunpack.c.h.b16 %v5724
        %v8053 = vunpack.c.l.b16 %v5725
        %v8054 = vunpack.c.h.b16 %v5725
        %v8055 = vunpack.c.l.b16 %v5726
        %v8056 = vunpack.c.h.b16 %v5726
        %v8057 = vunpack.c.l.b16 %v5727
        %v8058 = vunpack.c.h.b16 %v5727
        %v8059 = vunpack.c.l.b16 %v5728
        %v8060 = vunpack.c.h.b16 %v5728
        %v8061 = vunpack.c.l.b16 %v5729
        %v8062 = vunpack.c.h.b16 %v5729
        %v8063 = vunpack.c.l.b16 %v5730
        %v8064 = vunpack.c.h.b16 %v5730
        %v8065 = vunpack.c.l.b16 %v5731
        %v8066 = vunpack.c.h.b16 %v5731
        %v8067 = vunpack.c.l.b16 %v5732
        %v8068 = vunpack.c.h.b16 %v5732
        %v8069 = vunpack.c.l.b16 %v5733
        %v8070 = vunpack.c.h.b16 %v5733
        %v8071 = vunpack.c.l.b16 %v5734
        %v8072 = vunpack.c.h.b16 %v5734
        %v8073 = vunpack.c.l.b16 %v5735
        %v8074 = vunpack.c.h.b16 %v5735
        %v8075 = vunpack.c.l.b16 %v5736
        %v8076 = vunpack.c.h.b16 %v5736
        %v8077 = vunpack.c.l.b16 %v5737
        %v8078 = vunpack.c.h.b16 %v5737
        %v8079 = vunpack.c.l.b16 %v5738
        %v8080 = vunpack.c.h.b16 %v5738
        %v8081 = vunpack.c.l.b16 %v5739
        %v8082 = vunpack.c.h.b16 %v5739
        %v8083 = vunpack.c.l.b16 %v5740
        %v8084 = vunpack.c.h.b16 %v5740
        %v8085 = vunpack.c.l.b16 %v5741
        %v8086 = vunpack.c.h.b16 %v5741
        %v8087 = vunpack.c.l.b16 %v5742
        %v8088 = vunpack.c.h.b16 %v5742
        %v8089 = vunpack.c.l.b16 %v5743
        %v8090 = vunpack.c.h.b16 %v5743
        %v8091 = vunpack.c.l.b16 %v5744
        %v8092 = vunpack.c.h.b16 %v5744
        %v8093 = vunpack.c.l.b16 %v5745
        %v8094 = vunpack.c.h.b16 %v5745
        %v8095 = vunpack.c.l.b16 %v5746
        %v8096 = vunpack.c.h.b16 %v5746
        %v8097 = vunpack.c.l.b16 %v5747
        %v8098 = vunpack.c.h.b16 %v5747
        %v8099 = vunpack.c.l.b16 %v5748
        %v8100 = vunpack.c.h.b16 %v5748
        %v8101 = vunpack.c.l.b16 %v5749
        %v8102 = vunpack.c.h.b16 %v5749
        %v8103 = vunpack.c.l.b16 %v5750
        %v8104 = vunpack.c.h.b16 %v5750
        %v8105 = vunpack.c.l.b16 %v5751
        %v8106 = vunpack.c.h.b16 %v5751
        %v8107 = vunpack.c.l.b16 %v5752
        %v8108 = vunpack.c.h.b16 %v5752
        %v8109 = vunpack.c.l.b16 %v5753
        %v8110 = vunpack.c.h.b16 %v5753
        %v8111 = vunpack.c.l.b16 %v5754
        %v8112 = vunpack.c.h.b16 %v5754
        %v8113 = vunpack.c.l.b16 %v5755
        %v8114 = vunpack.c.h.b16 %v5755
        %v8115 = vunpack.c.l.b16 %v5756
        %v8116 = vunpack.c.h.b16 %v5756
        %v8117 = vunpack.c.l.b16 %v5757
        %v8118 = vunpack.c.h.b16 %v5757
        %v8119 = vunpack.c.l.b16 %v5758
        %v8120 = vunpack.c.h.b16 %v5758
        %v8121 = vunpack.c.l.b16 %v5759
        %v8122 = vunpack.c.h.b16 %v5759
        %v8123 = vunpack.c.l.b16 %v5760
        %v8124 = vunpack.c.h.b16 %v5760
        %v8125 = vunpack.c.l.b16 %v5761
        %v8126 = vunpack.c.h.b16 %v5761
        %v8127 = vunpack.c.l.b16 %v5762
        %v8128 = vunpack.c.h.b16 %v5762
        %v8129 = vunpack.c.l.b16 %v5763
        %v8130 = vunpack.c.h.b16 %v5763
        %v8131 = vunpack.c.l.b16 %v5764
        %v8132 = vunpack.c.h.b16 %v5764
        %v8133 = vunpack.c.l.b16 %v5765
        %v8134 = vunpack.c.h.b16 %v5765
        %v8135 = vunpack.c.l.b16 %v5766
        %v8136 = vunpack.c.h.b16 %v5766
        %v8137 = vunpack.c.l.b16 %v5767
        %v8138 = vunpack.c.h.b16 %v5767
        %v8139 = vunpack.c.l.b16 %v5768
        %v8140 = vunpack.c.h.b16 %v5768
        %v8141 = vunpack.c.l.b16 %v5769
        %v8142 = vunpack.c.h.b16 %v5769
        %v8143 = vunpack.c.l.b16 %v5770
        %v8144 = vunpack.c.h.b16 %v5770
        %v8145 = vunpack.c.l.b16 %v5771
        %v8146 = vunpack.c.h.b16 %v5771
        %v8147 = vunpack.c.l.b16 %v5772
        %v8148 = vunpack.c.h.b16 %v5772
        %v8149 = vunpack.c.l.b16 %v5773
        %v8150 = vunpack.c.h.b16 %v5773
        %v8151 = vunpack.c.l.b16 %v5774
        %v8152 = vunpack.c.h.b16 %v5774
        %v8153 = vunpack.c.l.b16 %v5775
        %v8154 = vunpack.c.h.b16 %v5775
        %v8155 = vunpack.c.l.b16 %v5776
        %v8156 = vunpack.c.h.b16 %v5776
        %v8157 = vunpack.c.l.b16 %v5777
        %v8158 = vunpack.c.h.b16 %v5777
        %v8159 = vunpack.c.l.b16 %v5778
        %v8160 = vunpack.c.h.b16 %v5778
        %v8161 = vunpack.c.l.b16 %v5779
        %v8162 = vunpack.c.h.b16 %v5779
        %v8163 = vunpack.c.l.b16 %v5780
        %v8164 = vunpack.c.h.b16 %v5780
        %v8165 = vunpack.c.l.b16 %v5781
        %v8166 = vunpack.c.h.b16 %v5781
        %v8167 = vunpack.c.l.b16 %v5782
        %v8168 = vunpack.c.h.b16 %v5782
        %v8169 = vunpack.c.l.b16 %v5783
        %v8170 = vunpack.c.h.b16 %v5783
        %v8171 = vunpack.c.l.b16 %v5784
        %v8172 = vunpack.c.h.b16 %v5784
        %v8173 = vunpack.c.l.b16 %v5785
        %v8174 = vunpack.c.h.b16 %v5785
        %v8175 = vunpack.c.l.b16 %v5786
        %v8176 = vunpack.c.h.b16 %v5786
        %v8177 = vunpack.c.l.b16 %v5787
        %v8178 = vunpack.c.h.b16 %v5787
        %v8179 = vunpack.c.l.b16 %v5788
        %v8180 = vunpack.c.h.b16 %v5788
        %v8181 = vunpack.c.l.b16 %v5789
        %v8182 = vunpack.c.h.b16 %v5789
        %v8183 = vunpack.c.l.b16 %v5790
        %v8184 = vunpack.c.h.b16 %v5790
        %v8185 = vunpack.c.l.b16 %v5791
        %v8186 = vunpack.c.h.b16 %v5791
        %v8187 = vunpack.c.l.b16 %v5792
        %v8188 = vunpack.c.h.b16 %v5792
        %v8189 = vunpack.c.l.b16 %v5793
        %v8190 = vunpack.c.h.b16 %v5793
        %v8191 = vunpack.c.l.b16 %v5794
        %v8192 = vunpack.c.h.b16 %v5794
        %v8193 = vunpack.c.l.b16 %v5795
        %v8194 = vunpack.c.h.b16 %v5795
        %v8195 = vunpack.c.l.b16 %v5796
        %v8196 = vunpack.c.h.b16 %v5796
        %v8197 = vunpack.c.l.b16 %v5797
        %v8198 = vunpack.c.h.b16 %v5797
        %v8199 = vunpack.c.l.b16 %v5798
        %v8200 = vunpack.c.h.b16 %v5798
        %v8201 = vunpack.c.l.b16 %v5799
        %v8202 = vunpack.c.h.b16 %v5799
        %v8203 = vunpack.c.l.b16 %v5800
        %v8204 = vunpack.c.h.b16 %v5800
        %v8205 = vunpack.c.l.b16 %v5801
        %v8206 = vunpack.c.h.b16 %v5801
        %v8207 = vunpack.c.l.b16 %v5802
        %v8208 = vunpack.c.h.b16 %v5802
        %v8209 = vunpack.c.l.b16 %v5803
        %v8210 = vunpack.c.h.b16 %v5803
        %v8211 = vunpack.c.l.b16 %v5804
        %v8212 = vunpack.c.h.b16 %v5804
        %v8213 = vunpack.c.l.b16 %v5805
        %v8214 = vunpack.c.h.b16 %v5805
        %v8215 = vunpack.c.l.b16 %v5806
        %v8216 = vunpack.c.h.b16 %v5806
        %v8217 = vunpack.c.l.b16 %v5807
        %v8218 = vunpack.c.h.b16 %v5807
        %v8219 = vunpack.c.l.b16 %v5808
        %v8220 = vunpack.c.h.b16 %v5808
        %v8221 = vunpack.c.l.b16 %v5809
        %v8222 = vunpack.c.h.b16 %v5809
        %v8223 = vunpack.c.l.b16 %v5810
        %v8224 = vunpack.c.h.b16 %v5810
        %v8225 = vunpack.c.l.b16 %v5811
        %v8226 = vunpack.c.h.b16 %v5811
        %v8227 = vunpack.c.l.b16 %v5812
        %v8228 = vunpack.c.h.b16 %v5812
        %v8229 = vunpack.c.l.b16 %v5813
        %v8230 = vunpack.c.h.b16 %v5813
        %v8231 = vunpack.c.l.b16 %v5814
        %v8232 = vunpack.c.h.b16 %v5814
        %v8233 = vunpack.c.l.b16 %v5815
        %v8234 = vunpack.c.h.b16 %v5815
        %v8235 = vunpack.c.l.b16 %v5816
        %v8236 = vunpack.c.h.b16 %v5816
        %v8237 = vunpack.c.l.b16 %v5817
        %v8238 = vunpack.c.h.b16 %v5817
        %v8239 = vunpack.c.l.b16 %v5818
        %v8240 = vunpack.c.h.b16 %v5818
        %v8241 = vunpack.c.l.b16 %v5819
        %v8242 = vunpack.c.h.b16 %v5819
        %v8243 = vunpack.c.l.b16 %v5820
        %v8244 = vunpack.c.h.b16 %v5820
        %v8245 = vunpack.c.l.b16 %v5821
        %v8246 = vunpack.c.h.b16 %v5821
        %v8247 = vunpack.c.l.b16 %v5822
        %v8248 = vunpack.c.h.b16 %v5822
        %v8249 = vunpack.c.l.b16 %v5823
        %v8250 = vunpack.c.h.b16 %v5823
        %v8251 = vunpack.c.l.b16 %v5824
        %v8252 = vunpack.c.h.b16 %v5824
        %v8253 = vunpack.c.l.b16 %v5825
        %v8254 = vunpack.c.h.b16 %v5825
        %v8255 = vunpack.c.l.b16 %v5826
        %v8256 = vunpack.c.h.b16 %v5826
        %v8257 = vunpack.c.l.b16 %v5827
        %v8258 = vunpack.c.h.b16 %v5827
        %v8259 = vunpack.c.l.b16 %v5828
        %v8260 = vunpack.c.h.b16 %v5828
        %v8261 = vunpack.c.l.b16 %v5829
        %v8262 = vunpack.c.h.b16 %v5829
        %v8263 = vunpack.c.l.b16 %v5830
        %v8264 = vunpack.c.h.b16 %v5830
        %v8265 = vunpack.c.l.b16 %v5831
        %v8266 = vunpack.c.h.b16 %v5831
        %v8267 = vunpack.c.l.b16 %v5832
        %v8268 = vunpack.c.h.b16 %v5832
        %v8269 = vunpack.c.l.b16 %v5833
        %v8270 = vunpack.c.h.b16 %v5833
        %v8271 = vunpack.c.l.b16 %v5834
        %v8272 = vunpack.c.h.b16 %v5834
        %v8273 = vunpack.c.l.b16 %v5835
        %v8274 = vunpack.c.h.b16 %v5835
        %v8275 = vunpack.c.l.b16 %v5836
        %v8276 = vunpack.c.h.b16 %v5836
        %v8277 = vunpack.c.l.b16 %v5837
        %v8278 = vunpack.c.h.b16 %v5837
        %v8279 = vunpack.c.l.b16 %v5838
        %v8280 = vunpack.c.h.b16 %v5838
        %v8281 = vunpack.c.l.b16 %v5839
        %v8282 = vunpack.c.h.b16 %v5839
        %v8283 = vunpack.c.l.b16 %v5840
        %v8284 = vunpack.c.h.b16 %v5840
        %v8285 = vunpack.c.l.b16 %v5841
        %v8286 = vunpack.c.h.b16 %v5841
        %v8287 = vunpack.c.l.b16 %v5842
        %v8288 = vunpack.c.h.b16 %v5842
        %v8289 = vunpack.c.l.b16 %v5843
        %v8290 = vunpack.c.h.b16 %v5843
        %v8291 = vunpack.c.l.b16 %v5844
        %v8292 = vunpack.c.h.b16 %v5844
        %v8293 = vunpack.c.l.b16 %v5845
        %v8294 = vunpack.c.h.b16 %v5845
        %v8295 = vunpack.c.l.b16 %v5846
        %v8296 = vunpack.c.h.b16 %v5846
        %v8297 = vunpack.c.l.b16 %v5847
        %v8298 = vunpack.c.h.b16 %v5847
        %v8299 = vunpack.c.l.b16 %v5848
        %v8300 = vunpack.c.h.b16 %v5848
        %v8301 = vunpack.c.l.b16 %v5849
        %v8302 = vunpack.c.h.b16 %v5849
        %v8303 = vunpack.c.l.b16 %v5850
        %v8304 = vunpack.c.h.b16 %v5850
        %v8305 = vunpack.c.l.b16 %v5851
        %v8306 = vunpack.c.h.b16 %v5851
        %v8307 = vunpack.c.l.b16 %v5852
        %v8308 = vunpack.c.h.b16 %v5852
        %v8309 = vunpack.c.l.b16 %v5853
        %v8310 = vunpack.c.h.b16 %v5853
        %v8311 = vunpack.c.l.b16 %v5854
        %v8312 = vunpack.c.h.b16 %v5854
        %v8313 = vunpack.c.l.b16 %v5855
        %v8314 = vunpack.c.h.b16 %v5855
        %v8315 = vunpack.c.l.b16 %v5856
        %v8316 = vunpack.c.h.b16 %v5856
        %v8317 = vunpack.c.l.b16 %v5857
        %v8318 = vunpack.c.h.b16 %v5857
        %v8319 = vunpack.c.l.b16 %v5858
        %v8320 = vunpack.c.h.b16 %v5858
        %v8321 = vunpack.c.l.b16 %v5859
        %v8322 = vunpack.c.h.b16 %v5859
        %v8323 = vunpack.c.l.b16 %v5860
        %v8324 = vunpack.c.h.b16 %v5860
        %v8325 = vunpack.c.l.b16 %v5861
        %v8326 = vunpack.c.h.b16 %v5861
        %v8327 = vunpack.c.l.b16 %v5862
        %v8328 = vunpack.c.h.b16 %v5862
        %v8329 = vunpack.c.l.b16 %v5863
        %v8330 = vunpack.c.h.b16 %v5863
        %v8331 = vunpack.c.l.b16 %v5864
        %v8332 = vunpack.c.h.b16 %v5864
        %v8333 = vunpack.c.l.b16 %v5865
        %v8334 = vunpack.c.h.b16 %v5865
        %v8335 = vunpack.c.l.b16 %v5866
        %v8336 = vunpack.c.h.b16 %v5866
        %v8337 = vunpack.c.l.b16 %v5867
        %v8338 = vunpack.c.h.b16 %v5867
        %v8339 = vunpack.c.l.b16 %v5868
        %v8340 = vunpack.c.h.b16 %v5868
        %v8341 = vunpack.c.l.b16 %v5869
        %v8342 = vunpack.c.h.b16 %v5869
        %v8343 = vunpack.c.l.b16 %v5870
        %v8344 = vunpack.c.h.b16 %v5870
        %v8345 = vunpack.c.l.b16 %v5871
        %v8346 = vunpack.c.h.b16 %v5871
        %v8347 = vunpack.c.l.b16 %v5872
        %v8348 = vunpack.c.h.b16 %v5872
        %v8349 = vunpack.c.l.b16 %v5873
        %v8350 = vunpack.c.h.b16 %v5873
        %v8351 = vunpack.c.l.b16 %v5874
        %v8352 = vunpack.c.h.b16 %v5874
        %v8353 = vunpack.c.l.b16 %v5875
        %v8354 = vunpack.c.h.b16 %v5875
        %v8355 = vunpack.c.l.b16 %v5876
        %v8356 = vunpack.c.h.b16 %v5876
        %v8357 = vunpack.c.l.b16 %v5877
        %v8358 = vunpack.c.h.b16 %v5877
        %v8359 = vunpack.c.l.b16 %v5878
        %v8360 = vunpack.c.h.b16 %v5878
        %v8361 = vunpack.c.l.b16 %v5879
        %v8362 = vunpack.c.h.b16 %v5879
        %v8363 = vunpack.c.l.b16 %v5880
        %v8364 = vunpack.c.h.b16 %v5880
        %v8365 = vunpack.c.l.b16 %v5881
        %v8366 = vunpack.c.h.b16 %v5881
        %v8367 = vunpack.c.l.b16 %v5882
        %v8368 = vunpack.c.h.b16 %v5882
        %v8369 = vunpack.c.l.b16 %v5883
        %v8370 = vunpack.c.h.b16 %v5883
        %v8371 = vunpack.c.l.b16 %v5884
        %v8372 = vunpack.c.h.b16 %v5884
        %v8373 = vunpack.c.l.b16 %v5885
        %v8374 = vunpack.c.h.b16 %v5885
        %v8375 = vunpack.c.l.b16 %v5886
        %v8376 = vunpack.c.h.b16 %v5886
        %v8377 = vunpack.c.l.b16 %v5887
        %v8378 = vunpack.c.h.b16 %v5887
        %v8379 = vunpack.c.l.b16 %v5888
        %v8380 = vunpack.c.h.b16 %v5888
        %v8381 = vunpack.c.l.b16 %v5889
        %v8382 = vunpack.c.h.b16 %v5889
        %v8383 = vunpack.c.l.b16 %v5890
        %v8384 = vunpack.c.h.b16 %v5890
        %v8385 = vunpack.c.l.b16 %v5891
        %v8386 = vunpack.c.h.b16 %v5891
        %v8387 = vunpack.c.l.b16 %v5892
        %v8388 = vunpack.c.h.b16 %v5892
        %v8389 = vunpack.c.l.b16 %v5893
        %v8390 = vunpack.c.h.b16 %v5893
        %v8391 = vunpack.c.l.b16 %v5894
        %v8392 = vunpack.c.h.b16 %v5894
        %v8393 = vunpack.c.l.b16 %v5895
        %v8394 = vunpack.c.h.b16 %v5895
        %v8395 = vunpack.c.l.b16 %v5896
        %v8396 = vunpack.c.h.b16 %v5896
        %v8397 = vunpack.c.l.b16 %v5897
        %v8398 = vunpack.c.h.b16 %v5897
        %v8399 = vunpack.c.l.b16 %v5898
        %v8400 = vunpack.c.h.b16 %v5898
        %v8401 = vunpack.c.l.b16 %v5899
        %v8402 = vunpack.c.h.b16 %v5899
        %v8403 = vunpack.c.l.b16 %v5900
        %v8404 = vunpack.c.h.b16 %v5900
        %v8405 = vunpack.c.l.b16 %v5901
        %v8406 = vunpack.c.h.b16 %v5901
        %v8407 = vunpack.c.l.b16 %v5902
        %v8408 = vunpack.c.h.b16 %v5902
        %v8409 = vunpack.c.l.b16 %v5903
        %v8410 = vunpack.c.h.b16 %v5903
        %v8411 = vunpack.c.l.b16 %v5904
        %v8412 = vunpack.c.h.b16 %v5904
        %v8413 = vunpack.c.l.b16 %v5905
        %v8414 = vunpack.c.h.b16 %v5905
        %v8415 = vunpack.c.l.b16 %v5906
        %v8416 = vunpack.c.h.b16 %v5906
        %v8417 = vunpack.c.l.b16 %v5907
        %v8418 = vunpack.c.h.b16 %v5907
        %v8419 = vunpack.c.l.b16 %v5908
        %v8420 = vunpack.c.h.b16 %v5908
        %v8421 = vunpack.c.l.b16 %v5909
        %v8422 = vunpack.c.h.b16 %v5909
        %v8423 = vunpack.c.l.b16 %v5910
        %v8424 = vunpack.c.h.b16 %v5910
        %v8425 = vunpack.c.l.b16 %v5911
        %v8426 = vunpack.c.h.b16 %v5911
        %v8427 = vunpack.c.l.b16 %v5912
        %v8428 = vunpack.c.h.b16 %v5912
        %v8429 = vunpack.c.l.b16 %v5913
        %v8430 = vunpack.c.h.b16 %v5913
        %v8431 = vunpack.c.l.b16 %v5914
        %v8432 = vunpack.c.h.b16 %v5914
        %v8433 = vunpack.c.l.b16 %v5915
        %v8434 = vunpack.c.h.b16 %v5915
        %v8435 = vunpack.c.l.b16 %v5916
        %v8436 = vunpack.c.h.b16 %v5916
        %v8437 = vunpack.c.l.b16 %v5917
        %v8438 = vunpack.c.h.b16 %v5917
        %v8439 = vunpack.c.l.b16 %v5918
        %v8440 = vunpack.c.h.b16 %v5918
        %v8441 = vunpack.c.l.b16 %v5919
        %v8442 = vunpack.c.h.b16 %v5919
        %v8443 = vunpack.c.l.b16 %v5920
        %v8444 = vunpack.c.h.b16 %v5920
        %v8445 = vunpack.c.l.b16 %v5921
        %v8446 = vunpack.c.h.b16 %v5921
        %v8447 = vunpack.c.l.b16 %v5922
        %v8448 = vunpack.c.h.b16 %v5922
        %v8449 = vunpack.c.l.b16 %v5923
        %v8450 = vunpack.c.h.b16 %v5923
        %v8451 = vunpack.c.l.b16 %v5924
        %v8452 = vunpack.c.h.b16 %v5924
        %v8453 = vunpack.c.l.b16 %v5925
        %v8454 = vunpack.c.h.b16 %v5925
        %v8455 = vunpack.c.l.b16 %v5926
        %v8456 = vunpack.c.h.b16 %v5926
        %v8457 = vunpack.c.l.b16 %v5927
        %v8458 = vunpack.c.h.b16 %v5927
        %v8459 = vunpack.c.l.b16 %v5928
        %v8460 = vunpack.c.h.b16 %v5928
        %v8461 = vunpack.c.l.b16 %v5929
        %v8462 = vunpack.c.h.b16 %v5929
        %v8463 = vunpack.c.l.b16 %v5930
        %v8464 = vunpack.c.h.b16 %v5930
        %v8465 = vunpack.c.l.b16 %v5931
        %v8466 = vunpack.c.h.b16 %v5931
        %v8467 = vunpack.c.l.b16 %v5932
        %v8468 = vunpack.c.h.b16 %v5932
        %v8469 = vunpack.c.l.b16 %v5933
        %v8470 = vunpack.c.h.b16 %v5933
        %v8471 = vunpack.c.l.b16 %v5934
        %v8472 = vunpack.c.h.b16 %v5934
        %v8473 = vunpack.c.l.b16 %v5935
        %v8474 = vunpack.c.h.b16 %v5935
        %v8475 = vunpack.c.l.b16 %v5936
        %v8476 = vunpack.c.h.b16 %v5936
        %v8477 = vunpack.c.l.b16 %v5937
        %v8478 = vunpack.c.h.b16 %v5937
        %v8479 = vunpack.c.l.b16 %v5938
        %v8480 = vunpack.c.h.b16 %v5938
        %v8481 = vunpack.c.l.b16 %v5939
        %v8482 = vunpack.c.h.b16 %v5939
        %v8483 = vunpack.c.l.b16 %v5940
        %v8484 = vunpack.c.h.b16 %v5940
        %v8485 = vunpack.c.l.b16 %v5941
        %v8486 = vunpack.c.h.b16 %v5941
        %v8487 = vunpack.c.l.b16 %v5942
        %v8488 = vunpack.c.h.b16 %v5942
        %v8489 = vunpack.c.l.b16 %v5943
        %v8490 = vunpack.c.h.b16 %v5943
        %v8491 = vunpack.c.l.b16 %v5944
        %v8492 = vunpack.c.h.b16 %v5944
        %v8493 = vunpack.c.l.b16 %v5945
        %v8494 = vunpack.c.h.b16 %v5945
        %v8495 = vunpack.c.l.b16 %v5946
        %v8496 = vunpack.c.h.b16 %v5946
        %v8497 = vunpack.c.l.b16 %v5947
        %v8498 = vunpack.c.h.b16 %v5947
        %v8499 = vunpack.c.l.b16 %v5948
        %v8500 = vunpack.c.h.b16 %v5948
        %v8501 = vunpack.c.l.b16 %v5949
        %v8502 = vunpack.c.h.b16 %v5949
        %v8503 = vunpack.c.l.b16 %v5950
        %v8504 = vunpack.c.h.b16 %v5950
        %v8505 = vunpack.c.l.b16 %v5951
        %v8506 = vunpack.c.h.b16 %v5951
        %v8507 = vunpack.c.l.b16 %v5952
        %v8508 = vunpack.c.h.b16 %v5952
        %v8509 = vunpack.c.l.b16 %v5953
        %v8510 = vunpack.c.h.b16 %v5953
        %v8511 = vunpack.c.l.b16 %v5954
        %v8512 = vunpack.c.h.b16 %v5954
        %v8513 = vunpack.c.l.b16 %v5955
        %v8514 = vunpack.c.h.b16 %v5955
        %v8515 = vunpack.c.l.b16 %v5956
        %v8516 = vunpack.c.h.b16 %v5956
        %v8517 = vunpack.c.l.b16 %v5957
        %v8518 = vunpack.c.h.b16 %v5957
        %v8519 = vunpack.c.l.b16 %v5958
        %v8520 = vunpack.c.h.b16 %v5958
        %v8521 = vunpack.c.l.b16 %v5959
        %v8522 = vunpack.c.h.b16 %v5959
        %v8523 = vunpack.c.l.b16 %v5960
        %v8524 = vunpack.c.h.b16 %v5960
        %v8525 = vunpack.c.l.b16 %v5961
        %v8526 = vunpack.c.h.b16 %v5961
        %v8527 = vunpack.c.l.b16 %v5962
        %v8528 = vunpack.c.h.b16 %v5962
        %v8529 = vunpack.c.l.b16 %v5963
        %v8530 = vunpack.c.h.b16 %v5963
        %v8531 = vunpack.c.l.b16 %v5964
        %v8532 = vunpack.c.h.b16 %v5964
        %v8533 = vunpack.c.l.b16 %v5965
        %v8534 = vunpack.c.h.b16 %v5965
        %v8535 = vunpack.c.l.b16 %v5966
        %v8536 = vunpack.c.h.b16 %v5966
        %v8537 = vunpack.c.l.b16 %v5967
        %v8538 = vunpack.c.h.b16 %v5967
        %v8539 = vunpack.c.l.b16 %v5968
        %v8540 = vunpack.c.h.b16 %v5968
        %v8541 = vunpack.c.l.b16 %v5969
        %v8542 = vunpack.c.h.b16 %v5969
        %v8543 = vunpack.c.l.b16 %v5970
        %v8544 = vunpack.c.h.b16 %v5970
        %v8545 = vunpack.c.l.b16 %v5971
        %v8546 = vunpack.c.h.b16 %v5971
        %v8547 = vunpack.c.l.b16 %v5972
        %v8548 = vunpack.c.h.b16 %v5972
        %v8549 = vunpack.c.l.b16 %v5973
        %v8550 = vunpack.c.h.b16 %v5973
        %v8551 = vunpack.c.l.b16 %v5974
        %v8552 = vunpack.c.h.b16 %v5974
        %v8553 = vunpack.c.l.b16 %v5975
        %v8554 = vunpack.c.h.b16 %v5975
        %v8555 = vunpack.c.l.b16 %v5976
        %v8556 = vunpack.c.h.b16 %v5976
        %v8557 = vunpack.c.l.b16 %v5977
        %v8558 = vunpack.c.h.b16 %v5977
        %v8559 = vunpack.c.l.b16 %v5978
        %v8560 = vunpack.c.h.b16 %v5978
        %v8561 = vunpack.c.l.b16 %v5979
        %v8562 = vunpack.c.h.b16 %v5979
        %v8563 = vunpack.c.l.b16 %v5980
        %v8564 = vunpack.c.h.b16 %v5980
        %v8565 = vunpack.c.l.b16 %v5981
        %v8566 = vunpack.c.h.b16 %v5981
        %v8567 = vunpack.c.l.b16 %v5982
        %v8568 = vunpack.c.h.b16 %v5982
        %v8569 = vunpack.c.l.b16 %v5983
        %v8570 = vunpack.c.h.b16 %v5983
        %v8571 = vunpack.c.l.b16 %v5984
        %v8572 = vunpack.c.h.b16 %v5984
        %v8573 = vunpack.c.l.b16 %v5985
        %v8574 = vunpack.c.h.b16 %v5985
        %v8575 = vunpack.c.l.b16 %v5986
        %v8576 = vunpack.c.h.b16 %v5986
        %v8577 = vunpack.c.l.b16 %v5987
        %v8578 = vunpack.c.h.b16 %v5987
        %v8579 = vunpack.c.l.b16 %v5988
        %v8580 = vunpack.c.h.b16 %v5988
        %v8581 = vunpack.c.l.b16 %v5989
        %v8582 = vunpack.c.h.b16 %v5989
        %v8583 = vunpack.c.l.b16 %v5990
        %v8584 = vunpack.c.h.b16 %v5990
        %v8585 = vunpack.c.l.b16 %v5991
        %v8586 = vunpack.c.h.b16 %v5991
        %v8587 = vunpack.c.l.b16 %v5992
        %v8588 = vunpack.c.h.b16 %v5992
        %v8589 = vunpack.c.l.b16 %v5993
        %v8590 = vunpack.c.h.b16 %v5993
        %v8591 = vunpack.c.l.b16 %v5994
        %v8592 = vunpack.c.h.b16 %v5994
        %v8593 = vunpack.c.l.b16 %v5995
        %v8594 = vunpack.c.h.b16 %v5995
        %v8595 = vunpack.c.l.b16 %v5996
        %v8596 = vunpack.c.h.b16 %v5996
        %v8597 = vunpack.c.l.b16 %v5997
        %v8598 = vunpack.c.h.b16 %v5997
        %v8599 = vunpack.c.l.b16 %v5998
        %v8600 = vunpack.c.h.b16 %v5998
        %v8601 = vunpack.c.l.b16 %v5999
        %v8602 = vunpack.c.h.b16 %v5999
        %v8603 = vunpack.c.l.b16 %v6000
        %v8604 = vunpack.c.h.b16 %v6000
        %v8605 = vunpack.c.l.b16 %v6001
        %v8606 = vunpack.c.h.b16 %v6001
        %v8607 = vunpack.c.l.b16 %v6002
        %v8608 = vunpack.c.h.b16 %v6002
        %v8609 = vunpack.c.l.b16 %v6003
        %v8610 = vunpack.c.h.b16 %v6003
        %v8611 = vunpack.c.l.b16 %v6004
        %v8612 = vunpack.c.h.b16 %v6004
        %v8613 = vunpack.c.l.b16 %v6005
        %v8614 = vunpack.c.h.b16 %v6005
        %v8615 = vunpack.c.l.b16 %v6006
        %v8616 = vunpack.c.h.b16 %v6006
        %v8617 = vunpack.c.l.b16 %v6007
        %v8618 = vunpack.c.h.b16 %v6007
        %v8619 = vunpack.c.l.b16 %v6008
        %v8620 = vunpack.c.h.b16 %v6008
        %v8621 = vunpack.c.l.b16 %v6009
        %v8622 = vunpack.c.h.b16 %v6009
        %v8623 = vunpack.c.l.b16 %v6010
        %v8624 = vunpack.c.h.b16 %v6010
        %v8625 = vunpack.c.l.b16 %v6011
        %v8626 = vunpack.c.h.b16 %v6011
        %v8627 = vunpack.c.l.b16 %v6012
        %v8628 = vunpack.c.h.b16 %v6012
        %v8629 = vunpack.c.l.b16 %v6013
        %v8630 = vunpack.c.h.b16 %v6013
        %v8631 = vunpack.c.l.b16 %v6014
        %v8632 = vunpack.c.h.b16 %v6014
        %v8633 = vunpack.c.l.b16 %v6015
        %v8634 = vunpack.c.h.b16 %v6015
        %v8635 = vunpack.c.l.b16 %v6016
        %v8636 = vunpack.c.h.b16 %v6016
        %v8637 = vunpack.c.l.b16 %v6017
        %v8638 = vunpack.c.h.b16 %v6017
        %v8639 = vunpack.c.l.b16 %v6018
        %v8640 = vunpack.c.h.b16 %v6018
        %v8641 = vunpack.c.l.b16 %v6019
        %v8642 = vunpack.c.h.b16 %v6019
        %v8643 = vunpack.c.l.b16 %v6020
        %v8644 = vunpack.c.h.b16 %v6020
        %v8645 = vunpack.c.l.b16 %v6021
        %v8646 = vunpack.c.h.b16 %v6021
        %v8647 = vunpack.c.l.b16 %v6022
        %v8648 = vunpack.c.h.b16 %v6022
        %v8649 = vunpack.c.l.b16 %v6023
        %v8650 = vunpack.c.h.b16 %v6023
        %v8651 = vunpack.c.l.b16 %v6024
        %v8652 = vunpack.c.h.b16 %v6024
        %v8653 = vunpack.c.l.b16 %v6025
        %v8654 = vunpack.c.h.b16 %v6025
        %v8655 = vunpack.c.l.b16 %v6026
        %v8656 = vunpack.c.h.b16 %v6026
        %v8657 = vunpack.c.l.b16 %v6027
        %v8658 = vunpack.c.h.b16 %v6027
        %v8659 = vunpack.c.l.b16 %v6028
        %v8660 = vunpack.c.h.b16 %v6028
        %v8661 = vunpack.c.l.b16 %v6029
        %v8662 = vunpack.c.h.b16 %v6029
        %v8663 = vunpack.c.l.b16 %v6030
        %v8664 = vunpack.c.h.b16 %v6030
        %v8665 = vunpack.c.l.b16 %v6031
        %v8666 = vunpack.c.h.b16 %v6031
        %v8667 = vunpack.c.l.b16 %v6032
        %v8668 = vunpack.c.h.b16 %v6032
        %v8669 = vunpack.c.l.b16 %v6033
        %v8670 = vunpack.c.h.b16 %v6033
        %v8671 = vunpack.c.l.b16 %v6034
        %v8672 = vunpack.c.h.b16 %v6034
        %v8673 = vunpack.c.l.b16 %v6035
        %v8674 = vunpack.c.h.b16 %v6035
        %v8675 = vunpack.c.l.b16 %v6036
        %v8676 = vunpack.c.h.b16 %v6036
        %v8677 = vunpack.c.l.b16 %v6037
        %v8678 = vunpack.c.h.b16 %v6037
        %v8679 = vunpack.c.l.b16 %v6038
        %v8680 = vunpack.c.h.b16 %v6038
        %v8681 = vunpack.c.l.b16 %v6039
        %v8682 = vunpack.c.h.b16 %v6039
        %v8683 = vunpack.c.l.b16 %v6040
        %v8684 = vunpack.c.h.b16 %v6040
        %v8685 = vunpack.c.l.b16 %v6041
        %v8686 = vunpack.c.h.b16 %v6041
        %v8687 = vunpack.c.l.b16 %v6042
        %v8688 = vunpack.c.h.b16 %v6042
        %v8689 = vunpack.c.l.b16 %v6043
        %v8690 = vunpack.c.h.b16 %v6043
        %v8691 = vunpack.c.l.b16 %v6044
        %v8692 = vunpack.c.h.b16 %v6044
        %v8693 = vunpack.c.l.b16 %v6045
        %v8694 = vunpack.c.h.b16 %v6045
        %v8695 = vunpack.c.l.b16 %v6046
        %v8696 = vunpack.c.h.b16 %v6046
        %v8697 = vunpack.c.l.b16 %v6047
        %v8698 = vunpack.c.h.b16 %v6047
        %v8699 = vunpack.c.l.b16 %v6048
        %v8700 = vunpack.c.h.b16 %v6048
        %v8701 = vunpack.c.l.b16 %v6049
        %v8702 = vunpack.c.h.b16 %v6049
        %v8703 = vunpack.c.l.b16 %v6050
        %v8704 = vunpack.c.h.b16 %v6050
        %v8705 = vunpack.c.l.b16 %v6051
        %v8706 = vunpack.c.h.b16 %v6051
        %v8707 = vunpack.c.l.b16 %v6052
        %v8708 = vunpack.c.h.b16 %v6052
        %v8709 = vunpack.c.l.b16 %v6053
        %v8710 = vunpack.c.h.b16 %v6053
        %v8711 = vunpack.c.l.b16 %v6054
        %v8712 = vunpack.c.h.b16 %v6054
        %v8713 = vunpack.c.l.b16 %v6055
        %v8714 = vunpack.c.h.b16 %v6055
        %v8715 = vunpack.c.l.b16 %v6056
        %v8716 = vunpack.c.h.b16 %v6056
        %v8717 = vunpack.c.l.b16 %v6057
        %v8718 = vunpack.c.h.b16 %v6057
        %v8719 = vunpack.c.l.b16 %v6058
        %v8720 = vunpack.c.h.b16 %v6058
        %v8721 = vunpack.c.l.b16 %v6059
        %v8722 = vunpack.c.h.b16 %v6059
        %v8723 = vunpack.c.l.b16 %v6060
        %v8724 = vunpack.c.h.b16 %v6060
        %v8725 = vunpack.c.l.b16 %v6061
        %v8726 = vunpack.c.h.b16 %v6061
        %v8727 = vunpack.c.l.b16 %v6062
        %v8728 = vunpack.c.h.b16 %v6062
        %v8729 = vunpack.c.l.b16 %v6063
        %v8730 = vunpack.c.h.b16 %v6063
        %v8731 = vunpack.c.l.b16 %v6064
        %v8732 = vunpack.c.h.b16 %v6064
        %v8733 = vunpack.c.l.b16 %v6065
        %v8734 = vunpack.c.h.b16 %v6065
        %v8735 = vunpack.c.l.b16 %v6066
        %v8736 = vunpack.c.h.b16 %v6066
        %v8737 = vunpack.c.l.b16 %v6067
        %v8738 = vunpack.c.h.b16 %v6067
        %v8739 = vunpack.c.l.b16 %v6068
        %v8740 = vunpack.c.h.b16 %v6068
        %v8741 = vunpack.c.l.b16 %v6069
        %v8742 = vunpack.c.h.b16 %v6069
        %v8743 = vunpack.c.l.b16 %v6070
        %v8744 = vunpack.c.h.b16 %v6070
        %v8745 = vunpack.c.l.b16 %v6071
        %v8746 = vunpack.c.h.b16 %v6071
        %v8747 = vunpack.c.l.b16 %v6072
        %v8748 = vunpack.c.h.b16 %v6072
        %v8749 = vunpack.c.l.b16 %v6073
        %v8750 = vunpack.c.h.b16 %v6073
        %v8751 = vunpack.c.l.b16 %v6074
        %v8752 = vunpack.c.h.b16 %v6074
        %v8753 = vunpack.c.l.b16 %v6075
        %v8754 = vunpack.c.h.b16 %v6075
        %v8755 = vunpack.c.l.b16 %v6076
        %v8756 = vunpack.c.h.b16 %v6076
        %v8757 = vunpack.c.l.b16 %v6077
        %v8758 = vunpack.c.h.b16 %v6077
        %v8759 = vunpack.c.l.b16 %v6078
        %v8760 = vunpack.c.h.b16 %v6078
        %v8761 = vunpack.c.l.b16 %v6079
        %v8762 = vunpack.c.h.b16 %v6079
        %v8763 = vunpack.c.l.b16 %v6080
        %v8764 = vunpack.c.h.b16 %v6080
        %v8765 = vunpack.c.l.b16 %v6081
        %v8766 = vunpack.c.h.b16 %v6081
        %v8767 = vunpack.c.l.b16 %v6082
        %v8768 = vunpack.c.h.b16 %v6082
        %v8769 = vunpack.c.l.b16 %v6083
        %v8770 = vunpack.c.h.b16 %v6083
        %v8771 = vunpack.c.l.b16 %v6084
        %v8772 = vunpack.c.h.b16 %v6084
        %v8773 = vunpack.c.l.b16 %v6085
        %v8774 = vunpack.c.h.b16 %v6085
        %v8775 = vunpack.c.l.b16 %v6086
        %v8776 = vunpack.c.h.b16 %v6086
        %v8777 = vunpack.c.l.b16 %v6087
        %v8778 = vunpack.c.h.b16 %v6087
        %v8779 = vunpack.c.l.b16 %v6088
        %v8780 = vunpack.c.h.b16 %v6088
        %v8781 = vunpack.c.l.b16 %v6089
        %v8782 = vunpack.c.h.b16 %v6089
        %v8783 = vunpack.c.l.b16 %v6090
        %v8784 = vunpack.c.h.b16 %v6090
        %v8785 = vunpack.c.l.b16 %v6091
        %v8786 = vunpack.c.h.b16 %v6091
        %v8787 = vunpack.c.l.b16 %v6092
        %v8788 = vunpack.c.h.b16 %v6092
        %v8789 = vunpack.c.l.b16 %v6093
        %v8790 = vunpack.c.h.b16 %v6093
        %v8791 = vunpack.c.l.b16 %v6094
        %v8792 = vunpack.c.h.b16 %v6094
        %v8793 = vunpack.c.l.b16 %v6095
        %v8794 = vunpack.c.h.b16 %v6095
        %v8795 = vunpack.c.l.b16 %v6096
        %v8796 = vunpack.c.h.b16 %v6096
        %v8797 = vunpack.c.l.b16 %v6097
        %v8798 = vunpack.c.h.b16 %v6097
        %v8799 = vunpack.c.l.b16 %v6098
        %v8800 = vunpack.c.h.b16 %v6098
        %v8801 = vunpack.c.l.b16 %v6099
        %v8802 = vunpack.c.h.b16 %v6099
        %v8803 = vunpack.c.l.b16 %v6100
        %v8804 = vunpack.c.h.b16 %v6100
        %v8805 = vunpack.c.l.b16 %v6101
        %v8806 = vunpack.c.h.b16 %v6101
        %v8807 = vunpack.c.l.b16 %v6102
        %v8808 = vunpack.c.h.b16 %v6102
        %v8809 = vunpack.c.l.b16 %v6103
        %v8810 = vunpack.c.h.b16 %v6103
        %v8811 = vunpack.c.l.b16 %v6104
        %v8812 = vunpack.c.h.b16 %v6104
        %v8813 = vunpack.c.l.b16 %v6105
        %v8814 = vunpack.c.h.b16 %v6105
        %v8815 = vunpack.c.l.b16 %v6106
        %v8816 = vunpack.c.h.b16 %v6106
        %v8817 = vunpack.c.l.b16 %v6107
        %v8818 = vunpack.c.h.b16 %v6107
        %v8819 = vunpack.c.l.b16 %v6108
        %v8820 = vunpack.c.h.b16 %v6108
        %v8821 = vunpack.c.l.b16 %v6109
        %v8822 = vunpack.c.h.b16 %v6109
        %v8823 = vunpack.c.l.b16 %v6110
        %v8824 = vunpack.c.h.b16 %v6110
        %v8825 = vunpack.c.l.b16 %v6111
        %v8826 = vunpack.c.h.b16 %v6111
        %v8827 = vunpack.c.l.b16 %v6112
        %v8828 = vunpack.c.h.b16 %v6112
        %v8829 = vunpack.c.l.b16 %v6113
        %v8830 = vunpack.c.h.b16 %v6113
        %v8831 = vunpack.c.l.b16 %v6114
        %v8832 = vunpack.c.h.b16 %v6114
        %v8833 = vunpack.c.l.b16 %v6115
        %v8834 = vunpack.c.h.b16 %v6115
        %v8835 = vunpack.c.l.b16 %v6116
        %v8836 = vunpack.c.h.b16 %v6116
        %v8837 = vunpack.c.l.b16 %v6117
        %v8838 = vunpack.c.h.b16 %v6117
        %v8839 = vunpack.c.l.b16 %v6118
        %v8840 = vunpack.c.h.b16 %v6118
        %v8841 = vunpack.c.l.b16 %v6119
        %v8842 = vunpack.c.h.b16 %v6119
        %v8843 = vunpack.c.l.b16 %v6120
        %v8844 = vunpack.c.h.b16 %v6120
        %v8845 = vunpack.c.l.b16 %v6121
        %v8846 = vunpack.c.h.b16 %v6121
        %v8847 = vunpack.c.l.b16 %v6122
        %v8848 = vunpack.c.h.b16 %v6122
        %v8849 = vunpack.c.l.b16 %v6123
        %v8850 = vunpack.c.h.b16 %v6123
        %v8851 = vunpack.c.l.b16 %v6124
        %v8852 = vunpack.c.h.b16 %v6124
        %v8853 = vunpack.c.l.b16 %v6125
        %v8854 = vunpack.c.h.b16 %v6125
        %v8855 = vunpack.c.l.b16 %v6126
        %v8856 = vunpack.c.h.b16 %v6126
        %v8857 = vunpack.c.l.b16 %v6127
        %v8858 = vunpack.c.h.b16 %v6127
        %v8859 = vunpack.c.l.b16 %v6128
        %v8860 = vunpack.c.h.b16 %v6128
        %v8861 = vunpack.c.l.b16 %v6129
        %v8862 = vunpack.c.h.b16 %v6129
        %v8863 = vunpack.c.l.b16 %v6130
        %v8864 = vunpack.c.h.b16 %v6130
        %v8865 = vunpack.c.l.b16 %v6131
        %v8866 = vunpack.c.h.b16 %v6131
        %v8867 = vunpack.c.l.b16 %v6132
        %v8868 = vunpack.c.h.b16 %v6132
        %v8869 = vunpack.c.l.b16 %v6133
        %v8870 = vunpack.c.h.b16 %v6133
        %v8871 = vunpack.c.l.b16 %v6134
        %v8872 = vunpack.c.h.b16 %v6134
        %v8873 = vunpack.c.l.b16 %v6135
        %v8874 = vunpack.c.h.b16 %v6135
        %v8875 = vunpack.c.l.b16 %v6136
        %v8876 = vunpack.c.h.b16 %v6136
        %v8877 = vunpack.c.l.b16 %v6137
        %v8878 = vunpack.c.h.b16 %v6137
        %v8879 = vunpack.c.l.b16 %v6138
        %v8880 = vunpack.c.h.b16 %v6138
        %v8881 = vunpack.c.l.b16 %v6139
        %v8882 = vunpack.c.h.b16 %v6139
        %v8883 = vunpack.c.l.b16 %v6140
        %v8884 = vunpack.c.h.b16 %v6140
        %v8885 = vunpack.c.l.b16 %v6141
        %v8886 = vunpack.c.h.b16 %v6141
        %v8887 = vunpack.c.l.b16 %v6142
        %v8888 = vunpack.c.h.b16 %v6142
        %v8889 = vunpack.c.l.b16 %v6143
        %v8890 = vunpack.c.h.b16 %v6143
        %v8891 = vunpack.c.l.b16 %v6144
        %v8892 = vunpack.c.h.b16 %v6144
        %v8893 = vunpack.c.l.b16 %v6145
        %v8894 = vunpack.c.h.b16 %v6145
        %v8895 = vunpack.c.l.b16 %v6146
        %v8896 = vunpack.c.h.b16 %v6146
        %v8897 = vunpack.c.l.b16 %v6147
        %v8898 = vunpack.c.h.b16 %v6147
        %v8899 = vunpack.c.l.b16 %v6148
        %v8900 = vunpack.c.h.b16 %v6148
        %v8901 = vunpack.c.l.b16 %v6149
        %v8902 = vunpack.c.h.b16 %v6149
        %v8903 = vunpack.c.l.b16 %v6150
        %v8904 = vunpack.c.h.b16 %v6150
        %v8905 = vunpack.c.l.b16 %v6151
        %v8906 = vunpack.c.h.b16 %v6151
        %v8907 = vunpack.c.l.b16 %v6152
        %v8908 = vunpack.c.h.b16 %v6152
        %v8909 = vunpack.c.l.b16 %v6153
        %v8910 = vunpack.c.h.b16 %v6153
        %v8911 = vunpack.c.l.b16 %v6154
        %v8912 = vunpack.c.h.b16 %v6154
        %v8913 = vunpack.c.l.b16 %v6155
        %v8914 = vunpack.c.h.b16 %v6155
        %v8915 = vunpack.c.l.b16 %v6156
        %v8916 = vunpack.c.h.b16 %v6156
        %v8917 = vunpack.c.l.b16 %v6157
        %v8918 = vunpack.c.h.b16 %v6157
        %v8919 = vunpack.c.l.b16 %v6158
        %v8920 = vunpack.c.h.b16 %v6158
        %v8921 = vunpack.c.l.b16 %v6159
        %v8922 = vunpack.c.h.b16 %v6159
        %v8923 = vunpack.c.l.b16 %v6160
        %v8924 = vunpack.c.h.b16 %v6160
        %v8925 = vunpack.c.l.b16 %v6161
        %v8926 = vunpack.c.h.b16 %v6161
        %v8927 = vunpack.c.l.b16 %v6162
        %v8928 = vunpack.c.h.b16 %v6162
        %v8929 = vunpack.c.l.b16 %v6163
        %v8930 = vunpack.c.h.b16 %v6163
        %v8931 = vunpack.c.l.b16 %v6164
        %v8932 = vunpack.c.h.b16 %v6164
        %v8933 = vunpack.c.l.b16 %v6165
        %v8934 = vunpack.c.h.b16 %v6165
        %v8935 = vunpack.c.l.b16 %v6166
        %v8936 = vunpack.c.h.b16 %v6166
        %v8937 = vunpack.c.l.b16 %v6167
        %v8938 = vunpack.c.h.b16 %v6167
        %v8939 = vunpack.c.l.b16 %v6168
        %v8940 = vunpack.c.h.b16 %v6168
        %v8941 = vunpack.c.l.b16 %v6169
        %v8942 = vunpack.c.h.b16 %v6169
        %v8943 = vunpack.c.l.b16 %v6170
        %v8944 = vunpack.c.h.b16 %v6170
        %v8945 = vunpack.c.l.b16 %v6171
        %v8946 = vunpack.c.h.b16 %v6171
        %v8947 = vunpack.c.l.b16 %v6172
        %v8948 = vunpack.c.h.b16 %v6172
        %v8949 = vunpack.c.l.b16 %v6173
        %v8950 = vunpack.c.h.b16 %v6173
        %v8951 = vunpack.c.l.b16 %v6174
        %v8952 = vunpack.c.h.b16 %v6174
        %v8953 = vunpack.c.l.b16 %v6175
        %v8954 = vunpack.c.h.b16 %v6175
        %v8955 = vunpack.c.l.b16 %v6176
        %v8956 = vunpack.c.h.b16 %v6176
        %v8957 = vunpack.c.l.b16 %v6177
        %v8958 = vunpack.c.h.b16 %v6177
        %v8959 = vunpack.c.l.b16 %v6178
        %v8960 = vunpack.c.h.b16 %v6178
        %v8961 = vunpack.c.l.b16 %v6179
        %v8962 = vunpack.c.h.b16 %v6179
        %v8963 = vunpack.c.l.b16 %v6180
        %v8964 = vunpack.c.h.b16 %v6180
        %v8965 = vunpack.c.l.b16 %v6181
        %v8966 = vunpack.c.h.b16 %v6181
        %v8967 = vunpack.c.l.b16 %v6182
        %v8968 = vunpack.c.h.b16 %v6182
        %v8969 = vunpack.c.l.b16 %v6183
        %v8970 = vunpack.c.h.b16 %v6183
        %v8971 = vunpack.c.l.b16 %v6184
        %v8972 = vunpack.c.h.b16 %v6184
        %v8973 = vunpack.c.l.b16 %v6185
        %v8974 = vunpack.c.h.b16 %v6185
        %v8975 = vunpack.c.l.b16 %v6186
        %v8976 = vunpack.c.h.b16 %v6186
        %v8977 = vunpack.c.l.b16 %v6187
        %v8978 = vunpack.c.h.b16 %v6187
        %v8979 = vunpack.c.l.b16 %v6188
        %v8980 = vunpack.c.h.b16 %v6188
        %v8981 = vunpack.c.l.b16 %v6189
        %v8982 = vunpack.c.h.b16 %v6189
        %v8983 = vunpack.c.l.b16 %v6190
        %v8984 = vunpack.c.h.b16 %v6190
        %v8985 = vunpack.c.l.b16 %v6191
        %v8986 = vunpack.c.h.b16 %v6191
        %v8987 = vunpack.c.l.b16 %v6192
        %v8988 = vunpack.c.h.b16 %v6192
        %v8989 = vunpack.c.l.b16 %v6193
        %v8990 = vunpack.c.h.b16 %v6193
        %v8991 = vunpack.c.l.b16 %v6194
        %v8992 = vunpack.c.h.b16 %v6194
        %v8993 = vunpack.c.l.b16 %v6195
        %v8994 = vunpack.c.h.b16 %v6195
        %v8995 = vunpack.c.l.b16 %v6196
        %v8996 = vunpack.c.h.b16 %v6196
        %v8997 = vunpack.c.l.b16 %v6197
        %v8998 = vunpack.c.h.b16 %v6197
        %v8999 = vunpack.c.l.b16 %v6198
        %v9000 = vunpack.c.h.b16 %v6198
        %v9001 = vunpack.c.l.b16 %v6199
        %v9002 = vunpack.c.h.b16 %v6199
        %v9003 = vunpack.c.l.b16 %v6200
        %v9004 = vunpack.c.h.b16 %v6200
        %v9005 = vunpack.c.l.b16 %v6201
        %v9006 = vunpack.c.h.b16 %v6201
        %v9007 = vunpack.c.l.b16 %v6202
        %v9008 = vunpack.c.h.b16 %v6202
        %v9009 = vunpack.c.l.b16 %v6203
        %v9010 = vunpack.c.h.b16 %v6203
        %v9011 = vunpack.c.l.b16 %v6204
        %v9012 = vunpack.c.h.b16 %v6204
        %v9013 = vunpack.c.l.b16 %v6205
        %v9014 = vunpack.c.h.b16 %v6205
        %v9015 = vunpack.c.l.b16 %v6206
        %v9016 = vunpack.c.h.b16 %v6206
        %v9017 = vunpack.c.l.b16 %v6207
        %v9018 = vunpack.c.h.b16 %v6207
        %v9019 = vunpack.c.l.b16 %v6208
        %v9020 = vunpack.c.h.b16 %v6208
        %v9021 = vunpack.c.l.b16 %v6209
        %v9022 = vunpack.c.h.b16 %v6209
        %v9023 = vunpack.c.l.b16 %v6210
        %v9024 = vunpack.c.h.b16 %v6210
        %v9025 = vunpack.c.l.b16 %v6211
        %v9026 = vunpack.c.h.b16 %v6211
        %v9027 = vunpack.c.l.b16 %v6212
        %v9028 = vunpack.c.h.b16 %v6212
        %v9029 = vunpack.c.l.b16 %v6213
        %v9030 = vunpack.c.h.b16 %v6213
        %v9031 = vunpack.c.l.b16 %v6214
        %v9032 = vunpack.c.h.b16 %v6214
        %v9033 = vunpack.c.l.b16 %v6215
        %v9034 = vunpack.c.h.b16 %v6215
        %v9035 = vunpack.c.l.b16 %v6216
        %v9036 = vunpack.c.h.b16 %v6216
        %v9037 = vunpack.c.l.b16 %v6217
        %v9038 = vunpack.c.h.b16 %v6217
        %v9039 = vunpack.c.l.b16 %v6218
        %v9040 = vunpack.c.h.b16 %v6218
        %v9041 = vunpack.c.l.b16 %v6219
        %v9042 = vunpack.c.h.b16 %v6219
        %v9043 = vunpack.c.l.b16 %v6220
        %v9044 = vunpack.c.h.b16 %v6220
        %v9045 = vunpack.c.l.b16 %v6221
        %v9046 = vunpack.c.h.b16 %v6221
        %v9047 = vunpack.c.l.b16 %v6222
        %v9048 = vunpack.c.h.b16 %v6222
        %v9049 = vunpack.c.l.b16 %v6223
        %v9050 = vunpack.c.h.b16 %v6223
        %v9051 = vunpack.c.l.b16 %v6224
        %v9052 = vunpack.c.h.b16 %v6224
        %v9053 = vunpack.c.l.b16 %v6225
        %v9054 = vunpack.c.h.b16 %v6225
        %v9055 = vunpack.c.l.b16 %v6226
        %v9056 = vunpack.c.h.b16 %v6226
        %v9057 = vunpack.c.l.b16 %v6227
        %v9058 = vunpack.c.h.b16 %v6227
        %v9059 = vunpack.c.l.b16 %v6228
        %v9060 = vunpack.c.h.b16 %v6228
        %v9061 = vunpack.c.l.b16 %v6229
        %v9062 = vunpack.c.h.b16 %v6229
        %v9063 = vunpack.c.l.b16 %v6230
        %v9064 = vunpack.c.h.b16 %v6230
        %v9065 = vunpack.c.l.b16 %v6231
        %v9066 = vunpack.c.h.b16 %v6231
        %v9067 = vunpack.c.l.b16 %v6232
        %v9068 = vunpack.c.h.b16 %v6232
        %v9069 = vunpack.c.l.b16 %v6233
        %v9070 = vunpack.c.h.b16 %v6233
        %v9071 = vunpack.c.l.b16 %v6234
        %v9072 = vunpack.c.h.b16 %v6234
        %v9073 = vunpack.c.l.b16 %v6235
        %v9074 = vunpack.c.h.b16 %v6235
        %v9075 = vunpack.c.l.b16 %v6236
        %v9076 = vunpack.c.h.b16 %v6236
        %v9077 = vunpack.c.l.b16 %v6237
        %v9078 = vunpack.c.h.b16 %v6237
        %v9079 = vunpack.c.l.b16 %v6238
        %v9080 = vunpack.c.h.b16 %v6238
        %v9081 = vunpack.c.l.b16 %v6239
        %v9082 = vunpack.c.h.b16 %v6239
        %v9083 = vunpack.c.l.b16 %v6240
        %v9084 = vunpack.c.h.b16 %v6240
        %v9085 = vunpack.c.l.b16 %v6241
        %v9086 = vunpack.c.h.b16 %v6241
        %v9087 = vunpack.c.l.b16 %v6242
        %v9088 = vunpack.c.h.b16 %v6242
        %v9089 = vunpack.c.l.b16 %v6243
        %v9090 = vunpack.c.h.b16 %v6243
        %v9091 = vunpack.c.l.b16 %v6244
        %v9092 = vunpack.c.h.b16 %v6244
        %v9093 = vunpack.c.l.b16 %v6245
        %v9094 = vunpack.c.h.b16 %v6245
        %v9095 = vunpack.c.l.b16 %v6246
        %v9096 = vunpack.c.h.b16 %v6246
        %v9097 = vunpack.c.l.b16 %v6247
        %v9098 = vunpack.c.h.b16 %v6247
        %v9099 = vunpack.c.l.b16 %v6248
        %v9100 = vunpack.c.h.b16 %v6248
        %v9101 = vunpack.c.l.b16 %v6249
        %v9102 = vunpack.c.h.b16 %v6249
        %v9103 = vunpack.c.l.b16 %v6250
        %v9104 = vunpack.c.h.b16 %v6250
        %v9105 = vunpack.c.l.b16 %v6251
        %v9106 = vunpack.c.h.b16 %v6251
        %v9107 = vunpack.c.l.b16 %v6252
        %v9108 = vunpack.c.h.b16 %v6252
        %v9109 = vunpack.c.l.b16 %v6253
        %v9110 = vunpack.c.h.b16 %v6253
        %v9111 = vunpack.c.l.b16 %v6254
        %v9112 = vunpack.c.h.b16 %v6254
        %v9113 = vunpack.c.l.b16 %v6255
        %v9114 = vunpack.c.h.b16 %v6255
        %v9115 = vunpack.c.l.b16 %v6256
        %v9116 = vunpack.c.h.b16 %v6256
        %v9117 = vunpack.c.l.b16 %v6257
        %v9118 = vunpack.c.h.b16 %v6257
        %v9119 = vunpack.c.l.b16 %v6258
        %v9120 = vunpack.c.h.b16 %v6258
        %v9121 = vunpack.c.l.b16 %v6259
        %v9122 = vunpack.c.h.b16 %v6259
        %v9123 = vunpack.c.l.b16 %v6260
        %v9124 = vunpack.c.h.b16 %v6260
        %v9125 = vunpack.c.l.b16 %v6261
        %v9126 = vunpack.c.h.b16 %v6261
        %v9127 = vunpack.c.l.b16 %v6262
        %v9128 = vunpack.c.h.b16 %v6262
        %v9129 = vunpack.c.l.b16 %v6263
        %v9130 = vunpack.c.h.b16 %v6263
        %v9131 = vunpack.c.l.b16 %v6264
        %v9132 = vunpack.c.h.b16 %v6264
        %v9133 = vunpack.c.l.b16 %v6265
        %v9134 = vunpack.c.h.b16 %v6265
        %v9135 = vunpack.c.l.b16 %v6266
        %v9136 = vunpack.c.h.b16 %v6266
        %v9137 = vunpack.c.l.b16 %v6267
        %v9138 = vunpack.c.h.b16 %v6267
        %v9139 = vunpack.c.l.b16 %v6268
        %v9140 = vunpack.c.h.b16 %v6268
        %v9141 = vunpack.c.l.b16 %v6269
        %v9142 = vunpack.c.h.b16 %v6269
        %v9143 = vunpack.c.l.b16 %v6270
        %v9144 = vunpack.c.h.b16 %v6270
        %v9145 = vunpack.c.l.b16 %v6271
        %v9146 = vunpack.c.h.b16 %v6271
        %v9147 = vunpack.c.l.b16 %v6272
        %v9148 = vunpack.c.h.b16 %v6272
        %v9149 = vunpack.c.l.b16 %v6273
        %v9150 = vunpack.c.h.b16 %v6273
        %v9151 = vunpack.c.l.b16 %v6274
        %v9152 = vunpack.c.h.b16 %v6274
        %v9153 = vunpack.c.l.b16 %v6275
        %v9154 = vunpack.c.h.b16 %v6275
        %v9155 = vunpack.c.l.b16 %v6276
        %v9156 = vunpack.c.h.b16 %v6276
        %v9157 = vunpack.c.l.b16 %v6277
        %v9158 = vunpack.c.h.b16 %v6277
        %v9159 = vunpack.c.l.b16 %v6278
        %v9160 = vunpack.c.h.b16 %v6278
        %v9161 = vunpack.c.l.b16 %v6279
        %v9162 = vunpack.c.h.b16 %v6279
        %v9163 = vunpack.c.l.b16 %v6280
        %v9164 = vunpack.c.h.b16 %v6280
        %v9165 = vunpack.c.l.b16 %v6281
        %v9166 = vunpack.c.h.b16 %v6281
        %v9167 = vunpack.c.l.b16 %v6282
        %v9168 = vunpack.c.h.b16 %v6282
        %v9169 = vunpack.c.l.b16 %v6283
        %v9170 = vunpack.c.h.b16 %v6283
        %v9171 = vunpack.c.l.b16 %v6284
        %v9172 = vunpack.c.h.b16 %v6284
        %v9173 = vunpack.c.l.b16 %v6285
        %v9174 = vunpack.c.h.b16 %v6285
        %v9175 = vunpack.c.l.b16 %v6286
        %v9176 = vunpack.c.h.b16 %v6286
        %v9177 = vunpack.c.l.b16 %v6287
        %v9178 = vunpack.c.h.b16 %v6287
        %v9179 = vunpack.c.l.b16 %v6288
        %v9180 = vunpack.c.h.b16 %v6288
        %v9181 = vunpack.c.l.b16 %v6289
        %v9182 = vunpack.c.h.b16 %v6289
        %v9183 = vunpack.c.l.b16 %v6290
        %v9184 = vunpack.c.h.b16 %v6290
        %v9185 = vunpack.c.l.b16 %v6291
        %v9186 = vunpack.c.h.b16 %v6291
        %v9187 = vunpack.c.l.b16 %v6292
        %v9188 = vunpack.c.h.b16 %v6292
        %v9189 = vunpack.c.l.b16 %v6293
        %v9190 = vunpack.c.h.b16 %v6293
        %v9191 = vunpack.c.l.b16 %v6294
        %v9192 = vunpack.c.h.b16 %v6294
        %v9193 = vunpack.c.l.b16 %v6295
        %v9194 = vunpack.c.h.b16 %v6295
        %v9195 = vunpack.c.l.b16 %v6296
        %v9196 = vunpack.c.h.b16 %v6296
        %v9197 = vunpack.c.l.b16 %v6297
        %v9198 = vunpack.c.h.b16 %v6297
        %v9199 = vunpack.c.l.b16 %v6298
        %v9200 = vunpack.c.h.b16 %v6298
        %v9201 = vunpack.c.l.b16 %v6299
        %v9202 = vunpack.c.h.b16 %v6299
        %v9203 = vunpack.c.l.b16 %v6300
        %v9204 = vunpack.c.h.b16 %v6300
        %v9205 = vunpack.c.l.b16 %v6301
        %v9206 = vunpack.c.h.b16 %v6301
        %v9207 = vunpack.c.l.b16 %v6302
        %v9208 = vunpack.c.h.b16 %v6302
        %v9209 = vunpack.c.l.b16 %v6303
        %v9210 = vunpack.c.h.b16 %v6303
        %v9211 = vunpack.c.l.b16 %v6304
        %v9212 = vunpack.c.h.b16 %v6304
        %v9213 = vunpack.c.l.b16 %v6305
        %v9214 = vunpack.c.h.b16 %v6305
        %v9215 = vunpack.c.l.b16 %v6306
        %v9216 = vunpack.c.h.b16 %v6306
        %v9217 = vunpack.c.l.b16 %v6307
        %v9218 = vunpack.c.h.b16 %v6307
        %v9219 = vunpack.c.l.b16 %v6308
        %v9220 = vunpack.c.h.b16 %v6308
        %v9221 = vunpack.c.l.b16 %v6309
        %v9222 = vunpack.c.h.b16 %v6309
        %v9223 = vunpack.c.l.b16 %v6310
        %v9224 = vunpack.c.h.b16 %v6310
        %v9225 = vunpack.c.l.b16 %v6311
        %v9226 = vunpack.c.h.b16 %v6311
        %v9227 = vunpack.c.l.b16 %v6312
        %v9228 = vunpack.c.h.b16 %v6312
        %v9229 = vunpack.c.l.b16 %v6313
        %v9230 = vunpack.c.h.b16 %v6313
        %v9231 = vunpack.c.l.b16 %v6314
        %v9232 = vunpack.c.h.b16 %v6314
        %v9233 = vunpack.c.l.b16 %v6315
        %v9234 = vunpack.c.h.b16 %v6315
        %v9235 = vunpack.c.l.b16 %v6316
        %v9236 = vunpack.c.h.b16 %v6316
        %v9237 = vunpack.c.l.b16 %v6317
        %v9238 = vunpack.c.h.b16 %v6317
        %v9239 = vunpack.c.l.b16 %v6318
        %v9240 = vunpack.c.h.b16 %v6318
        %v9241 = vunpack.c.l.b16 %v6319
        %v9242 = vunpack.c.h.b16 %v6319
        %v9243 = vunpack.c.l.b16 %v6320
        %v9244 = vunpack.c.h.b16 %v6320
        %v9245 = vunpack.c.l.b16 %v6321
        %v9246 = vunpack.c.h.b16 %v6321
        %v9247 = vunpack.c.l.b16 %v6322
        %v9248 = vunpack.c.h.b16 %v6322
        %v9249 = vunpack.c.l.b16 %v6323
        %v9250 = vunpack.c.h.b16 %v6323
        %v9251 = vunpack.c.l.b16 %v6324
        %v9252 = vunpack.c.h.b16 %v6324
        %v9253 = vunpack.c.l.b16 %v6325
        %v9254 = vunpack.c.h.b16 %v6325
        %v9255 = vunpack.c.l.b16 %v6326
        %v9256 = vunpack.c.h.b16 %v6326
        %v9257 = vunpack.c.l.b16 %v6327
        %v9258 = vunpack.c.h.b16 %v6327
        %v9259 = vunpack.c.l.b16 %v6328
        %v9260 = vunpack.c.h.b16 %v6328
        %v9261 = vunpack.c.l.b16 %v6329
        %v9262 = vunpack.c.h.b16 %v6329
        %v9263 = vunpack.c.l.b16 %v6330
        %v9264 = vunpack.c.h.b16 %v6330
        %v9265 = vunpack.c.l.b16 %v6331
        %v9266 = vunpack.c.h.b16 %v6331
        %v9267 = vunpack.c.l.b16 %v6332
        %v9268 = vunpack.c.h.b16 %v6332
        %v9269 = vunpack.c.l.b16 %v6333
        %v9270 = vunpack.c.h.b16 %v6333
        %v9271 = vunpack.c.l.b16 %v6334
        %v9272 = vunpack.c.h.b16 %v6334
        %v9273 = vunpack.c.l.b16 %v6335
        %v9274 = vunpack.c.h.b16 %v6335
        %v9275 = vunpack.c.l.b16 %v6336
        %v9276 = vunpack.c.h.b16 %v6336
        %v9277 = vunpack.c.l.b16 %v6337
        %v9278 = vunpack.c.h.b16 %v6337
        %v9279 = vunpack.c.l.b16 %v6338
        %v9280 = vunpack.c.h.b16 %v6338
        %v9281 = vunpack.c.l.b16 %v6339
        %v9282 = vunpack.c.h.b16 %v6339
        %v9283 = vunpack.c.l.b16 %v6340
        %v9284 = vunpack.c.h.b16 %v6340
        %v9285 = vunpack.c.l.b16 %v6341
        %v9286 = vunpack.c.h.b16 %v6341
        %v9287 = vunpack.c.l.b16 %v6342
        %v9288 = vunpack.c.h.b16 %v6342
        %v9289 = vunpack.c.l.b16 %v6343
        %v9290 = vunpack.c.h.b16 %v6343
        %v9291 = vunpack.c.l.b16 %v6344
        %v9292 = vunpack.c.h.b16 %v6344
        %v9293 = vunpack.c.l.b16 %v6345
        %v9294 = vunpack.c.h.b16 %v6345
        %v9295 = vunpack.c.l.b16 %v6346
        %v9296 = vunpack.c.h.b16 %v6346
        %v9297 = vunpack.c.l.b16 %v6347
        %v9298 = vunpack.c.h.b16 %v6347
        %v9299 = vunpack.c.l.b16 %v6348
        %v9300 = vunpack.c.h.b16 %v6348
        %v9301 = vunpack.c.l.b16 %v6349
        %v9302 = vunpack.c.h.b16 %v6349
        %v9303 = vunpack.c.l.b16 %v6350
        %v9304 = vunpack.c.h.b16 %v6350
        %v9305 = vunpack.c.l.b16 %v6351
        %v9306 = vunpack.c.h.b16 %v6351
        %v9307 = vunpack.c.l.b16 %v6352
        %v9308 = vunpack.c.h.b16 %v6352
        %v9309 = vunpack.c.l.b16 %v6353
        %v9310 = vunpack.c.h.b16 %v6353
        %v9311 = vunpack.c.l.b16 %v6354
        %v9312 = vunpack.c.h.b16 %v6354
        %v9313 = vunpack.c.l.b16 %v6355
        %v9314 = vunpack.c.h.b16 %v6355
        %v9315 = vunpack.c.l.b16 %v6356
        %v9316 = vunpack.c.h.b16 %v6356
        %v9317 = vunpack.c.l.b16 %v6357
        %v9318 = vunpack.c.h.b16 %v6357
        %v9319 = vunpack.c.l.b16 %v6358
        %v9320 = vunpack.c.h.b16 %v6358
        %v9321 = vunpack.c.l.b16 %v6359
        %v9322 = vunpack.c.h.b16 %v6359
        %v9323 = vunpack.c.l.b16 %v6360
        %v9324 = vunpack.c.h.b16 %v6360
        %v9325 = vunpack.c.l.b16 %v6361
        %v9326 = vunpack.c.h.b16 %v6361
        %v9327 = vunpack.c.l.b16 %v6362
        %v9328 = vunpack.c.h.b16 %v6362
        %v9329 = vunpack.c.l.b16 %v6363
        %v9330 = vunpack.c.h.b16 %v6363
        %v9331 = vunpack.c.l.b16 %v6364
        %v9332 = vunpack.c.h.b16 %v6364
        %v9333 = vunpack.c.l.b16 %v6365
        %v9334 = vunpack.c.h.b16 %v6365
        %v9335 = vunpack.c.l.b16 %v6366
        %v9336 = vunpack.c.h.b16 %v6366
        %v9337 = vunpack.c.l.b16 %v6367
        %v9338 = vunpack.c.h.b16 %v6367
        %v9339 = vunpack.c.l.b16 %v6368
        %v9340 = vunpack.c.h.b16 %v6368
        %v9341 = vunpack.c.l.b16 %v6369
        %v9342 = vunpack.c.h.b16 %v6369
        %v9343 = vunpack.c.l.b16 %v6370
        %v9344 = vunpack.c.h.b16 %v6370
        %v9345 = vunpack.c.l.b16 %v6371
        %v9346 = vunpack.c.h.b16 %v6371
        %v9347 = vunpack.c.l.b16 %v6372
        %v9348 = vunpack.c.h.b16 %v6372
        %v9349 = vunpack.c.l.b16 %v6373
        %v9350 = vunpack.c.h.b16 %v6373
        %v9351 = vunpack.c.l.b16 %v6374
        %v9352 = vunpack.c.h.b16 %v6374
        %v9353 = vunpack.c.l.b16 %v6375
        %v9354 = vunpack.c.h.b16 %v6375
        %v9355 = vunpack.c.l.b16 %v6376
        %v9356 = vunpack.c.h.b16 %v6376
        %v9357 = vunpack.c.l.b16 %v6377
        %v9358 = vunpack.c.h.b16 %v6377
        %v9359 = vunpack.c.l.b16 %v6378
        %v9360 = vunpack.c.h.b16 %v6378
        %v9361 = vunpack.c.l.b16 %v6379
        %v9362 = vunpack.c.h.b16 %v6379
        %v9363 = vunpack.c.l.b16 %v6380
        %v9364 = vunpack.c.h.b16 %v6380
        %v9365 = vunpack.c.l.b16 %v6381
        %v9366 = vunpack.c.h.b16 %v6381
        %v9367 = vunpack.c.l.b16 %v6382
        %v9368 = vunpack.c.h.b16 %v6382
        %v9369 = vunpack.c.l.b16 %v6383
        %v9370 = vunpack.c.h.b16 %v6383
        %v9371 = vunpack.c.l.b16 %v6384
        %v9372 = vunpack.c.h.b16 %v6384
        %v9373 = vunpack.c.l.b16 %v6385
        %v9374 = vunpack.c.h.b16 %v6385
        %v9375 = vunpack.c.l.b16 %v6386
        %v9376 = vunpack.c.h.b16 %v6386
        %v9377 = vunpack.c.l.b16 %v6387
        %v9378 = vunpack.c.h.b16 %v6387
        %v9379 = vunpack.c.l.b16 %v6388
        %v9380 = vunpack.c.h.b16 %v6388
        %v9381 = vunpack.c.l.b16 %v6389
        %v9382 = vunpack.c.h.b16 %v6389
        %v9383 = vunpack.c.l.b16 %v6390
        %v9384 = vunpack.c.h.b16 %v6390
        %v9385 = vunpack.c.l.b16 %v6391
        %v9386 = vunpack.c.h.b16 %v6391
        %v9387 = vunpack.c.l.b16 %v6392
        %v9388 = vunpack.c.h.b16 %v6392
        %v9389 = vunpack.c.l.b16 %v6393
        %v9390 = vunpack.c.h.b16 %v6393
        %v9391 = vunpack.c.l.b16 %v6394
        %v9392 = vunpack.c.h.b16 %v6394
        %v9393 = vunpack.c.l.b16 %v6395
        %v9394 = vunpack.c.h.b16 %v6395
        %v9395 = vunpack.c.l.b16 %v6396
        %v9396 = vunpack.c.h.b16 %v6396
        %v9397 = vunpack.c.l.b16 %v6397
        %v9398 = vunpack.c.h.b16 %v6397
        %v9399 = vunpack.c.l.b16 %v6398
        %v9400 = vunpack.c.h.b16 %v6398
        %v9401 = vunpack.c.l.b16 %v6399
        %v9402 = vunpack.c.h.b16 %v6399
        %v9403 = vunpack.c.l.b16 %v6400
        %v9404 = vunpack.c.h.b16 %v6400
        %v9405 = vunpack.c.l.b16 %v6401
        %v9406 = vunpack.c.h.b16 %v6401
        %v9407 = vunpack.c.l.b16 %v6402
        %v9408 = vunpack.c.h.b16 %v6402
        %v9409 = vunpack.c.l.b16 %v6403
        %v9410 = vunpack.c.h.b16 %v6403
        %v9411 = vunpack.c.l.b16 %v6404
        %v9412 = vunpack.c.h.b16 %v6404
        %v9413 = vunpack.c.l.b16 %v6405
        %v9414 = vunpack.c.h.b16 %v6405
        %v9415 = vunpack.c.l.b16 %v6406
        %v9416 = vunpack.c.h.b16 %v6406
        %v9417 = vunpack.c.l.b16 %v6407
        %v9418 = vunpack.c.h.b16 %v6407
        %v9419 = vunpack.c.l.b16 %v6408
        %v9420 = vunpack.c.h.b16 %v6408
        %v9421 = vunpack.c.l.b16 %v6409
        %v9422 = vunpack.c.h.b16 %v6409
        %v9423 = vunpack.c.l.b16 %v6410
        %v9424 = vunpack.c.h.b16 %v6410
        %v9425 = vunpack.c.l.b16 %v6411
        %v9426 = vunpack.c.h.b16 %v6411
        %v9427 = vunpack.c.l.b16 %v6412
        %v9428 = vunpack.c.h.b16 %v6412
        %v9429 = vunpack.c.l.b16 %v6413
        %v9430 = vunpack.c.h.b16 %v6413
        %v9431 = vunpack.c.l.b16 %v6414
        %v9432 = vunpack.c.h.b16 %v6414
        %v9433 = vunpack.c.l.b16 %v6415
        %v9434 = vunpack.c.h.b16 %v6415
        %v9435 = vunpack.c.l.b16 %v6416
        %v9436 = vunpack.c.h.b16 %v6416
        %v9437 = vunpack.c.l.b16 %v6417
        %v9438 = vunpack.c.h.b16 %v6417
        %v9439 = vunpack.c.l.b16 %v6418
        %v9440 = vunpack.c.h.b16 %v6418
        %v9441 = vunpack.c.l.b16 %v6419
        %v9442 = vunpack.c.h.b16 %v6419
        %v9443 = vunpack.c.l.b16 %v6420
        %v9444 = vunpack.c.h.b16 %v6420
        %v9445 = vunpack.c.l.b16 %v6421
        %v9446 = vunpack.c.h.b16 %v6421
        %v9447 = vunpack.c.l.b16 %v6422
        %v9448 = vunpack.c.h.b16 %v6422
        %v9449 = vunpack.c.l.b16 %v6423
        %v9450 = vunpack.c.h.b16 %v6423
        %v9451 = vunpack.c.l.b16 %v6424
        %v9452 = vunpack.c.h.b16 %v6424
        %v9453 = vunpack.c.l.b16 %v6425
        %v9454 = vunpack.c.h.b16 %v6425
        %v9455 = vunpack.c.l.b16 %v6426
        %v9456 = vunpack.c.h.b16 %v6426
        %v9457 = vunpack.c.l.b16 %v6427
        %v9458 = vunpack.c.h.b16 %v6427
        %v9459 = vunpack.c.l.b16 %v6428
        %v9460 = vunpack.c.h.b16 %v6428
        %v9461 = vunpack.c.l.b16 %v6429
        %v9462 = vunpack.c.h.b16 %v6429
        %v9463 = vunpack.c.l.b16 %v6430
        %v9464 = vunpack.c.h.b16 %v6430
        %v9465 = vunpack.c.l.b16 %v6431
        %v9466 = vunpack.c.h.b16 %v6431
        %v9467 = vunpack.c.l.b16 %v6432
        %v9468 = vunpack.c.h.b16 %v6432
        %v9469 = vunpack.c.l.b16 %v6433
        %v9470 = vunpack.c.h.b16 %v6433
        %v9471 = vunpack.c.l.b16 %v6434
        %v9472 = vunpack.c.h.b16 %v6434
        %v9473 = vunpack.c.l.b16 %v6435
        %v9474 = vunpack.c.h.b16 %v6435
        %v9475 = vunpack.c.l.b16 %v6436
        %v9476 = vunpack.c.h.b16 %v6436
        %v9477 = vunpack.c.l.b16 %v6437
        %v9478 = vunpack.c.h.b16 %v6437
        %v9479 = vunpack.c.l.b16 %v6438
        %v9480 = vunpack.c.h.b16 %v6438
        %v9481 = vunpack.c.l.b16 %v6439
        %v9482 = vunpack.c.h.b16 %v6439
        %v9483 = vunpack.c.l.b16 %v6440
        %v9484 = vunpack.c.h.b16 %v6440
        %v9485 = vunpack.c.l.b16 %v6441
        %v9486 = vunpack.c.h.b16 %v6441
        %v9487 = vunpack.c.l.b16 %v6442
        %v9488 = vunpack.c.h.b16 %v6442
        %v9489 = vunpack.c.l.b16 %v6443
        %v9490 = vunpack.c.h.b16 %v6443
        %v9491 = vunpack.c.l.b16 %v6444
        %v9492 = vunpack.c.h.b16 %v6444
        %v9493 = vunpack.c.l.b16 %v6445
        %v9494 = vunpack.c.h.b16 %v6445
        %v9495 = vunpack.c.l.b16 %v6446
        %v9496 = vunpack.c.h.b16 %v6446
        %v9497 = vunpack.c.l.b16 %v6447
        %v9498 = vunpack.c.h.b16 %v6447
        %v9499 = vunpack.c.l.b16 %v6448
        %v9500 = vunpack.c.h.b16 %v6448
        %v9501 = vunpack.c.l.b16 %v6449
        %v9502 = vunpack.c.h.b16 %v6449
        %v9503 = vunpack.c.l.b16 %v6450
        %v9504 = vunpack.c.h.b16 %v6450
        %v9505 = vunpack.c.l.b16 %v6451
        %v9506 = vunpack.c.h.b16 %v6451
        %v9507 = vunpack.c.l.b16 %v6452
        %v9508 = vunpack.c.h.b16 %v6452
        %v9509 = vunpack.c.l.b16 %v6453
        %v9510 = vunpack.c.h.b16 %v6453
        %v9511 = vunpack.c.l.b16 %v6454
        %v9512 = vunpack.c.h.b16 %v6454
        %v9513 = vunpack.c.l.b16 %v6455
        %v9514 = vunpack.c.h.b16 %v6455
        %v9515 = vunpack.c.l.b16 %v6456
        %v9516 = vunpack.c.h.b16 %v6456
        %v9517 = vunpack.c.l.b16 %v6457
        %v9518 = vunpack.c.h.b16 %v6457
        %v9519 = vunpack.c.l.b16 %v6458
        %v9520 = vunpack.c.h.b16 %v6458
        %v9521 = vunpack.c.l.b16 %v6459
        %v9522 = vunpack.c.h.b16 %v6459
        %v9523 = vunpack.c.l.b16 %v6460
        %v9524 = vunpack.c.h.b16 %v6460
        %v9525 = vunpack.c.l.b16 %v6461
        %v9526 = vunpack.c.h.b16 %v6461
        %v9527 = vunpack.c.l.b16 %v6462
        %v9528 = vunpack.c.h.b16 %v6462
        %v9529 = vunpack.c.l.b16 %v6463
        %v9530 = vunpack.c.h.b16 %v6463
        %v9531 = vunpack.c.l.b16 %v6464
        %v9532 = vunpack.c.h.b16 %v6464
        %v9533 = vunpack.c.l.b16 %v6465
        %v9534 = vunpack.c.h.b16 %v6465
        %v9535 = vunpack.c.l.b16 %v6466
        %v9536 = vunpack.c.h.b16 %v6466
        %v9537 = vunpack.c.l.b16 %v6467
        %v9538 = vunpack.c.h.b16 %v6467
        %v9539 = vunpack.c.l.b16 %v6468
        %v9540 = vunpack.c.h.b16 %v6468
        %v9541 = vunpack.c.l.b16 %v6469
        %v9542 = vunpack.c.h.b16 %v6469
        %v9543 = vunpack.c.l.b16 %v6470
        %v9544 = vunpack.c.h.b16 %v6470
        %v9545 = vunpack.c.l.b16 %v6471
        %v9546 = vunpack.c.h.b16 %v6471
        %v9547 = vunpack.c.l.b16 %v6472
        %v9548 = vunpack.c.h.b16 %v6472
        %v9549 = vunpack.c.l.b16 %v6473
        %v9550 = vunpack.c.h.b16 %v6473
        %v9551 = vunpack.c.l.b16 %v6474
        %v9552 = vunpack.c.h.b16 %v6474
        %v9553 = vunpack.c.l.b16 %v6475
        %v9554 = vunpack.c.h.b16 %v6475
        %v9555 = vunpack.c.l.b16 %v6476
        %v9556 = vunpack.c.h.b16 %v6476
        %v9557 = vunpack.c.l.b16 %v6477
        %v9558 = vunpack.c.h.b16 %v6477
        %v9559 = vunpack.c.l.b16 %v6478
        %v9560 = vunpack.c.h.b16 %v6478
        %v9561 = vunpack.c.l.b16 %v6479
        %v9562 = vunpack.c.h.b16 %v6479
        %v9563 = vunpack.c.l.b16 %v6480
        %v9564 = vunpack.c.h.b16 %v6480
        %v9565 = vunpack.c.l.b16 %v6481
        %v9566 = vunpack.c.h.b16 %v6481
        %v9567 = vunpack.c.l.b16 %v6482
        %v9568 = vunpack.c.h.b16 %v6482
        %v9569 = vunpack.c.l.b16 %v6483
        %v9570 = vunpack.c.h.b16 %v6483
        %v9571 = vunpack.c.l.b16 %v6484
        %v9572 = vunpack.c.h.b16 %v6484
        %v9573 = vunpack.c.l.b16 %v6485
        %v9574 = vunpack.c.h.b16 %v6485
        %v9575 = vunpack.c.l.b16 %v6486
        %v9576 = vunpack.c.h.b16 %v6486
        %v9577 = vunpack.c.l.b16 %v6487
        %v9578 = vunpack.c.h.b16 %v6487
        %v9579 = vunpack.c.l.b16 %v6488
        %v9580 = vunpack.c.h.b16 %v6488
        %v9581 = vunpack.c.l.b16 %v6489
        %v9582 = vunpack.c.h.b16 %v6489
        %v9583 = vunpack.c.l.b16 %v6490
        %v9584 = vunpack.c.h.b16 %v6490
        %v9585 = vunpack.c.l.b16 %v6491
        %v9586 = vunpack.c.h.b16 %v6491
        %v9587 = vunpack.c.l.b16 %v6492
        %v9588 = vunpack.c.h.b16 %v6492
        %v9589 = vunpack.c.l.b16 %v6493
        %v9590 = vunpack.c.h.b16 %v6493
        %v9591 = vunpack.c.l.b16 %v6494
        %v9592 = vunpack.c.h.b16 %v6494
        %v9593 = vunpack.c.l.b16 %v6495
        %v9594 = vunpack.c.h.b16 %v6495
        %v9595 = vunpack.c.l.b16 %v6496
        %v9596 = vunpack.c.h.b16 %v6496
        %v9597 = vunpack.c.l.b16 %v6497
        %v9598 = vunpack.c.h.b16 %v6497
        %v9599 = vunpack.c.l.b16 %v6498
        %v9600 = vunpack.c.h.b16 %v6498
        %v9601 = vunpack.c.l.b16 %v6499
        %v9602 = vunpack.c.h.b16 %v6499
        %v9603 = vunpack.c.l.b16 %v6500
        %v9604 = vunpack.c.h.b16 %v6500
        %v9605 = vunpack.c.l.b16 %v6501
        %v9606 = vunpack.c.h.b16 %v6501
        %v9607 = vunpack.c.l.b16 %v6502
        %v9608 = vunpack.c.h.b16 %v6502
        %v9609 = vunpack.c.l.b16 %v6503
        %v9610 = vunpack.c.h.b16 %v6503
        %v9611 = vunpack.c.l.b16 %v6504
        %v9612 = vunpack.c.h.b16 %v6504
        %v9613 = vunpack.c.l.b16 %v6505
        %v9614 = vunpack.c.h.b16 %v6505
        %v9615 = vunpack.c.l.b16 %v6506
        %v9616 = vunpack.c.h.b16 %v6506
        %v9617 = vunpack.c.l.b16 %v6507
        %v9618 = vunpack.c.h.b16 %v6507
        %v9619 = vunpack.c.l.b16 %v6508
        %v9620 = vunpack.c.h.b16 %v6508
        %v9621 = vunpack.c.l.b16 %v6509
        %v9622 = vunpack.c.h.b16 %v6509
        %v9623 = vunpack.c.l.b16 %v6510
        %v9624 = vunpack.c.h.b16 %v6510
        %v9625 = vunpack.c.l.b16 %v6511
        %v9626 = vunpack.c.h.b16 %v6511
        %v9627 = vunpack.c.l.b16 %v6512
        %v9628 = vunpack.c.h.b16 %v6512
        %v9629 = vunpack.c.l.b16 %v6513
        %v9630 = vunpack.c.h.b16 %v6513
        %v9631 = vunpack.c.l.b16 %v6514
        %v9632 = vunpack.c.h.b16 %v6514
        %v9633 = vunpack.c.l.b16 %v6515
        %v9634 = vunpack.c.h.b16 %v6515
        %v9635 = vunpack.c.l.b16 %v6516
        %v9636 = vunpack.c.h.b16 %v6516
        %v9637 = vunpack.c.l.b16 %v6517
        %v9638 = vunpack.c.h.b16 %v6517
        %v9639 = vunpack.c.l.b16 %v6518
        %v9640 = vunpack.c.h.b16 %v6518
        %v9641 = vunpack.c.l.b16 %v6519
        %v9642 = vunpack.c.h.b16 %v6519
        %v9643 = vunpack.c.l.b16 %v6520
        %v9644 = vunpack.c.h.b16 %v6520
        %v9645 = vunpack.c.l.b16 %v6521
        %v9646 = vunpack.c.h.b16 %v6521
        %v9647 = vunpack.c.l.b16 %v6522
        %v9648 = vunpack.c.h.b16 %v6522
        %v9649 = vunpack.c.l.b16 %v6523
        %v9650 = vunpack.c.h.b16 %v6523
        %v9651 = vunpack.c.l.b16 %v6524
        %v9652 = vunpack.c.h.b16 %v6524
        %v9653 = vpack.c.b16 %v7613, %v7605
        %v9654 = vpack.c.b16 %v7614, %v7606
        %v9655 = vpack.c.b16 %v7615, %v7607
        %v9656 = vpack.c.b16 %v7616, %v7608
        %v9657 = vpack.c.b16 %v7617, %v7609
        %v9658 = vpack.c.b16 %v7618, %v7610
        %v9659 = vpack.c.b16 %v7619, %v7611
        %v9660 = vpack.c.b16 %v7620, %v7612
        %v9661 = vpack.c.b16 %v7629, %v7621
        %v9662 = vpack.c.b16 %v7630, %v7622
        %v9663 = vpack.c.b16 %v7631, %v7623
        %v9664 = vpack.c.b16 %v7632, %v7624
        %v9665 = vpack.c.b16 %v7633, %v7625
        %v9666 = vpack.c.b16 %v7634, %v7626
        %v9667 = vpack.c.b16 %v7635, %v7627
        %v9668 = vpack.c.b16 %v7636, %v7628
        %v9669 = vpack.c.b16 %v7645, %v7637
        %v9670 = vpack.c.b16 %v7646, %v7638
        %v9671 = vpack.c.b16 %v7647, %v7639
        %v9672 = vpack.c.b16 %v7648, %v7640
        %v9673 = vpack.c.b16 %v7649, %v7641
        %v9674 = vpack.c.b16 %v7650, %v7642
        %v9675 = vpack.c.b16 %v7651, %v7643
        %v9676 = vpack.c.b16 %v7652, %v7644
        %v9677 = vpack.c.b16 %v7661, %v7653
        %v9678 = vpack.c.b16 %v7662, %v7654
        %v9679 = vpack.c.b16 %v7663, %v7655
        %v9680 = vpack.c.b16 %v7664, %v7656
        %v9681 = vpack.c.b16 %v7665, %v7657
        %v9682 = vpack.c.b16 %v7666, %v7658
        %v9683 = vpack.c.b16 %v7667, %v7659
        %v9684 = vpack.c.b16 %v7668, %v7660
        %v9685 = vpack.c.b16 %v7677, %v7669
        %v9686 = vpack.c.b16 %v7678, %v7670
        %v9687 = vpack.c.b16 %v7679, %v7671
        %v9688 = vpack.c.b16 %v7680, %v7672
        %v9689 = vpack.c.b16 %v7681, %v7673
        %v9690 = vpack.c.b16 %v7682, %v7674
        %v9691 = vpack.c.b16 %v7683, %v7675
        %v9692 = vpack.c.b16 %v7684, %v7676
        %v9693 = vpack.c.b16 %v7693, %v7685
        %v9694 = vpack.c.b16 %v7694, %v7686
        %v9695 = vpack.c.b16 %v7695, %v7687
        %v9696 = vpack.c.b16 %v7696, %v7688
        %v9697 = vpack.c.b16 %v7697, %v7689
        %v9698 = vpack.c.b16 %v7698, %v7690
        %v9699 = vpack.c.b16 %v7699, %v7691
        %v9700 = vpack.c.b16 %v7700, %v7692
        %v9701 = vpack.c.b16 %v7709, %v7701
        %v9702 = vpack.c.b16 %v7710, %v7702
        %v9703 = vpack.c.b16 %v7711, %v7703
        %v9704 = vpack.c.b16 %v7712, %v7704
        %v9705 = vpack.c.b16 %v7713, %v7705
        %v9706 = vpack.c.b16 %v7714, %v7706
        %v9707 = vpack.c.b16 %v7715, %v7707
        %v9708 = vpack.c.b16 %v7716, %v7708
        %v9709 = vpack.c.b16 %v7725, %v7717
        %v9710 = vpack.c.b16 %v7726, %v7718
        %v9711 = vpack.c.b16 %v7727, %v7719
        %v9712 = vpack.c.b16 %v7728, %v7720
        %v9713 = vpack.c.b16 %v7729, %v7721
        %v9714 = vpack.c.b16 %v7730, %v7722
        %v9715 = vpack.c.b16 %v7731, %v7723
        %v9716 = vpack.c.b16 %v7732, %v7724
        %v9717 = vpack.c.b16 %v7741, %v7733
        %v9718 = vpack.c.b16 %v7742, %v7734
        %v9719 = vpack.c.b16 %v7743, %v7735
        %v9720 = vpack.c.b16 %v7744, %v7736
        %v9721 = vpack.c.b16 %v7745, %v7737
        %v9722 = vpack.c.b16 %v7746, %v7738
        %v9723 = vpack.c.b16 %v7747, %v7739
        %v9724 = vpack.c.b16 %v7748, %v7740
        %v9725 = vpack.c.b16 %v7757, %v7749
        %v9726 = vpack.c.b16 %v7758, %v7750
        %v9727 = vpack.c.b16 %v7759, %v7751
        %v9728 = vpack.c.b16 %v7760, %v7752
        %v9729 = vpack.c.b16 %v7761, %v7753
        %v9730 = vpack.c.b16 %v7762, %v7754
        %v9731 = vpack.c.b16 %v7763, %v7755
        %v9732 = vpack.c.b16 %v7764, %v7756
        %v9733 = vpack.c.b16 %v7773, %v7765
        %v9734 = vpack.c.b16 %v7774, %v7766
        %v9735 = vpack.c.b16 %v7775, %v7767
        %v9736 = vpack.c.b16 %v7776, %v7768
        %v9737 = vpack.c.b16 %v7777, %v7769
        %v9738 = vpack.c.b16 %v7778, %v7770
        %v9739 = vpack.c.b16 %v7779, %v7771
        %v9740 = vpack.c.b16 %v7780, %v7772
        %v9741 = vpack.c.b16 %v7789, %v7781
        %v9742 = vpack.c.b16 %v7790, %v7782
        %v9743 = vpack.c.b16 %v7791, %v7783
        %v9744 = vpack.c.b16 %v7792, %v7784
        %v9745 = vpack.c.b16 %v7793, %v7785
        %v9746 = vpack.c.b16 %v7794, %v7786
        %v9747 = vpack.c.b16 %v7795, %v7787
        %v9748 = vpack.c.b16 %v7796, %v7788
        %v9749 = vpack.c.b16 %v7805, %v7797
        %v9750 = vpack.c.b16 %v7806, %v7798
        %v9751 = vpack.c.b16 %v7807, %v7799
        %v9752 = vpack.c.b16 %v7808, %v7800
        %v9753 = vpack.c.b16 %v7809, %v7801
        %v9754 = vpack.c.b16 %v7810, %v7802
        %v9755 = vpack.c.b16 %v7811, %v7803
        %v9756 = vpack.c.b16 %v7812, %v7804
        %v9757 = vpack.c.b16 %v7821, %v7813
        %v9758 = vpack.c.b16 %v7822, %v7814
        %v9759 = vpack.c.b16 %v7823, %v7815
        %v9760 = vpack.c.b16 %v7824, %v7816
        %v9761 = vpack.c.b16 %v7825, %v7817
        %v9762 = vpack.c.b16 %v7826, %v7818
        %v9763 = vpack.c.b16 %v7827, %v7819
        %v9764 = vpack.c.b16 %v7828, %v7820
        %v9765 = vpack.c.b16 %v7837, %v7829
        %v9766 = vpack.c.b16 %v7838, %v7830
        %v9767 = vpack.c.b16 %v7839, %v7831
        %v9768 = vpack.c.b16 %v7840, %v7832
        %v9769 = vpack.c.b16 %v7841, %v7833
        %v9770 = vpack.c.b16 %v7842, %v7834
        %v9771 = vpack.c.b16 %v7843, %v7835
        %v9772 = vpack.c.b16 %v7844, %v7836
        %v9773 = vpack.c.b16 %v7853, %v7845
        %v9774 = vpack.c.b16 %v7854, %v7846
        %v9775 = vpack.c.b16 %v7855, %v7847
        %v9776 = vpack.c.b16 %v7856, %v7848
        %v9777 = vpack.c.b16 %v7857, %v7849
        %v9778 = vpack.c.b16 %v7858, %v7850
        %v9779 = vpack.c.b16 %v7859, %v7851
        %v9780 = vpack.c.b16 %v7860, %v7852
        %v9781 = vpack.c.b16 %v7869, %v7861
        %v9782 = vpack.c.b16 %v7870, %v7862
        %v9783 = vpack.c.b16 %v7871, %v7863
        %v9784 = vpack.c.b16 %v7872, %v7864
        %v9785 = vpack.c.b16 %v7873, %v7865
        %v9786 = vpack.c.b16 %v7874, %v7866
        %v9787 = vpack.c.b16 %v7875, %v7867
        %v9788 = vpack.c.b16 %v7876, %v7868
        %v9789 = vpack.c.b16 %v7885, %v7877
        %v9790 = vpack.c.b16 %v7886, %v7878
        %v9791 = vpack.c.b16 %v7887, %v7879
        %v9792 = vpack.c.b16 %v7888, %v7880
        %v9793 = vpack.c.b16 %v7889, %v7881
        %v9794 = vpack.c.b16 %v7890, %v7882
        %v9795 = vpack.c.b16 %v7891, %v7883
        %v9796 = vpack.c.b16 %v7892, %v7884
        %v9797 = vpack.c.b16 %v7901, %v7893
        %v9798 = vpack.c.b16 %v7902, %v7894
        %v9799 = vpack.c.b16 %v7903, %v7895
        %v9800 = vpack.c.b16 %v7904, %v7896
        %v9801 = vpack.c.b16 %v7905, %v7897
        %v9802 = vpack.c.b16 %v7906, %v7898
        %v9803 = vpack.c.b16 %v7907, %v7899
        %v9804 = vpack.c.b16 %v7908, %v7900
        %v9805 = vpack.c.b16 %v7917, %v7909
        %v9806 = vpack.c.b16 %v7918, %v7910
        %v9807 = vpack.c.b16 %v7919, %v7911
        %v9808 = vpack.c.b16 %v7920, %v7912
        %v9809 = vpack.c.b16 %v7921, %v7913
        %v9810 = vpack.c.b16 %v7922, %v7914
        %v9811 = vpack.c.b16 %v7923, %v7915
        %v9812 = vpack.c.b16 %v7924, %v7916
        %v9813 = vpack.c.b16 %v7933, %v7925
        %v9814 = vpack.c.b16 %v7934, %v7926
        %v9815 = vpack.c.b16 %v7935, %v7927
        %v9816 = vpack.c.b16 %v7936, %v7928
        %v9817 = vpack.c.b16 %v7937, %v7929
        %v9818 = vpack.c.b16 %v7938, %v7930
        %v9819 = vpack.c.b16 %v7939, %v7931
        %v9820 = vpack.c.b16 %v7940, %v7932
        %v9821 = vpack.c.b16 %v7949, %v7941
        %v9822 = vpack.c.b16 %v7950, %v7942
        %v9823 = vpack.c.b16 %v7951, %v7943
        %v9824 = vpack.c.b16 %v7952, %v7944
        %v9825 = vpack.c.b16 %v7953, %v7945
        %v9826 = vpack.c.b16 %v7954, %v7946
        %v9827 = vpack.c.b16 %v7955, %v7947
        %v9828 = vpack.c.b16 %v7956, %v7948
        %v9829 = vpack.c.b16 %v7965, %v7957
        %v9830 = vpack.c.b16 %v7966, %v7958
        %v9831 = vpack.c.b16 %v7967, %v7959
        %v9832 = vpack.c.b16 %v7968, %v7960
        %v9833 = vpack.c.b16 %v7969, %v7961
        %v9834 = vpack.c.b16 %v7970, %v7962
        %v9835 = vpack.c.b16 %v7971, %v7963
        %v9836 = vpack.c.b16 %v7972, %v7964
        %v9837 = vpack.c.b16 %v7981, %v7973
        %v9838 = vpack.c.b16 %v7982, %v7974
        %v9839 = vpack.c.b16 %v7983, %v7975
        %v9840 = vpack.c.b16 %v7984, %v7976
        %v9841 = vpack.c.b16 %v7985, %v7977
        %v9842 = vpack.c.b16 %v7986, %v7978
        %v9843 = vpack.c.b16 %v7987, %v7979
        %v9844 = vpack.c.b16 %v7988, %v7980
        %v9845 = vpack.c.b16 %v7997, %v7989
        %v9846 = vpack.c.b16 %v7998, %v7990
        %v9847 = vpack.c.b16 %v7999, %v7991
        %v9848 = vpack.c.b16 %v8000, %v7992
        %v9849 = vpack.c.b16 %v8001, %v7993
        %v9850 = vpack.c.b16 %v8002, %v7994
        %v9851 = vpack.c.b16 %v8003, %v7995
        %v9852 = vpack.c.b16 %v8004, %v7996
        %v9853 = vpack.c.b16 %v8013, %v8005
        %v9854 = vpack.c.b16 %v8014, %v8006
        %v9855 = vpack.c.b16 %v8015, %v8007
        %v9856 = vpack.c.b16 %v8016, %v8008
        %v9857 = vpack.c.b16 %v8017, %v8009
        %v9858 = vpack.c.b16 %v8018, %v8010
        %v9859 = vpack.c.b16 %v8019, %v8011
        %v9860 = vpack.c.b16 %v8020, %v8012
        %v9861 = vpack.c.b16 %v8029, %v8021
        %v9862 = vpack.c.b16 %v8030, %v8022
        %v9863 = vpack.c.b16 %v8031, %v8023
        %v9864 = vpack.c.b16 %v8032, %v8024
        %v9865 = vpack.c.b16 %v8033, %v8025
        %v9866 = vpack.c.b16 %v8034, %v8026
        %v9867 = vpack.c.b16 %v8035, %v8027
        %v9868 = vpack.c.b16 %v8036, %v8028
        %v9869 = vpack.c.b16 %v8045, %v8037
        %v9870 = vpack.c.b16 %v8046, %v8038
        %v9871 = vpack.c.b16 %v8047, %v8039
        %v9872 = vpack.c.b16 %v8048, %v8040
        %v9873 = vpack.c.b16 %v8049, %v8041
        %v9874 = vpack.c.b16 %v8050, %v8042
        %v9875 = vpack.c.b16 %v8051, %v8043
        %v9876 = vpack.c.b16 %v8052, %v8044
        %v9877 = vpack.c.b16 %v8061, %v8053
        %v9878 = vpack.c.b16 %v8062, %v8054
        %v9879 = vpack.c.b16 %v8063, %v8055
        %v9880 = vpack.c.b16 %v8064, %v8056
        %v9881 = vpack.c.b16 %v8065, %v8057
        %v9882 = vpack.c.b16 %v8066, %v8058
        %v9883 = vpack.c.b16 %v8067, %v8059
        %v9884 = vpack.c.b16 %v8068, %v8060
        %v9885 = vpack.c.b16 %v8077, %v8069
        %v9886 = vpack.c.b16 %v8078, %v8070
        %v9887 = vpack.c.b16 %v8079, %v8071
        %v9888 = vpack.c.b16 %v8080, %v8072
        %v9889 = vpack.c.b16 %v8081, %v8073
        %v9890 = vpack.c.b16 %v8082, %v8074
        %v9891 = vpack.c.b16 %v8083, %v8075
        %v9892 = vpack.c.b16 %v8084, %v8076
        %v9893 = vpack.c.b16 %v8093, %v8085
        %v9894 = vpack.c.b16 %v8094, %v8086
        %v9895 = vpack.c.b16 %v8095, %v8087
        %v9896 = vpack.c.b16 %v8096, %v8088
        %v9897 = vpack.c.b16 %v8097, %v8089
        %v9898 = vpack.c.b16 %v8098, %v8090
        %v9899 = vpack.c.b16 %v8099, %v8091
        %v9900 = vpack.c.b16 %v8100, %v8092
        %v9901 = vpack.c.b16 %v8109, %v8101
        %v9902 = vpack.c.b16 %v8110, %v8102
        %v9903 = vpack.c.b16 %v8111, %v8103
        %v9904 = vpack.c.b16 %v8112, %v8104
        %v9905 = vpack.c.b16 %v8113, %v8105
        %v9906 = vpack.c.b16 %v8114, %v8106
        %v9907 = vpack.c.b16 %v8115, %v8107
        %v9908 = vpack.c.b16 %v8116, %v8108
        %v9909 = vpack.c.b16 %v8125, %v8117
        %v9910 = vpack.c.b16 %v8126, %v8118
        %v9911 = vpack.c.b16 %v8127, %v8119
        %v9912 = vpack.c.b16 %v8128, %v8120
        %v9913 = vpack.c.b16 %v8129, %v8121
        %v9914 = vpack.c.b16 %v8130, %v8122
        %v9915 = vpack.c.b16 %v8131, %v8123
        %v9916 = vpack.c.b16 %v8132, %v8124
        %v9917 = vpack.c.b16 %v8141, %v8133
        %v9918 = vpack.c.b16 %v8142, %v8134
        %v9919 = vpack.c.b16 %v8143, %v8135
        %v9920 = vpack.c.b16 %v8144, %v8136
        %v9921 = vpack.c.b16 %v8145, %v8137
        %v9922 = vpack.c.b16 %v8146, %v8138
        %v9923 = vpack.c.b16 %v8147, %v8139
        %v9924 = vpack.c.b16 %v8148, %v8140
        %v9925 = vpack.c.b16 %v8157, %v8149
        %v9926 = vpack.c.b16 %v8158, %v8150
        %v9927 = vpack.c.b16 %v8159, %v8151
        %v9928 = vpack.c.b16 %v8160, %v8152
        %v9929 = vpack.c.b16 %v8161, %v8153
        %v9930 = vpack.c.b16 %v8162, %v8154
        %v9931 = vpack.c.b16 %v8163, %v8155
        %v9932 = vpack.c.b16 %v8164, %v8156
        %v9933 = vpack.c.b16 %v8173, %v8165
        %v9934 = vpack.c.b16 %v8174, %v8166
        %v9935 = vpack.c.b16 %v8175, %v8167
        %v9936 = vpack.c.b16 %v8176, %v8168
        %v9937 = vpack.c.b16 %v8177, %v8169
        %v9938 = vpack.c.b16 %v8178, %v8170
        %v9939 = vpack.c.b16 %v8179, %v8171
        %v9940 = vpack.c.b16 %v8180, %v8172
        %v9941 = vpack.c.b16 %v8189, %v8181
        %v9942 = vpack.c.b16 %v8190, %v8182
        %v9943 = vpack.c.b16 %v8191, %v8183
        %v9944 = vpack.c.b16 %v8192, %v8184
        %v9945 = vpack.c.b16 %v8193, %v8185
        %v9946 = vpack.c.b16 %v8194, %v8186
        %v9947 = vpack.c.b16 %v8195, %v8187
        %v9948 = vpack.c.b16 %v8196, %v8188
        %v9949 = vpack.c.b16 %v8205, %v8197
        %v9950 = vpack.c.b16 %v8206, %v8198
        %v9951 = vpack.c.b16 %v8207, %v8199
        %v9952 = vpack.c.b16 %v8208, %v8200
        %v9953 = vpack.c.b16 %v8209, %v8201
        %v9954 = vpack.c.b16 %v8210, %v8202
        %v9955 = vpack.c.b16 %v8211, %v8203
        %v9956 = vpack.c.b16 %v8212, %v8204
        %v9957 = vpack.c.b16 %v8221, %v8213
        %v9958 = vpack.c.b16 %v8222, %v8214
        %v9959 = vpack.c.b16 %v8223, %v8215
        %v9960 = vpack.c.b16 %v8224, %v8216
        %v9961 = vpack.c.b16 %v8225, %v8217
        %v9962 = vpack.c.b16 %v8226, %v8218
        %v9963 = vpack.c.b16 %v8227, %v8219
        %v9964 = vpack.c.b16 %v8228, %v8220
        %v9965 = vpack.c.b16 %v8237, %v8229
        %v9966 = vpack.c.b16 %v8238, %v8230
        %v9967 = vpack.c.b16 %v8239, %v8231
        %v9968 = vpack.c.b16 %v8240, %v8232
        %v9969 = vpack.c.b16 %v8241, %v8233
        %v9970 = vpack.c.b16 %v8242, %v8234
        %v9971 = vpack.c.b16 %v8243, %v8235
        %v9972 = vpack.c.b16 %v8244, %v8236
        %v9973 = vpack.c.b16 %v8253, %v8245
        %v9974 = vpack.c.b16 %v8254, %v8246
        %v9975 = vpack.c.b16 %v8255, %v8247
        %v9976 = vpack.c.b16 %v8256, %v8248
        %v9977 = vpack.c.b16 %v8257, %v8249
        %v9978 = vpack.c.b16 %v8258, %v8250
        %v9979 = vpack.c.b16 %v8259, %v8251
        %v9980 = vpack.c.b16 %v8260, %v8252
        %v9981 = vpack.c.b16 %v8269, %v8261
        %v9982 = vpack.c.b16 %v8270, %v8262
        %v9983 = vpack.c.b16 %v8271, %v8263
        %v9984 = vpack.c.b16 %v8272, %v8264
        %v9985 = vpack.c.b16 %v8273, %v8265
        %v9986 = vpack.c.b16 %v8274, %v8266
        %v9987 = vpack.c.b16 %v8275, %v8267
        %v9988 = vpack.c.b16 %v8276, %v8268
        %v9989 = vpack.c.b16 %v8285, %v8277
        %v9990 = vpack.c.b16 %v8286, %v8278
        %v9991 = vpack.c.b16 %v8287, %v8279
        %v9992 = vpack.c.b16 %v8288, %v8280
        %v9993 = vpack.c.b16 %v8289, %v8281
        %v9994 = vpack.c.b16 %v8290, %v8282
        %v9995 = vpack.c.b16 %v8291, %v8283
        %v9996 = vpack.c.b16 %v8292, %v8284
        %v9997 = vpack.c.b16 %v8301, %v8293
        %v9998 = vpack.c.b16 %v8302, %v8294
        %v9999 = vpack.c.b16 %v8303, %v8295
        %v10000 = vpack.c.b16 %v8304, %v8296
        %v10001 = vpack.c.b16 %v8305, %v8297
        %v10002 = vpack.c.b16 %v8306, %v8298
        %v10003 = vpack.c.b16 %v8307, %v8299
        %v10004 = vpack.c.b16 %v8308, %v8300
        %v10005 = vpack.c.b16 %v8317, %v8309
        %v10006 = vpack.c.b16 %v8318, %v8310
        %v10007 = vpack.c.b16 %v8319, %v8311
        %v10008 = vpack.c.b16 %v8320, %v8312
        %v10009 = vpack.c.b16 %v8321, %v8313
        %v10010 = vpack.c.b16 %v8322, %v8314
        %v10011 = vpack.c.b16 %v8323, %v8315
        %v10012 = vpack.c.b16 %v8324, %v8316
        %v10013 = vpack.c.b16 %v8333, %v8325
        %v10014 = vpack.c.b16 %v8334, %v8326
        %v10015 = vpack.c.b16 %v8335, %v8327
        %v10016 = vpack.c.b16 %v8336, %v8328
        %v10017 = vpack.c.b16 %v8337, %v8329
        %v10018 = vpack.c.b16 %v8338, %v8330
        %v10019 = vpack.c.b16 %v8339, %v8331
        %v10020 = vpack.c.b16 %v8340, %v8332
        %v10021 = vpack.c.b16 %v8349, %v8341
        %v10022 = vpack.c.b16 %v8350, %v8342
        %v10023 = vpack.c.b16 %v8351, %v8343
        %v10024 = vpack.c.b16 %v8352, %v8344
        %v10025 = vpack.c.b16 %v8353, %v8345
        %v10026 = vpack.c.b16 %v8354, %v8346
        %v10027 = vpack.c.b16 %v8355, %v8347
        %v10028 = vpack.c.b16 %v8356, %v8348
        %v10029 = vpack.c.b16 %v8365, %v8357
        %v10030 = vpack.c.b16 %v8366, %v8358
        %v10031 = vpack.c.b16 %v8367, %v8359
        %v10032 = vpack.c.b16 %v8368, %v8360
        %v10033 = vpack.c.b16 %v8369, %v8361
        %v10034 = vpack.c.b16 %v8370, %v8362
        %v10035 = vpack.c.b16 %v8371, %v8363
        %v10036 = vpack.c.b16 %v8372, %v8364
        %v10037 = vpack.c.b16 %v8381, %v8373
        %v10038 = vpack.c.b16 %v8382, %v8374
        %v10039 = vpack.c.b16 %v8383, %v8375
        %v10040 = vpack.c.b16 %v8384, %v8376
        %v10041 = vpack.c.b16 %v8385, %v8377
        %v10042 = vpack.c.b16 %v8386, %v8378
        %v10043 = vpack.c.b16 %v8387, %v8379
        %v10044 = vpack.c.b16 %v8388, %v8380
        %v10045 = vpack.c.b16 %v8397, %v8389
        %v10046 = vpack.c.b16 %v8398, %v8390
        %v10047 = vpack.c.b16 %v8399, %v8391
        %v10048 = vpack.c.b16 %v8400, %v8392
        %v10049 = vpack.c.b16 %v8401, %v8393
        %v10050 = vpack.c.b16 %v8402, %v8394
        %v10051 = vpack.c.b16 %v8403, %v8395
        %v10052 = vpack.c.b16 %v8404, %v8396
        %v10053 = vpack.c.b16 %v8413, %v8405
        %v10054 = vpack.c.b16 %v8414, %v8406
        %v10055 = vpack.c.b16 %v8415, %v8407
        %v10056 = vpack.c.b16 %v8416, %v8408
        %v10057 = vpack.c.b16 %v8417, %v8409
        %v10058 = vpack.c.b16 %v8418, %v8410
        %v10059 = vpack.c.b16 %v8419, %v8411
        %v10060 = vpack.c.b16 %v8420, %v8412
        %v10061 = vpack.c.b16 %v8429, %v8421
        %v10062 = vpack.c.b16 %v8430, %v8422
        %v10063 = vpack.c.b16 %v8431, %v8423
        %v10064 = vpack.c.b16 %v8432, %v8424
        %v10065 = vpack.c.b16 %v8433, %v8425
        %v10066 = vpack.c.b16 %v8434, %v8426
        %v10067 = vpack.c.b16 %v8435, %v8427
        %v10068 = vpack.c.b16 %v8436, %v8428
        %v10069 = vpack.c.b16 %v8445, %v8437
        %v10070 = vpack.c.b16 %v8446, %v8438
        %v10071 = vpack.c.b16 %v8447, %v8439
        %v10072 = vpack.c.b16 %v8448, %v8440
        %v10073 = vpack.c.b16 %v8449, %v8441
        %v10074 = vpack.c.b16 %v8450, %v8442
        %v10075 = vpack.c.b16 %v8451, %v8443
        %v10076 = vpack.c.b16 %v8452, %v8444
        %v10077 = vpack.c.b16 %v8461, %v8453
        %v10078 = vpack.c.b16 %v8462, %v8454
        %v10079 = vpack.c.b16 %v8463, %v8455
        %v10080 = vpack.c.b16 %v8464, %v8456
        %v10081 = vpack.c.b16 %v8465, %v8457
        %v10082 = vpack.c.b16 %v8466, %v8458
        %v10083 = vpack.c.b16 %v8467, %v8459
        %v10084 = vpack.c.b16 %v8468, %v8460
        %v10085 = vpack.c.b16 %v8477, %v8469
        %v10086 = vpack.c.b16 %v8478, %v8470
        %v10087 = vpack.c.b16 %v8479, %v8471
        %v10088 = vpack.c.b16 %v8480, %v8472
        %v10089 = vpack.c.b16 %v8481, %v8473
        %v10090 = vpack.c.b16 %v8482, %v8474
        %v10091 = vpack.c.b16 %v8483, %v8475
        %v10092 = vpack.c.b16 %v8484, %v8476
        %v10093 = vpack.c.b16 %v8493, %v8485
        %v10094 = vpack.c.b16 %v8494, %v8486
        %v10095 = vpack.c.b16 %v8495, %v8487
        %v10096 = vpack.c.b16 %v8496, %v8488
        %v10097 = vpack.c.b16 %v8497, %v8489
        %v10098 = vpack.c.b16 %v8498, %v8490
        %v10099 = vpack.c.b16 %v8499, %v8491
        %v10100 = vpack.c.b16 %v8500, %v8492
        %v10101 = vpack.c.b16 %v8509, %v8501
        %v10102 = vpack.c.b16 %v8510, %v8502
        %v10103 = vpack.c.b16 %v8511, %v8503
        %v10104 = vpack.c.b16 %v8512, %v8504
        %v10105 = vpack.c.b16 %v8513, %v8505
        %v10106 = vpack.c.b16 %v8514, %v8506
        %v10107 = vpack.c.b16 %v8515, %v8507
        %v10108 = vpack.c.b16 %v8516, %v8508
        %v10109 = vpack.c.b16 %v8525, %v8517
        %v10110 = vpack.c.b16 %v8526, %v8518
        %v10111 = vpack.c.b16 %v8527, %v8519
        %v10112 = vpack.c.b16 %v8528, %v8520
        %v10113 = vpack.c.b16 %v8529, %v8521
        %v10114 = vpack.c.b16 %v8530, %v8522
        %v10115 = vpack.c.b16 %v8531, %v8523
        %v10116 = vpack.c.b16 %v8532, %v8524
        %v10117 = vpack.c.b16 %v8541, %v8533
        %v10118 = vpack.c.b16 %v8542, %v8534
        %v10119 = vpack.c.b16 %v8543, %v8535
        %v10120 = vpack.c.b16 %v8544, %v8536
        %v10121 = vpack.c.b16 %v8545, %v8537
        %v10122 = vpack.c.b16 %v8546, %v8538
        %v10123 = vpack.c.b16 %v8547, %v8539
        %v10124 = vpack.c.b16 %v8548, %v8540
        %v10125 = vpack.c.b16 %v8557, %v8549
        %v10126 = vpack.c.b16 %v8558, %v8550
        %v10127 = vpack.c.b16 %v8559, %v8551
        %v10128 = vpack.c.b16 %v8560, %v8552
        %v10129 = vpack.c.b16 %v8561, %v8553
        %v10130 = vpack.c.b16 %v8562, %v8554
        %v10131 = vpack.c.b16 %v8563, %v8555
        %v10132 = vpack.c.b16 %v8564, %v8556
        %v10133 = vpack.c.b16 %v8573, %v8565
        %v10134 = vpack.c.b16 %v8574, %v8566
        %v10135 = vpack.c.b16 %v8575, %v8567
        %v10136 = vpack.c.b16 %v8576, %v8568
        %v10137 = vpack.c.b16 %v8577, %v8569
        %v10138 = vpack.c.b16 %v8578, %v8570
        %v10139 = vpack.c.b16 %v8579, %v8571
        %v10140 = vpack.c.b16 %v8580, %v8572
        %v10141 = vpack.c.b16 %v8589, %v8581
        %v10142 = vpack.c.b16 %v8590, %v8582
        %v10143 = vpack.c.b16 %v8591, %v8583
        %v10144 = vpack.c.b16 %v8592, %v8584
        %v10145 = vpack.c.b16 %v8593, %v8585
        %v10146 = vpack.c.b16 %v8594, %v8586
        %v10147 = vpack.c.b16 %v8595, %v8587
        %v10148 = vpack.c.b16 %v8596, %v8588
        %v10149 = vpack.c.b16 %v8605, %v8597
        %v10150 = vpack.c.b16 %v8606, %v8598
        %v10151 = vpack.c.b16 %v8607, %v8599
        %v10152 = vpack.c.b16 %v8608, %v8600
        %v10153 = vpack.c.b16 %v8609, %v8601
        %v10154 = vpack.c.b16 %v8610, %v8602
        %v10155 = vpack.c.b16 %v8611, %v8603
        %v10156 = vpack.c.b16 %v8612, %v8604
        %v10157 = vpack.c.b16 %v8621, %v8613
        %v10158 = vpack.c.b16 %v8622, %v8614
        %v10159 = vpack.c.b16 %v8623, %v8615
        %v10160 = vpack.c.b16 %v8624, %v8616
        %v10161 = vpack.c.b16 %v8625, %v8617
        %v10162 = vpack.c.b16 %v8626, %v8618
        %v10163 = vpack.c.b16 %v8627, %v8619
        %v10164 = vpack.c.b16 %v8628, %v8620
        %v10165 = vpack.c.b16 %v8637, %v8629
        %v10166 = vpack.c.b16 %v8638, %v8630
        %v10167 = vpack.c.b16 %v8639, %v8631
        %v10168 = vpack.c.b16 %v8640, %v8632
        %v10169 = vpack.c.b16 %v8641, %v8633
        %v10170 = vpack.c.b16 %v8642, %v8634
        %v10171 = vpack.c.b16 %v8643, %v8635
        %v10172 = vpack.c.b16 %v8644, %v8636
        %v10173 = vpack.c.b16 %v8653, %v8645
        %v10174 = vpack.c.b16 %v8654, %v8646
        %v10175 = vpack.c.b16 %v8655, %v8647
        %v10176 = vpack.c.b16 %v8656, %v8648
        %v10177 = vpack.c.b16 %v8657, %v8649
        %v10178 = vpack.c.b16 %v8658, %v8650
        %v10179 = vpack.c.b16 %v8659, %v8651
        %v10180 = vpack.c.b16 %v8660, %v8652
        %v10181 = vpack.c.b16 %v8669, %v8661
        %v10182 = vpack.c.b16 %v8670, %v8662
        %v10183 = vpack.c.b16 %v8671, %v8663
        %v10184 = vpack.c.b16 %v8672, %v8664
        %v10185 = vpack.c.b16 %v8673, %v8665
        %v10186 = vpack.c.b16 %v8674, %v8666
        %v10187 = vpack.c.b16 %v8675, %v8667
        %v10188 = vpack.c.b16 %v8676, %v8668
        %v10189 = vpack.c.b16 %v8685, %v8677
        %v10190 = vpack.c.b16 %v8686, %v8678
        %v10191 = vpack.c.b16 %v8687, %v8679
        %v10192 = vpack.c.b16 %v8688, %v8680
        %v10193 = vpack.c.b16 %v8689, %v8681
        %v10194 = vpack.c.b16 %v8690, %v8682
        %v10195 = vpack.c.b16 %v8691, %v8683
        %v10196 = vpack.c.b16 %v8692, %v8684
        %v10197 = vpack.c.b16 %v8701, %v8693
        %v10198 = vpack.c.b16 %v8702, %v8694
        %v10199 = vpack.c.b16 %v8703, %v8695
        %v10200 = vpack.c.b16 %v8704, %v8696
        %v10201 = vpack.c.b16 %v8705, %v8697
        %v10202 = vpack.c.b16 %v8706, %v8698
        %v10203 = vpack.c.b16 %v8707, %v8699
        %v10204 = vpack.c.b16 %v8708, %v8700
        %v10205 = vpack.c.b16 %v8717, %v8709
        %v10206 = vpack.c.b16 %v8718, %v8710
        %v10207 = vpack.c.b16 %v8719, %v8711
        %v10208 = vpack.c.b16 %v8720, %v8712
        %v10209 = vpack.c.b16 %v8721, %v8713
        %v10210 = vpack.c.b16 %v8722, %v8714
        %v10211 = vpack.c.b16 %v8723, %v8715
        %v10212 = vpack.c.b16 %v8724, %v8716
        %v10213 = vpack.c.b16 %v8733, %v8725
        %v10214 = vpack.c.b16 %v8734, %v8726
        %v10215 = vpack.c.b16 %v8735, %v8727
        %v10216 = vpack.c.b16 %v8736, %v8728
        %v10217 = vpack.c.b16 %v8737, %v8729
        %v10218 = vpack.c.b16 %v8738, %v8730
        %v10219 = vpack.c.b16 %v8739, %v8731
        %v10220 = vpack.c.b16 %v8740, %v8732
        %v10221 = vpack.c.b16 %v8749, %v8741
        %v10222 = vpack.c.b16 %v8750, %v8742
        %v10223 = vpack.c.b16 %v8751, %v8743
        %v10224 = vpack.c.b16 %v8752, %v8744
        %v10225 = vpack.c.b16 %v8753, %v8745
        %v10226 = vpack.c.b16 %v8754, %v8746
        %v10227 = vpack.c.b16 %v8755, %v8747
        %v10228 = vpack.c.b16 %v8756, %v8748
        %v10229 = vpack.c.b16 %v8765, %v8757
        %v10230 = vpack.c.b16 %v8766, %v8758
        %v10231 = vpack.c.b16 %v8767, %v8759
        %v10232 = vpack.c.b16 %v8768, %v8760
        %v10233 = vpack.c.b16 %v8769, %v8761
        %v10234 = vpack.c.b16 %v8770, %v8762
        %v10235 = vpack.c.b16 %v8771, %v8763
        %v10236 = vpack.c.b16 %v8772, %v8764
        %v10237 = vpack.c.b16 %v8781, %v8773
        %v10238 = vpack.c.b16 %v8782, %v8774
        %v10239 = vpack.c.b16 %v8783, %v8775
        %v10240 = vpack.c.b16 %v8784, %v8776
        %v10241 = vpack.c.b16 %v8785, %v8777
        %v10242 = vpack.c.b16 %v8786, %v8778
        %v10243 = vpack.c.b16 %v8787, %v8779
        %v10244 = vpack.c.b16 %v8788, %v8780
        %v10245 = vpack.c.b16 %v8797, %v8789
        %v10246 = vpack.c.b16 %v8798, %v8790
        %v10247 = vpack.c.b16 %v8799, %v8791
        %v10248 = vpack.c.b16 %v8800, %v8792
        %v10249 = vpack.c.b16 %v8801, %v8793
        %v10250 = vpack.c.b16 %v8802, %v8794
        %v10251 = vpack.c.b16 %v8803, %v8795
        %v10252 = vpack.c.b16 %v8804, %v8796
        %v10253 = vpack.c.b16 %v8813, %v8805
        %v10254 = vpack.c.b16 %v8814, %v8806
        %v10255 = vpack.c.b16 %v8815, %v8807
        %v10256 = vpack.c.b16 %v8816, %v8808
        %v10257 = vpack.c.b16 %v8817, %v8809
        %v10258 = vpack.c.b16 %v8818, %v8810
        %v10259 = vpack.c.b16 %v8819, %v8811
        %v10260 = vpack.c.b16 %v8820, %v8812
        %v10261 = vpack.c.b16 %v8829, %v8821
        %v10262 = vpack.c.b16 %v8830, %v8822
        %v10263 = vpack.c.b16 %v8831, %v8823
        %v10264 = vpack.c.b16 %v8832, %v8824
        %v10265 = vpack.c.b16 %v8833, %v8825
        %v10266 = vpack.c.b16 %v8834, %v8826
        %v10267 = vpack.c.b16 %v8835, %v8827
        %v10268 = vpack.c.b16 %v8836, %v8828
        %v10269 = vpack.c.b16 %v8845, %v8837
        %v10270 = vpack.c.b16 %v8846, %v8838
        %v10271 = vpack.c.b16 %v8847, %v8839
        %v10272 = vpack.c.b16 %v8848, %v8840
        %v10273 = vpack.c.b16 %v8849, %v8841
        %v10274 = vpack.c.b16 %v8850, %v8842
        %v10275 = vpack.c.b16 %v8851, %v8843
        %v10276 = vpack.c.b16 %v8852, %v8844
        %v10277 = vpack.c.b16 %v8861, %v8853
        %v10278 = vpack.c.b16 %v8862, %v8854
        %v10279 = vpack.c.b16 %v8863, %v8855
        %v10280 = vpack.c.b16 %v8864, %v8856
        %v10281 = vpack.c.b16 %v8865, %v8857
        %v10282 = vpack.c.b16 %v8866, %v8858
        %v10283 = vpack.c.b16 %v8867, %v8859
        %v10284 = vpack.c.b16 %v8868, %v8860
        %v10285 = vpack.c.b16 %v8877, %v8869
        %v10286 = vpack.c.b16 %v8878, %v8870
        %v10287 = vpack.c.b16 %v8879, %v8871
        %v10288 = vpack.c.b16 %v8880, %v8872
        %v10289 = vpack.c.b16 %v8881, %v8873
        %v10290 = vpack.c.b16 %v8882, %v8874
        %v10291 = vpack.c.b16 %v8883, %v8875
        %v10292 = vpack.c.b16 %v8884, %v8876
        %v10293 = vpack.c.b16 %v8893, %v8885
        %v10294 = vpack.c.b16 %v8894, %v8886
        %v10295 = vpack.c.b16 %v8895, %v8887
        %v10296 = vpack.c.b16 %v8896, %v8888
        %v10297 = vpack.c.b16 %v8897, %v8889
        %v10298 = vpack.c.b16 %v8898, %v8890
        %v10299 = vpack.c.b16 %v8899, %v8891
        %v10300 = vpack.c.b16 %v8900, %v8892
        %v10301 = vpack.c.b16 %v8909, %v8901
        %v10302 = vpack.c.b16 %v8910, %v8902
        %v10303 = vpack.c.b16 %v8911, %v8903
        %v10304 = vpack.c.b16 %v8912, %v8904
        %v10305 = vpack.c.b16 %v8913, %v8905
        %v10306 = vpack.c.b16 %v8914, %v8906
        %v10307 = vpack.c.b16 %v8915, %v8907
        %v10308 = vpack.c.b16 %v8916, %v8908
        %v10309 = vpack.c.b16 %v8925, %v8917
        %v10310 = vpack.c.b16 %v8926, %v8918
        %v10311 = vpack.c.b16 %v8927, %v8919
        %v10312 = vpack.c.b16 %v8928, %v8920
        %v10313 = vpack.c.b16 %v8929, %v8921
        %v10314 = vpack.c.b16 %v8930, %v8922
        %v10315 = vpack.c.b16 %v8931, %v8923
        %v10316 = vpack.c.b16 %v8932, %v8924
        %v10317 = vpack.c.b16 %v8941, %v8933
        %v10318 = vpack.c.b16 %v8942, %v8934
        %v10319 = vpack.c.b16 %v8943, %v8935
        %v10320 = vpack.c.b16 %v8944, %v8936
        %v10321 = vpack.c.b16 %v8945, %v8937
        %v10322 = vpack.c.b16 %v8946, %v8938
        %v10323 = vpack.c.b16 %v8947, %v8939
        %v10324 = vpack.c.b16 %v8948, %v8940
        %v10325 = vpack.c.b16 %v8957, %v8949
        %v10326 = vpack.c.b16 %v8958, %v8950
        %v10327 = vpack.c.b16 %v8959, %v8951
        %v10328 = vpack.c.b16 %v8960, %v8952
        %v10329 = vpack.c.b16 %v8961, %v8953
        %v10330 = vpack.c.b16 %v8962, %v8954
        %v10331 = vpack.c.b16 %v8963, %v8955
        %v10332 = vpack.c.b16 %v8964, %v8956
        %v10333 = vpack.c.b16 %v8973, %v8965
        %v10334 = vpack.c.b16 %v8974, %v8966
        %v10335 = vpack.c.b16 %v8975, %v8967
        %v10336 = vpack.c.b16 %v8976, %v8968
        %v10337 = vpack.c.b16 %v8977, %v8969
        %v10338 = vpack.c.b16 %v8978, %v8970
        %v10339 = vpack.c.b16 %v8979, %v8971
        %v10340 = vpack.c.b16 %v8980, %v8972
        %v10341 = vpack.c.b16 %v8989, %v8981
        %v10342 = vpack.c.b16 %v8990, %v8982
        %v10343 = vpack.c.b16 %v8991, %v8983
        %v10344 = vpack.c.b16 %v8992, %v8984
        %v10345 = vpack.c.b16 %v8993, %v8985
        %v10346 = vpack.c.b16 %v8994, %v8986
        %v10347 = vpack.c.b16 %v8995, %v8987
        %v10348 = vpack.c.b16 %v8996, %v8988
        %v10349 = vpack.c.b16 %v9005, %v8997
        %v10350 = vpack.c.b16 %v9006, %v8998
        %v10351 = vpack.c.b16 %v9007, %v8999
        %v10352 = vpack.c.b16 %v9008, %v9000
        %v10353 = vpack.c.b16 %v9009, %v9001
        %v10354 = vpack.c.b16 %v9010, %v9002
        %v10355 = vpack.c.b16 %v9011, %v9003
        %v10356 = vpack.c.b16 %v9012, %v9004
        %v10357 = vpack.c.b16 %v9021, %v9013
        %v10358 = vpack.c.b16 %v9022, %v9014
        %v10359 = vpack.c.b16 %v9023, %v9015
        %v10360 = vpack.c.b16 %v9024, %v9016
        %v10361 = vpack.c.b16 %v9025, %v9017
        %v10362 = vpack.c.b16 %v9026, %v9018
        %v10363 = vpack.c.b16 %v9027, %v9019
        %v10364 = vpack.c.b16 %v9028, %v9020
        %v10365 = vpack.c.b16 %v9037, %v9029
        %v10366 = vpack.c.b16 %v9038, %v9030
        %v10367 = vpack.c.b16 %v9039, %v9031
        %v10368 = vpack.c.b16 %v9040, %v9032
        %v10369 = vpack.c.b16 %v9041, %v9033
        %v10370 = vpack.c.b16 %v9042, %v9034
        %v10371 = vpack.c.b16 %v9043, %v9035
        %v10372 = vpack.c.b16 %v9044, %v9036
        %v10373 = vpack.c.b16 %v9053, %v9045
        %v10374 = vpack.c.b16 %v9054, %v9046
        %v10375 = vpack.c.b16 %v9055, %v9047
        %v10376 = vpack.c.b16 %v9056, %v9048
        %v10377 = vpack.c.b16 %v9057, %v9049
        %v10378 = vpack.c.b16 %v9058, %v9050
        %v10379 = vpack.c.b16 %v9059, %v9051
        %v10380 = vpack.c.b16 %v9060, %v9052
        %v10381 = vpack.c.b16 %v9069, %v9061
        %v10382 = vpack.c.b16 %v9070, %v9062
        %v10383 = vpack.c.b16 %v9071, %v9063
        %v10384 = vpack.c.b16 %v9072, %v9064
        %v10385 = vpack.c.b16 %v9073, %v9065
        %v10386 = vpack.c.b16 %v9074, %v9066
        %v10387 = vpack.c.b16 %v9075, %v9067
        %v10388 = vpack.c.b16 %v9076, %v9068
        %v10389 = vpack.c.b16 %v9085, %v9077
        %v10390 = vpack.c.b16 %v9086, %v9078
        %v10391 = vpack.c.b16 %v9087, %v9079
        %v10392 = vpack.c.b16 %v9088, %v9080
        %v10393 = vpack.c.b16 %v9089, %v9081
        %v10394 = vpack.c.b16 %v9090, %v9082
        %v10395 = vpack.c.b16 %v9091, %v9083
        %v10396 = vpack.c.b16 %v9092, %v9084
        %v10397 = vpack.c.b16 %v9101, %v9093
        %v10398 = vpack.c.b16 %v9102, %v9094
        %v10399 = vpack.c.b16 %v9103, %v9095
        %v10400 = vpack.c.b16 %v9104, %v9096
        %v10401 = vpack.c.b16 %v9105, %v9097
        %v10402 = vpack.c.b16 %v9106, %v9098
        %v10403 = vpack.c.b16 %v9107, %v9099
        %v10404 = vpack.c.b16 %v9108, %v9100
        %v10405 = vpack.c.b16 %v9117, %v9109
        %v10406 = vpack.c.b16 %v9118, %v9110
        %v10407 = vpack.c.b16 %v9119, %v9111
        %v10408 = vpack.c.b16 %v9120, %v9112
        %v10409 = vpack.c.b16 %v9121, %v9113
        %v10410 = vpack.c.b16 %v9122, %v9114
        %v10411 = vpack.c.b16 %v9123, %v9115
        %v10412 = vpack.c.b16 %v9124, %v9116
        %v10413 = vpack.c.b16 %v9133, %v9125
        %v10414 = vpack.c.b16 %v9134, %v9126
        %v10415 = vpack.c.b16 %v9135, %v9127
        %v10416 = vpack.c.b16 %v9136, %v9128
        %v10417 = vpack.c.b16 %v9137, %v9129
        %v10418 = vpack.c.b16 %v9138, %v9130
        %v10419 = vpack.c.b16 %v9139, %v9131
        %v10420 = vpack.c.b16 %v9140, %v9132
        %v10421 = vpack.c.b16 %v9149, %v9141
        %v10422 = vpack.c.b16 %v9150, %v9142
        %v10423 = vpack.c.b16 %v9151, %v9143
        %v10424 = vpack.c.b16 %v9152, %v9144
        %v10425 = vpack.c.b16 %v9153, %v9145
        %v10426 = vpack.c.b16 %v9154, %v9146
        %v10427 = vpack.c.b16 %v9155, %v9147
        %v10428 = vpack.c.b16 %v9156, %v9148
        %v10429 = vpack.c.b16 %v9165, %v9157
        %v10430 = vpack.c.b16 %v9166, %v9158
        %v10431 = vpack.c.b16 %v9167, %v9159
        %v10432 = vpack.c.b16 %v9168, %v9160
        %v10433 = vpack.c.b16 %v9169, %v9161
        %v10434 = vpack.c.b16 %v9170, %v9162
        %v10435 = vpack.c.b16 %v9171, %v9163
        %v10436 = vpack.c.b16 %v9172, %v9164
        %v10437 = vpack.c.b16 %v9181, %v9173
        %v10438 = vpack.c.b16 %v9182, %v9174
        %v10439 = vpack.c.b16 %v9183, %v9175
        %v10440 = vpack.c.b16 %v9184, %v9176
        %v10441 = vpack.c.b16 %v9185, %v9177
        %v10442 = vpack.c.b16 %v9186, %v9178
        %v10443 = vpack.c.b16 %v9187, %v9179
        %v10444 = vpack.c.b16 %v9188, %v9180
        %v10445 = vpack.c.b16 %v9197, %v9189
        %v10446 = vpack.c.b16 %v9198, %v9190
        %v10447 = vpack.c.b16 %v9199, %v9191
        %v10448 = vpack.c.b16 %v9200, %v9192
        %v10449 = vpack.c.b16 %v9201, %v9193
        %v10450 = vpack.c.b16 %v9202, %v9194
        %v10451 = vpack.c.b16 %v9203, %v9195
        %v10452 = vpack.c.b16 %v9204, %v9196
        %v10453 = vpack.c.b16 %v9213, %v9205
        %v10454 = vpack.c.b16 %v9214, %v9206
        %v10455 = vpack.c.b16 %v9215, %v9207
        %v10456 = vpack.c.b16 %v9216, %v9208
        %v10457 = vpack.c.b16 %v9217, %v9209
        %v10458 = vpack.c.b16 %v9218, %v9210
        %v10459 = vpack.c.b16 %v9219, %v9211
        %v10460 = vpack.c.b16 %v9220, %v9212
        %v10461 = vpack.c.b16 %v9229, %v9221
        %v10462 = vpack.c.b16 %v9230, %v9222
        %v10463 = vpack.c.b16 %v9231, %v9223
        %v10464 = vpack.c.b16 %v9232, %v9224
        %v10465 = vpack.c.b16 %v9233, %v9225
        %v10466 = vpack.c.b16 %v9234, %v9226
        %v10467 = vpack.c.b16 %v9235, %v9227
        %v10468 = vpack.c.b16 %v9236, %v9228
        %v10469 = vpack.c.b16 %v9245, %v9237
        %v10470 = vpack.c.b16 %v9246, %v9238
        %v10471 = vpack.c.b16 %v9247, %v9239
        %v10472 = vpack.c.b16 %v9248, %v9240
        %v10473 = vpack.c.b16 %v9249, %v9241
        %v10474 = vpack.c.b16 %v9250, %v9242
        %v10475 = vpack.c.b16 %v9251, %v9243
        %v10476 = vpack.c.b16 %v9252, %v9244
        %v10477 = vpack.c.b16 %v9261, %v9253
        %v10478 = vpack.c.b16 %v9262, %v9254
        %v10479 = vpack.c.b16 %v9263, %v9255
        %v10480 = vpack.c.b16 %v9264, %v9256
        %v10481 = vpack.c.b16 %v9265, %v9257
        %v10482 = vpack.c.b16 %v9266, %v9258
        %v10483 = vpack.c.b16 %v9267, %v9259
        %v10484 = vpack.c.b16 %v9268, %v9260
        %v10485 = vpack.c.b16 %v9277, %v9269
        %v10486 = vpack.c.b16 %v9278, %v9270
        %v10487 = vpack.c.b16 %v9279, %v9271
        %v10488 = vpack.c.b16 %v9280, %v9272
        %v10489 = vpack.c.b16 %v9281, %v9273
        %v10490 = vpack.c.b16 %v9282, %v9274
        %v10491 = vpack.c.b16 %v9283, %v9275
        %v10492 = vpack.c.b16 %v9284, %v9276
        %v10493 = vpack.c.b16 %v9293, %v9285
        %v10494 = vpack.c.b16 %v9294, %v9286
        %v10495 = vpack.c.b16 %v9295, %v9287
        %v10496 = vpack.c.b16 %v9296, %v9288
        %v10497 = vpack.c.b16 %v9297, %v9289
        %v10498 = vpack.c.b16 %v9298, %v9290
        %v10499 = vpack.c.b16 %v9299, %v9291
        %v10500 = vpack.c.b16 %v9300, %v9292
        %v10501 = vpack.c.b16 %v9309, %v9301
        %v10502 = vpack.c.b16 %v9310, %v9302
        %v10503 = vpack.c.b16 %v9311, %v9303
        %v10504 = vpack.c.b16 %v9312, %v9304
        %v10505 = vpack.c.b16 %v9313, %v9305
        %v10506 = vpack.c.b16 %v9314, %v9306
        %v10507 = vpack.c.b16 %v9315, %v9307
        %v10508 = vpack.c.b16 %v9316, %v9308
        %v10509 = vpack.c.b16 %v9325, %v9317
        %v10510 = vpack.c.b16 %v9326, %v9318
        %v10511 = vpack.c.b16 %v9327, %v9319
        %v10512 = vpack.c.b16 %v9328, %v9320
        %v10513 = vpack.c.b16 %v9329, %v9321
        %v10514 = vpack.c.b16 %v9330, %v9322
        %v10515 = vpack.c.b16 %v9331, %v9323
        %v10516 = vpack.c.b16 %v9332, %v9324
        %v10517 = vpack.c.b16 %v9341, %v9333
        %v10518 = vpack.c.b16 %v9342, %v9334
        %v10519 = vpack.c.b16 %v9343, %v9335
        %v10520 = vpack.c.b16 %v9344, %v9336
        %v10521 = vpack.c.b16 %v9345, %v9337
        %v10522 = vpack.c.b16 %v9346, %v9338
        %v10523 = vpack.c.b16 %v9347, %v9339
        %v10524 = vpack.c.b16 %v9348, %v9340
        %v10525 = vpack.c.b16 %v9357, %v9349
        %v10526 = vpack.c.b16 %v9358, %v9350
        %v10527 = vpack.c.b16 %v9359, %v9351
        %v10528 = vpack.c.b16 %v9360, %v9352
        %v10529 = vpack.c.b16 %v9361, %v9353
        %v10530 = vpack.c.b16 %v9362, %v9354
        %v10531 = vpack.c.b16 %v9363, %v9355
        %v10532 = vpack.c.b16 %v9364, %v9356
        %v10533 = vpack.c.b16 %v9373, %v9365
        %v10534 = vpack.c.b16 %v9374, %v9366
        %v10535 = vpack.c.b16 %v9375, %v9367
        %v10536 = vpack.c.b16 %v9376, %v9368
        %v10537 = vpack.c.b16 %v9377, %v9369
        %v10538 = vpack.c.b16 %v9378, %v9370
        %v10539 = vpack.c.b16 %v9379, %v9371
        %v10540 = vpack.c.b16 %v9380, %v9372
        %v10541 = vpack.c.b16 %v9389, %v9381
        %v10542 = vpack.c.b16 %v9390, %v9382
        %v10543 = vpack.c.b16 %v9391, %v9383
        %v10544 = vpack.c.b16 %v9392, %v9384
        %v10545 = vpack.c.b16 %v9393, %v9385
        %v10546 = vpack.c.b16 %v9394, %v9386
        %v10547 = vpack.c.b16 %v9395, %v9387
        %v10548 = vpack.c.b16 %v9396, %v9388
        %v10549 = vpack.c.b16 %v9405, %v9397
        %v10550 = vpack.c.b16 %v9406, %v9398
        %v10551 = vpack.c.b16 %v9407, %v9399
        %v10552 = vpack.c.b16 %v9408, %v9400
        %v10553 = vpack.c.b16 %v9409, %v9401
        %v10554 = vpack.c.b16 %v9410, %v9402
        %v10555 = vpack.c.b16 %v9411, %v9403
        %v10556 = vpack.c.b16 %v9412, %v9404
        %v10557 = vpack.c.b16 %v9421, %v9413
        %v10558 = vpack.c.b16 %v9422, %v9414
        %v10559 = vpack.c.b16 %v9423, %v9415
        %v10560 = vpack.c.b16 %v9424, %v9416
        %v10561 = vpack.c.b16 %v9425, %v9417
        %v10562 = vpack.c.b16 %v9426, %v9418
        %v10563 = vpack.c.b16 %v9427, %v9419
        %v10564 = vpack.c.b16 %v9428, %v9420
        %v10565 = vpack.c.b16 %v9437, %v9429
        %v10566 = vpack.c.b16 %v9438, %v9430
        %v10567 = vpack.c.b16 %v9439, %v9431
        %v10568 = vpack.c.b16 %v9440, %v9432
        %v10569 = vpack.c.b16 %v9441, %v9433
        %v10570 = vpack.c.b16 %v9442, %v9434
        %v10571 = vpack.c.b16 %v9443, %v9435
        %v10572 = vpack.c.b16 %v9444, %v9436
        %v10573 = vpack.c.b16 %v9453, %v9445
        %v10574 = vpack.c.b16 %v9454, %v9446
        %v10575 = vpack.c.b16 %v9455, %v9447
        %v10576 = vpack.c.b16 %v9456, %v9448
        %v10577 = vpack.c.b16 %v9457, %v9449
        %v10578 = vpack.c.b16 %v9458, %v9450
        %v10579 = vpack.c.b16 %v9459, %v9451
        %v10580 = vpack.c.b16 %v9460, %v9452
        %v10581 = vpack.c.b16 %v9469, %v9461
        %v10582 = vpack.c.b16 %v9470, %v9462
        %v10583 = vpack.c.b16 %v9471, %v9463
        %v10584 = vpack.c.b16 %v9472, %v9464
        %v10585 = vpack.c.b16 %v9473, %v9465
        %v10586 = vpack.c.b16 %v9474, %v9466
        %v10587 = vpack.c.b16 %v9475, %v9467
        %v10588 = vpack.c.b16 %v9476, %v9468
        %v10589 = vpack.c.b16 %v9485, %v9477
        %v10590 = vpack.c.b16 %v9486, %v9478
        %v10591 = vpack.c.b16 %v9487, %v9479
        %v10592 = vpack.c.b16 %v9488, %v9480
        %v10593 = vpack.c.b16 %v9489, %v9481
        %v10594 = vpack.c.b16 %v9490, %v9482
        %v10595 = vpack.c.b16 %v9491, %v9483
        %v10596 = vpack.c.b16 %v9492, %v9484
        %v10597 = vpack.c.b16 %v9501, %v9493
        %v10598 = vpack.c.b16 %v9502, %v9494
        %v10599 = vpack.c.b16 %v9503, %v9495
        %v10600 = vpack.c.b16 %v9504, %v9496
        %v10601 = vpack.c.b16 %v9505, %v9497
        %v10602 = vpack.c.b16 %v9506, %v9498
        %v10603 = vpack.c.b16 %v9507, %v9499
        %v10604 = vpack.c.b16 %v9508, %v9500
        %v10605 = vpack.c.b16 %v9517, %v9509
        %v10606 = vpack.c.b16 %v9518, %v9510
        %v10607 = vpack.c.b16 %v9519, %v9511
        %v10608 = vpack.c.b16 %v9520, %v9512
        %v10609 = vpack.c.b16 %v9521, %v9513
        %v10610 = vpack.c.b16 %v9522, %v9514
        %v10611 = vpack.c.b16 %v9523, %v9515
        %v10612 = vpack.c.b16 %v9524, %v9516
        %v10613 = vpack.c.b16 %v9533, %v9525
        %v10614 = vpack.c.b16 %v9534, %v9526
        %v10615 = vpack.c.b16 %v9535, %v9527
        %v10616 = vpack.c.b16 %v9536, %v9528
        %v10617 = vpack.c.b16 %v9537, %v9529
        %v10618 = vpack.c.b16 %v9538, %v9530
        %v10619 = vpack.c.b16 %v9539, %v9531
        %v10620 = vpack.c.b16 %v9540, %v9532
        %v10621 = vpack.c.b16 %v9549, %v9541
        %v10622 = vpack.c.b16 %v9550, %v9542
        %v10623 = vpack.c.b16 %v9551, %v9543
        %v10624 = vpack.c.b16 %v9552, %v9544
        %v10625 = vpack.c.b16 %v9553, %v9545
        %v10626 = vpack.c.b16 %v9554, %v9546
        %v10627 = vpack.c.b16 %v9555, %v9547
        %v10628 = vpack.c.b16 %v9556, %v9548
        %v10629 = vpack.c.b16 %v9565, %v9557
        %v10630 = vpack.c.b16 %v9566, %v9558
        %v10631 = vpack.c.b16 %v9567, %v9559
        %v10632 = vpack.c.b16 %v9568, %v9560
        %v10633 = vpack.c.b16 %v9569, %v9561
        %v10634 = vpack.c.b16 %v9570, %v9562
        %v10635 = vpack.c.b16 %v9571, %v9563
        %v10636 = vpack.c.b16 %v9572, %v9564
        %v10637 = vpack.c.b16 %v9581, %v9573
        %v10638 = vpack.c.b16 %v9582, %v9574
        %v10639 = vpack.c.b16 %v9583, %v9575
        %v10640 = vpack.c.b16 %v9584, %v9576
        %v10641 = vpack.c.b16 %v9585, %v9577
        %v10642 = vpack.c.b16 %v9586, %v9578
        %v10643 = vpack.c.b16 %v9587, %v9579
        %v10644 = vpack.c.b16 %v9588, %v9580
        %v10645 = vpack.c.b16 %v9597, %v9589
        %v10646 = vpack.c.b16 %v9598, %v9590
        %v10647 = vpack.c.b16 %v9599, %v9591
        %v10648 = vpack.c.b16 %v9600, %v9592
        %v10649 = vpack.c.b16 %v9601, %v9593
        %v10650 = vpack.c.b16 %v9602, %v9594
        %v10651 = vpack.c.b16 %v9603, %v9595
        %v10652 = vpack.c.b16 %v9604, %v9596
        %v10653 = vpack.c.b16 %v9613, %v9605
        %v10654 = vpack.c.b16 %v9614, %v9606
        %v10655 = vpack.c.b16 %v9615, %v9607
        %v10656 = vpack.c.b16 %v9616, %v9608
        %v10657 = vpack.c.b16 %v9617, %v9609
        %v10658 = vpack.c.b16 %v9618, %v9610
        %v10659 = vpack.c.b16 %v9619, %v9611
        %v10660 = vpack.c.b16 %v9620, %v9612
        %v10661 = vpack.c.b16 %v9629, %v9621
        %v10662 = vpack.c.b16 %v9630, %v9622
        %v10663 = vpack.c.b16 %v9631, %v9623
        %v10664 = vpack.c.b16 %v9632, %v9624
        %v10665 = vpack.c.b16 %v9633, %v9625
        %v10666 = vpack.c.b16 %v9634, %v9626
        %v10667 = vpack.c.b16 %v9635, %v9627
        %v10668 = vpack.c.b16 %v9636, %v9628
        %v10669 = vpack.c.b16 %v9645, %v9637
        %v10670 = vpack.c.b16 %v9646, %v9638
        %v10671 = vpack.c.b16 %v9647, %v9639
        %v10672 = vpack.c.b16 %v9648, %v9640
        %v10673 = vpack.c.b16 %v9649, %v9641
        %v10674 = vpack.c.b16 %v9650, %v9642
        %v10675 = vpack.c.b16 %v9651, %v9643
        %v10676 = vpack.c.b16 %v9652, %v9644
        %11701 = vmatprep.subr.bf16.mxu0 %v9654
        %11702 = vmatpush1.bf16.msra.mxu0 %v9653
        %11703 = vmatprep.subr.bf16.mxu0 %v9662
        %11704 = vmatpush1.bf16.msra.mxu0 %v9661
        %11705 = vmatprep.subr.bf16.mxu0 %v9670
        %11706 = vmatpush1.bf16.msra.mxu0 %v9669
        %11707 = vmatprep.subr.bf16.mxu0 %v9678
        %11708 = vmatpush1.bf16.msra.mxu0 %v9677
        %11709 = vmatprep.subr.bf16.mxu0 %v9686
        %11710 = vmatpush1.bf16.msra.mxu0 %v9685
        %11711 = vmatprep.subr.bf16.mxu0 %v9694
        %11712 = vmatpush1.bf16.msra.mxu0 %v9693
        %11713 = vmatprep.subr.bf16.mxu0 %v9702
        %11714 = vmatpush1.bf16.msra.mxu0 %v9701
        %11715 = vmatprep.subr.bf16.mxu0 %v9710
        %11716 = vmatpush1.bf16.msra.mxu0 %v9709
        %11717 = vmatprep.subr.bf16.mxu0 %v9718
        %11718 = vmatpush1.bf16.msra.mxu0 %v9717
        %11719 = vmatprep.subr.bf16.mxu0 %v9726
        %11720 = vmatpush1.bf16.msra.mxu0 %v9725
        %11721 = vmatprep.subr.bf16.mxu0 %v9734
        %11722 = vmatpush1.bf16.msra.mxu0 %v9733
        %11723 = vmatprep.subr.bf16.mxu0 %v9742
        %11724 = vmatpush1.bf16.msra.mxu0 %v9741
        %11725 = vmatprep.subr.bf16.mxu0 %v9750
        %11726 = vmatpush1.bf16.msra.mxu0 %v9749
        %11727 = vmatprep.subr.bf16.mxu0 %v9758
        %11728 = vmatpush1.bf16.msra.mxu0 %v9757
        %11729 = vmatprep.subr.bf16.mxu0 %v9766
        %11730 = vmatpush1.bf16.msra.mxu0 %v9765
        %11731 = vmatprep.subr.bf16.mxu0 %v9774
        %11732 = vmatpush1.bf16.msra.mxu0 %v9773
        %11733 = vmatprep.mubr.bf16.mxu0 %v6550
        %11734 = vmatmul.mubr.bf16.gmra.mrb[0].mxu0 %v6549
        %v11735 = vpop.f32.mrb[0].mxu0
        %v11736 = vadd.f32 0.0, %v11735
        %v11737 = vpop.f32.mrb[0].mxu0
        %v11738 = vadd.f32 0.0, %v11737
        %v11739 = vpop.f32.mrb[0].mxu0
        %v11740 = vpop.f32.mrb[0].mxu0
        %11741 = vdwg.mxu0
        %11742 = vmatprep.subr.bf16.mxu0 %v9782
        %11743 = vmatpush1.bf16.msra.mxu0 %v9781
        %11744 = vmatprep.subr.bf16.mxu0 %v9790
        %11745 = vmatpush1.bf16.msra.mxu0 %v9789
        %11746 = vmatprep.subr.bf16.mxu0 %v9798
        %11747 = vmatpush1.bf16.msra.mxu0 %v9797
        %11748 = vmatprep.subr.bf16.mxu0 %v9806
        %11749 = vmatpush1.bf16.msra.mxu0 %v9805
        %11750 = vmatprep.subr.bf16.mxu0 %v9814
        %11751 = vmatpush1.bf16.msra.mxu0 %v9813
        %11752 = vmatprep.subr.bf16.mxu0 %v9822
        %11753 = vmatpush1.bf16.msra.mxu0 %v9821
        %11754 = vmatprep.subr.bf16.mxu0 %v9830
        %11755 = vmatpush1.bf16.msra.mxu0 %v9829
        %11756 = vmatprep.subr.bf16.mxu0 %v9838
        %11757 = vmatpush1.bf16.msra.mxu0 %v9837
        %11758 = vmatprep.subr.bf16.mxu0 %v9846
        %11759 = vmatpush1.bf16.msra.mxu0 %v9845
        %11760 = vmatprep.subr.bf16.mxu0 %v9854
        %11761 = vmatpush1.bf16.msra.mxu0 %v9853
        %11762 = vmatprep.subr.bf16.mxu0 %v9862
        %11763 = vmatpush1.bf16.msra.mxu0 %v9861
        %11764 = vmatprep.subr.bf16.mxu0 %v9870
        %11765 = vmatpush1.bf16.msra.mxu0 %v9869
        %11766 = vmatprep.subr.bf16.mxu0 %v9878
        %11767 = vmatpush1.bf16.msra.mxu0 %v9877
        %11768 = vmatprep.subr.bf16.mxu0 %v9886
        %11769 = vmatpush1.bf16.msra.mxu0 %v9885
        %11770 = vmatprep.subr.bf16.mxu0 %v9894
        %11771 = vmatpush1.bf16.msra.mxu0 %v9893
        %11772 = vmatprep.subr.bf16.mxu0 %v9902
        %11773 = vmatpush1.bf16.msra.mxu0 %v9901
        %11774 = vmatprep.mubr.bf16.mxu0 %v6552
        %11775 = vmatmul.mubr.bf16.gmra.mrb[0].mxu0 %v6551
        %v11776 = vpop.f32.mrb[0].mxu0
        %v11777 = vadd.f32 %v11736, %v11776
        %v11778 = vpop.f32.mrb[0].mxu0
        %v11779 = vadd.f32 %v11738, %v11778
        %v11780 = vpop.f32.mrb[0].mxu0
        %v11781 = vpop.f32.mrb[0].mxu0
        %11782 = vdwg.mxu0
        %11783 = vmatprep.subr.bf16.mxu0 %v9910
        %11784 = vmatpush1.bf16.msra.mxu0 %v9909
        %11785 = vmatprep.subr.bf16.mxu0 %v9918
        %11786 = vmatpush1.bf16.msra.mxu0 %v9917
        %11787 = vmatprep.subr.bf16.mxu0 %v9926
        %11788 = vmatpush1.bf16.msra.mxu0 %v9925
        %11789 = vmatprep.subr.bf16.mxu0 %v9934
        %11790 = vmatpush1.bf16.msra.mxu0 %v9933
        %11791 = vmatprep.subr.bf16.mxu0 %v9942
        %11792 = vmatpush1.bf16.msra.mxu0 %v9941
        %11793 = vmatprep.subr.bf16.mxu0 %v9950
        %11794 = vmatpush1.bf16.msra.mxu0 %v9949
        %11795 = vmatprep.subr.bf16.mxu0 %v9958
        %11796 = vmatpush1.bf16.msra.mxu0 %v9957
        %11797 = vmatprep.subr.bf16.mxu0 %v9966
        %11798 = vmatpush1.bf16.msra.mxu0 %v9965
        %11799 = vmatprep.subr.bf16.mxu0 %v9974
        %11800 = vmatpush1.bf16.msra.mxu0 %v9973
        %11801 = vmatprep.subr.bf16.mxu0 %v9982
        %11802 = vmatpush1.bf16.msra.mxu0 %v9981
        %11803 = vmatprep.subr.bf16.mxu0 %v9990
        %11804 = vmatpush1.bf16.msra.mxu0 %v9989
        %11805 = vmatprep.subr.bf16.mxu0 %v9998
        %11806 = vmatpush1.bf16.msra.mxu0 %v9997
        %11807 = vmatprep.subr.bf16.mxu0 %v10006
        %11808 = vmatpush1.bf16.msra.mxu0 %v10005
        %11809 = vmatprep.subr.bf16.mxu0 %v10014
        %11810 = vmatpush1.bf16.msra.mxu0 %v10013
        %11811 = vmatprep.subr.bf16.mxu0 %v10022
        %11812 = vmatpush1.bf16.msra.mxu0 %v10021
        %11813 = vmatprep.subr.bf16.mxu0 %v10030
        %11814 = vmatpush1.bf16.msra.mxu0 %v10029
        %11815 = vmatprep.mubr.bf16.mxu0 %v6554
        %11816 = vmatmul.mubr.bf16.gmra.mrb[0].mxu0 %v6553
        %v11817 = vpop.f32.mrb[0].mxu0
        %v11818 = vadd.f32 %v11777, %v11817
        %v11819 = vpop.f32.mrb[0].mxu0
        %v11820 = vadd.f32 %v11779, %v11819
        %v11821 = vpop.f32.mrb[0].mxu0
        %v11822 = vpop.f32.mrb[0].mxu0
        %11823 = vdwg.mxu0
        %11824 = vmatprep.subr.bf16.mxu0 %v10038
        %11825 = vmatpush1.bf16.msra.mxu0 %v10037
        %11826 = vmatprep.subr.bf16.mxu0 %v10046
        %11827 = vmatpush1.bf16.msra.mxu0 %v10045
        %11828 = vmatprep.subr.bf16.mxu0 %v10054
        %11829 = vmatpush1.bf16.msra.mxu0 %v10053
        %11830 = vmatprep.subr.bf16.mxu0 %v10062
        %11831 = vmatpush1.bf16.msra.mxu0 %v10061
        %11832 = vmatprep.subr.bf16.mxu0 %v10070
        %11833 = vmatpush1.bf16.msra.mxu0 %v10069
        %11834 = vmatprep.subr.bf16.mxu0 %v10078
        %11835 = vmatpush1.bf16.msra.mxu0 %v10077
        %11836 = vmatprep.subr.bf16.mxu0 %v10086
        %11837 = vmatpush1.bf16.msra.mxu0 %v10085
        %11838 = vmatprep.subr.bf16.mxu0 %v10094
        %11839 = vmatpush1.bf16.msra.mxu0 %v10093
        %11840 = vmatprep.subr.bf16.mxu0 %v10102
        %11841 = vmatpush1.bf16.msra.mxu0 %v10101
        %11842 = vmatprep.subr.bf16.mxu0 %v10110
        %11843 = vmatpush1.bf16.msra.mxu0 %v10109
        %11844 = vmatprep.subr.bf16.mxu0 %v10118
        %11845 = vmatpush1.bf16.msra.mxu0 %v10117
        %11846 = vmatprep.subr.bf16.mxu0 %v10126
        %11847 = vmatpush1.bf16.msra.mxu0 %v10125
        %11848 = vmatprep.subr.bf16.mxu0 %v10134
        %11849 = vmatpush1.bf16.msra.mxu0 %v10133
        %11850 = vmatprep.subr.bf16.mxu0 %v10142
        %11851 = vmatpush1.bf16.msra.mxu0 %v10141
        %11852 = vmatprep.subr.bf16.mxu0 %v10150
        %11853 = vmatpush1.bf16.msra.mxu0 %v10149
        %11854 = vmatprep.subr.bf16.mxu0 %v10158
        %11855 = vmatpush1.bf16.msra.mxu0 %v10157
        %11856 = vmatprep.mubr.bf16.mxu0 %v6556
        %11857 = vmatmul.mubr.bf16.gmra.mrb[0].mxu0 %v6555
        %v11858 = vpop.f32.mrb[0].mxu0
        %v11859 = vadd.f32 %v11818, %v11858
        %v11860 = vpop.f32.mrb[0].mxu0
        %v11861 = vadd.f32 %v11820, %v11860
        %v11862 = vpop.f32.mrb[0].mxu0
        %v11863 = vpop.f32.mrb[0].mxu0
        %11864 = vdwg.mxu0
        %11865 = vmatprep.subr.bf16.mxu0 %v10166
        %11866 = vmatpush1.bf16.msra.mxu0 %v10165
        %11867 = vmatprep.subr.bf16.mxu0 %v10174
        %11868 = vmatpush1.bf16.msra.mxu0 %v10173
        %11869 = vmatprep.subr.bf16.mxu0 %v10182
        %11870 = vmatpush1.bf16.msra.mxu0 %v10181
        %11871 = vmatprep.subr.bf16.mxu0 %v10190
        %11872 = vmatpush1.bf16.msra.mxu0 %v10189
        %11873 = vmatprep.subr.bf16.mxu0 %v10198
        %11874 = vmatpush1.bf16.msra.mxu0 %v10197
        %11875 = vmatprep.subr.bf16.mxu0 %v10206
        %11876 = vmatpush1.bf16.msra.mxu0 %v10205
        %11877 = vmatprep.subr.bf16.mxu0 %v10214
        %11878 = vmatpush1.bf16.msra.mxu0 %v10213
        %11879 = vmatprep.subr.bf16.mxu0 %v10222
        %11880 = vmatpush1.bf16.msra.mxu0 %v10221
        %11881 = vmatprep.subr.bf16.mxu0 %v10230
        %11882 = vmatpush1.bf16.msra.mxu0 %v10229
        %11883 = vmatprep.subr.bf16.mxu0 %v10238
        %11884 = vmatpush1.bf16.msra.mxu0 %v10237
        %11885 = vmatprep.subr.bf16.mxu0 %v10246
        %11886 = vmatpush1.bf16.msra.mxu0 %v10245
        %11887 = vmatprep.subr.bf16.mxu0 %v10254
        %11888 = vmatpush1.bf16.msra.mxu0 %v10253
        %11889 = vmatprep.subr.bf16.mxu0 %v10262
        %11890 = vmatpush1.bf16.msra.mxu0 %v10261
        %11891 = vmatprep.subr.bf16.mxu0 %v10270
        %11892 = vmatpush1.bf16.msra.mxu0 %v10269
        %11893 = vmatprep.subr.bf16.mxu0 %v10278
        %11894 = vmatpush1.bf16.msra.mxu0 %v10277
        %11895 = vmatprep.subr.bf16.mxu0 %v10286
        %11896 = vmatpush1.bf16.msra.mxu0 %v10285
        %11897 = vmatprep.mubr.bf16.mxu0 %v6558
        %11898 = vmatmul.mubr.bf16.gmra.mrb[0].mxu0 %v6557
        %v11899 = vpop.f32.mrb[0].mxu0
        %v11900 = vadd.f32 %v11859, %v11899
        %v11901 = vpop.f32.mrb[0].mxu0
        %v11902 = vadd.f32 %v11861, %v11901
        %v11903 = vpop.f32.mrb[0].mxu0
        %v11904 = vpop.f32.mrb[0].mxu0
        %11905 = vdwg.mxu0
        %11906 = vmatprep.subr.bf16.mxu0 %v10294
        %11907 = vmatpush1.bf16.msra.mxu0 %v10293
        %11908 = vmatprep.subr.bf16.mxu0 %v10302
        %11909 = vmatpush1.bf16.msra.mxu0 %v10301
        %11910 = vmatprep.subr.bf16.mxu0 %v10310
        %11911 = vmatpush1.bf16.msra.mxu0 %v10309
        %11912 = vmatprep.subr.bf16.mxu0 %v10318
        %11913 = vmatpush1.bf16.msra.mxu0 %v10317
        %11914 = vmatprep.subr.bf16.mxu0 %v10326
        %11915 = vmatpush1.bf16.msra.mxu0 %v10325
        %11916 = vmatprep.subr.bf16.mxu0 %v10334
        %11917 = vmatpush1.bf16.msra.mxu0 %v10333
        %11918 = vmatprep.subr.bf16.mxu0 %v10342
        %11919 = vmatpush1.bf16.msra.mxu0 %v10341
        %11920 = vmatprep.subr.bf16.mxu0 %v10350
        %11921 = vmatpush1.bf16.msra.mxu0 %v10349
        %11922 = vmatprep.subr.bf16.mxu0 %v10358
        %11923 = vmatpush1.bf16.msra.mxu0 %v10357
        %11924 = vmatprep.subr.bf16.mxu0 %v10366
        %11925 = vmatpush1.bf16.msra.mxu0 %v10365
        %11926 = vmatprep.subr.bf16.mxu0 %v10374
        %11927 = vmatpush1.bf16.msra.mxu0 %v10373
        %11928 = vmatprep.subr.bf16.mxu0 %v10382
        %11929 = vmatpush1.bf16.msra.mxu0 %v10381
        %11930 = vmatprep.subr.bf16.mxu0 %v10390
        %11931 = vmatpush1.bf16.msra.mxu0 %v10389
        %11932 = vmatprep.subr.bf16.mxu0 %v10398
        %11933 = vmatpush1.bf16.msra.mxu0 %v10397
        %11934 = vmatprep.subr.bf16.mxu0 %v10406
        %11935 = vmatpush1.bf16.msra.mxu0 %v10405
        %11936 = vmatprep.subr.bf16.mxu0 %v10414
        %11937 = vmatpush1.bf16.msra.mxu0 %v10413
        %11938 = vmatprep.mubr.bf16.mxu0 %v6560
        %11939 = vmatmul.mubr.bf16.gmra.mrb[0].mxu0 %v6559
        %v11940 = vpop.f32.mrb[0].mxu0
        %v11941 = vadd.f32 %v11900, %v11940
        %v11942 = vpop.f32.mrb[0].mxu0
        %v11943 = vadd.f32 %v11902, %v11942
        %v11944 = vpop.f32.mrb[0].mxu0
        %v11945 = vpop.f32.mrb[0].mxu0
        %11946 = vdwg.mxu0
        %11947 = vmatprep.subr.bf16.mxu0 %v10422
        %11948 = vmatpush1.bf16.msra.mxu0 %v10421
        %11949 = vmatprep.subr.bf16.mxu0 %v10430
        %11950 = vmatpush1.bf16.msra.mxu0 %v10429
        %11951 = vmatprep.subr.bf16.mxu0 %v10438
        %11952 = vmatpush1.bf16.msra.mxu0 %v10437
        %11953 = vmatprep.subr.bf16.mxu0 %v10446
        %11954 = vmatpush1.bf16.msra.mxu0 %v10445
        %11955 = vmatprep.subr.bf16.mxu0 %v10454
        %11956 = vmatpush1.bf16.msra.mxu0 %v10453
        %11957 = vmatprep.subr.bf16.mxu0 %v10462
        %11958 = vmatpush1.bf16.msra.mxu0 %v10461
        %11959 = vmatprep.subr.bf16.mxu0 %v10470
        %11960 = vmatpush1.bf16.msra.mxu0 %v10469
        %11961 = vmatprep.subr.bf16.mxu0 %v10478
        %11962 = vmatpush1.bf16.msra.mxu0 %v10477
        %11963 = vmatprep.subr.bf16.mxu0 %v10486
        %11964 = vmatpush1.bf16.msra.mxu0 %v10485
        %11965 = vmatprep.subr.bf16.mxu0 %v10494
        %11966 = vmatpush1.bf16.msra.mxu0 %v10493
        %11967 = vmatprep.subr.bf16.mxu0 %v10502
        %11968 = vmatpush1.bf16.msra.mxu0 %v10501
        %11969 = vmatprep.subr.bf16.mxu0 %v10510
        %11970 = vmatpush1.bf16.msra.mxu0 %v10509
        %11971 = vmatprep.subr.bf16.mxu0 %v10518
        %11972 = vmatpush1.bf16.msra.mxu0 %v10517
        %11973 = vmatprep.subr.bf16.mxu0 %v10526
        %11974 = vmatpush1.bf16.msra.mxu0 %v10525
        %11975 = vmatprep.subr.bf16.mxu0 %v10534
        %11976 = vmatpush1.bf16.msra.mxu0 %v10533
        %11977 = vmatprep.subr.bf16.mxu0 %v10542
        %11978 = vmatpush1.bf16.msra.mxu0 %v10541
        %11979 = vmatprep.mubr.bf16.mxu0 %v6562
        %11980 = vmatmul.mubr.bf16.gmra.mrb[0].mxu0 %v6561
        %v11981 = vpop.f32.mrb[0].mxu0
        %v11982 = vadd.f32 %v11941, %v11981
        %v11983 = vpop.f32.mrb[0].mxu0
        %v11984 = vadd.f32 %v11943, %v11983
        %v11985 = vpop.f32.mrb[0].mxu0
        %v11986 = vpop.f32.mrb[0].mxu0
        %11987 = vdwg.mxu0
        %11988 = vmatprep.subr.bf16.mxu0 %v10550
        %11989 = vmatpush1.bf16.msra.mxu0 %v10549
        %11990 = vmatprep.subr.bf16.mxu0 %v10558
        %11991 = vmatpush1.bf16.msra.mxu0 %v10557
        %11992 = vmatprep.subr.bf16.mxu0 %v10566
        %11993 = vmatpush1.bf16.msra.mxu0 %v10565
        %11994 = vmatprep.subr.bf16.mxu0 %v10574
        %11995 = vmatpush1.bf16.msra.mxu0 %v10573
        %11996 = vmatprep.subr.bf16.mxu0 %v10582
        %11997 = vmatpush1.bf16.msra.mxu0 %v10581
        %11998 = vmatprep.subr.bf16.mxu0 %v10590
        %11999 = vmatpush1.bf16.msra.mxu0 %v10589
        %12000 = vmatprep.subr.bf16.mxu0 %v10598
        %12001 = vmatpush1.bf16.msra.mxu0 %v10597
        %12002 = vmatprep.subr.bf16.mxu0 %v10606
        %12003 = vmatpush1.bf16.msra.mxu0 %v10605
        %12004 = vmatprep.subr.bf16.mxu0 %v10614
        %12005 = vmatpush1.bf16.msra.mxu0 %v10613
        %12006 = vmatprep.subr.bf16.mxu0 %v10622
        %12007 = vmatpush1.bf16.msra.mxu0 %v10621
        %12008 = vmatprep.subr.bf16.mxu0 %v10630
        %12009 = vmatpush1.bf16.msra.mxu0 %v10629
        %12010 = vmatprep.subr.bf16.mxu0 %v10638
        %12011 = vmatpush1.bf16.msra.mxu0 %v10637
        %12012 = vmatprep.subr.bf16.mxu0 %v10646
        %12013 = vmatpush1.bf16.msra.mxu0 %v10645
        %12014 = vmatprep.subr.bf16.mxu0 %v10654
        %12015 = vmatpush1.bf16.msra.mxu0 %v10653
        %12016 = vmatprep.subr.bf16.mxu0 %v10662
        %12017 = vmatpush1.bf16.msra.mxu0 %v10661
        %12018 = vmatprep.subr.bf16.mxu0 %v10670
        %12019 = vmatpush1.bf16.msra.mxu0 %v10669
        %12020 = vmatprep.mubr.bf16.mxu0 %v6564
        %12021 = vmatmul.mubr.bf16.gmra.mrb[0].mxu0 %v6563
        %v12022 = vpop.f32.mrb[0].mxu0
        %v12023 = vadd.f32 %v11982, %v12022
        %v12024 = vpop.f32.mrb[0].mxu0
        %v12025 = vadd.f32 %v11984, %v12024
        %v12026 = vpop.f32.mrb[0].mxu0
        %v12027 = vpop.f32.mrb[0].mxu0
        %12028 = vdwg.mxu0
        %12029 = vmatprep.subr.bf16.mxu0 %v9656
        %12030 = vmatpush1.bf16.msra.mxu0 %v9655
        %12031 = vmatprep.subr.bf16.mxu0 %v9664
        %12032 = vmatpush1.bf16.msra.mxu0 %v9663
        %12033 = vmatprep.subr.bf16.mxu0 %v9672
        %12034 = vmatpush1.bf16.msra.mxu0 %v9671
        %12035 = vmatprep.subr.bf16.mxu0 %v9680
        %12036 = vmatpush1.bf16.msra.mxu0 %v9679
        %12037 = vmatprep.subr.bf16.mxu0 %v9688
        %12038 = vmatpush1.bf16.msra.mxu0 %v9687
        %12039 = vmatprep.subr.bf16.mxu0 %v9696
        %12040 = vmatpush1.bf16.msra.mxu0 %v9695
        %12041 = vmatprep.subr.bf16.mxu0 %v9704
        %12042 = vmatpush1.bf16.msra.mxu0 %v9703
        %12043 = vmatprep.subr.bf16.mxu0 %v9712
        %12044 = vmatpush1.bf16.msra.mxu0 %v9711
        %12045 = vmatprep.subr.bf16.mxu0 %v9720
        %12046 = vmatpush1.bf16.msra.mxu0 %v9719
        %12047 = vmatprep.subr.bf16.mxu0 %v9728
        %12048 = vmatpush1.bf16.msra.mxu0 %v9727
        %12049 = vmatprep.subr.bf16.mxu0 %v9736
        %12050 = vmatpush1.bf16.msra.mxu0 %v9735
        %12051 = vmatprep.subr.bf16.mxu0 %v9744
        %12052 = vmatpush1.bf16.msra.mxu0 %v9743
        %12053 = vmatprep.subr.bf16.mxu0 %v9752
        %12054 = vmatpush1.bf16.msra.mxu0 %v9751
        %12055 = vmatprep.subr.bf16.mxu0 %v9760
        %12056 = vmatpush1.bf16.msra.mxu0 %v9759
        %12057 = vmatprep.subr.bf16.mxu0 %v9768
        %12058 = vmatpush1.bf16.msra.mxu0 %v9767
        %12059 = vmatprep.subr.bf16.mxu0 %v9776
        %12060 = vmatpush1.bf16.msra.mxu0 %v9775
        %12061 = vmatprep.mubr.bf16.mxu0 %v6550
        %12062 = vmatmul.mubr.bf16.gmra.mrb[0].mxu0 %v6549
        %v12063 = vpop.f32.mrb[0].mxu0
        %v12064 = vadd.f32 0.0, %v12063
        %v12065 = vpop.f32.mrb[0].mxu0
        %v12066 = vadd.f32 0.0, %v12065
        %v12067 = vpop.f32.mrb[0].mxu0
        %v12068 = vpop.f32.mrb[0].mxu0
        %12069 = vdwg.mxu0
        %12070 = vmatprep.subr.bf16.mxu0 %v9784
        %12071 = vmatpush1.bf16.msra.mxu0 %v9783
        %12072 = vmatprep.subr.bf16.mxu0 %v9792
        %12073 = vmatpush1.bf16.msra.mxu0 %v9791
        %12074 = vmatprep.subr.bf16.mxu0 %v9800
        %12075 = vmatpush1.bf16.msra.mxu0 %v9799
        %12076 = vmatprep.subr.bf16.mxu0 %v9808
        %12077 = vmatpush1.bf16.msra.mxu0 %v9807
        %12078 = vmatprep.subr.bf16.mxu0 %v9816
        %12079 = vmatpush1.bf16.msra.mxu0 %v9815
        %12080 = vmatprep.subr.bf16.mxu0 %v9824
        %12081 = vmatpush1.bf16.msra.mxu0 %v9823
        %12082 = vmatprep.subr.bf16.mxu0 %v9832
        %12083 = vmatpush1.bf16.msra.mxu0 %v9831
        %12084 = vmatprep.subr.bf16.mxu0 %v9840
        %12085 = vmatpush1.bf16.msra.mxu0 %v9839
        %12086 = vmatprep.subr.bf16.mxu0 %v9848
        %12087 = vmatpush1.bf16.msra.mxu0 %v9847
        %12088 = vmatprep.subr.bf16.mxu0 %v9856
        %12089 = vmatpush1.bf16.msra.mxu0 %v9855
        %12090 = vmatprep.subr.bf16.mxu0 %v9864
        %12091 = vmatpush1.bf16.msra.mxu0 %v9863
        %12092 = vmatprep.subr.bf16.mxu0 %v9872
        %12093 = vmatpush1.bf16.msra.mxu0 %v9871
        %12094 = vmatprep.subr.bf16.mxu0 %v9880
        %12095 = vmatpush1.bf16.msra.mxu0 %v9879
        %12096 = vmatprep.subr.bf16.mxu0 %v9888
        %12097 = vmatpush1.bf16.msra.mxu0 %v9887
        %12098 = vmatprep.subr.bf16.mxu0 %v9896
        %12099 = vmatpush1.bf16.msra.mxu0 %v9895
        %12100 = vmatprep.subr.bf16.mxu0 %v9904
        %12101 = vmatpush1.bf16.msra.mxu0 %v9903
        %12102 = vmatprep.mubr.bf16.mxu0 %v6552
        %12103 = vmatmul.mubr.bf16.gmra.mrb[0].mxu0 %v6551
        %v12104 = vpop.f32.mrb[0].mxu0
        %v12105 = vadd.f32 %v12064, %v12104
        %v12106 = vpop.f32.mrb[0].mxu0
        %v12107 = vadd.f32 %v12066, %v12106
        %v12108 = vpop.f32.mrb[0].mxu0
        %v12109 = vpop.f32.mrb[0].mxu0
        %12110 = vdwg.mxu0
        %12111 = vmatprep.subr.bf16.mxu0 %v9912
        %12112 = vmatpush1.bf16.msra.mxu0 %v9911
        %12113 = vmatprep.subr.bf16.mxu0 %v9920
        %12114 = vmatpush1.bf16.msra.mxu0 %v9919
        %12115 = vmatprep.subr.bf16.mxu0 %v9928
        %12116 = vmatpush1.bf16.msra.mxu0 %v9927
        %12117 = vmatprep.subr.bf16.mxu0 %v9936
        %12118 = vmatpush1.bf16.msra.mxu0 %v9935
        %12119 = vmatprep.subr.bf16.mxu0 %v9944
        %12120 = vmatpush1.bf16.msra.mxu0 %v9943
        %12121 = vmatprep.subr.bf16.mxu0 %v9952
        %12122 = vmatpush1.bf16.msra.mxu0 %v9951
        %12123 = vmatprep.subr.bf16.mxu0 %v9960
        %12124 = vmatpush1.bf16.msra.mxu0 %v9959
        %12125 = vmatprep.subr.bf16.mxu0 %v9968
        %12126 = vmatpush1.bf16.msra.mxu0 %v9967
        %12127 = vmatprep.subr.bf16.mxu0 %v9976
        %12128 = vmatpush1.bf16.msra.mxu0 %v9975
        %12129 = vmatprep.subr.bf16.mxu0 %v9984
        %12130 = vmatpush1.bf16.msra.mxu0 %v9983
        %12131 = vmatprep.subr.bf16.mxu0 %v9992
        %12132 = vmatpush1.bf16.msra.mxu0 %v9991
        %12133 = vmatprep.subr.bf16.mxu0 %v10000
        %12134 = vmatpush1.bf16.msra.mxu0 %v9999
        %12135 = vmatprep.subr.bf16.mxu0 %v10008
        %12136 = vmatpush1.bf16.msra.mxu0 %v10007
        %12137 = vmatprep.subr.bf16.mxu0 %v10016
        %12138 = vmatpush1.bf16.msra.mxu0 %v10015
        %12139 = vmatprep.subr.bf16.mxu0 %v10024
        %12140 = vmatpush1.bf16.msra.mxu0 %v10023
        %12141 = vmatprep.subr.bf16.mxu0 %v10032
        %12142 = vmatpush1.bf16.msra.mxu0 %v10031
        %12143 = vmatprep.mubr.bf16.mxu0 %v6554
        %12144 = vmatmul.mubr.bf16.gmra.mrb[0].mxu0 %v6553
        %v12145 = vpop.f32.mrb[0].mxu0
        %v12146 = vadd.f32 %v12105, %v12145
        %v12147 = vpop.f32.mrb[0].mxu0
        %v12148 = vadd.f32 %v12107, %v12147
        %v12149 = vpop.f32.mrb[0].mxu0
        %v12150 = vpop.f32.mrb[0].mxu0
        %12151 = vdwg.mxu0
        %12152 = vmatprep.subr.bf16.mxu0 %v10040
        %12153 = vmatpush1.bf16.msra.mxu0 %v10039
        %12154 = vmatprep.subr.bf16.mxu0 %v10048
        %12155 = vmatpush1.bf16.msra.mxu0 %v10047
        %12156 = vmatprep.subr.bf16.mxu0 %v10056
        %12157 = vmatpush1.bf16.msra.mxu0 %v10055
        %12158 = vmatprep.subr.bf16.mxu0 %v10064
        %12159 = vmatpush1.bf16.msra.mxu0 %v10063
        %12160 = vmatprep.subr.bf16.mxu0 %v10072
        %12161 = vmatpush1.bf16.msra.mxu0 %v10071
        %12162 = vmatprep.subr.bf16.mxu0 %v10080
        %12163 = vmatpush1.bf16.msra.mxu0 %v10079
        %12164 = vmatprep.subr.bf16.mxu0 %v10088
        %12165 = vmatpush1.bf16.msra.mxu0 %v10087
        %12166 = vmatprep.subr.bf16.mxu0 %v10096
        %12167 = vmatpush1.bf16.msra.mxu0 %v10095
        %12168 = vmatprep.subr.bf16.mxu0 %v10104
        %12169 = vmatpush1.bf16.msra.mxu0 %v10103
        %12170 = vmatprep.subr.bf16.mxu0 %v10112
        %12171 = vmatpush1.bf16.msra.mxu0 %v10111
        %12172 = vmatprep.subr.bf16.mxu0 %v10120
        %12173 = vmatpush1.bf16.msra.mxu0 %v10119
        %12174 = vmatprep.subr.bf16.mxu0 %v10128
        %12175 = vmatpush1.bf16.msra.mxu0 %v10127
        %12176 = vmatprep.subr.bf16.mxu0 %v10136
        %12177 = vmatpush1.bf16.msra.mxu0 %v10135
        %12178 = vmatprep.subr.bf16.mxu0 %v10144
        %12179 = vmatpush1.bf16.msra.mxu0 %v10143
        %12180 = vmatprep.subr.bf16.mxu0 %v10152
        %12181 = vmatpush1.bf16.msra.mxu0 %v10151
        %12182 = vmatprep.subr.bf16.mxu0 %v10160
        %12183 = vmatpush1.bf16.msra.mxu0 %v10159
        %12184 = vmatprep.mubr.bf16.mxu0 %v6556
        %12185 = vmatmul.mubr.bf16.gmra.mrb[0].mxu0 %v6555
        %v12186 = vpop.f32.mrb[0].mxu0
        %v12187 = vadd.f32 %v12146, %v12186
        %v12188 = vpop.f32.mrb[0].mxu0
        %v12189 = vadd.f32 %v12148, %v12188
        %v12190 = vpop.f32.mrb[0].mxu0
        %v12191 = vpop.f32.mrb[0].mxu0
        %12192 = vdwg.mxu0
        %12193 = vmatprep.subr.bf16.mxu0 %v10168
        %12194 = vmatpush1.bf16.msra.mxu0 %v10167
        %12195 = vmatprep.subr.bf16.mxu0 %v10176
        %12196 = vmatpush1.bf16.msra.mxu0 %v10175
        %12197 = vmatprep.subr.bf16.mxu0 %v10184
        %12198 = vmatpush1.bf16.msra.mxu0 %v10183
        %12199 = vmatprep.subr.bf16.mxu0 %v10192
        %12200 = vmatpush1.bf16.msra.mxu0 %v10191
        %12201 = vmatprep.subr.bf16.mxu0 %v10200
        %12202 = vmatpush1.bf16.msra.mxu0 %v10199
        %12203 = vmatprep.subr.bf16.mxu0 %v10208
        %12204 = vmatpush1.bf16.msra.mxu0 %v10207
        %12205 = vmatprep.subr.bf16.mxu0 %v10216
        %12206 = vmatpush1.bf16.msra.mxu0 %v10215
        %12207 = vmatprep.subr.bf16.mxu0 %v10224
        %12208 = vmatpush1.bf16.msra.mxu0 %v10223
        %12209 = vmatprep.subr.bf16.mxu0 %v10232
        %12210 = vmatpush1.bf16.msra.mxu0 %v10231
        %12211 = vmatprep.subr.bf16.mxu0 %v10240
        %12212 = vmatpush1.bf16.msra.mxu0 %v10239
        %12213 = vmatprep.subr.bf16.mxu0 %v10248
        %12214 = vmatpush1.bf16.msra.mxu0 %v10247
        %12215 = vmatprep.subr.bf16.mxu0 %v10256
        %12216 = vmatpush1.bf16.msra.mxu0 %v10255
        %12217 = vmatprep.subr.bf16.mxu0 %v10264
        %12218 = vmatpush1.bf16.msra.mxu0 %v10263
        %12219 = vmatprep.subr.bf16.mxu0 %v10272
        %12220 = vmatpush1.bf16.msra.mxu0 %v10271
        %12221 = vmatprep.subr.bf16.mxu0 %v10280
        %12222 = vmatpush1.bf16.msra.mxu0 %v10279
        %12223 = vmatprep.subr.bf16.mxu0 %v10288
        %12224 = vmatpush1.bf16.msra.mxu0 %v10287
        %12225 = vmatprep.mubr.bf16.mxu0 %v6558
        %12226 = vmatmul.mubr.bf16.gmra.mrb[0].mxu0 %v6557
        %v12227 = vpop.f32.mrb[0].mxu0
        %v12228 = vadd.f32 %v12187, %v12227
        %v12229 = vpop.f32.mrb[0].mxu0
        %v12230 = vadd.f32 %v12189, %v12229
        %v12231 = vpop.f32.mrb[0].mxu0
        %v12232 = vpop.f32.mrb[0].mxu0
        %12233 = vdwg.mxu0
        %12234 = vmatprep.subr.bf16.mxu0 %v10296
        %12235 = vmatpush1.bf16.msra.mxu0 %v10295
        %12236 = vmatprep.subr.bf16.mxu0 %v10304
        %12237 = vmatpush1.bf16.msra.mxu0 %v10303
        %12238 = vmatprep.subr.bf16.mxu0 %v10312
        %12239 = vmatpush1.bf16.msra.mxu0 %v10311
        %12240 = vmatprep.subr.bf16.mxu0 %v10320
        %12241 = vmatpush1.bf16.msra.mxu0 %v10319
        %12242 = vmatprep.subr.bf16.mxu0 %v10328
        %12243 = vmatpush1.bf16.msra.mxu0 %v10327
        %12244 = vmatprep.subr.bf16.mxu0 %v10336
        %12245 = vmatpush1.bf16.msra.mxu0 %v10335
        %12246 = vmatprep.subr.bf16.mxu0 %v10344
        %12247 = vmatpush1.bf16.msra.mxu0 %v10343
        %12248 = vmatprep.subr.bf16.mxu0 %v10352
        %12249 = vmatpush1.bf16.msra.mxu0 %v10351
        %12250 = vmatprep.subr.bf16.mxu0 %v10360
        %12251 = vmatpush1.bf16.msra.mxu0 %v10359
        %12252 = vmatprep.subr.bf16.mxu0 %v10368
        %12253 = vmatpush1.bf16.msra.mxu0 %v10367
        %12254 = vmatprep.subr.bf16.mxu0 %v10376
        %12255 = vmatpush1.bf16.msra.mxu0 %v10375
        %12256 = vmatprep.subr.bf16.mxu0 %v10384
        %12257 = vmatpush1.bf16.msra.mxu0 %v10383
        %12258 = vmatprep.subr.bf16.mxu0 %v10392
        %12259 = vmatpush1.bf16.msra.mxu0 %v10391
        %12260 = vmatprep.subr.bf16.mxu0 %v10400
        %12261 = vmatpush1.bf16.msra.mxu0 %v10399
        %12262 = vmatprep.subr.bf16.mxu0 %v10408
        %12263 = vmatpush1.bf16.msra.mxu0 %v10407
        %12264 = vmatprep.subr.bf16.mxu0 %v10416
        %12265 = vmatpush1.bf16.msra.mxu0 %v10415
        %12266 = vmatprep.mubr.bf16.mxu0 %v6560
        %12267 = vmatmul.mubr.bf16.gmra.mrb[0].mxu0 %v6559
        %v12268 = vpop.f32.mrb[0].mxu0
        %v12269 = vadd.f32 %v12228, %v12268
        %v12270 = vpop.f32.mrb[0].mxu0
        %v12271 = vadd.f32 %v12230, %v12270
        %v12272 = vpop.f32.mrb[0].mxu0
        %v12273 = vpop.f32.mrb[0].mxu0
        %12274 = vdwg.mxu0
        %12275 = vmatprep.subr.bf16.mxu0 %v10424
        %12276 = vmatpush1.bf16.msra.mxu0 %v10423
        %12277 = vmatprep.subr.bf16.mxu0 %v10432
        %12278 = vmatpush1.bf16.msra.mxu0 %v10431
        %12279 = vmatprep.subr.bf16.mxu0 %v10440
        %12280 = vmatpush1.bf16.msra.mxu0 %v10439
        %12281 = vmatprep.subr.bf16.mxu0 %v10448
        %12282 = vmatpush1.bf16.msra.mxu0 %v10447
        %12283 = vmatprep.subr.bf16.mxu0 %v10456
        %12284 = vmatpush1.bf16.msra.mxu0 %v10455
        %12285 = vmatprep.subr.bf16.mxu0 %v10464
        %12286 = vmatpush1.bf16.msra.mxu0 %v10463
        %12287 = vmatprep.subr.bf16.mxu0 %v10472
        %12288 = vmatpush1.bf16.msra.mxu0 %v10471
        %12289 = vmatprep.subr.bf16.mxu0 %v10480
        %12290 = vmatpush1.bf16.msra.mxu0 %v10479
        %12291 = vmatprep.subr.bf16.mxu0 %v10488
        %12292 = vmatpush1.bf16.msra.mxu0 %v10487
        %12293 = vmatprep.subr.bf16.mxu0 %v10496
        %12294 = vmatpush1.bf16.msra.mxu0 %v10495
        %12295 = vmatprep.subr.bf16.mxu0 %v10504
        %12296 = vmatpush1.bf16.msra.mxu0 %v10503
        %12297 = vmatprep.subr.bf16.mxu0 %v10512
        %12298 = vmatpush1.bf16.msra.mxu0 %v10511
        %12299 = vmatprep.subr.bf16.mxu0 %v10520
        %12300 = vmatpush1.bf16.msra.mxu0 %v10519
        %12301 = vmatprep.subr.bf16.mxu0 %v10528
        %12302 = vmatpush1.bf16.msra.mxu0 %v10527
        %12303 = vmatprep.subr.bf16.mxu0 %v10536
        %12304 = vmatpush1.bf16.msra.mxu0 %v10535
        %12305 = vmatprep.subr.bf16.mxu0 %v10544
        %12306 = vmatpush1.bf16.msra.mxu0 %v10543
        %12307 = vmatprep.mubr.bf16.mxu0 %v6562
        %12308 = vmatmul.mubr.bf16.gmra.mrb[0].mxu0 %v6561
        %v12309 = vpop.f32.mrb[0].mxu0
        %v12310 = vadd.f32 %v12269, %v12309
        %v12311 = vpop.f32.mrb[0].mxu0
        %v12312 = vadd.f32 %v12271, %v12311
        %v12313 = vpop.f32.mrb[0].mxu0
        %v12314 = vpop.f32.mrb[0].mxu0
        %12315 = vdwg.mxu0
        %12316 = vmatprep.subr.bf16.mxu0 %v10552
        %12317 = vmatpush1.bf16.msra.mxu0 %v10551
        %12318 = vmatprep.subr.bf16.mxu0 %v10560
        %12319 = vmatpush1.bf16.msra.mxu0 %v10559
        %12320 = vmatprep.subr.bf16.mxu0 %v10568
        %12321 = vmatpush1.bf16.msra.mxu0 %v10567
        %12322 = vmatprep.subr.bf16.mxu0 %v10576
        %12323 = vmatpush1.bf16.msra.mxu0 %v10575
        %12324 = vmatprep.subr.bf16.mxu0 %v10584
        %12325 = vmatpush1.bf16.msra.mxu0 %v10583
        %12326 = vmatprep.subr.bf16.mxu0 %v10592
        %12327 = vmatpush1.bf16.msra.mxu0 %v10591
        %12328 = vmatprep.subr.bf16.mxu0 %v10600
        %12329 = vmatpush1.bf16.msra.mxu0 %v10599
        %12330 = vmatprep.subr.bf16.mxu0 %v10608
        %12331 = vmatpush1.bf16.msra.mxu0 %v10607
        %12332 = vmatprep.subr.bf16.mxu0 %v10616
        %12333 = vmatpush1.bf16.msra.mxu0 %v10615
        %12334 = vmatprep.subr.bf16.mxu0 %v10624
        %12335 = vmatpush1.bf16.msra.mxu0 %v10623
        %12336 = vmatprep.subr.bf16.mxu0 %v10632
        %12337 = vmatpush1.bf16.msra.mxu0 %v10631
        %12338 = vmatprep.subr.bf16.mxu0 %v10640
        %12339 = vmatpush1.bf16.msra.mxu0 %v10639
        %12340 = vmatprep.subr.bf16.mxu0 %v10648
        %12341 = vmatpush1.bf16.msra.mxu0 %v10647
        %12342 = vmatprep.subr.bf16.mxu0 %v10656
        %12343 = vmatpush1.bf16.msra.mxu0 %v10655
        %12344 = vmatprep.subr.bf16.mxu0 %v10664
        %12345 = vmatpush1.bf16.msra.mxu0 %v10663
        %12346 = vmatprep.subr.bf16.mxu0 %v10672
        %12347 = vmatpush1.bf16.msra.mxu0 %v10671
        %12348 = vmatprep.mubr.bf16.mxu0 %v6564
        %12349 = vmatmul.mubr.bf16.gmra.mrb[0].mxu0 %v6563
        %v12350 = vpop.f32.mrb[0].mxu0
        %v12351 = vadd.f32 %v12310, %v12350
        %v12352 = vpop.f32.mrb[0].mxu0
        %v12353 = vadd.f32 %v12312, %v12352
        %v12354 = vpop.f32.mrb[0].mxu0
        %v12355 = vpop.f32.mrb[0].mxu0
        %12356 = vdwg.mxu0
        %12357 = vmatprep.subr.bf16.mxu0 %v9658
        %12358 = vmatpush1.bf16.msra.mxu0 %v9657
        %12359 = vmatprep.subr.bf16.mxu0 %v9666
        %12360 = vmatpush1.bf16.msra.mxu0 %v9665
        %12361 = vmatprep.subr.bf16.mxu0 %v9674
        %12362 = vmatpush1.bf16.msra.mxu0 %v9673
        %12363 = vmatprep.subr.bf16.mxu0 %v9682
        %12364 = vmatpush1.bf16.msra.mxu0 %v9681
        %12365 = vmatprep.subr.bf16.mxu0 %v9690
        %12366 = vmatpush1.bf16.msra.mxu0 %v9689
        %12367 = vmatprep.subr.bf16.mxu0 %v9698
        %12368 = vmatpush1.bf16.msra.mxu0 %v9697
        %12369 = vmatprep.subr.bf16.mxu0 %v9706
        %12370 = vmatpush1.bf16.msra.mxu0 %v9705
        %12371 = vmatprep.subr.bf16.mxu0 %v9714
        %12372 = vmatpush1.bf16.msra.mxu0 %v9713
        %12373 = vmatprep.subr.bf16.mxu0 %v9722
        %12374 = vmatpush1.bf16.msra.mxu0 %v9721
        %12375 = vmatprep.subr.bf16.mxu0 %v9730
        %12376 = vmatpush1.bf16.msra.mxu0 %v9729
        %12377 = vmatprep.subr.bf16.mxu0 %v9738
        %12378 = vmatpush1.bf16.msra.mxu0 %v9737
        %12379 = vmatprep.subr.bf16.mxu0 %v9746
        %12380 = vmatpush1.bf16.msra.mxu0 %v9745
        %12381 = vmatprep.subr.bf16.mxu0 %v9754
        %12382 = vmatpush1.bf16.msra.mxu0 %v9753
        %12383 = vmatprep.subr.bf16.mxu0 %v9762
        %12384 = vmatpush1.bf16.msra.mxu0 %v9761
        %12385 = vmatprep.subr.bf16.mxu0 %v9770
        %12386 = vmatpush1.bf16.msra.mxu0 %v9769
        %12387 = vmatprep.subr.bf16.mxu0 %v9778
        %12388 = vmatpush1.bf16.msra.mxu0 %v9777
        %12389 = vmatprep.mubr.bf16.mxu0 %v6550
        %12390 = vmatmul.mubr.bf16.gmra.mrb[0].mxu0 %v6549
        %v12391 = vpop.f32.mrb[0].mxu0
        %v12392 = vadd.f32 0.0, %v12391
        %v12393 = vpop.f32.mrb[0].mxu0
        %v12394 = vadd.f32 0.0, %v12393
        %v12395 = vpop.f32.mrb[0].mxu0
        %v12396 = vpop.f32.mrb[0].mxu0
        %12397 = vdwg.mxu0
        %12398 = vmatprep.subr.bf16.mxu0 %v9786
        %12399 = vmatpush1.bf16.msra.mxu0 %v9785
        %12400 = vmatprep.subr.bf16.mxu0 %v9794
        %12401 = vmatpush1.bf16.msra.mxu0 %v9793
        %12402 = vmatprep.subr.bf16.mxu0 %v9802
        %12403 = vmatpush1.bf16.msra.mxu0 %v9801
        %12404 = vmatprep.subr.bf16.mxu0 %v9810
        %12405 = vmatpush1.bf16.msra.mxu0 %v9809
        %12406 = vmatprep.subr.bf16.mxu0 %v9818
        %12407 = vmatpush1.bf16.msra.mxu0 %v9817
        %12408 = vmatprep.subr.bf16.mxu0 %v9826
        %12409 = vmatpush1.bf16.msra.mxu0 %v9825
        %12410 = vmatprep.subr.bf16.mxu0 %v9834
        %12411 = vmatpush1.bf16.msra.mxu0 %v9833
        %12412 = vmatprep.subr.bf16.mxu0 %v9842
        %12413 = vmatpush1.bf16.msra.mxu0 %v9841
        %12414 = vmatprep.subr.bf16.mxu0 %v9850
        %12415 = vmatpush1.bf16.msra.mxu0 %v9849
        %12416 = vmatprep.subr.bf16.mxu0 %v9858
        %12417 = vmatpush1.bf16.msra.mxu0 %v9857
        %12418 = vmatprep.subr.bf16.mxu0 %v9866
        %12419 = vmatpush1.bf16.msra.mxu0 %v9865
        %12420 = vmatprep.subr.bf16.mxu0 %v9874
        %12421 = vmatpush1.bf16.msra.mxu0 %v9873
        %12422 = vmatprep.subr.bf16.mxu0 %v9882
        %12423 = vmatpush1.bf16.msra.mxu0 %v9881
        %12424 = vmatprep.subr.bf16.mxu0 %v9890
        %12425 = vmatpush1.bf16.msra.mxu0 %v9889
        %12426 = vmatprep.subr.bf16.mxu0 %v9898
        %12427 = vmatpush1.bf16.msra.mxu0 %v9897
        %12428 = vmatprep.subr.bf16.mxu0 %v9906
        %12429 = vmatpush1.bf16.msra.mxu0 %v9905
        %12430 = vmatprep.mubr.bf16.mxu0 %v6552
        %12431 = vmatmul.mubr.bf16.gmra.mrb[0].mxu0 %v6551
        %v12432 = vpop.f32.mrb[0].mxu0
        %v12433 = vadd.f32 %v12392, %v12432
        %v12434 = vpop.f32.mrb[0].mxu0
        %v12435 = vadd.f32 %v12394, %v12434
        %v12436 = vpop.f32.mrb[0].mxu0
        %v12437 = vpop.f32.mrb[0].mxu0
        %12438 = vdwg.mxu0
        %12439 = vmatprep.subr.bf16.mxu0 %v9914
        %12440 = vmatpush1.bf16.msra.mxu0 %v9913
        %12441 = vmatprep.subr.bf16.mxu0 %v9922
        %12442 = vmatpush1.bf16.msra.mxu0 %v9921
        %12443 = vmatprep.subr.bf16.mxu0 %v9930
        %12444 = vmatpush1.bf16.msra.mxu0 %v9929
        %12445 = vmatprep.subr.bf16.mxu0 %v9938
        %12446 = vmatpush1.bf16.msra.mxu0 %v9937
        %12447 = vmatprep.subr.bf16.mxu0 %v9946
        %12448 = vmatpush1.bf16.msra.mxu0 %v9945
        %12449 = vmatprep.subr.bf16.mxu0 %v9954
        %12450 = vmatpush1.bf16.msra.mxu0 %v9953
        %12451 = vmatprep.subr.bf16.mxu0 %v9962
        %12452 = vmatpush1.bf16.msra.mxu0 %v9961
        %12453 = vmatprep.subr.bf16.mxu0 %v9970
        %12454 = vmatpush1.bf16.msra.mxu0 %v9969
        %12455 = vmatprep.subr.bf16.mxu0 %v9978
        %12456 = vmatpush1.bf16.msra.mxu0 %v9977
        %12457 = vmatprep.subr.bf16.mxu0 %v9986
        %12458 = vmatpush1.bf16.msra.mxu0 %v9985
        %12459 = vmatprep.subr.bf16.mxu0 %v9994
        %12460 = vmatpush1.bf16.msra.mxu0 %v9993
        %12461 = vmatprep.subr.bf16.mxu0 %v10002
        %12462 = vmatpush1.bf16.msra.mxu0 %v10001
        %12463 = vmatprep.subr.bf16.mxu0 %v10010
        %12464 = vmatpush1.bf16.msra.mxu0 %v10009
        %12465 = vmatprep.subr.bf16.mxu0 %v10018
        %12466 = vmatpush1.bf16.msra.mxu0 %v10017
        %12467 = vmatprep.subr.bf16.mxu0 %v10026
        %12468 = vmatpush1.bf16.msra.mxu0 %v10025
        %12469 = vmatprep.subr.bf16.mxu0 %v10034
        %12470 = vmatpush1.bf16.msra.mxu0 %v10033
        %12471 = vmatprep.mubr.bf16.mxu0 %v6554
        %12472 = vmatmul.mubr.bf16.gmra.mrb[0].mxu0 %v6553
        %v12473 = vpop.f32.mrb[0].mxu0
        %v12474 = vadd.f32 %v12433, %v12473
        %v12475 = vpop.f32.mrb[0].mxu0
        %v12476 = vadd.f32 %v12435, %v12475
        %v12477 = vpop.f32.mrb[0].mxu0
        %v12478 = vpop.f32.mrb[0].mxu0
        %12479 = vdwg.mxu0
        %12480 = vmatprep.subr.bf16.mxu0 %v10042
        %12481 = vmatpush1.bf16.msra.mxu0 %v10041
        %12482 = vmatprep.subr.bf16.mxu0 %v10050
        %12483 = vmatpush1.bf16.msra.mxu0 %v10049
        %12484 = vmatprep.subr.bf16.mxu0 %v10058
        %12485 = vmatpush1.bf16.msra.mxu0 %v10057
        %12486 = vmatprep.subr.bf16.mxu0 %v10066
        %12487 = vmatpush1.bf16.msra.mxu0 %v10065
        %12488 = vmatprep.subr.bf16.mxu0 %v10074
        %12489 = vmatpush1.bf16.msra.mxu0 %v10073
        %12490 = vmatprep.subr.bf16.mxu0 %v10082
        %12491 = vmatpush1.bf16.msra.mxu0 %v10081
        %12492 = vmatprep.subr.bf16.mxu0 %v10090
        %12493 = vmatpush1.bf16.msra.mxu0 %v10089
        %12494 = vmatprep.subr.bf16.mxu0 %v10098
        %12495 = vmatpush1.bf16.msra.mxu0 %v10097
        %12496 = vmatprep.subr.bf16.mxu0 %v10106
        %12497 = vmatpush1.bf16.msra.mxu0 %v10105
        %12498 = vmatprep.subr.bf16.mxu0 %v10114
        %12499 = vmatpush1.bf16.msra.mxu0 %v10113
        %12500 = vmatprep.subr.bf16.mxu0 %v10122
        %12501 = vmatpush1.bf16.msra.mxu0 %v10121
        %12502 = vmatprep.subr.bf16.mxu0 %v10130
        %12503 = vmatpush1.bf16.msra.mxu0 %v10129
        %12504 = vmatprep.subr.bf16.mxu0 %v10138
        %12505 = vmatpush1.bf16.msra.mxu0 %v10137
        %12506 = vmatprep.subr.bf16.mxu0 %v10146
        %12507 = vmatpush1.bf16.msra.mxu0 %v10145
        %12508 = vmatprep.subr.bf16.mxu0 %v10154
        %12509 = vmatpush1.bf16.msra.mxu0 %v10153
        %12510 = vmatprep.subr.bf16.mxu0 %v10162
        %12511 = vmatpush1.bf16.msra.mxu0 %v10161
        %12512 = vmatprep.mubr.bf16.mxu0 %v6556
        %12513 = vmatmul.mubr.bf16.gmra.mrb[0].mxu0 %v6555
        %v12514 = vpop.f32.mrb[0].mxu0
        %v12515 = vadd.f32 %v12474, %v12514
        %v12516 = vpop.f32.mrb[0].mxu0
        %v12517 = vadd.f32 %v12476, %v12516
        %v12518 = vpop.f32.mrb[0].mxu0
        %v12519 = vpop.f32.mrb[0].mxu0
        %12520 = vdwg.mxu0
        %12521 = vmatprep.subr.bf16.mxu0 %v10170
        %12522 = vmatpush1.bf16.msra.mxu0 %v10169
        %12523 = vmatprep.subr.bf16.mxu0 %v10178
        %12524 = vmatpush1.bf16.msra.mxu0 %v10177
        %12525 = vmatprep.subr.bf16.mxu0 %v10186
        %12526 = vmatpush1.bf16.msra.mxu0 %v10185
        %12527 = vmatprep.subr.bf16.mxu0 %v10194
        %12528 = vmatpush1.bf16.msra.mxu0 %v10193
        %12529 = vmatprep.subr.bf16.mxu0 %v10202
        %12530 = vmatpush1.bf16.msra.mxu0 %v10201
        %12531 = vmatprep.subr.bf16.mxu0 %v10210
        %12532 = vmatpush1.bf16.msra.mxu0 %v10209
        %12533 = vmatprep.subr.bf16.mxu0 %v10218
        %12534 = vmatpush1.bf16.msra.mxu0 %v10217
        %12535 = vmatprep.subr.bf16.mxu0 %v10226
        %12536 = vmatpush1.bf16.msra.mxu0 %v10225
        %12537 = vmatprep.subr.bf16.mxu0 %v10234
        %12538 = vmatpush1.bf16.msra.mxu0 %v10233
        %12539 = vmatprep.subr.bf16.mxu0 %v10242
        %12540 = vmatpush1.bf16.msra.mxu0 %v10241
        %12541 = vmatprep.subr.bf16.mxu0 %v10250
        %12542 = vmatpush1.bf16.msra.mxu0 %v10249
        %12543 = vmatprep.subr.bf16.mxu0 %v10258
        %12544 = vmatpush1.bf16.msra.mxu0 %v10257
        %12545 = vmatprep.subr.bf16.mxu0 %v10266
        %12546 = vmatpush1.bf16.msra.mxu0 %v10265
        %12547 = vmatprep.subr.bf16.mxu0 %v10274
        %12548 = vmatpush1.bf16.msra.mxu0 %v10273
        %12549 = vmatprep.subr.bf16.mxu0 %v10282
        %12550 = vmatpush1.bf16.msra.mxu0 %v10281
        %12551 = vmatprep.subr.bf16.mxu0 %v10290
        %12552 = vmatpush1.bf16.msra.mxu0 %v10289
        %12553 = vmatprep.mubr.bf16.mxu0 %v6558
        %12554 = vmatmul.mubr.bf16.gmra.mrb[0].mxu0 %v6557
        %v12555 = vpop.f32.mrb[0].mxu0
        %v12556 = vadd.f32 %v12515, %v12555
        %v12557 = vpop.f32.mrb[0].mxu0
        %v12558 = vadd.f32 %v12517, %v12557
        %v12559 = vpop.f32.mrb[0].mxu0
        %v12560 = vpop.f32.mrb[0].mxu0
        %12561 = vdwg.mxu0
        %12562 = vmatprep.subr.bf16.mxu0 %v10298
        %12563 = vmatpush1.bf16.msra.mxu0 %v10297
        %12564 = vmatprep.subr.bf16.mxu0 %v10306
        %12565 = vmatpush1.bf16.msra.mxu0 %v10305
        %12566 = vmatprep.subr.bf16.mxu0 %v10314
        %12567 = vmatpush1.bf16.msra.mxu0 %v10313
        %12568 = vmatprep.subr.bf16.mxu0 %v10322
        %12569 = vmatpush1.bf16.msra.mxu0 %v10321
        %12570 = vmatprep.subr.bf16.mxu0 %v10330
        %12571 = vmatpush1.bf16.msra.mxu0 %v10329
        %12572 = vmatprep.subr.bf16.mxu0 %v10338
        %12573 = vmatpush1.bf16.msra.mxu0 %v10337
        %12574 = vmatprep.subr.bf16.mxu0 %v10346
        %12575 = vmatpush1.bf16.msra.mxu0 %v10345
        %12576 = vmatprep.subr.bf16.mxu0 %v10354
        %12577 = vmatpush1.bf16.msra.mxu0 %v10353
        %12578 = vmatprep.subr.bf16.mxu0 %v10362
        %12579 = vmatpush1.bf16.msra.mxu0 %v10361
        %12580 = vmatprep.subr.bf16.mxu0 %v10370
        %12581 = vmatpush1.bf16.msra.mxu0 %v10369
        %12582 = vmatprep.subr.bf16.mxu0 %v10378
        %12583 = vmatpush1.bf16.msra.mxu0 %v10377
        %12584 = vmatprep.subr.bf16.mxu0 %v10386
        %12585 = vmatpush1.bf16.msra.mxu0 %v10385
        %12586 = vmatprep.subr.bf16.mxu0 %v10394
        %12587 = vmatpush1.bf16.msra.mxu0 %v10393
        %12588 = vmatprep.subr.bf16.mxu0 %v10402
        %12589 = vmatpush1.bf16.msra.mxu0 %v10401
        %12590 = vmatprep.subr.bf16.mxu0 %v10410
        %12591 = vmatpush1.bf16.msra.mxu0 %v10409
        %12592 = vmatprep.subr.bf16.mxu0 %v10418
        %12593 = vmatpush1.bf16.msra.mxu0 %v10417
        %12594 = vmatprep.mubr.bf16.mxu0 %v6560
        %12595 = vmatmul.mubr.bf16.gmra.mrb[0].mxu0 %v6559
        %v12596 = vpop.f32.mrb[0].mxu0
        %v12597 = vadd.f32 %v12556, %v12596
        %v12598 = vpop.f32.mrb[0].mxu0
        %v12599 = vadd.f32 %v12558, %v12598
        %v12600 = vpop.f32.mrb[0].mxu0
        %v12601 = vpop.f32.mrb[0].mxu0
        %12602 = vdwg.mxu0
        %12603 = vmatprep.subr.bf16.mxu0 %v10426
        %12604 = vmatpush1.bf16.msra.mxu0 %v10425
        %12605 = vmatprep.subr.bf16.mxu0 %v10434
        %12606 = vmatpush1.bf16.msra.mxu0 %v10433
        %12607 = vmatprep.subr.bf16.mxu0 %v10442
        %12608 = vmatpush1.bf16.msra.mxu0 %v10441
        %12609 = vmatprep.subr.bf16.mxu0 %v10450
        %12610 = vmatpush1.bf16.msra.mxu0 %v10449
        %12611 = vmatprep.subr.bf16.mxu0 %v10458
        %12612 = vmatpush1.bf16.msra.mxu0 %v10457
        %12613 = vmatprep.subr.bf16.mxu0 %v10466
        %12614 = vmatpush1.bf16.msra.mxu0 %v10465
        %12615 = vmatprep.subr.bf16.mxu0 %v10474
        %12616 = vmatpush1.bf16.msra.mxu0 %v10473
        %12617 = vmatprep.subr.bf16.mxu0 %v10482
        %12618 = vmatpush1.bf16.msra.mxu0 %v10481
        %12619 = vmatprep.subr.bf16.mxu0 %v10490
        %12620 = vmatpush1.bf16.msra.mxu0 %v10489
        %12621 = vmatprep.subr.bf16.mxu0 %v10498
        %12622 = vmatpush1.bf16.msra.mxu0 %v10497
        %12623 = vmatprep.subr.bf16.mxu0 %v10506
        %12624 = vmatpush1.bf16.msra.mxu0 %v10505
        %12625 = vmatprep.subr.bf16.mxu0 %v10514
        %12626 = vmatpush1.bf16.msra.mxu0 %v10513
        %12627 = vmatprep.subr.bf16.mxu0 %v10522
        %12628 = vmatpush1.bf16.msra.mxu0 %v10521
        %12629 = vmatprep.subr.bf16.mxu0 %v10530
        %12630 = vmatpush1.bf16.msra.mxu0 %v10529
        %12631 = vmatprep.subr.bf16.mxu0 %v10538
        %12632 = vmatpush1.bf16.msra.mxu0 %v10537
        %12633 = vmatprep.subr.bf16.mxu0 %v10546
        %12634 = vmatpush1.bf16.msra.mxu0 %v10545
        %12635 = vmatprep.mubr.bf16.mxu0 %v6562
        %12636 = vmatmul.mubr.bf16.gmra.mrb[0].mxu0 %v6561
        %v12637 = vpop.f32.mrb[0].mxu0
        %v12638 = vadd.f32 %v12597, %v12637
        %v12639 = vpop.f32.mrb[0].mxu0
        %v12640 = vadd.f32 %v12599, %v12639
        %v12641 = vpop.f32.mrb[0].mxu0
        %v12642 = vpop.f32.mrb[0].mxu0
        %12643 = vdwg.mxu0
        %12644 = vmatprep.subr.bf16.mxu0 %v10554
        %12645 = vmatpush1.bf16.msra.mxu0 %v10553
        %12646 = vmatprep.subr.bf16.mxu0 %v10562
        %12647 = vmatpush1.bf16.msra.mxu0 %v10561
        %12648 = vmatprep.subr.bf16.mxu0 %v10570
        %12649 = vmatpush1.bf16.msra.mxu0 %v10569
        %12650 = vmatprep.subr.bf16.mxu0 %v10578
        %12651 = vmatpush1.bf16.msra.mxu0 %v10577
        %12652 = vmatprep.subr.bf16.mxu0 %v10586
        %12653 = vmatpush1.bf16.msra.mxu0 %v10585
        %12654 = vmatprep.subr.bf16.mxu0 %v10594
        %12655 = vmatpush1.bf16.msra.mxu0 %v10593
        %12656 = vmatprep.subr.bf16.mxu0 %v10602
        %12657 = vmatpush1.bf16.msra.mxu0 %v10601
        %12658 = vmatprep.subr.bf16.mxu0 %v10610
        %12659 = vmatpush1.bf16.msra.mxu0 %v10609
        %12660 = vmatprep.subr.bf16.mxu0 %v10618
        %12661 = vmatpush1.bf16.msra.mxu0 %v10617
        %12662 = vmatprep.subr.bf16.mxu0 %v10626
        %12663 = vmatpush1.bf16.msra.mxu0 %v10625
        %12664 = vmatprep.subr.bf16.mxu0 %v10634
        %12665 = vmatpush1.bf16.msra.mxu0 %v10633
        %12666 = vmatprep.subr.bf16.mxu0 %v10642
        %12667 = vmatpush1.bf16.msra.mxu0 %v10641
        %12668 = vmatprep.subr.bf16.mxu0 %v10650
        %12669 = vmatpush1.bf16.msra.mxu0 %v10649
        %12670 = vmatprep.subr.bf16.mxu0 %v10658
        %12671 = vmatpush1.bf16.msra.mxu0 %v10657
        %12672 = vmatprep.subr.bf16.mxu0 %v10666
        %12673 = vmatpush1.bf16.msra.mxu0 %v10665
        %12674 = vmatprep.subr.bf16.mxu0 %v10674
        %12675 = vmatpush1.bf16.msra.mxu0 %v10673
        %12676 = vmatprep.mubr.bf16.mxu0 %v6564
        %12677 = vmatmul.mubr.bf16.gmra.mrb[0].mxu0 %v6563
        %v12678 = vpop.f32.mrb[0].mxu0
        %v12679 = vadd.f32 %v12638, %v12678
        %v12680 = vpop.f32.mrb[0].mxu0
        %v12681 = vadd.f32 %v12640, %v12680
        %v12682 = vpop.f32.mrb[0].mxu0
        %v12683 = vpop.f32.mrb[0].mxu0
        %12684 = vdwg.mxu0
        %12685 = vmatprep.subr.bf16.mxu0 %v9660
        %12686 = vmatpush1.bf16.msra.mxu0 %v9659
        %12687 = vmatprep.subr.bf16.mxu0 %v9668
        %12688 = vmatpush1.bf16.msra.mxu0 %v9667
        %12689 = vmatprep.subr.bf16.mxu0 %v9676
        %12690 = vmatpush1.bf16.msra.mxu0 %v9675
        %12691 = vmatprep.subr.bf16.mxu0 %v9684
        %12692 = vmatpush1.bf16.msra.mxu0 %v9683
        %12693 = vmatprep.subr.bf16.mxu0 %v9692
        %12694 = vmatpush1.bf16.msra.mxu0 %v9691
        %12695 = vmatprep.subr.bf16.mxu0 %v9700
        %12696 = vmatpush1.bf16.msra.mxu0 %v9699
        %12697 = vmatprep.subr.bf16.mxu0 %v9708
        %12698 = vmatpush1.bf16.msra.mxu0 %v9707
        %12699 = vmatprep.subr.bf16.mxu0 %v9716
        %12700 = vmatpush1.bf16.msra.mxu0 %v9715
        %12701 = vmatprep.subr.bf16.mxu0 %v9724
        %12702 = vmatpush1.bf16.msra.mxu0 %v9723
        %12703 = vmatprep.subr.bf16.mxu0 %v9732
        %12704 = vmatpush1.bf16.msra.mxu0 %v9731
        %12705 = vmatprep.subr.bf16.mxu0 %v9740
        %12706 = vmatpush1.bf16.msra.mxu0 %v9739
        %12707 = vmatprep.subr.bf16.mxu0 %v9748
        %12708 = vmatpush1.bf16.msra.mxu0 %v9747
        %12709 = vmatprep.subr.bf16.mxu0 %v9756
        %12710 = vmatpush1.bf16.msra.mxu0 %v9755
        %12711 = vmatprep.subr.bf16.mxu0 %v9764
        %12712 = vmatpush1.bf16.msra.mxu0 %v9763
        %12713 = vmatprep.subr.bf16.mxu0 %v9772
        %12714 = vmatpush1.bf16.msra.mxu0 %v9771
        %12715 = vmatprep.subr.bf16.mxu0 %v9780
        %12716 = vmatpush1.bf16.msra.mxu0 %v9779
        %12717 = vmatprep.mubr.bf16.mxu0 %v6550
        %12718 = vmatmul.mubr.bf16.gmra.mrb[0].mxu0 %v6549
        %v12719 = vpop.f32.mrb[0].mxu0
        %v12720 = vadd.f32 0.0, %v12719
        %v12721 = vpop.f32.mrb[0].mxu0
        %v12722 = vadd.f32 0.0, %v12721
        %v12723 = vpop.f32.mrb[0].mxu0
        %v12724 = vpop.f32.mrb[0].mxu0
        %12725 = vdwg.mxu0
        %12726 = vmatprep.subr.bf16.mxu0 %v9788
        %12727 = vmatpush1.bf16.msra.mxu0 %v9787
        %12728 = vmatprep.subr.bf16.mxu0 %v9796
        %12729 = vmatpush1.bf16.msra.mxu0 %v9795
        %12730 = vmatprep.subr.bf16.mxu0 %v9804
        %12731 = vmatpush1.bf16.msra.mxu0 %v9803
        %12732 = vmatprep.subr.bf16.mxu0 %v9812
        %12733 = vmatpush1.bf16.msra.mxu0 %v9811
        %12734 = vmatprep.subr.bf16.mxu0 %v9820
        %12735 = vmatpush1.bf16.msra.mxu0 %v9819
        %12736 = vmatprep.subr.bf16.mxu0 %v9828
        %12737 = vmatpush1.bf16.msra.mxu0 %v9827
        %12738 = vmatprep.subr.bf16.mxu0 %v9836
        %12739 = vmatpush1.bf16.msra.mxu0 %v9835
        %12740 = vmatprep.subr.bf16.mxu0 %v9844
        %12741 = vmatpush1.bf16.msra.mxu0 %v9843
        %12742 = vmatprep.subr.bf16.mxu0 %v9852
        %12743 = vmatpush1.bf16.msra.mxu0 %v9851
        %12744 = vmatprep.subr.bf16.mxu0 %v9860
        %12745 = vmatpush1.bf16.msra.mxu0 %v9859
        %12746 = vmatprep.subr.bf16.mxu0 %v9868
        %12747 = vmatpush1.bf16.msra.mxu0 %v9867
        %12748 = vmatprep.subr.bf16.mxu0 %v9876
        %12749 = vmatpush1.bf16.msra.mxu0 %v9875
        %12750 = vmatprep.subr.bf16.mxu0 %v9884
        %12751 = vmatpush1.bf16.msra.mxu0 %v9883
        %12752 = vmatprep.subr.bf16.mxu0 %v9892
        %12753 = vmatpush1.bf16.msra.mxu0 %v9891
        %12754 = vmatprep.subr.bf16.mxu0 %v9900
        %12755 = vmatpush1.bf16.msra.mxu0 %v9899
        %12756 = vmatprep.subr.bf16.mxu0 %v9908
        %12757 = vmatpush1.bf16.msra.mxu0 %v9907
        %12758 = vmatprep.mubr.bf16.mxu0 %v6552
        %12759 = vmatmul.mubr.bf16.gmra.mrb[0].mxu0 %v6551
        %v12760 = vpop.f32.mrb[0].mxu0
        %v12761 = vadd.f32 %v12720, %v12760
        %v12762 = vpop.f32.mrb[0].mxu0
        %v12763 = vadd.f32 %v12722, %v12762
        %v12764 = vpop.f32.mrb[0].mxu0
        %v12765 = vpop.f32.mrb[0].mxu0
        %12766 = vdwg.mxu0
        %12767 = vmatprep.subr.bf16.mxu0 %v9916
        %12768 = vmatpush1.bf16.msra.mxu0 %v9915
        %12769 = vmatprep.subr.bf16.mxu0 %v9924
        %12770 = vmatpush1.bf16.msra.mxu0 %v9923
        %12771 = vmatprep.subr.bf16.mxu0 %v9932
        %12772 = vmatpush1.bf16.msra.mxu0 %v9931
        %12773 = vmatprep.subr.bf16.mxu0 %v9940
        %12774 = vmatpush1.bf16.msra.mxu0 %v9939
        %12775 = vmatprep.subr.bf16.mxu0 %v9948
        %12776 = vmatpush1.bf16.msra.mxu0 %v9947
        %12777 = vmatprep.subr.bf16.mxu0 %v9956
        %12778 = vmatpush1.bf16.msra.mxu0 %v9955
        %12779 = vmatprep.subr.bf16.mxu0 %v9964
        %12780 = vmatpush1.bf16.msra.mxu0 %v9963
        %12781 = vmatprep.subr.bf16.mxu0 %v9972
        %12782 = vmatpush1.bf16.msra.mxu0 %v9971
        %12783 = vmatprep.subr.bf16.mxu0 %v9980
        %12784 = vmatpush1.bf16.msra.mxu0 %v9979
        %12785 = vmatprep.subr.bf16.mxu0 %v9988
        %12786 = vmatpush1.bf16.msra.mxu0 %v9987
        %12787 = vmatprep.subr.bf16.mxu0 %v9996
        %12788 = vmatpush1.bf16.msra.mxu0 %v9995
        %12789 = vmatprep.subr.bf16.mxu0 %v10004
        %12790 = vmatpush1.bf16.msra.mxu0 %v10003
        %12791 = vmatprep.subr.bf16.mxu0 %v10012
        %12792 = vmatpush1.bf16.msra.mxu0 %v10011
        %12793 = vmatprep.subr.bf16.mxu0 %v10020
        %12794 = vmatpush1.bf16.msra.mxu0 %v10019
        %12795 = vmatprep.subr.bf16.mxu0 %v10028
        %12796 = vmatpush1.bf16.msra.mxu0 %v10027
        %12797 = vmatprep.subr.bf16.mxu0 %v10036
        %12798 = vmatpush1.bf16.msra.mxu0 %v10035
        %12799 = vmatprep.mubr.bf16.mxu0 %v6554
        %12800 = vmatmul.mubr.bf16.gmra.mrb[0].mxu0 %v6553
        %v12801 = vpop.f32.mrb[0].mxu0
        %v12802 = vadd.f32 %v12761, %v12801
        %v12803 = vpop.f32.mrb[0].mxu0
        %v12804 = vadd.f32 %v12763, %v12803
        %v12805 = vpop.f32.mrb[0].mxu0
        %v12806 = vpop.f32.mrb[0].mxu0
        %12807 = vdwg.mxu0
        %12808 = vmatprep.subr.bf16.mxu0 %v10044
        %12809 = vmatpush1.bf16.msra.mxu0 %v10043
        %12810 = vmatprep.subr.bf16.mxu0 %v10052
        %12811 = vmatpush1.bf16.msra.mxu0 %v10051
        %12812 = vmatprep.subr.bf16.mxu0 %v10060
        %12813 = vmatpush1.bf16.msra.mxu0 %v10059
        %12814 = vmatprep.subr.bf16.mxu0 %v10068
        %12815 = vmatpush1.bf16.msra.mxu0 %v10067
        %12816 = vmatprep.subr.bf16.mxu0 %v10076
        %12817 = vmatpush1.bf16.msra.mxu0 %v10075
        %12818 = vmatprep.subr.bf16.mxu0 %v10084
        %12819 = vmatpush1.bf16.msra.mxu0 %v10083
        %12820 = vmatprep.subr.bf16.mxu0 %v10092
        %12821 = vmatpush1.bf16.msra.mxu0 %v10091
        %12822 = vmatprep.subr.bf16.mxu0 %v10100
        %12823 = vmatpush1.bf16.msra.mxu0 %v10099
        %12824 = vmatprep.subr.bf16.mxu0 %v10108
        %12825 = vmatpush1.bf16.msra.mxu0 %v10107
        %12826 = vmatprep.subr.bf16.mxu0 %v10116
        %12827 = vmatpush1.bf16.msra.mxu0 %v10115
        %12828 = vmatprep.subr.bf16.mxu0 %v10124
        %12829 = vmatpush1.bf16.msra.mxu0 %v10123
        %12830 = vmatprep.subr.bf16.mxu0 %v10132
        %12831 = vmatpush1.bf16.msra.mxu0 %v10131
        %12832 = vmatprep.subr.bf16.mxu0 %v10140
        %12833 = vmatpush1.bf16.msra.mxu0 %v10139
        %12834 = vmatprep.subr.bf16.mxu0 %v10148
        %12835 = vmatpush1.bf16.msra.mxu0 %v10147
        %12836 = vmatprep.subr.bf16.mxu0 %v10156
        %12837 = vmatpush1.bf16.msra.mxu0 %v10155
        %12838 = vmatprep.subr.bf16.mxu0 %v10164
        %12839 = vmatpush1.bf16.msra.mxu0 %v10163
        %12840 = vmatprep.mubr.bf16.mxu0 %v6556
        %12841 = vmatmul.mubr.bf16.gmra.mrb[0].mxu0 %v6555
        %v12842 = vpop.f32.mrb[0].mxu0
        %v12843 = vadd.f32 %v12802, %v12842
        %v12844 = vpop.f32.mrb[0].mxu0
        %v12845 = vadd.f32 %v12804, %v12844
        %v12846 = vpop.f32.mrb[0].mxu0
        %v12847 = vpop.f32.mrb[0].mxu0
        %12848 = vdwg.mxu0
        %12849 = vmatprep.subr.bf16.mxu0 %v10172
        %12850 = vmatpush1.bf16.msra.mxu0 %v10171
        %12851 = vmatprep.subr.bf16.mxu0 %v10180
        %12852 = vmatpush1.bf16.msra.mxu0 %v10179
        %12853 = vmatprep.subr.bf16.mxu0 %v10188
        %12854 = vmatpush1.bf16.msra.mxu0 %v10187
        %12855 = vmatprep.subr.bf16.mxu0 %v10196
        %12856 = vmatpush1.bf16.msra.mxu0 %v10195
        %12857 = vmatprep.subr.bf16.mxu0 %v10204
        %12858 = vmatpush1.bf16.msra.mxu0 %v10203
        %12859 = vmatprep.subr.bf16.mxu0 %v10212
        %12860 = vmatpush1.bf16.msra.mxu0 %v10211
        %12861 = vmatprep.subr.bf16.mxu0 %v10220
        %12862 = vmatpush1.bf16.msra.mxu0 %v10219
        %12863 = vmatprep.subr.bf16.mxu0 %v10228
        %12864 = vmatpush1.bf16.msra.mxu0 %v10227
        %12865 = vmatprep.subr.bf16.mxu0 %v10236
        %12866 = vmatpush1.bf16.msra.mxu0 %v10235
        %12867 = vmatprep.subr.bf16.mxu0 %v10244
        %12868 = vmatpush1.bf16.msra.mxu0 %v10243
        %12869 = vmatprep.subr.bf16.mxu0 %v10252
        %12870 = vmatpush1.bf16.msra.mxu0 %v10251
        %12871 = vmatprep.subr.bf16.mxu0 %v10260
        %12872 = vmatpush1.bf16.msra.mxu0 %v10259
        %12873 = vmatprep.subr.bf16.mxu0 %v10268
        %12874 = vmatpush1.bf16.msra.mxu0 %v10267
        %12875 = vmatprep.subr.bf16.mxu0 %v10276
        %12876 = vmatpush1.bf16.msra.mxu0 %v10275
        %12877 = vmatprep.subr.bf16.mxu0 %v10284
        %12878 = vmatpush1.bf16.msra.mxu0 %v10283
        %12879 = vmatprep.subr.bf16.mxu0 %v10292
        %12880 = vmatpush1.bf16.msra.mxu0 %v10291
        %12881 = vmatprep.mubr.bf16.mxu0 %v6558
        %12882 = vmatmul.mubr.bf16.gmra.mrb[0].mxu0 %v6557
        %v12883 = vpop.f32.mrb[0].mxu0
        %v12884 = vadd.f32 %v12843, %v12883
        %v12885 = vpop.f32.mrb[0].mxu0
        %v12886 = vadd.f32 %v12845, %v12885
        %v12887 = vpop.f32.mrb[0].mxu0
        %v12888 = vpop.f32.mrb[0].mxu0
        %12889 = vdwg.mxu0
        %12890 = vmatprep.subr.bf16.mxu0 %v10300
        %12891 = vmatpush1.bf16.msra.mxu0 %v10299
        %12892 = vmatprep.subr.bf16.mxu0 %v10308
        %12893 = vmatpush1.bf16.msra.mxu0 %v10307
        %12894 = vmatprep.subr.bf16.mxu0 %v10316
        %12895 = vmatpush1.bf16.msra.mxu0 %v10315
        %12896 = vmatprep.subr.bf16.mxu0 %v10324
        %12897 = vmatpush1.bf16.msra.mxu0 %v10323
        %12898 = vmatprep.subr.bf16.mxu0 %v10332
        %12899 = vmatpush1.bf16.msra.mxu0 %v10331
        %12900 = vmatprep.subr.bf16.mxu0 %v10340
        %12901 = vmatpush1.bf16.msra.mxu0 %v10339
        %12902 = vmatprep.subr.bf16.mxu0 %v10348
        %12903 = vmatpush1.bf16.msra.mxu0 %v10347
        %12904 = vmatprep.subr.bf16.mxu0 %v10356
        %12905 = vmatpush1.bf16.msra.mxu0 %v10355
        %12906 = vmatprep.subr.bf16.mxu0 %v10364
        %12907 = vmatpush1.bf16.msra.mxu0 %v10363
        %12908 = vmatprep.subr.bf16.mxu0 %v10372
        %12909 = vmatpush1.bf16.msra.mxu0 %v10371
        %12910 = vmatprep.subr.bf16.mxu0 %v10380
        %12911 = vmatpush1.bf16.msra.mxu0 %v10379
        %12912 = vmatprep.subr.bf16.mxu0 %v10388
        %12913 = vmatpush1.bf16.msra.mxu0 %v10387
        %12914 = vmatprep.subr.bf16.mxu0 %v10396
        %12915 = vmatpush1.bf16.msra.mxu0 %v10395
        %12916 = vmatprep.subr.bf16.mxu0 %v10404
        %12917 = vmatpush1.bf16.msra.mxu0 %v10403
        %12918 = vmatprep.subr.bf16.mxu0 %v10412
        %12919 = vmatpush1.bf16.msra.mxu0 %v10411
        %12920 = vmatprep.subr.bf16.mxu0 %v10420
        %12921 = vmatpush1.bf16.msra.mxu0 %v10419
        %12922 = vmatprep.mubr.bf16.mxu0 %v6560
        %12923 = vmatmul.mubr.bf16.gmra.mrb[0].mxu0 %v6559
        %v12924 = vpop.f32.mrb[0].mxu0
        %v12925 = vadd.f32 %v12884, %v12924
        %v12926 = vpop.f32.mrb[0].mxu0
        %v12927 = vadd.f32 %v12886, %v12926
        %v12928 = vpop.f32.mrb[0].mxu0
        %v12929 = vpop.f32.mrb[0].mxu0
        %12930 = vdwg.mxu0
        %12931 = vmatprep.subr.bf16.mxu0 %v10428
        %12932 = vmatpush1.bf16.msra.mxu0 %v10427
        %12933 = vmatprep.subr.bf16.mxu0 %v10436
        %12934 = vmatpush1.bf16.msra.mxu0 %v10435
        %12935 = vmatprep.subr.bf16.mxu0 %v10444
        %12936 = vmatpush1.bf16.msra.mxu0 %v10443
        %12937 = vmatprep.subr.bf16.mxu0 %v10452
        %12938 = vmatpush1.bf16.msra.mxu0 %v10451
        %12939 = vmatprep.subr.bf16.mxu0 %v10460
        %12940 = vmatpush1.bf16.msra.mxu0 %v10459
        %12941 = vmatprep.subr.bf16.mxu0 %v10468
        %12942 = vmatpush1.bf16.msra.mxu0 %v10467
        %12943 = vmatprep.subr.bf16.mxu0 %v10476
        %12944 = vmatpush1.bf16.msra.mxu0 %v10475
        %12945 = vmatprep.subr.bf16.mxu0 %v10484
        %12946 = vmatpush1.bf16.msra.mxu0 %v10483
        %12947 = vmatprep.subr.bf16.mxu0 %v10492
        %12948 = vmatpush1.bf16.msra.mxu0 %v10491
        %12949 = vmatprep.subr.bf16.mxu0 %v10500
        %12950 = vmatpush1.bf16.msra.mxu0 %v10499
        %12951 = vmatprep.subr.bf16.mxu0 %v10508
        %12952 = vmatpush1.bf16.msra.mxu0 %v10507
        %12953 = vmatprep.subr.bf16.mxu0 %v10516
        %12954 = vmatpush1.bf16.msra.mxu0 %v10515
        %12955 = vmatprep.subr.bf16.mxu0 %v10524
        %12956 = vmatpush1.bf16.msra.mxu0 %v10523
        %12957 = vmatprep.subr.bf16.mxu0 %v10532
        %12958 = vmatpush1.bf16.msra.mxu0 %v10531
        %12959 = vmatprep.subr.bf16.mxu0 %v10540
        %12960 = vmatpush1.bf16.msra.mxu0 %v10539
        %12961 = vmatprep.subr.bf16.mxu0 %v10548
        %12962 = vmatpush1.bf16.msra.mxu0 %v10547
        %12963 = vmatprep.mubr.bf16.mxu0 %v6562
        %12964 = vmatmul.mubr.bf16.gmra.mrb[0].mxu0 %v6561
        %v12965 = vpop.f32.mrb[0].mxu0
        %v12966 = vadd.f32 %v12925, %v12965
        %v12967 = vpop.f32.mrb[0].mxu0
        %v12968 = vadd.f32 %v12927, %v12967
        %v12969 = vpop.f32.mrb[0].mxu0
        %v12970 = vpop.f32.mrb[0].mxu0
        %12971 = vdwg.mxu0
        %12972 = vmatprep.subr.bf16.mxu0 %v10556
        %12973 = vmatpush1.bf16.msra.mxu0 %v10555
        %12974 = vmatprep.subr.bf16.mxu0 %v10564
        %12975 = vmatpush1.bf16.msra.mxu0 %v10563
        %12976 = vmatprep.subr.bf16.mxu0 %v10572
        %12977 = vmatpush1.bf16.msra.mxu0 %v10571
        %12978 = vmatprep.subr.bf16.mxu0 %v10580
        %12979 = vmatpush1.bf16.msra.mxu0 %v10579
        %12980 = vmatprep.subr.bf16.mxu0 %v10588
        %12981 = vmatpush1.bf16.msra.mxu0 %v10587
        %12982 = vmatprep.subr.bf16.mxu0 %v10596
        %12983 = vmatpush1.bf16.msra.mxu0 %v10595
        %12984 = vmatprep.subr.bf16.mxu0 %v10604
        %12985 = vmatpush1.bf16.msra.mxu0 %v10603
        %12986 = vmatprep.subr.bf16.mxu0 %v10612
        %12987 = vmatpush1.bf16.msra.mxu0 %v10611
        %12988 = vmatprep.subr.bf16.mxu0 %v10620
        %12989 = vmatpush1.bf16.msra.mxu0 %v10619
        %12990 = vmatprep.subr.bf16.mxu0 %v10628
        %12991 = vmatpush1.bf16.msra.mxu0 %v10627
        %12992 = vmatprep.subr.bf16.mxu0 %v10636
        %12993 = vmatpush1.bf16.msra.mxu0 %v10635
        %12994 = vmatprep.subr.bf16.mxu0 %v10644
        %12995 = vmatpush1.bf16.msra.mxu0 %v10643
        %12996 = vmatprep.subr.bf16.mxu0 %v10652
        %12997 = vmatpush1.bf16.msra.mxu0 %v10651
        %12998 = vmatprep.subr.bf16.mxu0 %v10660
        %12999 = vmatpush1.bf16.msra.mxu0 %v10659
        %13000 = vmatprep.subr.bf16.mxu0 %v10668
        %13001 = vmatpush1.bf16.msra.mxu0 %v10667
        %13002 = vmatprep.subr.bf16.mxu0 %v10676
        %13003 = vmatpush1.bf16.msra.mxu0 %v10675
        %13004 = vmatprep.mubr.bf16.mxu0 %v6564
        %13005 = vmatmul.mubr.bf16.gmra.mrb[0].mxu0 %v6563
        %v13006 = vpop.f32.mrb[0].mxu0
        %v13007 = vadd.f32 %v12966, %v13006
        %v13008 = vpop.f32.mrb[0].mxu0
        %v13009 = vadd.f32 %v12968, %v13008
        %v13010 = vpop.f32.mrb[0].mxu0
        %v13011 = vpop.f32.mrb[0].mxu0
        %13012 = vdwg.mxu0
        %v13013 = vadd.f32 %v5481, %v12023
        %v13014 = vadd.f32 %v5482, %v12025
        %v13015 = vadd.f32 %v5483, %v12351
        %v13016 = vadd.f32 %v5484, %v12353
        %v13017 = vadd.f32 %v5485, %v12679
        %v13018 = vadd.f32 %v5486, %v12681
        %v13019 = vadd.f32 %v5487, %v13007
        %v13020 = vadd.f32 %v5488, %v13009
        %13021 = vst [vmem:[#allocation3] sm:$0xff] %v13013
        %13022 = vst [vmem:[#allocation3 + $0x8] sm:$0xff] %v13014
        %13023 = vst [vmem:[#allocation3 + $0x10] sm:$0xff] %v13015
        %13024 = vst [vmem:[#allocation3 + $0x18] sm:$0xff] %v13016
        %13025 = vst [vmem:[#allocation3 + $0x20] sm:$0xff] %v13017
        %13026 = vst [vmem:[#allocation3 + $0x28] sm:$0xff] %v13018
        %13027 = vst [vmem:[#allocation3 + $0x30] sm:$0xff] %v13019
        %13028 = vst [vmem:[#allocation3 + $0x38] sm:$0xff] %v13020
        %p13029 = scmp.eq.s32.totalorder %s29, 1
        // Predicated region
        $region65: #{tpu_custom_call.1} parent=39 // pred_check
          %p13030 = pneg %p13029
        $region66: #{tpu_custom_call.1} parent=39 // pred_check_branch
          %13032 = sbr.rel (%p13030) target = $region68
        $region67: #{tpu_custom_call.1} parent=39 // pred_region
          %v13033 = vld [vmem:[#allocation3] sm:$0xff]
          %v13034 = vld [vmem:[#allocation3 + $0x8] sm:$0xff]
          %v13035 = vld [vmem:[#allocation3 + $0x10] sm:$0xff]
          %v13036 = vld [vmem:[#allocation3 + $0x18] sm:$0xff]
          %v13037 = vld [vmem:[#allocation3 + $0x20] sm:$0xff]
          %v13038 = vld [vmem:[#allocation3 + $0x28] sm:$0xff]
          %v13039 = vld [vmem:[#allocation3 + $0x30] sm:$0xff]
          %v13040 = vld [vmem:[#allocation3 + $0x38] sm:$0xff]
          %v13041 = vld [vmem:[%s303] sm:$0xff]
          %v13043 = vlaneseq
          %v13044 = vshrl.u32 %v13043, 7
          %v13045 = vsub.s32 0, %v13044
          %v13046 = vrot.slane %v13041, %v13045
          %v13047 = vlaneseq
          %v13048 = vshrl.u32 %v13047, 7
          %v13049 = vsub.s32 1, %v13048
          %v13050 = vrot.slane %v13041, %v13049
          %v13051 = vlaneseq
          %v13052 = vshrl.u32 %v13051, 7
          %v13053 = vsub.s32 2, %v13052
          %v13054 = vrot.slane %v13041, %v13053
          %v13055 = vlaneseq
          %v13056 = vshrl.u32 %v13055, 7
          %v13057 = vsub.s32 3, %v13056
          %v13058 = vrot.slane %v13041, %v13057
          %v13059 = vlaneseq
          %v13060 = vshrl.u32 %v13059, 7
          %v13061 = vsub.s32 4, %v13060
          %v13062 = vrot.slane %v13041, %v13061
          %v13063 = vlaneseq
          %v13064 = vshrl.u32 %v13063, 7
          %v13065 = vsub.s32 5, %v13064
          %v13066 = vrot.slane %v13041, %v13065
          %v13067 = vlaneseq
          %v13068 = vshrl.u32 %v13067, 7
          %v13069 = vsub.s32 6, %v13068
          %v13070 = vrot.slane %v13041, %v13069
          %v13071 = vlaneseq
          %v13072 = vshrl.u32 %v13071, 7
          %v13073 = vsub.s32 7, %v13072
          %v13074 = vrot.slane %v13041, %v13073
          %v13083 = vadd.f32 %v13033, %v13046
          %v13084 = vadd.f32 %v13034, %v13050
          %v13085 = vadd.f32 %v13035, %v13054
          %v13086 = vadd.f32 %v13036, %v13058
          %v13087 = vadd.f32 %v13037, %v13062
          %v13088 = vadd.f32 %v13038, %v13066
          %v13089 = vadd.f32 %v13039, %v13070
          %v13090 = vadd.f32 %v13040, %v13074
          %v13091 = vmax.f32 %v13083, 0.0
          %v13092 = vmax.f32 %v13084, 0.0
          %v13093 = vmax.f32 %v13085, 0.0
          %v13094 = vmax.f32 %v13086, 0.0
          %v13095 = vmax.f32 %v13087, 0.0
          %v13096 = vmax.f32 %v13088, 0.0
          %v13097 = vmax.f32 %v13089, 0.0
          %v13098 = vmax.f32 %v13090, 0.0
          %v13099 = vpack.c.bf16 %v13091, %v13091
          %v13100 = vpack.c.bf16 %v13092, %v13092
          %v13101 = vpack.c.bf16 %v13093, %v13093
          %v13102 = vpack.c.bf16 %v13094, %v13094
          %v13103 = vpack.c.bf16 %v13095, %v13095
          %v13104 = vpack.c.bf16 %v13096, %v13096
          %v13105 = vpack.c.bf16 %v13097, %v13097
          %v13106 = vpack.c.bf16 %v13098, %v13098
          %v13115 = vunpack.c.l.b16 %v13099
          %v13116 = vunpack.c.l.b16 %v13100
          %v13117 = vunpack.c.l.b16 %v13101
          %v13118 = vunpack.c.l.b16 %v13102
          %v13119 = vunpack.c.l.b16 %v13103
          %v13120 = vunpack.c.l.b16 %v13104
          %v13121 = vunpack.c.l.b16 %v13105
          %v13122 = vunpack.c.l.b16 %v13106
          %v13123 = vpack.c.b16 %v13116, %v13115
          %v13124 = vpack.c.b16 %v13118, %v13117
          %v13125 = vpack.c.b16 %v13120, %v13119
          %v13126 = vpack.c.b16 %v13122, %v13121
          %13131 = vst [vmem:[%s334] sm:$0xff] %v13123
          %13132 = vst [vmem:[%s334 + $0x8] sm:$0xff] %v13124
          %13133 = vst [vmem:[%s334 + $0x10] sm:$0xff] %v13125
          %13134 = vst [vmem:[%s334 + $0x18] sm:$0xff] %v13126
        $region68: #{tpu_custom_call.1} parent=39 // pred_fallthru
          _
        %s13135 = sand.u32 %s161, 1
        %s13136 = scalar_lea.sflag [#allocation6], %s13135
        %s13137 = sand.u32 %s161, 1
        %s13138 = smul.addr %s13137, 32
        %s13139 = scalar_lea.vmem [#allocation13], %s13138
        // Predicated region
        $region69: #{tpu_custom_call.1} parent=39 // pred_check
          %p13140 = pneg %p171
        $region70: #{tpu_custom_call.1} parent=39 // pred_check_branch
          %13142 = sbr.rel (%p13140) target = $region72
        $region71: #{tpu_custom_call.1} parent=39 // pred_region
          %s13143 = smul.u32 8, %s28
          %s13145 = ssub.s32 512, 512
          %13146 = vsyncadd %s13136, %s13145
          %s13147 = smul.addr %s13143, 64
          %s13148 = scalar_lea.hbm %s5, %s13147
          %s13150 = sshll.u32 %s13139, 4
          %s13151 = int_to_ptr.vmem [resolvable:$true] %s13150
          %13153 = dma.vmem_to_hbm [thread:$0]  %s13151, 512, %s13148, %s13136
        $region72: #{tpu_custom_call.1} parent=39 // pred_fallthru
          _
      $region40: #{tpu_custom_call.1} parent=5 // pred_fallthru
        _
      %p13154 = scmp.le.s32.totalorder 2, %s19
      // Predicated region
      $region73: #{tpu_custom_call.1} parent=5 // pred_check
        %p13155 = pneg %p13154
      $region74: #{tpu_custom_call.1} parent=5 // pred_check_branch
        %13157 = sbr.rel (%p13155) target = $region76
      $region75: #{tpu_custom_call.1} parent=5 // pred_region
        %s13158 = ssub.s32 %s19, 2
        // Predicated region
        $region77: #{tpu_custom_call.1} parent=75 // pred_check
          %p13159 = pneg %p177
        $region78: #{tpu_custom_call.1} parent=75 // pred_check_branch
          %13161 = sbr.rel (%p13159) target = $region80
        $region79: #{tpu_custom_call.1} parent=75 // pred_region
          %s13162 = sand.u32 %s162, 1
          %s13163 = scalar_lea.sflag [#allocation6], %s13162
          %s13164 = sand.u32 %s162, 1
          %s13165 = smul.addr %s13164, 32
          %s13166 = scalar_lea.vmem [#allocation13], %s13165
          %13167 = dma.done %s13163, 512
        $region80: #{tpu_custom_call.1} parent=75 // pred_fallthru
          _
      $region76: #{tpu_custom_call.1} parent=5 // pred_fallthru
        _
    $region6: #{tpu_custom_call.1} parent=1 // loop_footer
      %s23 = sadd.s32 1, %s19
    $region7: #{tpu_custom_call.1} parent=1 // loop_footer_branch
      %18 = sbr.rel target = $region3
    $region8: #{tpu_custom_call.1} parent=1 // loop_exit
      _
    %13168 = vsyncpa [#allocation5], 1
    %s13169 = scalar_lea.sflag [#allocation5], 1
    %13170 = vsyncpa %s13169, 1
    %13171 = vsyncpa [#allocation8], 1
    %13172 = vsyncpa [#allocation11], 1
    %s13173 = scalar_lea.sflag [#allocation11], 1
    %13174 = vsyncpa %s13173, 1
    %13175 = vsyncpa [#allocation6], 1
    %s13176 = scalar_lea.sflag [#allocation6], 1
    %13177 = vsyncpa %s13176, 1

</llo_original>
